<compile_context>
chip_gen: v5e
topology: v5e:2x2
jax: 0.10.0
libtpu: 0.0.40
codegen_flags: <defaults>
</compile_context>

<pallas_src>
import functools

import jax
import jax.numpy as jnp
from jax.experimental import pallas as pl
from jax.experimental.pallas import tpu as pltpu

LEAKY_SLOPE = 0.01   # PyTorch nn.LeakyReLU default negative_slope
BN_EPS = 1e-5
LANE = 128           # vreg lane width -> channel padding target


def _round_up(x, m):
    return ((x + m - 1) // m) * m


def _apply_act(y, act):
    if act == "leaky_relu":
        return jnp.where(y >= 0.0, y, LEAKY_SLOPE * y)
    if act == "tanh":
        return jnp.tanh(y)
    return y


# ---------------------------------------------------------------------------
# Kernel: Conv2d(k=3, s=2, p=1) + folded BN + activation
# ---------------------------------------------------------------------------
def _conv_s2_kernel(ph_ref, w_ref, sh_ref, o_ref, *, m_out, wop, act):
    """9 shifted matmuls over the flattened spatial-phase buffer.

    ph_ref: (4, 1, Lp, Cp)      phases of the padded input, flattened per image
    w_ref : (9, Cp, Cop)        per-tap (C_in, C_out) weights (BN-scaled, bf16)
    sh_ref: (1, Cop)            folded bias/BN shift (f32)
    o_ref : (1, m_out, Cop)     flattened output rows (ho x (wo+1) incl. junk col)
    """
    cop = w_ref.shape[2]
    acc = jnp.zeros((m_out, cop), jnp.float32)
    for kh in range(3):
        for kw in range(3):
            ph = (kh % 2) * 2 + (kw % 2)        # which spatial phase
            ofs = (kh // 2) * wop + (kw // 2)   # flat shift inside that phase
            xs = ph_ref[ph, 0, ofs:ofs + m_out, :]
            acc = acc + jnp.dot(xs, w_ref[kh * 3 + kw],
                                preferred_element_type=jnp.float32)
    y = _apply_act(acc + sh_ref[...], act)
    o_ref[0] = y.astype(o_ref.dtype)


def conv2d_s2(x, wk, shift, act, out_dtype):
    """x: (N, H, W, Cp) NHWC, channel-padded, H/W even. Returns (N, H/2, W/2, Cop)."""
    n, h, wdim, cp = x.shape
    ho, wo = h // 2, wdim // 2
    wop = wo + 1                       # phase width (includes right halo)
    m_out = ho * wop                   # flattened output rows (junk col kept)
    cop = wk.shape[-1]
    lp = _round_up((ho + 1) * wop + 1, 8)

    xp = jnp.pad(x, ((0, 0), (1, 1), (1, 1), (0, 0)))
    # 4 phases of the padded input: total bytes == input bytes (no blow-up).
    phases = jnp.stack([xp[:, r::2, s::2, :] for r in (0, 1) for s in (0, 1)],
                       axis=0)                               # (4, n, ho+1, wop, cp)
    phases = phases.reshape(4, n, (ho + 1) * wop, cp)
    phases = jnp.pad(phases, ((0, 0), (0, 0), (0, lp - (ho + 1) * wop), (0, 0)))
    phases = phases.astype(jnp.bfloat16)

    kernel = functools.partial(_conv_s2_kernel, m_out=m_out, wop=wop, act=act)
    out = pl.pallas_call(
        kernel,
        out_shape=jax.ShapeDtypeStruct((n, m_out, cop), out_dtype),
        grid=(n,),
        in_specs=[
            pl.BlockSpec((4, 1, lp, cp), lambda i: (0, i, 0, 0)),
            pl.BlockSpec((9, cp, cop), lambda i: (0, 0, 0)),
            pl.BlockSpec((1, cop), lambda i: (0, 0)),
        ],
        out_specs=pl.BlockSpec((1, m_out, cop), lambda i: (i, 0, 0)),
        compiler_params=pltpu.CompilerParams(
            dimension_semantics=("parallel",)),
    )(phases, wk, shift)
    # drop the junk column, back to spatial layout
    return out.reshape(n, ho, wop, cop)[:, :, :wo, :]


# ---------------------------------------------------------------------------
# Kernel: ConvTranspose2d(k=3, s=2, p=1, op=1) + folded BN + activation
# (polyphase: y[2i+u, 2j+v] uses only the taps with matching parity)
# ---------------------------------------------------------------------------
def _convT_s2_kernel(x_ref, w_ref, sh_ref, o_ref, *, m_out, we, act):
    """x_ref : (1, Lp, Cp)           input (+1 bottom/right halo), flattened
       w_ref : (3, 3, Cp, Cop)       (kh, kw, C_in, C_out) weights (bf16)
       sh_ref: (1, Cop)
       o_ref : (2, 2, 1, m_out, Cop) the 4 output phases, flattened rows
    """
    x00 = x_ref[0, 0:m_out, :]                 # x[i, j]
    x01 = x_ref[0, 1:1 + m_out, :]             # x[i, j+1]
    x10 = x_ref[0, we:we + m_out, :]           # x[i+1, j]
    x11 = x_ref[0, we + 1:we + 1 + m_out, :]   # x[i+1, j+1]
    sh = sh_ref[...]

    def mm(xs, kh, kw):
        return jnp.dot(xs, w_ref[kh, kw], preferred_element_type=jnp.float32)

    def emit(u, v, p):
        o_ref[u, v, 0] = _apply_act(p + sh, act).astype(o_ref.dtype)

    emit(0, 0, mm(x00, 1, 1))
    emit(0, 1, mm(x00, 1, 2) + mm(x01, 1, 0))
    emit(1, 0, mm(x00, 2, 1) + mm(x10, 0, 1))
    emit(1, 1, mm(x00, 2, 2) + mm(x01, 2, 0) + mm(x10, 0, 2) + mm(x11, 0, 0))


def conv_transpose2d_s2(x, wk, shift, act, out_dtype):
    """x: (N, H, W, Cp) NHWC, channel-padded. Returns (N, 2H, 2W, Cop)."""
    n, h, wdim, cp = x.shape
    cop = wk.shape[-1]
    we = wdim + 1                     # row pitch (includes right halo)
    m_out = h * we                    # flattened rows per output phase
    lp = _round_up((h + 1) * we + 1, 8)

    xe = jnp.pad(x, ((0, 0), (0, 1), (0, 1), (0, 0)))        # bottom/right halo
    xe = xe.reshape(n, (h + 1) * we, cp)
    xe = jnp.pad(xe, ((0, 0), (0, lp - (h + 1) * we), (0, 0))).astype(jnp.bfloat16)

    kernel = functools.partial(_convT_s2_kernel, m_out=m_out, we=we, act=act)
    out = pl.pallas_call(
        kernel,
        out_shape=jax.ShapeDtypeStruct((2, 2, n, m_out, cop), out_dtype),
        grid=(n,),
        in_specs=[
            pl.BlockSpec((1, lp, cp), lambda i: (i, 0, 0)),
            pl.BlockSpec((3, 3, cp, cop), lambda i: (0, 0, 0, 0)),
            pl.BlockSpec((1, cop), lambda i: (0, 0)),
        ],
        out_specs=pl.BlockSpec((2, 2, 1, m_out, cop), lambda i: (0, 0, i, 0, 0)),
        compiler_params=pltpu.CompilerParams(
            dimension_semantics=("parallel",)),
    )(xe, wk, shift)
    # drop junk column, interleave the 4 phases -> (n, 2h, 2w, cop)
    out = out.reshape(2, 2, n, h, we, cop)[:, :, :, :, :wdim, :]
    out = jnp.transpose(out, (2, 3, 0, 4, 1, 5)).reshape(n, 2 * h, 2 * wdim, cop)
    return out


# ---------------------------------------------------------------------------
# Parameters: synthetic init (PyTorch layout) + offline BN/bias folding
# ---------------------------------------------------------------------------
def init_params(key, hidden_dims):
    params = {"encoder": [], "decoder": []}
    in_c = 1
    for h_dim in hidden_dims:
        key, k1, k2, k3, k4, k5, k6 = jax.random.split(key, 7)
        params["encoder"].append(dict(
            w=0.05 * jax.random.normal(k1, (h_dim, in_c, 3, 3), jnp.float32),
            b=0.05 * jax.random.normal(k2, (h_dim,), jnp.float32),
            gamma=1.0 + 0.1 * jax.random.normal(k3, (h_dim,), jnp.float32),
            beta=0.1 * jax.random.normal(k4, (h_dim,), jnp.float32),
            mean=0.1 * jax.random.normal(k5, (h_dim,), jnp.float32),
            var=1.0 + 0.1 * jnp.abs(jax.random.normal(k6, (h_dim,), jnp.float32)),
        ))
        in_c = h_dim

    rev = list(reversed(hidden_dims))          # matches the in-place .reverse()
    for i in range(1, len(rev)):
        c_in, c_out = rev[i - 1], rev[i]
        key, k1, k2, k3, k4, k5, k6 = jax.random.split(key, 7)
        params["decoder"].append(dict(
            w=0.05 * jax.random.normal(k1, (c_in, c_out, 3, 3), jnp.float32),
            b=0.05 * jax.random.normal(k2, (c_out,), jnp.float32),
            gamma=1.0 + 0.1 * jax.random.normal(k3, (c_out,), jnp.float32),
            beta=0.1 * jax.random.normal(k4, (c_out,), jnp.float32),
            mean=0.1 * jax.random.normal(k5, (c_out,), jnp.float32),
            var=1.0 + 0.1 * jnp.abs(jax.random.normal(k6, (c_out,), jnp.float32)),
        ))
    # final: ConvTranspose2d(rev[-1] -> 1) + Tanh (no BN)
    key, k1, k2 = jax.random.split(key, 3)
    params["decoder"].append(dict(
        w=0.05 * jax.random.normal(k1, (rev[-1], 1, 3, 3), jnp.float32),
        b=0.05 * jax.random.normal(k2, (1,), jnp.float32)))
    return params


def prepare_params(params):
    """Fold bias + inference-mode BN into the weights; pad channels to 128; bf16."""
    kp = {"encoder": [], "decoder": []}
    cin_pad = _round_up(1, LANE)

    for p in params["encoder"]:
        w, b = p["w"], p["b"]                              # (co, ci, 3, 3)
        scale = p["gamma"] / jnp.sqrt(p["var"] + BN_EPS)
        shift = p["beta"] - p["mean"] * scale + b * scale
        co, ci = w.shape[0], w.shape[1]
        cop = _round_up(co, LANE)
        wk = jnp.transpose(w, (2, 3, 1, 0)).reshape(9, ci, co) * scale[None, None, :]
        wk = jnp.pad(wk, ((0, 0), (0, cin_pad - ci), (0, cop - co)))
        kp["encoder"].append(dict(
            w=wk.astype(jnp.bfloat16),
            shift=jnp.pad(shift, (0, cop - co)).reshape(1, cop).astype(jnp.float32)))
        cin_pad = cop

    for p in params["decoder"]:
        w, b = p["w"], p["b"]                              # (ci, co, 3, 3)
        ci, co = w.shape[0], w.shape[1]
        if "gamma" in p:
            scale = p["gamma"] / jnp.sqrt(p["var"] + BN_EPS)
            shift = p["beta"] - p["mean"] * scale + b * scale
        else:                                              # last layer: no BN
            scale = jnp.ones((co,), jnp.float32)
            shift = b
        cop = _round_up(co, LANE)
        wk = jnp.transpose(w, (2, 3, 0, 1)) * scale[None, None, None, :]  # (3,3,ci,co)
        wk = jnp.pad(wk, ((0, 0), (0, 0), (0, cin_pad - ci), (0, cop - co)))
        kp["decoder"].append(dict(
            w=wk.astype(jnp.bfloat16),
            shift=jnp.pad(shift, (0, cop - co)).reshape(1, cop).astype(jnp.float32)))
        cin_pad = cop
    return kp


# ---------------------------------------------------------------------------
# Model forward
# ---------------------------------------------------------------------------
def music_genre_forward(x_nchw, kparams):
    # NCHW (PyTorch) -> NHWC, pad channels to the 128-lane width, bf16
    x = jnp.transpose(x_nchw, (0, 2, 3, 1)).astype(jnp.float32)
    c = x.shape[-1]
    x = jnp.pad(x, ((0, 0), (0, 0), (0, 0), (0, _round_up(c, LANE) - c)))
    x = x.astype(jnp.bfloat16)

    for p in kparams["encoder"]:
        x = conv2d_s2(x, p["w"], p["shift"], "leaky_relu", jnp.bfloat16)
    for p in kparams["decoder"][:-1]:
        x = conv_transpose2d_s2(x, p["w"], p["shift"], "leaky_relu", jnp.bfloat16)
    p = kparams["decoder"][-1]
    x = conv_transpose2d_s2(x, p["w"], p["shift"], "tanh", jnp.float32)

    x = x[..., :1]                                 # strip channel padding (C_out = 1)
    return jnp.transpose(x, (0, 3, 1, 2))          # back to NCHW


if __name__ == "__main__":
    key = jax.random.PRNGKey(0)
    k_param, k_x = jax.random.split(key)

    # Small shapes consistent with the module: batch=2, 1 input channel,
    # 16x16 "mel spectrogram" patch, hidden_dims scaled down to [8, 16, 32].
    hidden_dims = [8, 16, 32]
    x = jax.random.normal(k_x, (2, 1, 16, 16), jnp.float32)

    params = init_params(k_param, hidden_dims)
    kparams = prepare_params(params)

    fwd = jax.jit(music_genre_forward)
    out = jax.block_until_ready(fwd(x, kparams))

    assert out.shape == (2, 1, 16, 16), out.shape
    assert bool(jnp.all(jnp.isfinite(out)))
    assert bool(jnp.all(jnp.abs(out) <= 1.0))      # tanh output range
    print("KERNEL_OK")
</pallas_src>

<mosaic_0001>
module attributes {stable_mosaic.version = 11 : i64} {
  func.func @_conv_s2_kernel(%arg0: i32, %arg1: memref<4x1x88x128xbf16, #tpu.memory_space<vmem>>, %arg2: memref<9x128x128xbf16, #tpu.memory_space<vmem>>, %arg3: memref<1x128xf32, #tpu.memory_space<vmem>>, %arg4: memref<1x72x128xbf16, #tpu.memory_space<vmem>>) attributes {dimension_semantics = [#tpu.dimension_semantics<parallel>], iteration_bounds = array<i64: 2>, scalar_prefetch = 0 : i64, scratch_operands = 0 : i64, tpu.core_type = #tpu.core_type<tc>, window_params = [{transform_indices = @transform_0, window_bounds = array<i64: 4, 1, 88, 128>}, {pipeline_mode = #tpu.pipeline_mode<synchronous>, transform_indices = @transform_1, window_bounds = array<i64: 9, 128, 128>}, {pipeline_mode = #tpu.pipeline_mode<synchronous>, transform_indices = @transform_2, window_bounds = array<i64: 1, 128>}, {transform_indices = @transform_3, window_bounds = array<i64: 1, 72, 128>}]} {
    %cst = arith.constant 0.000000e+00 : f32
    %0 = vector.broadcast %cst : f32 to vector<72x128xf32>
    %c0 = arith.constant 0 : index
    %c0_0 = arith.constant 0 : index
    %c0_1 = arith.constant 0 : index
    %c0_2 = arith.constant 0 : index
    %1 = vector.load %arg1[%c0, %c0_0, %c0_1, %c0_2] : memref<4x1x88x128xbf16, #tpu.memory_space<vmem>>, vector<1x1x72x128xbf16>
    %2 = vector.shape_cast %1 : vector<1x1x72x128xbf16> to vector<72x128xbf16>
    %c0_3 = arith.constant 0 : index
    %c0_4 = arith.constant 0 : index
    %c0_5 = arith.constant 0 : index
    %3 = vector.load %arg2[%c0_3, %c0_4, %c0_5] : memref<9x128x128xbf16, #tpu.memory_space<vmem>>, vector<1x128x128xbf16>
    %4 = vector.shape_cast %3 : vector<1x128x128xbf16> to vector<128x128xbf16>
    %cst_6 = arith.constant dense<0.000000e+00> : vector<72x128xf32>
    %5 = tpu.matmul %2, %4, %cst_6 {dimension_numbers = #tpu.dot_dimension_numbers<[1], [0], [0], [1], [0, 0, 1, 1], [], []>} : vector<72x128xbf16>, vector<128x128xbf16>, vector<72x128xf32> -> vector<72x128xf32>
    %6 = arith.addf %0, %5 : vector<72x128xf32>
    %c1 = arith.constant 1 : index
    %c0_7 = arith.constant 0 : index
    %c0_8 = arith.constant 0 : index
    %c0_9 = arith.constant 0 : index
    %7 = vector.load %arg1[%c1, %c0_7, %c0_8, %c0_9] : memref<4x1x88x128xbf16, #tpu.memory_space<vmem>>, vector<1x1x72x128xbf16>
    %8 = vector.shape_cast %7 : vector<1x1x72x128xbf16> to vector<72x128xbf16>
    %c1_10 = arith.constant 1 : index
    %c0_11 = arith.constant 0 : index
    %c0_12 = arith.constant 0 : index
    %9 = vector.load %arg2[%c1_10, %c0_11, %c0_12] : memref<9x128x128xbf16, #tpu.memory_space<vmem>>, vector<1x128x128xbf16>
    %10 = vector.shape_cast %9 : vector<1x128x128xbf16> to vector<128x128xbf16>
    %cst_13 = arith.constant dense<0.000000e+00> : vector<72x128xf32>
    %11 = tpu.matmul %8, %10, %cst_13 {dimension_numbers = #tpu.dot_dimension_numbers<[1], [0], [0], [1], [0, 0, 1, 1], [], []>} : vector<72x128xbf16>, vector<128x128xbf16>, vector<72x128xf32> -> vector<72x128xf32>
    %12 = arith.addf %6, %11 : vector<72x128xf32>
    %c0_14 = arith.constant 0 : index
    %c0_15 = arith.constant 0 : index
    %c1_16 = arith.constant 1 : index
    %c0_17 = arith.constant 0 : index
    %13 = vector.load %arg1[%c0_14, %c0_15, %c1_16, %c0_17] : memref<4x1x88x128xbf16, #tpu.memory_space<vmem>>, vector<1x1x72x128xbf16>
    %14 = vector.shape_cast %13 : vector<1x1x72x128xbf16> to vector<72x128xbf16>
    %c2 = arith.constant 2 : index
    %c0_18 = arith.constant 0 : index
    %c0_19 = arith.constant 0 : index
    %15 = vector.load %arg2[%c2, %c0_18, %c0_19] : memref<9x128x128xbf16, #tpu.memory_space<vmem>>, vector<1x128x128xbf16>
    %16 = vector.shape_cast %15 : vector<1x128x128xbf16> to vector<128x128xbf16>
    %cst_20 = arith.constant dense<0.000000e+00> : vector<72x128xf32>
    %17 = tpu.matmul %14, %16, %cst_20 {dimension_numbers = #tpu.dot_dimension_numbers<[1], [0], [0], [1], [0, 0, 1, 1], [], []>} : vector<72x128xbf16>, vector<128x128xbf16>, vector<72x128xf32> -> vector<72x128xf32>
    %18 = arith.addf %12, %17 : vector<72x128xf32>
    %c2_21 = arith.constant 2 : index
    %c0_22 = arith.constant 0 : index
    %c0_23 = arith.constant 0 : index
    %c0_24 = arith.constant 0 : index
    %19 = vector.load %arg1[%c2_21, %c0_22, %c0_23, %c0_24] : memref<4x1x88x128xbf16, #tpu.memory_space<vmem>>, vector<1x1x72x128xbf16>
    %20 = vector.shape_cast %19 : vector<1x1x72x128xbf16> to vector<72x128xbf16>
    %c3 = arith.constant 3 : index
    %c0_25 = arith.constant 0 : index
    %c0_26 = arith.constant 0 : index
    %21 = vector.load %arg2[%c3, %c0_25, %c0_26] : memref<9x128x128xbf16, #tpu.memory_space<vmem>>, vector<1x128x128xbf16>
    %22 = vector.shape_cast %21 : vector<1x128x128xbf16> to vector<128x128xbf16>
    %cst_27 = arith.constant dense<0.000000e+00> : vector<72x128xf32>
    %23 = tpu.matmul %20, %22, %cst_27 {dimension_numbers = #tpu.dot_dimension_numbers<[1], [0], [0], [1], [0, 0, 1, 1], [], []>} : vector<72x128xbf16>, vector<128x128xbf16>, vector<72x128xf32> -> vector<72x128xf32>
    %24 = arith.addf %18, %23 : vector<72x128xf32>
    %c3_28 = arith.constant 3 : index
    %c0_29 = arith.constant 0 : index
    %c0_30 = arith.constant 0 : index
    %c0_31 = arith.constant 0 : index
    %25 = vector.load %arg1[%c3_28, %c0_29, %c0_30, %c0_31] : memref<4x1x88x128xbf16, #tpu.memory_space<vmem>>, vector<1x1x72x128xbf16>
    %26 = vector.shape_cast %25 : vector<1x1x72x128xbf16> to vector<72x128xbf16>
    %c4 = arith.constant 4 : index
    %c0_32 = arith.constant 0 : index
    %c0_33 = arith.constant 0 : index
    %27 = vector.load %arg2[%c4, %c0_32, %c0_33] : memref<9x128x128xbf16, #tpu.memory_space<vmem>>, vector<1x128x128xbf16>
    %28 = vector.shape_cast %27 : vector<1x128x128xbf16> to vector<128x128xbf16>
    %cst_34 = arith.constant dense<0.000000e+00> : vector<72x128xf32>
    %29 = tpu.matmul %26, %28, %cst_34 {dimension_numbers = #tpu.dot_dimension_numbers<[1], [0], [0], [1], [0, 0, 1, 1], [], []>} : vector<72x128xbf16>, vector<128x128xbf16>, vector<72x128xf32> -> vector<72x128xf32>
    %30 = arith.addf %24, %29 : vector<72x128xf32>
    %c2_35 = arith.constant 2 : index
    %c0_36 = arith.constant 0 : index
    %c1_37 = arith.constant 1 : index
    %c0_38 = arith.constant 0 : index
    %31 = vector.load %arg1[%c2_35, %c0_36, %c1_37, %c0_38] : memref<4x1x88x128xbf16, #tpu.memory_space<vmem>>, vector<1x1x72x128xbf16>
    %32 = vector.shape_cast %31 : vector<1x1x72x128xbf16> to vector<72x128xbf16>
    %c5 = arith.constant 5 : index
    %c0_39 = arith.constant 0 : index
    %c0_40 = arith.constant 0 : index
    %33 = vector.load %arg2[%c5, %c0_39, %c0_40] : memref<9x128x128xbf16, #tpu.memory_space<vmem>>, vector<1x128x128xbf16>
    %34 = vector.shape_cast %33 : vector<1x128x128xbf16> to vector<128x128xbf16>
    %cst_41 = arith.constant dense<0.000000e+00> : vector<72x128xf32>
    %35 = tpu.matmul %32, %34, %cst_41 {dimension_numbers = #tpu.dot_dimension_numbers<[1], [0], [0], [1], [0, 0, 1, 1], [], []>} : vector<72x128xbf16>, vector<128x128xbf16>, vector<72x128xf32> -> vector<72x128xf32>
    %36 = arith.addf %30, %35 : vector<72x128xf32>
    %c0_42 = arith.constant 0 : index
    %c0_43 = arith.constant 0 : index
    %c9 = arith.constant 9 : index
    %c0_44 = arith.constant 0 : index
    %37 = vector.load %arg1[%c0_42, %c0_43, %c9, %c0_44] : memref<4x1x88x128xbf16, #tpu.memory_space<vmem>>, vector<1x1x72x128xbf16>
    %38 = vector.shape_cast %37 : vector<1x1x72x128xbf16> to vector<72x128xbf16>
    %c6 = arith.constant 6 : index
    %c0_45 = arith.constant 0 : index
    %c0_46 = arith.constant 0 : index
    %39 = vector.load %arg2[%c6, %c0_45, %c0_46] : memref<9x128x128xbf16, #tpu.memory_space<vmem>>, vector<1x128x128xbf16>
    %40 = vector.shape_cast %39 : vector<1x128x128xbf16> to vector<128x128xbf16>
    %cst_47 = arith.constant dense<0.000000e+00> : vector<72x128xf32>
    %41 = tpu.matmul %38, %40, %cst_47 {dimension_numbers = #tpu.dot_dimension_numbers<[1], [0], [0], [1], [0, 0, 1, 1], [], []>} : vector<72x128xbf16>, vector<128x128xbf16>, vector<72x128xf32> -> vector<72x128xf32>
    %42 = arith.addf %36, %41 : vector<72x128xf32>
    %c1_48 = arith.constant 1 : index
    %c0_49 = arith.constant 0 : index
    %c9_50 = arith.constant 9 : index
    %c0_51 = arith.constant 0 : index
    %43 = vector.load %arg1[%c1_48, %c0_49, %c9_50, %c0_51] : memref<4x1x88x128xbf16, #tpu.memory_space<vmem>>, vector<1x1x72x128xbf16>
    %44 = vector.shape_cast %43 : vector<1x1x72x128xbf16> to vector<72x128xbf16>
    %c7 = arith.constant 7 : index
    %c0_52 = arith.constant 0 : index
    %c0_53 = arith.constant 0 : index
    %45 = vector.load %arg2[%c7, %c0_52, %c0_53] : memref<9x128x128xbf16, #tpu.memory_space<vmem>>, vector<1x128x128xbf16>
    %46 = vector.shape_cast %45 : vector<1x128x128xbf16> to vector<128x128xbf16>
    %cst_54 = arith.constant dense<0.000000e+00> : vector<72x128xf32>
    %47 = tpu.matmul %44, %46, %cst_54 {dimension_numbers = #tpu.dot_dimension_numbers<[1], [0], [0], [1], [0, 0, 1, 1], [], []>} : vector<72x128xbf16>, vector<128x128xbf16>, vector<72x128xf32> -> vector<72x128xf32>
    %48 = arith.addf %42, %47 : vector<72x128xf32>
    %c0_55 = arith.constant 0 : index
    %c0_56 = arith.constant 0 : index
    %c10 = arith.constant 10 : index
    %c0_57 = arith.constant 0 : index
    %49 = vector.load %arg1[%c0_55, %c0_56, %c10, %c0_57] : memref<4x1x88x128xbf16, #tpu.memory_space<vmem>>, vector<1x1x72x128xbf16>
    %50 = vector.shape_cast %49 : vector<1x1x72x128xbf16> to vector<72x128xbf16>
    %c8 = arith.constant 8 : index
    %c0_58 = arith.constant 0 : index
    %c0_59 = arith.constant 0 : index
    %51 = vector.load %arg2[%c8, %c0_58, %c0_59] : memref<9x128x128xbf16, #tpu.memory_space<vmem>>, vector<1x128x128xbf16>
    %52 = vector.shape_cast %51 : vector<1x128x128xbf16> to vector<128x128xbf16>
    %cst_60 = arith.constant dense<0.000000e+00> : vector<72x128xf32>
    %53 = tpu.matmul %50, %52, %cst_60 {dimension_numbers = #tpu.dot_dimension_numbers<[1], [0], [0], [1], [0, 0, 1, 1], [], []>} : vector<72x128xbf16>, vector<128x128xbf16>, vector<72x128xf32> -> vector<72x128xf32>
    %54 = arith.addf %48, %53 : vector<72x128xf32>
    %c0_61 = arith.constant 0 : index
    %c0_62 = arith.constant 0 : index
    %55 = vector.load %arg3[%c0_61, %c0_62] : memref<1x128xf32, #tpu.memory_space<vmem>>, vector<1x128xf32>
    %56 = vector.broadcast %55 : vector<1x128xf32> to vector<72x128xf32>
    %57 = arith.addf %54, %56 : vector<72x128xf32>
    %cst_63 = arith.constant 0.000000e+00 : f32
    %58 = vector.broadcast %cst_63 : f32 to vector<72x128xf32>
    %59 = arith.cmpf oge, %57, %58 : vector<72x128xf32>
    %cst_64 = arith.constant 0.00999999977 : f32
    %60 = vector.broadcast %cst_64 : f32 to vector<72x128xf32>
    %61 = arith.mulf %60, %57 : vector<72x128xf32>
    %62 = arith.select %59, %57, %61 : vector<72x128xi1>, vector<72x128xf32>
    %63 = arith.truncf %62 : vector<72x128xf32> to vector<72x128xbf16>
    %c0_65 = arith.constant 0 : index
    %c0_66 = arith.constant 0 : index
    %c0_67 = arith.constant 0 : index
    %64 = vector.load %arg4[%c0_65, %c0_66, %c0_67] : memref<1x72x128xbf16, #tpu.memory_space<vmem>>, vector<1x72x128xbf16>
    %65 = vector.shape_cast %64 : vector<1x72x128xbf16> to vector<72x128xbf16>
    %66 = vector.shape_cast %63 : vector<72x128xbf16> to vector<1x72x128xbf16>
    tpu.vector_store %arg4[%c0_65, %c0_66, %c0_67], %66 {strides = array<i32>} : memref<1x72x128xbf16, #tpu.memory_space<vmem>>, vector<1x72x128xbf16>,
    return
  }
  func.func @transform_0(%arg0: i32) -> (i32, i32, i32, i32) {
    %c0_i32 = arith.constant 0 : i32
    %c0_i32_0 = arith.constant 0 : i32
    %c0_i32_1 = arith.constant 0 : i32
    %c0_i32_2 = arith.constant 0 : i32
    return %c0_i32, %arg0, %c0_i32_0, %c0_i32_1 : i32, i32, i32, i32
  }
  func.func @transform_1(%arg0: i32) -> (i32, i32, i32) {
    %c0_i32 = arith.constant 0 : i32
    %c0_i32_0 = arith.constant 0 : i32
    %c0_i32_1 = arith.constant 0 : i32
    %c0_i32_2 = arith.constant 0 : i32
    return %c0_i32, %c0_i32_0, %c0_i32_1 : i32, i32, i32
  }
  func.func @transform_2(%arg0: i32) -> (i32, i32) {
    %c0_i32 = arith.constant 0 : i32
    %c0_i32_0 = arith.constant 0 : i32
    %c0_i32_1 = arith.constant 0 : i32
    return %c0_i32, %c0_i32_0 : i32, i32
  }
  func.func @transform_3(%arg0: i32) -> (i32, i32, i32) {
    %c0_i32 = arith.constant 0 : i32
    %c0_i32_0 = arith.constant 0 : i32
    %c0_i32_1 = arith.constant 0 : i32
    return %arg0, %c0_i32, %c0_i32_0 : i32, i32, i32
  }
}

module attributes {stable_mosaic.version = 11 : i64} {
  func.func @_conv_s2_kernel(%arg0: i32, %arg1: memref<4x1x32x128xbf16, #tpu.memory_space<vmem>>, %arg2: memref<9x128x128xbf16, #tpu.memory_space<vmem>>, %arg3: memref<1x128xf32, #tpu.memory_space<vmem>>, %arg4: memref<1x20x128xbf16, #tpu.memory_space<vmem>>) attributes {dimension_semantics = [#tpu.dimension_semantics<parallel>], iteration_bounds = array<i64: 2>, scalar_prefetch = 0 : i64, scratch_operands = 0 : i64, tpu.core_type = #tpu.core_type<tc>, window_params = [{transform_indices = @transform_0, window_bounds = array<i64: 4, 1, 32, 128>}, {pipeline_mode = #tpu.pipeline_mode<synchronous>, transform_indices = @transform_1, window_bounds = array<i64: 9, 128, 128>}, {pipeline_mode = #tpu.pipeline_mode<synchronous>, transform_indices = @transform_2, window_bounds = array<i64: 1, 128>}, {transform_indices = @transform_3, window_bounds = array<i64: 1, 20, 128>}]} {
    %cst = arith.constant 0.000000e+00 : f32
    %0 = vector.broadcast %cst : f32 to vector<20x128xf32>
    %c0 = arith.constant 0 : index
    %c0_0 = arith.constant 0 : index
    %c0_1 = arith.constant 0 : index
    %c0_2 = arith.constant 0 : index
    %1 = vector.load %arg1[%c0, %c0_0, %c0_1, %c0_2] : memref<4x1x32x128xbf16, #tpu.memory_space<vmem>>, vector<1x1x20x128xbf16>
    %2 = vector.shape_cast %1 : vector<1x1x20x128xbf16> to vector<20x128xbf16>
    %c0_3 = arith.constant 0 : index
    %c0_4 = arith.constant 0 : index
    %c0_5 = arith.constant 0 : index
    %3 = vector.load %arg2[%c0_3, %c0_4, %c0_5] : memref<9x128x128xbf16, #tpu.memory_space<vmem>>, vector<1x128x128xbf16>
    %4 = vector.shape_cast %3 : vector<1x128x128xbf16> to vector<128x128xbf16>
    %cst_6 = arith.constant dense<0.000000e+00> : vector<20x128xf32>
    %5 = tpu.matmul %2, %4, %cst_6 {dimension_numbers = #tpu.dot_dimension_numbers<[1], [0], [0], [1], [0, 0, 1, 1], [], []>} : vector<20x128xbf16>, vector<128x128xbf16>, vector<20x128xf32> -> vector<20x128xf32>
    %6 = arith.addf %0, %5 : vector<20x128xf32>
    %c1 = arith.constant 1 : index
    %c0_7 = arith.constant 0 : index
    %c0_8 = arith.constant 0 : index
    %c0_9 = arith.constant 0 : index
    %7 = vector.load %arg1[%c1, %c0_7, %c0_8, %c0_9] : memref<4x1x32x128xbf16, #tpu.memory_space<vmem>>, vector<1x1x20x128xbf16>
    %8 = vector.shape_cast %7 : vector<1x1x20x128xbf16> to vector<20x128xbf16>
    %c1_10 = arith.constant 1 : index
    %c0_11 = arith.constant 0 : index
    %c0_12 = arith.constant 0 : index
    %9 = vector.load %arg2[%c1_10, %c0_11, %c0_12] : memref<9x128x128xbf16, #tpu.memory_space<vmem>>, vector<1x128x128xbf16>
    %10 = vector.shape_cast %9 : vector<1x128x128xbf16> to vector<128x128xbf16>
    %cst_13 = arith.constant dense<0.000000e+00> : vector<20x128xf32>
    %11 = tpu.matmul %8, %10, %cst_13 {dimension_numbers = #tpu.dot_dimension_numbers<[1], [0], [0], [1], [0, 0, 1, 1], [], []>} : vector<20x128xbf16>, vector<128x128xbf16>, vector<20x128xf32> -> vector<20x128xf32>
    %12 = arith.addf %6, %11 : vector<20x128xf32>
    %c0_14 = arith.constant 0 : index
    %c0_15 = arith.constant 0 : index
    %c1_16 = arith.constant 1 : index
    %c0_17 = arith.constant 0 : index
    %13 = vector.load %arg1[%c0_14, %c0_15, %c1_16, %c0_17] : memref<4x1x32x128xbf16, #tpu.memory_space<vmem>>, vector<1x1x20x128xbf16>
    %14 = vector.shape_cast %13 : vector<1x1x20x128xbf16> to vector<20x128xbf16>
    %c2 = arith.constant 2 : index
    %c0_18 = arith.constant 0 : index
    %c0_19 = arith.constant 0 : index
    %15 = vector.load %arg2[%c2, %c0_18, %c0_19] : memref<9x128x128xbf16, #tpu.memory_space<vmem>>, vector<1x128x128xbf16>
    %16 = vector.shape_cast %15 : vector<1x128x128xbf16> to vector<128x128xbf16>
    %cst_20 = arith.constant dense<0.000000e+00> : vector<20x128xf32>
    %17 = tpu.matmul %14, %16, %cst_20 {dimension_numbers = #tpu.dot_dimension_numbers<[1], [0], [0], [1], [0, 0, 1, 1], [], []>} : vector<20x128xbf16>, vector<128x128xbf16>, vector<20x128xf32> -> vector<20x128xf32>
    %18 = arith.addf %12, %17 : vector<20x128xf32>
    %c2_21 = arith.constant 2 : index
    %c0_22 = arith.constant 0 : index
    %c0_23 = arith.constant 0 : index
    %c0_24 = arith.constant 0 : index
    %19 = vector.load %arg1[%c2_21, %c0_22, %c0_23, %c0_24] : memref<4x1x32x128xbf16, #tpu.memory_space<vmem>>, vector<1x1x20x128xbf16>
    %20 = vector.shape_cast %19 : vector<1x1x20x128xbf16> to vector<20x128xbf16>
    %c3 = arith.constant 3 : index
    %c0_25 = arith.constant 0 : index
    %c0_26 = arith.constant 0 : index
    %21 = vector.load %arg2[%c3, %c0_25, %c0_26] : memref<9x128x128xbf16, #tpu.memory_space<vmem>>, vector<1x128x128xbf16>
    %22 = vector.shape_cast %21 : vector<1x128x128xbf16> to vector<128x128xbf16>
    %cst_27 = arith.constant dense<0.000000e+00> : vector<20x128xf32>
    %23 = tpu.matmul %20, %22, %cst_27 {dimension_numbers = #tpu.dot_dimension_numbers<[1], [0], [0], [1], [0, 0, 1, 1], [], []>} : vector<20x128xbf16>, vector<128x128xbf16>, vector<20x128xf32> -> vector<20x128xf32>
    %24 = arith.addf %18, %23 : vector<20x128xf32>
    %c3_28 = arith.constant 3 : index
    %c0_29 = arith.constant 0 : index
    %c0_30 = arith.constant 0 : index
    %c0_31 = arith.constant 0 : index
    %25 = vector.load %arg1[%c3_28, %c0_29, %c0_30, %c0_31] : memref<4x1x32x128xbf16, #tpu.memory_space<vmem>>, vector<1x1x20x128xbf16>
    %26 = vector.shape_cast %25 : vector<1x1x20x128xbf16> to vector<20x128xbf16>
    %c4 = arith.constant 4 : index
    %c0_32 = arith.constant 0 : index
    %c0_33 = arith.constant 0 : index
    %27 = vector.load %arg2[%c4, %c0_32, %c0_33] : memref<9x128x128xbf16, #tpu.memory_space<vmem>>, vector<1x128x128xbf16>
    %28 = vector.shape_cast %27 : vector<1x128x128xbf16> to vector<128x128xbf16>
    %cst_34 = arith.constant dense<0.000000e+00> : vector<20x128xf32>
    %29 = tpu.matmul %26, %28, %cst_34 {dimension_numbers = #tpu.dot_dimension_numbers<[1], [0], [0], [1], [0, 0, 1, 1], [], []>} : vector<20x128xbf16>, vector<128x128xbf16>, vector<20x128xf32> -> vector<20x128xf32>
    %30 = arith.addf %24, %29 : vector<20x128xf32>
    %c2_35 = arith.constant 2 : index
    %c0_36 = arith.constant 0 : index
    %c1_37 = arith.constant 1 : index
    %c0_38 = arith.constant 0 : index
    %31 = vector.load %arg1[%c2_35, %c0_36, %c1_37, %c0_38] : memref<4x1x32x128xbf16, #tpu.memory_space<vmem>>, vector<1x1x20x128xbf16>
    %32 = vector.shape_cast %31 : vector<1x1x20x128xbf16> to vector<20x128xbf16>
    %c5 = arith.constant 5 : index
    %c0_39 = arith.constant 0 : index
    %c0_40 = arith.constant 0 : index
    %33 = vector.load %arg2[%c5, %c0_39, %c0_40] : memref<9x128x128xbf16, #tpu.memory_space<vmem>>, vector<1x128x128xbf16>
    %34 = vector.shape_cast %33 : vector<1x128x128xbf16> to vector<128x128xbf16>
    %cst_41 = arith.constant dense<0.000000e+00> : vector<20x128xf32>
    %35 = tpu.matmul %32, %34, %cst_41 {dimension_numbers = #tpu.dot_dimension_numbers<[1], [0], [0], [1], [0, 0, 1, 1], [], []>} : vector<20x128xbf16>, vector<128x128xbf16>, vector<20x128xf32> -> vector<20x128xf32>
    %36 = arith.addf %30, %35 : vector<20x128xf32>
    %c0_42 = arith.constant 0 : index
    %c0_43 = arith.constant 0 : index
    %c5_44 = arith.constant 5 : index
    %c0_45 = arith.constant 0 : index
    %37 = vector.load %arg1[%c0_42, %c0_43, %c5_44, %c0_45] : memref<4x1x32x128xbf16, #tpu.memory_space<vmem>>, vector<1x1x20x128xbf16>
    %38 = vector.shape_cast %37 : vector<1x1x20x128xbf16> to vector<20x128xbf16>
    %c6 = arith.constant 6 : index
    %c0_46 = arith.constant 0 : index
    %c0_47 = arith.constant 0 : index
    %39 = vector.load %arg2[%c6, %c0_46, %c0_47] : memref<9x128x128xbf16, #tpu.memory_space<vmem>>, vector<1x128x128xbf16>
    %40 = vector.shape_cast %39 : vector<1x128x128xbf16> to vector<128x128xbf16>
    %cst_48 = arith.constant dense<0.000000e+00> : vector<20x128xf32>
    %41 = tpu.matmul %38, %40, %cst_48 {dimension_numbers = #tpu.dot_dimension_numbers<[1], [0], [0], [1], [0, 0, 1, 1], [], []>} : vector<20x128xbf16>, vector<128x128xbf16>, vector<20x128xf32> -> vector<20x128xf32>
    %42 = arith.addf %36, %41 : vector<20x128xf32>
    %c1_49 = arith.constant 1 : index
    %c0_50 = arith.constant 0 : index
    %c5_51 = arith.constant 5 : index
    %c0_52 = arith.constant 0 : index
    %43 = vector.load %arg1[%c1_49, %c0_50, %c5_51, %c0_52] : memref<4x1x32x128xbf16, #tpu.memory_space<vmem>>, vector<1x1x20x128xbf16>
    %44 = vector.shape_cast %43 : vector<1x1x20x128xbf16> to vector<20x128xbf16>
    %c7 = arith.constant 7 : index
    %c0_53 = arith.constant 0 : index
    %c0_54 = arith.constant 0 : index
    %45 = vector.load %arg2[%c7, %c0_53, %c0_54] : memref<9x128x128xbf16, #tpu.memory_space<vmem>>, vector<1x128x128xbf16>
    %46 = vector.shape_cast %45 : vector<1x128x128xbf16> to vector<128x128xbf16>
    %cst_55 = arith.constant dense<0.000000e+00> : vector<20x128xf32>
    %47 = tpu.matmul %44, %46, %cst_55 {dimension_numbers = #tpu.dot_dimension_numbers<[1], [0], [0], [1], [0, 0, 1, 1], [], []>} : vector<20x128xbf16>, vector<128x128xbf16>, vector<20x128xf32> -> vector<20x128xf32>
    %48 = arith.addf %42, %47 : vector<20x128xf32>
    %c0_56 = arith.constant 0 : index
    %c0_57 = arith.constant 0 : index
    %c6_58 = arith.constant 6 : index
    %c0_59 = arith.constant 0 : index
    %49 = vector.load %arg1[%c0_56, %c0_57, %c6_58, %c0_59] : memref<4x1x32x128xbf16, #tpu.memory_space<vmem>>, vector<1x1x20x128xbf16>
    %50 = vector.shape_cast %49 : vector<1x1x20x128xbf16> to vector<20x128xbf16>
    %c8 = arith.constant 8 : index
    %c0_60 = arith.constant 0 : index
    %c0_61 = arith.constant 0 : index
    %51 = vector.load %arg2[%c8, %c0_60, %c0_61] : memref<9x128x128xbf16, #tpu.memory_space<vmem>>, vector<1x128x128xbf16>
    %52 = vector.shape_cast %51 : vector<1x128x128xbf16> to vector<128x128xbf16>
    %cst_62 = arith.constant dense<0.000000e+00> : vector<20x128xf32>
    %53 = tpu.matmul %50, %52, %cst_62 {dimension_numbers = #tpu.dot_dimension_numbers<[1], [0], [0], [1], [0, 0, 1, 1], [], []>} : vector<20x128xbf16>, vector<128x128xbf16>, vector<20x128xf32> -> vector<20x128xf32>
    %54 = arith.addf %48, %53 : vector<20x128xf32>
    %c0_63 = arith.constant 0 : index
    %c0_64 = arith.constant 0 : index
    %55 = vector.load %arg3[%c0_63, %c0_64] : memref<1x128xf32, #tpu.memory_space<vmem>>, vector<1x128xf32>
    %56 = vector.broadcast %55 : vector<1x128xf32> to vector<20x128xf32>
    %57 = arith.addf %54, %56 : vector<20x128xf32>
    %cst_65 = arith.constant 0.000000e+00 : f32
    %58 = vector.broadcast %cst_65 : f32 to vector<20x128xf32>
    %59 = arith.cmpf oge, %57, %58 : vector<20x128xf32>
    %cst_66 = arith.constant 0.00999999977 : f32
    %60 = vector.broadcast %cst_66 : f32 to vector<20x128xf32>
    %61 = arith.mulf %60, %57 : vector<20x128xf32>
    %62 = arith.select %59, %57, %61 : vector<20x128xi1>, vector<20x128xf32>
    %63 = arith.truncf %62 : vector<20x128xf32> to vector<20x128xbf16>
    %c0_67 = arith.constant 0 : index
    %c0_68 = arith.constant 0 : index
    %c0_69 = arith.constant 0 : index
    %64 = vector.load %arg4[%c0_67, %c0_68, %c0_69] : memref<1x20x128xbf16, #tpu.memory_space<vmem>>, vector<1x20x128xbf16>
    %65 = vector.shape_cast %64 : vector<1x20x128xbf16> to vector<20x128xbf16>
    %66 = vector.shape_cast %63 : vector<20x128xbf16> to vector<1x20x128xbf16>
    tpu.vector_store %arg4[%c0_67, %c0_68, %c0_69], %66 {strides = array<i32>} : memref<1x20x128xbf16, #tpu.memory_space<vmem>>, vector<1x20x128xbf16>,
    return
  }
  func.func @transform_0(%arg0: i32) -> (i32, i32, i32, i32) {
    %c0_i32 = arith.constant 0 : i32
    %c0_i32_0 = arith.constant 0 : i32
    %c0_i32_1 = arith.constant 0 : i32
    %c0_i32_2 = arith.constant 0 : i32
    return %c0_i32, %arg0, %c0_i32_0, %c0_i32_1 : i32, i32, i32, i32
  }
  func.func @transform_1(%arg0: i32) -> (i32, i32, i32) {
    %c0_i32 = arith.constant 0 : i32
    %c0_i32_0 = arith.constant 0 : i32
    %c0_i32_1 = arith.constant 0 : i32
    %c0_i32_2 = arith.constant 0 : i32
    return %c0_i32, %c0_i32_0, %c0_i32_1 : i32, i32, i32
  }
  func.func @transform_2(%arg0: i32) -> (i32, i32) {
    %c0_i32 = arith.constant 0 : i32
    %c0_i32_0 = arith.constant 0 : i32
    %c0_i32_1 = arith.constant 0 : i32
    return %c0_i32, %c0_i32_0 : i32, i32
  }
  func.func @transform_3(%arg0: i32) -> (i32, i32, i32) {
    %c0_i32 = arith.constant 0 : i32
    %c0_i32_0 = arith.constant 0 : i32
    %c0_i32_1 = arith.constant 0 : i32
    return %arg0, %c0_i32, %c0_i32_0 : i32, i32, i32
  }
}

module attributes {stable_mosaic.version = 11 : i64} {
  func.func @_conv_s2_kernel(%arg0: i32, %arg1: memref<4x1x16x128xbf16, #tpu.memory_space<vmem>>, %arg2: memref<9x128x128xbf16, #tpu.memory_space<vmem>>, %arg3: memref<1x128xf32, #tpu.memory_space<vmem>>, %arg4: memref<1x6x128xbf16, #tpu.memory_space<vmem>>) attributes {dimension_semantics = [#tpu.dimension_semantics<parallel>], iteration_bounds = array<i64: 2>, scalar_prefetch = 0 : i64, scratch_operands = 0 : i64, tpu.core_type = #tpu.core_type<tc>, window_params = [{transform_indices = @transform_0, window_bounds = array<i64: 4, 1, 16, 128>}, {pipeline_mode = #tpu.pipeline_mode<synchronous>, transform_indices = @transform_1, window_bounds = array<i64: 9, 128, 128>}, {pipeline_mode = #tpu.pipeline_mode<synchronous>, transform_indices = @transform_2, window_bounds = array<i64: 1, 128>}, {transform_indices = @transform_3, window_bounds = array<i64: 1, 6, 128>}]} {
    %cst = arith.constant 0.000000e+00 : f32
    %0 = vector.broadcast %cst : f32 to vector<6x128xf32>
    %c0 = arith.constant 0 : index
    %c0_0 = arith.constant 0 : index
    %c0_1 = arith.constant 0 : index
    %c0_2 = arith.constant 0 : index
    %1 = vector.load %arg1[%c0, %c0_0, %c0_1, %c0_2] : memref<4x1x16x128xbf16, #tpu.memory_space<vmem>>, vector<1x1x6x128xbf16>
    %2 = vector.shape_cast %1 : vector<1x1x6x128xbf16> to vector<6x128xbf16>
    %c0_3 = arith.constant 0 : index
    %c0_4 = arith.constant 0 : index
    %c0_5 = arith.constant 0 : index
    %3 = vector.load %arg2[%c0_3, %c0_4, %c0_5] : memref<9x128x128xbf16, #tpu.memory_space<vmem>>, vector<1x128x128xbf16>
    %4 = vector.shape_cast %3 : vector<1x128x128xbf16> to vector<128x128xbf16>
    %cst_6 = arith.constant dense<0.000000e+00> : vector<6x128xf32>
    %5 = tpu.matmul %2, %4, %cst_6 {dimension_numbers = #tpu.dot_dimension_numbers<[1], [0], [0], [1], [0, 0, 1, 1], [], []>} : vector<6x128xbf16>, vector<128x128xbf16>, vector<6x128xf32> -> vector<6x128xf32>
    %6 = arith.addf %0, %5 : vector<6x128xf32>
    %c1 = arith.constant 1 : index
    %c0_7 = arith.constant 0 : index
    %c0_8 = arith.constant 0 : index
    %c0_9 = arith.constant 0 : index
    %7 = vector.load %arg1[%c1, %c0_7, %c0_8, %c0_9] : memref<4x1x16x128xbf16, #tpu.memory_space<vmem>>, vector<1x1x6x128xbf16>
    %8 = vector.shape_cast %7 : vector<1x1x6x128xbf16> to vector<6x128xbf16>
    %c1_10 = arith.constant 1 : index
    %c0_11 = arith.constant 0 : index
    %c0_12 = arith.constant 0 : index
    %9 = vector.load %arg2[%c1_10, %c0_11, %c0_12] : memref<9x128x128xbf16, #tpu.memory_space<vmem>>, vector<1x128x128xbf16>
    %10 = vector.shape_cast %9 : vector<1x128x128xbf16> to vector<128x128xbf16>
    %cst_13 = arith.constant dense<0.000000e+00> : vector<6x128xf32>
    %11 = tpu.matmul %8, %10, %cst_13 {dimension_numbers = #tpu.dot_dimension_numbers<[1], [0], [0], [1], [0, 0, 1, 1], [], []>} : vector<6x128xbf16>, vector<128x128xbf16>, vector<6x128xf32> -> vector<6x128xf32>
    %12 = arith.addf %6, %11 : vector<6x128xf32>
    %c0_14 = arith.constant 0 : index
    %c0_15 = arith.constant 0 : index
    %c1_16 = arith.constant 1 : index
    %c0_17 = arith.constant 0 : index
    %13 = vector.load %arg1[%c0_14, %c0_15, %c1_16, %c0_17] : memref<4x1x16x128xbf16, #tpu.memory_space<vmem>>, vector<1x1x6x128xbf16>
    %14 = vector.shape_cast %13 : vector<1x1x6x128xbf16> to vector<6x128xbf16>
    %c2 = arith.constant 2 : index
    %c0_18 = arith.constant 0 : index
    %c0_19 = arith.constant 0 : index
    %15 = vector.load %arg2[%c2, %c0_18, %c0_19] : memref<9x128x128xbf16, #tpu.memory_space<vmem>>, vector<1x128x128xbf16>
    %16 = vector.shape_cast %15 : vector<1x128x128xbf16> to vector<128x128xbf16>
    %cst_20 = arith.constant dense<0.000000e+00> : vector<6x128xf32>
    %17 = tpu.matmul %14, %16, %cst_20 {dimension_numbers = #tpu.dot_dimension_numbers<[1], [0], [0], [1], [0, 0, 1, 1], [], []>} : vector<6x128xbf16>, vector<128x128xbf16>, vector<6x128xf32> -> vector<6x128xf32>
    %18 = arith.addf %12, %17 : vector<6x128xf32>
    %c2_21 = arith.constant 2 : index
    %c0_22 = arith.constant 0 : index
    %c0_23 = arith.constant 0 : index
    %c0_24 = arith.constant 0 : index
    %19 = vector.load %arg1[%c2_21, %c0_22, %c0_23, %c0_24] : memref<4x1x16x128xbf16, #tpu.memory_space<vmem>>, vector<1x1x6x128xbf16>
    %20 = vector.shape_cast %19 : vector<1x1x6x128xbf16> to vector<6x128xbf16>
    %c3 = arith.constant 3 : index
    %c0_25 = arith.constant 0 : index
    %c0_26 = arith.constant 0 : index
    %21 = vector.load %arg2[%c3, %c0_25, %c0_26] : memref<9x128x128xbf16, #tpu.memory_space<vmem>>, vector<1x128x128xbf16>
    %22 = vector.shape_cast %21 : vector<1x128x128xbf16> to vector<128x128xbf16>
    %cst_27 = arith.constant dense<0.000000e+00> : vector<6x128xf32>
    %23 = tpu.matmul %20, %22, %cst_27 {dimension_numbers = #tpu.dot_dimension_numbers<[1], [0], [0], [1], [0, 0, 1, 1], [], []>} : vector<6x128xbf16>, vector<128x128xbf16>, vector<6x128xf32> -> vector<6x128xf32>
    %24 = arith.addf %18, %23 : vector<6x128xf32>
    %c3_28 = arith.constant 3 : index
    %c0_29 = arith.constant 0 : index
    %c0_30 = arith.constant 0 : index
    %c0_31 = arith.constant 0 : index
    %25 = vector.load %arg1[%c3_28, %c0_29, %c0_30, %c0_31] : memref<4x1x16x128xbf16, #tpu.memory_space<vmem>>, vector<1x1x6x128xbf16>
    %26 = vector.shape_cast %25 : vector<1x1x6x128xbf16> to vector<6x128xbf16>
    %c4 = arith.constant 4 : index
    %c0_32 = arith.constant 0 : index
    %c0_33 = arith.constant 0 : index
    %27 = vector.load %arg2[%c4, %c0_32, %c0_33] : memref<9x128x128xbf16, #tpu.memory_space<vmem>>, vector<1x128x128xbf16>
    %28 = vector.shape_cast %27 : vector<1x128x128xbf16> to vector<128x128xbf16>
    %cst_34 = arith.constant dense<0.000000e+00> : vector<6x128xf32>
    %29 = tpu.matmul %26, %28, %cst_34 {dimension_numbers = #tpu.dot_dimension_numbers<[1], [0], [0], [1], [0, 0, 1, 1], [], []>} : vector<6x128xbf16>, vector<128x128xbf16>, vector<6x128xf32> -> vector<6x128xf32>
    %30 = arith.addf %24, %29 : vector<6x128xf32>
    %c2_35 = arith.constant 2 : index
    %c0_36 = arith.constant 0 : index
    %c1_37 = arith.constant 1 : index
    %c0_38 = arith.constant 0 : index
    %31 = vector.load %arg1[%c2_35, %c0_36, %c1_37, %c0_38] : memref<4x1x16x128xbf16, #tpu.memory_space<vmem>>, vector<1x1x6x128xbf16>
    %32 = vector.shape_cast %31 : vector<1x1x6x128xbf16> to vector<6x128xbf16>
    %c5 = arith.constant 5 : index
    %c0_39 = arith.constant 0 : index
    %c0_40 = arith.constant 0 : index
    %33 = vector.load %arg2[%c5, %c0_39, %c0_40] : memref<9x128x128xbf16, #tpu.memory_space<vmem>>, vector<1x128x128xbf16>
    %34 = vector.shape_cast %33 : vector<1x128x128xbf16> to vector<128x128xbf16>
    %cst_41 = arith.constant dense<0.000000e+00> : vector<6x128xf32>
    %35 = tpu.matmul %32, %34, %cst_41 {dimension_numbers = #tpu.dot_dimension_numbers<[1], [0], [0], [1], [0, 0, 1, 1], [], []>} : vector<6x128xbf16>, vector<128x128xbf16>, vector<6x128xf32> -> vector<6x128xf32>
    %36 = arith.addf %30, %35 : vector<6x128xf32>
    %c0_42 = arith.constant 0 : index
    %c0_43 = arith.constant 0 : index
    %c3_44 = arith.constant 3 : index
    %c0_45 = arith.constant 0 : index
    %37 = vector.load %arg1[%c0_42, %c0_43, %c3_44, %c0_45] : memref<4x1x16x128xbf16, #tpu.memory_space<vmem>>, vector<1x1x6x128xbf16>
    %38 = vector.shape_cast %37 : vector<1x1x6x128xbf16> to vector<6x128xbf16>
    %c6 = arith.constant 6 : index
    %c0_46 = arith.constant 0 : index
    %c0_47 = arith.constant 0 : index
    %39 = vector.load %arg2[%c6, %c0_46, %c0_47] : memref<9x128x128xbf16, #tpu.memory_space<vmem>>, vector<1x128x128xbf16>
    %40 = vector.shape_cast %39 : vector<1x128x128xbf16> to vector<128x128xbf16>
    %cst_48 = arith.constant dense<0.000000e+00> : vector<6x128xf32>
    %41 = tpu.matmul %38, %40, %cst_48 {dimension_numbers = #tpu.dot_dimension_numbers<[1], [0], [0], [1], [0, 0, 1, 1], [], []>} : vector<6x128xbf16>, vector<128x128xbf16>, vector<6x128xf32> -> vector<6x128xf32>
    %42 = arith.addf %36, %41 : vector<6x128xf32>
    %c1_49 = arith.constant 1 : index
    %c0_50 = arith.constant 0 : index
    %c3_51 = arith.constant 3 : index
    %c0_52 = arith.constant 0 : index
    %43 = vector.load %arg1[%c1_49, %c0_50, %c3_51, %c0_52] : memref<4x1x16x128xbf16, #tpu.memory_space<vmem>>, vector<1x1x6x128xbf16>
    %44 = vector.shape_cast %43 : vector<1x1x6x128xbf16> to vector<6x128xbf16>
    %c7 = arith.constant 7 : index
    %c0_53 = arith.constant 0 : index
    %c0_54 = arith.constant 0 : index
    %45 = vector.load %arg2[%c7, %c0_53, %c0_54] : memref<9x128x128xbf16, #tpu.memory_space<vmem>>, vector<1x128x128xbf16>
    %46 = vector.shape_cast %45 : vector<1x128x128xbf16> to vector<128x128xbf16>
    %cst_55 = arith.constant dense<0.000000e+00> : vector<6x128xf32>
    %47 = tpu.matmul %44, %46, %cst_55 {dimension_numbers = #tpu.dot_dimension_numbers<[1], [0], [0], [1], [0, 0, 1, 1], [], []>} : vector<6x128xbf16>, vector<128x128xbf16>, vector<6x128xf32> -> vector<6x128xf32>
    %48 = arith.addf %42, %47 : vector<6x128xf32>
    %c0_56 = arith.constant 0 : index
    %c0_57 = arith.constant 0 : index
    %c4_58 = arith.constant 4 : index
    %c0_59 = arith.constant 0 : index
    %49 = vector.load %arg1[%c0_56, %c0_57, %c4_58, %c0_59] : memref<4x1x16x128xbf16, #tpu.memory_space<vmem>>, vector<1x1x6x128xbf16>
    %50 = vector.shape_cast %49 : vector<1x1x6x128xbf16> to vector<6x128xbf16>
    %c8 = arith.constant 8 : index
    %c0_60 = arith.constant 0 : index
    %c0_61 = arith.constant 0 : index
    %51 = vector.load %arg2[%c8, %c0_60, %c0_61] : memref<9x128x128xbf16, #tpu.memory_space<vmem>>, vector<1x128x128xbf16>
    %52 = vector.shape_cast %51 : vector<1x128x128xbf16> to vector<128x128xbf16>
    %cst_62 = arith.constant dense<0.000000e+00> : vector<6x128xf32>
    %53 = tpu.matmul %50, %52, %cst_62 {dimension_numbers = #tpu.dot_dimension_numbers<[1], [0], [0], [1], [0, 0, 1, 1], [], []>} : vector<6x128xbf16>, vector<128x128xbf16>, vector<6x128xf32> -> vector<6x128xf32>
    %54 = arith.addf %48, %53 : vector<6x128xf32>
    %c0_63 = arith.constant 0 : index
    %c0_64 = arith.constant 0 : index
    %55 = vector.load %arg3[%c0_63, %c0_64] : memref<1x128xf32, #tpu.memory_space<vmem>>, vector<1x128xf32>
    %56 = vector.broadcast %55 : vector<1x128xf32> to vector<6x128xf32>
    %57 = arith.addf %54, %56 : vector<6x128xf32>
    %cst_65 = arith.constant 0.000000e+00 : f32
    %58 = vector.broadcast %cst_65 : f32 to vector<6x128xf32>
    %59 = arith.cmpf oge, %57, %58 : vector<6x128xf32>
    %cst_66 = arith.constant 0.00999999977 : f32
    %60 = vector.broadcast %cst_66 : f32 to vector<6x128xf32>
    %61 = arith.mulf %60, %57 : vector<6x128xf32>
    %62 = arith.select %59, %57, %61 : vector<6x128xi1>, vector<6x128xf32>
    %63 = arith.truncf %62 : vector<6x128xf32> to vector<6x128xbf16>
    %c0_67 = arith.constant 0 : index
    %c0_68 = arith.constant 0 : index
    %c0_69 = arith.constant 0 : index
    %64 = vector.load %arg4[%c0_67, %c0_68, %c0_69] : memref<1x6x128xbf16, #tpu.memory_space<vmem>>, vector<1x6x128xbf16>
    %65 = vector.shape_cast %64 : vector<1x6x128xbf16> to vector<6x128xbf16>
    %66 = vector.shape_cast %63 : vector<6x128xbf16> to vector<1x6x128xbf16>
    tpu.vector_store %arg4[%c0_67, %c0_68, %c0_69], %66 {strides = array<i32>} : memref<1x6x128xbf16, #tpu.memory_space<vmem>>, vector<1x6x128xbf16>,
    return
  }
  func.func @transform_0(%arg0: i32) -> (i32, i32, i32, i32) {
    %c0_i32 = arith.constant 0 : i32
    %c0_i32_0 = arith.constant 0 : i32
    %c0_i32_1 = arith.constant 0 : i32
    %c0_i32_2 = arith.constant 0 : i32
    return %c0_i32, %arg0, %c0_i32_0, %c0_i32_1 : i32, i32, i32, i32
  }
  func.func @transform_1(%arg0: i32) -> (i32, i32, i32) {
    %c0_i32 = arith.constant 0 : i32
    %c0_i32_0 = arith.constant 0 : i32
    %c0_i32_1 = arith.constant 0 : i32
    %c0_i32_2 = arith.constant 0 : i32
    return %c0_i32, %c0_i32_0, %c0_i32_1 : i32, i32, i32
  }
  func.func @transform_2(%arg0: i32) -> (i32, i32) {
    %c0_i32 = arith.constant 0 : i32
    %c0_i32_0 = arith.constant 0 : i32
    %c0_i32_1 = arith.constant 0 : i32
    return %c0_i32, %c0_i32_0 : i32, i32
  }
  func.func @transform_3(%arg0: i32) -> (i32, i32, i32) {
    %c0_i32 = arith.constant 0 : i32
    %c0_i32_0 = arith.constant 0 : i32
    %c0_i32_1 = arith.constant 0 : i32
    return %arg0, %c0_i32, %c0_i32_0 : i32, i32, i32
  }
}

module attributes {stable_mosaic.version = 11 : i64} {
  func.func @_convT_s2_kernel(%arg0: i32, %arg1: memref<1x16x128xbf16, #tpu.memory_space<vmem>>, %arg2: memref<3x3x128x128xbf16, #tpu.memory_space<vmem>>, %arg3: memref<1x128xf32, #tpu.memory_space<vmem>>, %arg4: memref<2x2x1x6x128xbf16, #tpu.memory_space<vmem>>) attributes {dimension_semantics = [#tpu.dimension_semantics<parallel>], iteration_bounds = array<i64: 2>, scalar_prefetch = 0 : i64, scratch_operands = 0 : i64, tpu.core_type = #tpu.core_type<tc>, window_params = [{transform_indices = @transform_0, window_bounds = array<i64: 1, 16, 128>}, {pipeline_mode = #tpu.pipeline_mode<synchronous>, transform_indices = @transform_1, window_bounds = array<i64: 3, 3, 128, 128>}, {pipeline_mode = #tpu.pipeline_mode<synchronous>, transform_indices = @transform_2, window_bounds = array<i64: 1, 128>}, {transform_indices = @transform_3, window_bounds = array<i64: 2, 2, 1, 6, 128>}]} {
    %c0 = arith.constant 0 : index
    %c0_0 = arith.constant 0 : index
    %c0_1 = arith.constant 0 : index
    %0 = vector.load %arg1[%c0, %c0_0, %c0_1] : memref<1x16x128xbf16, #tpu.memory_space<vmem>>, vector<1x6x128xbf16>
    %1 = vector.shape_cast %0 : vector<1x6x128xbf16> to vector<6x128xbf16>
    %c0_2 = arith.constant 0 : index
    %c1 = arith.constant 1 : index
    %c0_3 = arith.constant 0 : index
    %2 = vector.load %arg1[%c0_2, %c1, %c0_3] : memref<1x16x128xbf16, #tpu.memory_space<vmem>>, vector<1x6x128xbf16>
    %3 = vector.shape_cast %2 : vector<1x6x128xbf16> to vector<6x128xbf16>
    %c0_4 = arith.constant 0 : index
    %c3 = arith.constant 3 : index
    %c0_5 = arith.constant 0 : index
    %4 = vector.load %arg1[%c0_4, %c3, %c0_5] : memref<1x16x128xbf16, #tpu.memory_space<vmem>>, vector<1x6x128xbf16>
    %5 = vector.shape_cast %4 : vector<1x6x128xbf16> to vector<6x128xbf16>
    %c0_6 = arith.constant 0 : index
    %c4 = arith.constant 4 : index
    %c0_7 = arith.constant 0 : index
    %6 = vector.load %arg1[%c0_6, %c4, %c0_7] : memref<1x16x128xbf16, #tpu.memory_space<vmem>>, vector<1x6x128xbf16>
    %7 = vector.shape_cast %6 : vector<1x6x128xbf16> to vector<6x128xbf16>
    %c0_8 = arith.constant 0 : index
    %c0_9 = arith.constant 0 : index
    %8 = vector.load %arg3[%c0_8, %c0_9] : memref<1x128xf32, #tpu.memory_space<vmem>>, vector<1x128xf32>
    %c1_10 = arith.constant 1 : index
    %c1_11 = arith.constant 1 : index
    %c0_12 = arith.constant 0 : index
    %c0_13 = arith.constant 0 : index
    %9 = vector.load %arg2[%c1_10, %c1_11, %c0_12, %c0_13] : memref<3x3x128x128xbf16, #tpu.memory_space<vmem>>, vector<1x1x128x128xbf16>
    %10 = vector.shape_cast %9 : vector<1x1x128x128xbf16> to vector<128x128xbf16>
    %cst = arith.constant dense<0.000000e+00> : vector<6x128xf32>
    %11 = tpu.matmul %1, %10, %cst {dimension_numbers = #tpu.dot_dimension_numbers<[1], [0], [0], [1], [0, 0, 1, 1], [], []>} : vector<6x128xbf16>, vector<128x128xbf16>, vector<6x128xf32> -> vector<6x128xf32>
    %12 = vector.broadcast %8 : vector<1x128xf32> to vector<6x128xf32>
    %13 = arith.addf %11, %12 : vector<6x128xf32>
    %cst_14 = arith.constant 0.000000e+00 : f32
    %14 = vector.broadcast %cst_14 : f32 to vector<6x128xf32>
    %15 = arith.cmpf oge, %13, %14 : vector<6x128xf32>
    %cst_15 = arith.constant 0.00999999977 : f32
    %16 = vector.broadcast %cst_15 : f32 to vector<6x128xf32>
    %17 = arith.mulf %16, %13 : vector<6x128xf32>
    %18 = arith.select %15, %13, %17 : vector<6x128xi1>, vector<6x128xf32>
    %19 = arith.truncf %18 : vector<6x128xf32> to vector<6x128xbf16>
    %c0_16 = arith.constant 0 : index
    %c0_17 = arith.constant 0 : index
    %c0_18 = arith.constant 0 : index
    %c0_19 = arith.constant 0 : index
    %c0_20 = arith.constant 0 : index
    %20 = vector.load %arg4[%c0_16, %c0_17, %c0_18, %c0_19, %c0_20] : memref<2x2x1x6x128xbf16, #tpu.memory_space<vmem>>, vector<1x1x1x6x128xbf16>
    %21 = vector.shape_cast %20 : vector<1x1x1x6x128xbf16> to vector<6x128xbf16>
    %22 = vector.shape_cast %19 : vector<6x128xbf16> to vector<1x1x1x6x128xbf16>
    tpu.vector_store %arg4[%c0_16, %c0_17, %c0_18, %c0_19, %c0_20], %22 {strides = array<i32>} : memref<2x2x1x6x128xbf16, #tpu.memory_space<vmem>>, vector<1x1x1x6x128xbf16>,
    %c1_21 = arith.constant 1 : index
    %c2 = arith.constant 2 : index
    %c0_22 = arith.constant 0 : index
    %c0_23 = arith.constant 0 : index
    %23 = vector.load %arg2[%c1_21, %c2, %c0_22, %c0_23] : memref<3x3x128x128xbf16, #tpu.memory_space<vmem>>, vector<1x1x128x128xbf16>
    %24 = vector.shape_cast %23 : vector<1x1x128x128xbf16> to vector<128x128xbf16>
    %cst_24 = arith.constant dense<0.000000e+00> : vector<6x128xf32>
    %25 = tpu.matmul %1, %24, %cst_24 {dimension_numbers = #tpu.dot_dimension_numbers<[1], [0], [0], [1], [0, 0, 1, 1], [], []>} : vector<6x128xbf16>, vector<128x128xbf16>, vector<6x128xf32> -> vector<6x128xf32>
    %c1_25 = arith.constant 1 : index
    %c0_26 = arith.constant 0 : index
    %c0_27 = arith.constant 0 : index
    %c0_28 = arith.constant 0 : index
    %26 = vector.load %arg2[%c1_25, %c0_26, %c0_27, %c0_28] : memref<3x3x128x128xbf16, #tpu.memory_space<vmem>>, vector<1x1x128x128xbf16>
    %27 = vector.shape_cast %26 : vector<1x1x128x128xbf16> to vector<128x128xbf16>
    %cst_29 = arith.constant dense<0.000000e+00> : vector<6x128xf32>
    %28 = tpu.matmul %3, %27, %cst_29 {dimension_numbers = #tpu.dot_dimension_numbers<[1], [0], [0], [1], [0, 0, 1, 1], [], []>} : vector<6x128xbf16>, vector<128x128xbf16>, vector<6x128xf32> -> vector<6x128xf32>
    %29 = arith.addf %25, %28 : vector<6x128xf32>
    %30 = vector.broadcast %8 : vector<1x128xf32> to vector<6x128xf32>
    %31 = arith.addf %29, %30 : vector<6x128xf32>
    %cst_30 = arith.constant 0.000000e+00 : f32
    %32 = vector.broadcast %cst_30 : f32 to vector<6x128xf32>
    %33 = arith.cmpf oge, %31, %32 : vector<6x128xf32>
    %cst_31 = arith.constant 0.00999999977 : f32
    %34 = vector.broadcast %cst_31 : f32 to vector<6x128xf32>
    %35 = arith.mulf %34, %31 : vector<6x128xf32>
    %36 = arith.select %33, %31, %35 : vector<6x128xi1>, vector<6x128xf32>
    %37 = arith.truncf %36 : vector<6x128xf32> to vector<6x128xbf16>
    %c0_32 = arith.constant 0 : index
    %c1_33 = arith.constant 1 : index
    %c0_34 = arith.constant 0 : index
    %c0_35 = arith.constant 0 : index
    %c0_36 = arith.constant 0 : index
    %38 = vector.load %arg4[%c0_32, %c1_33, %c0_34, %c0_35, %c0_36] : memref<2x2x1x6x128xbf16, #tpu.memory_space<vmem>>, vector<1x1x1x6x128xbf16>
    %39 = vector.shape_cast %38 : vector<1x1x1x6x128xbf16> to vector<6x128xbf16>
    %40 = vector.shape_cast %37 : vector<6x128xbf16> to vector<1x1x1x6x128xbf16>
    tpu.vector_store %arg4[%c0_32, %c1_33, %c0_34, %c0_35, %c0_36], %40 {strides = array<i32>} : memref<2x2x1x6x128xbf16, #tpu.memory_space<vmem>>, vector<1x1x1x6x128xbf16>,
    %c2_37 = arith.constant 2 : index
    %c1_38 = arith.constant 1 : index
    %c0_39 = arith.constant 0 : index
    %c0_40 = arith.constant 0 : index
    %41 = vector.load %arg2[%c2_37, %c1_38, %c0_39, %c0_40] : memref<3x3x128x128xbf16, #tpu.memory_space<vmem>>, vector<1x1x128x128xbf16>
    %42 = vector.shape_cast %41 : vector<1x1x128x128xbf16> to vector<128x128xbf16>
    %cst_41 = arith.constant dense<0.000000e+00> : vector<6x128xf32>
    %43 = tpu.matmul %1, %42, %cst_41 {dimension_numbers = #tpu.dot_dimension_numbers<[1], [0], [0], [1], [0, 0, 1, 1], [], []>} : vector<6x128xbf16>, vector<128x128xbf16>, vector<6x128xf32> -> vector<6x128xf32>
    %c0_42 = arith.constant 0 : index
    %c1_43 = arith.constant 1 : index
    %c0_44 = arith.constant 0 : index
    %c0_45 = arith.constant 0 : index
    %44 = vector.load %arg2[%c0_42, %c1_43, %c0_44, %c0_45] : memref<3x3x128x128xbf16, #tpu.memory_space<vmem>>, vector<1x1x128x128xbf16>
    %45 = vector.shape_cast %44 : vector<1x1x128x128xbf16> to vector<128x128xbf16>
    %cst_46 = arith.constant dense<0.000000e+00> : vector<6x128xf32>
    %46 = tpu.matmul %5, %45, %cst_46 {dimension_numbers = #tpu.dot_dimension_numbers<[1], [0], [0], [1], [0, 0, 1, 1], [], []>} : vector<6x128xbf16>, vector<128x128xbf16>, vector<6x128xf32> -> vector<6x128xf32>
    %47 = arith.addf %43, %46 : vector<6x128xf32>
    %48 = vector.broadcast %8 : vector<1x128xf32> to vector<6x128xf32>
    %49 = arith.addf %47, %48 : vector<6x128xf32>
    %cst_47 = arith.constant 0.000000e+00 : f32
    %50 = vector.broadcast %cst_47 : f32 to vector<6x128xf32>
    %51 = arith.cmpf oge, %49, %50 : vector<6x128xf32>
    %cst_48 = arith.constant 0.00999999977 : f32
    %52 = vector.broadcast %cst_48 : f32 to vector<6x128xf32>
    %53 = arith.mulf %52, %49 : vector<6x128xf32>
    %54 = arith.select %51, %49, %53 : vector<6x128xi1>, vector<6x128xf32>
    %55 = arith.truncf %54 : vector<6x128xf32> to vector<6x128xbf16>
    %c1_49 = arith.constant 1 : index
    %c0_50 = arith.constant 0 : index
    %c0_51 = arith.constant 0 : index
    %c0_52 = arith.constant 0 : index
    %c0_53 = arith.constant 0 : index
    %56 = vector.load %arg4[%c1_49, %c0_50, %c0_51, %c0_52, %c0_53] : memref<2x2x1x6x128xbf16, #tpu.memory_space<vmem>>, vector<1x1x1x6x128xbf16>
    %57 = vector.shape_cast %56 : vector<1x1x1x6x128xbf16> to vector<6x128xbf16>
    %58 = vector.shape_cast %55 : vector<6x128xbf16> to vector<1x1x1x6x128xbf16>
    tpu.vector_store %arg4[%c1_49, %c0_50, %c0_51, %c0_52, %c0_53], %58 {strides = array<i32>} : memref<2x2x1x6x128xbf16, #tpu.memory_space<vmem>>, vector<1x1x1x6x128xbf16>,
    %c2_54 = arith.constant 2 : index
    %c2_55 = arith.constant 2 : index
    %c0_56 = arith.constant 0 : index
    %c0_57 = arith.constant 0 : index
    %59 = vector.load %arg2[%c2_54, %c2_55, %c0_56, %c0_57] : memref<3x3x128x128xbf16, #tpu.memory_space<vmem>>, vector<1x1x128x128xbf16>
    %60 = vector.shape_cast %59 : vector<1x1x128x128xbf16> to vector<128x128xbf16>
    %cst_58 = arith.constant dense<0.000000e+00> : vector<6x128xf32>
    %61 = tpu.matmul %1, %60, %cst_58 {dimension_numbers = #tpu.dot_dimension_numbers<[1], [0], [0], [1], [0, 0, 1, 1], [], []>} : vector<6x128xbf16>, vector<128x128xbf16>, vector<6x128xf32> -> vector<6x128xf32>
    %c2_59 = arith.constant 2 : index
    %c0_60 = arith.constant 0 : index
    %c0_61 = arith.constant 0 : index
    %c0_62 = arith.constant 0 : index
    %62 = vector.load %arg2[%c2_59, %c0_60, %c0_61, %c0_62] : memref<3x3x128x128xbf16, #tpu.memory_space<vmem>>, vector<1x1x128x128xbf16>
    %63 = vector.shape_cast %62 : vector<1x1x128x128xbf16> to vector<128x128xbf16>
    %cst_63 = arith.constant dense<0.000000e+00> : vector<6x128xf32>
    %64 = tpu.matmul %3, %63, %cst_63 {dimension_numbers = #tpu.dot_dimension_numbers<[1], [0], [0], [1], [0, 0, 1, 1], [], []>} : vector<6x128xbf16>, vector<128x128xbf16>, vector<6x128xf32> -> vector<6x128xf32>
    %65 = arith.addf %61, %64 : vector<6x128xf32>
    %c0_64 = arith.constant 0 : index
    %c2_65 = arith.constant 2 : index
    %c0_66 = arith.constant 0 : index
    %c0_67 = arith.constant 0 : index
    %66 = vector.load %arg2[%c0_64, %c2_65, %c0_66, %c0_67] : memref<3x3x128x128xbf16, #tpu.memory_space<vmem>>, vector<1x1x128x128xbf16>
    %67 = vector.shape_cast %66 : vector<1x1x128x128xbf16> to vector<128x128xbf16>
    %cst_68 = arith.constant dense<0.000000e+00> : vector<6x128xf32>
    %68 = tpu.matmul %5, %67, %cst_68 {dimension_numbers = #tpu.dot_dimension_numbers<[1], [0], [0], [1], [0, 0, 1, 1], [], []>} : vector<6x128xbf16>, vector<128x128xbf16>, vector<6x128xf32> -> vector<6x128xf32>
    %69 = arith.addf %65, %68 : vector<6x128xf32>
    %c0_69 = arith.constant 0 : index
    %c0_70 = arith.constant 0 : index
    %c0_71 = arith.constant 0 : index
    %c0_72 = arith.constant 0 : index
    %70 = vector.load %arg2[%c0_69, %c0_70, %c0_71, %c0_72] : memref<3x3x128x128xbf16, #tpu.memory_space<vmem>>, vector<1x1x128x128xbf16>
    %71 = vector.shape_cast %70 : vector<1x1x128x128xbf16> to vector<128x128xbf16>
    %cst_73 = arith.constant dense<0.000000e+00> : vector<6x128xf32>
    %72 = tpu.matmul %7, %71, %cst_73 {dimension_numbers = #tpu.dot_dimension_numbers<[1], [0], [0], [1], [0, 0, 1, 1], [], []>} : vector<6x128xbf16>, vector<128x128xbf16>, vector<6x128xf32> -> vector<6x128xf32>
    %73 = arith.addf %69, %72 : vector<6x128xf32>
    %74 = vector.broadcast %8 : vector<1x128xf32> to vector<6x128xf32>
    %75 = arith.addf %73, %74 : vector<6x128xf32>
    %cst_74 = arith.constant 0.000000e+00 : f32
    %76 = vector.broadcast %cst_74 : f32 to vector<6x128xf32>
    %77 = arith.cmpf oge, %75, %76 : vector<6x128xf32>
    %cst_75 = arith.constant 0.00999999977 : f32
    %78 = vector.broadcast %cst_75 : f32 to vector<6x128xf32>
    %79 = arith.mulf %78, %75 : vector<6x128xf32>
    %80 = arith.select %77, %75, %79 : vector<6x128xi1>, vector<6x128xf32>
    %81 = arith.truncf %80 : vector<6x128xf32> to vector<6x128xbf16>
    %c1_76 = arith.constant 1 : index
    %c1_77 = arith.constant 1 : index
    %c0_78 = arith.constant 0 : index
    %c0_79 = arith.constant 0 : index
    %c0_80 = arith.constant 0 : index
    %82 = vector.load %arg4[%c1_76, %c1_77, %c0_78, %c0_79, %c0_80] : memref<2x2x1x6x128xbf16, #tpu.memory_space<vmem>>, vector<1x1x1x6x128xbf16>
    %83 = vector.shape_cast %82 : vector<1x1x1x6x128xbf16> to vector<6x128xbf16>
    %84 = vector.shape_cast %81 : vector<6x128xbf16> to vector<1x1x1x6x128xbf16>
    tpu.vector_store %arg4[%c1_76, %c1_77, %c0_78, %c0_79, %c0_80], %84 {strides = array<i32>} : memref<2x2x1x6x128xbf16, #tpu.memory_space<vmem>>, vector<1x1x1x6x128xbf16>,
    return
  }
  func.func @transform_0(%arg0: i32) -> (i32, i32, i32) {
    %c0_i32 = arith.constant 0 : i32
    %c0_i32_0 = arith.constant 0 : i32
    %c0_i32_1 = arith.constant 0 : i32
    return %arg0, %c0_i32, %c0_i32_0 : i32, i32, i32
  }
  func.func @transform_1(%arg0: i32) -> (i32, i32, i32, i32) {
    %c0_i32 = arith.constant 0 : i32
    %c0_i32_0 = arith.constant 0 : i32
    %c0_i32_1 = arith.constant 0 : i32
    %c0_i32_2 = arith.constant 0 : i32
    %c0_i32_3 = arith.constant 0 : i32
    return %c0_i32, %c0_i32_0, %c0_i32_1, %c0_i32_2 : i32, i32, i32, i32
  }
  func.func @transform_2(%arg0: i32) -> (i32, i32) {
    %c0_i32 = arith.constant 0 : i32
    %c0_i32_0 = arith.constant 0 : i32
    %c0_i32_1 = arith.constant 0 : i32
    return %c0_i32, %c0_i32_0 : i32, i32
  }
  func.func @transform_3(%arg0: i32) -> (i32, i32, i32, i32, i32) {
    %c0_i32 = arith.constant 0 : i32
    %c0_i32_0 = arith.constant 0 : i32
    %c0_i32_1 = arith.constant 0 : i32
    %c0_i32_2 = arith.constant 0 : i32
    %c0_i32_3 = arith.constant 0 : i32
    return %c0_i32, %c0_i32_0, %arg0, %c0_i32_1, %c0_i32_2 : i32, i32, i32, i32, i32
  }
}

module attributes {stable_mosaic.version = 11 : i64} {
  func.func @_convT_s2_kernel(%arg0: i32, %arg1: memref<1x32x128xbf16, #tpu.memory_space<vmem>>, %arg2: memref<3x3x128x128xbf16, #tpu.memory_space<vmem>>, %arg3: memref<1x128xf32, #tpu.memory_space<vmem>>, %arg4: memref<2x2x1x20x128xbf16, #tpu.memory_space<vmem>>) attributes {dimension_semantics = [#tpu.dimension_semantics<parallel>], iteration_bounds = array<i64: 2>, scalar_prefetch = 0 : i64, scratch_operands = 0 : i64, tpu.core_type = #tpu.core_type<tc>, window_params = [{transform_indices = @transform_0, window_bounds = array<i64: 1, 32, 128>}, {pipeline_mode = #tpu.pipeline_mode<synchronous>, transform_indices = @transform_1, window_bounds = array<i64: 3, 3, 128, 128>}, {pipeline_mode = #tpu.pipeline_mode<synchronous>, transform_indices = @transform_2, window_bounds = array<i64: 1, 128>}, {transform_indices = @transform_3, window_bounds = array<i64: 2, 2, 1, 20, 128>}]} {
    %c0 = arith.constant 0 : index
    %c0_0 = arith.constant 0 : index
    %c0_1 = arith.constant 0 : index
    %0 = vector.load %arg1[%c0, %c0_0, %c0_1] : memref<1x32x128xbf16, #tpu.memory_space<vmem>>, vector<1x20x128xbf16>
    %1 = vector.shape_cast %0 : vector<1x20x128xbf16> to vector<20x128xbf16>
    %c0_2 = arith.constant 0 : index
    %c1 = arith.constant 1 : index
    %c0_3 = arith.constant 0 : index
    %2 = vector.load %arg1[%c0_2, %c1, %c0_3] : memref<1x32x128xbf16, #tpu.memory_space<vmem>>, vector<1x20x128xbf16>
    %3 = vector.shape_cast %2 : vector<1x20x128xbf16> to vector<20x128xbf16>
    %c0_4 = arith.constant 0 : index
    %c5 = arith.constant 5 : index
    %c0_5 = arith.constant 0 : index
    %4 = vector.load %arg1[%c0_4, %c5, %c0_5] : memref<1x32x128xbf16, #tpu.memory_space<vmem>>, vector<1x20x128xbf16>
    %5 = vector.shape_cast %4 : vector<1x20x128xbf16> to vector<20x128xbf16>
    %c0_6 = arith.constant 0 : index
    %c6 = arith.constant 6 : index
    %c0_7 = arith.constant 0 : index
    %6 = vector.load %arg1[%c0_6, %c6, %c0_7] : memref<1x32x128xbf16, #tpu.memory_space<vmem>>, vector<1x20x128xbf16>
    %7 = vector.shape_cast %6 : vector<1x20x128xbf16> to vector<20x128xbf16>
    %c0_8 = arith.constant 0 : index
    %c0_9 = arith.constant 0 : index
    %8 = vector.load %arg3[%c0_8, %c0_9] : memref<1x128xf32, #tpu.memory_space<vmem>>, vector<1x128xf32>
    %c1_10 = arith.constant 1 : index
    %c1_11 = arith.constant 1 : index
    %c0_12 = arith.constant 0 : index
    %c0_13 = arith.constant 0 : index
    %9 = vector.load %arg2[%c1_10, %c1_11, %c0_12, %c0_13] : memref<3x3x128x128xbf16, #tpu.memory_space<vmem>>, vector<1x1x128x128xbf16>
    %10 = vector.shape_cast %9 : vector<1x1x128x128xbf16> to vector<128x128xbf16>
    %cst = arith.constant dense<0.000000e+00> : vector<20x128xf32>
    %11 = tpu.matmul %1, %10, %cst {dimension_numbers = #tpu.dot_dimension_numbers<[1], [0], [0], [1], [0, 0, 1, 1], [], []>} : vector<20x128xbf16>, vector<128x128xbf16>, vector<20x128xf32> -> vector<20x128xf32>
    %12 = vector.broadcast %8 : vector<1x128xf32> to vector<20x128xf32>
    %13 = arith.addf %11, %12 : vector<20x128xf32>
    %cst_14 = arith.constant 0.000000e+00 : f32
    %14 = vector.broadcast %cst_14 : f32 to vector<20x128xf32>
    %15 = arith.cmpf oge, %13, %14 : vector<20x128xf32>
    %cst_15 = arith.constant 0.00999999977 : f32
    %16 = vector.broadcast %cst_15 : f32 to vector<20x128xf32>
    %17 = arith.mulf %16, %13 : vector<20x128xf32>
    %18 = arith.select %15, %13, %17 : vector<20x128xi1>, vector<20x128xf32>
    %19 = arith.truncf %18 : vector<20x128xf32> to vector<20x128xbf16>
    %c0_16 = arith.constant 0 : index
    %c0_17 = arith.constant 0 : index
    %c0_18 = arith.constant 0 : index
    %c0_19 = arith.constant 0 : index
    %c0_20 = arith.constant 0 : index
    %20 = vector.load %arg4[%c0_16, %c0_17, %c0_18, %c0_19, %c0_20] : memref<2x2x1x20x128xbf16, #tpu.memory_space<vmem>>, vector<1x1x1x20x128xbf16>
    %21 = vector.shape_cast %20 : vector<1x1x1x20x128xbf16> to vector<20x128xbf16>
    %22 = vector.shape_cast %19 : vector<20x128xbf16> to vector<1x1x1x20x128xbf16>
    tpu.vector_store %arg4[%c0_16, %c0_17, %c0_18, %c0_19, %c0_20], %22 {strides = array<i32>} : memref<2x2x1x20x128xbf16, #tpu.memory_space<vmem>>, vector<1x1x1x20x128xbf16>,
    %c1_21 = arith.constant 1 : index
    %c2 = arith.constant 2 : index
    %c0_22 = arith.constant 0 : index
    %c0_23 = arith.constant 0 : index
    %23 = vector.load %arg2[%c1_21, %c2, %c0_22, %c0_23] : memref<3x3x128x128xbf16, #tpu.memory_space<vmem>>, vector<1x1x128x128xbf16>
    %24 = vector.shape_cast %23 : vector<1x1x128x128xbf16> to vector<128x128xbf16>
    %cst_24 = arith.constant dense<0.000000e+00> : vector<20x128xf32>
    %25 = tpu.matmul %1, %24, %cst_24 {dimension_numbers = #tpu.dot_dimension_numbers<[1], [0], [0], [1], [0, 0, 1, 1], [], []>} : vector<20x128xbf16>, vector<128x128xbf16>, vector<20x128xf32> -> vector<20x128xf32>
    %c1_25 = arith.constant 1 : index
    %c0_26 = arith.constant 0 : index
    %c0_27 = arith.constant 0 : index
    %c0_28 = arith.constant 0 : index
    %26 = vector.load %arg2[%c1_25, %c0_26, %c0_27, %c0_28] : memref<3x3x128x128xbf16, #tpu.memory_space<vmem>>, vector<1x1x128x128xbf16>
    %27 = vector.shape_cast %26 : vector<1x1x128x128xbf16> to vector<128x128xbf16>
    %cst_29 = arith.constant dense<0.000000e+00> : vector<20x128xf32>
    %28 = tpu.matmul %3, %27, %cst_29 {dimension_numbers = #tpu.dot_dimension_numbers<[1], [0], [0], [1], [0, 0, 1, 1], [], []>} : vector<20x128xbf16>, vector<128x128xbf16>, vector<20x128xf32> -> vector<20x128xf32>
    %29 = arith.addf %25, %28 : vector<20x128xf32>
    %30 = vector.broadcast %8 : vector<1x128xf32> to vector<20x128xf32>
    %31 = arith.addf %29, %30 : vector<20x128xf32>
    %cst_30 = arith.constant 0.000000e+00 : f32
    %32 = vector.broadcast %cst_30 : f32 to vector<20x128xf32>
    %33 = arith.cmpf oge, %31, %32 : vector<20x128xf32>
    %cst_31 = arith.constant 0.00999999977 : f32
    %34 = vector.broadcast %cst_31 : f32 to vector<20x128xf32>
    %35 = arith.mulf %34, %31 : vector<20x128xf32>
    %36 = arith.select %33, %31, %35 : vector<20x128xi1>, vector<20x128xf32>
    %37 = arith.truncf %36 : vector<20x128xf32> to vector<20x128xbf16>
    %c0_32 = arith.constant 0 : index
    %c1_33 = arith.constant 1 : index
    %c0_34 = arith.constant 0 : index
    %c0_35 = arith.constant 0 : index
    %c0_36 = arith.constant 0 : index
    %38 = vector.load %arg4[%c0_32, %c1_33, %c0_34, %c0_35, %c0_36] : memref<2x2x1x20x128xbf16, #tpu.memory_space<vmem>>, vector<1x1x1x20x128xbf16>
    %39 = vector.shape_cast %38 : vector<1x1x1x20x128xbf16> to vector<20x128xbf16>
    %40 = vector.shape_cast %37 : vector<20x128xbf16> to vector<1x1x1x20x128xbf16>
    tpu.vector_store %arg4[%c0_32, %c1_33, %c0_34, %c0_35, %c0_36], %40 {strides = array<i32>} : memref<2x2x1x20x128xbf16, #tpu.memory_space<vmem>>, vector<1x1x1x20x128xbf16>,
    %c2_37 = arith.constant 2 : index
    %c1_38 = arith.constant 1 : index
    %c0_39 = arith.constant 0 : index
    %c0_40 = arith.constant 0 : index
    %41 = vector.load %arg2[%c2_37, %c1_38, %c0_39, %c0_40] : memref<3x3x128x128xbf16, #tpu.memory_space<vmem>>, vector<1x1x128x128xbf16>
    %42 = vector.shape_cast %41 : vector<1x1x128x128xbf16> to vector<128x128xbf16>
    %cst_41 = arith.constant dense<0.000000e+00> : vector<20x128xf32>
    %43 = tpu.matmul %1, %42, %cst_41 {dimension_numbers = #tpu.dot_dimension_numbers<[1], [0], [0], [1], [0, 0, 1, 1], [], []>} : vector<20x128xbf16>, vector<128x128xbf16>, vector<20x128xf32> -> vector<20x128xf32>
    %c0_42 = arith.constant 0 : index
    %c1_43 = arith.constant 1 : index
    %c0_44 = arith.constant 0 : index
    %c0_45 = arith.constant 0 : index
    %44 = vector.load %arg2[%c0_42, %c1_43, %c0_44, %c0_45] : memref<3x3x128x128xbf16, #tpu.memory_space<vmem>>, vector<1x1x128x128xbf16>
    %45 = vector.shape_cast %44 : vector<1x1x128x128xbf16> to vector<128x128xbf16>
    %cst_46 = arith.constant dense<0.000000e+00> : vector<20x128xf32>
    %46 = tpu.matmul %5, %45, %cst_46 {dimension_numbers = #tpu.dot_dimension_numbers<[1], [0], [0], [1], [0, 0, 1, 1], [], []>} : vector<20x128xbf16>, vector<128x128xbf16>, vector<20x128xf32> -> vector<20x128xf32>
    %47 = arith.addf %43, %46 : vector<20x128xf32>
    %48 = vector.broadcast %8 : vector<1x128xf32> to vector<20x128xf32>
    %49 = arith.addf %47, %48 : vector<20x128xf32>
    %cst_47 = arith.constant 0.000000e+00 : f32
    %50 = vector.broadcast %cst_47 : f32 to vector<20x128xf32>
    %51 = arith.cmpf oge, %49, %50 : vector<20x128xf32>
    %cst_48 = arith.constant 0.00999999977 : f32
    %52 = vector.broadcast %cst_48 : f32 to vector<20x128xf32>
    %53 = arith.mulf %52, %49 : vector<20x128xf32>
    %54 = arith.select %51, %49, %53 : vector<20x128xi1>, vector<20x128xf32>
    %55 = arith.truncf %54 : vector<20x128xf32> to vector<20x128xbf16>
    %c1_49 = arith.constant 1 : index
    %c0_50 = arith.constant 0 : index
    %c0_51 = arith.constant 0 : index
    %c0_52 = arith.constant 0 : index
    %c0_53 = arith.constant 0 : index
    %56 = vector.load %arg4[%c1_49, %c0_50, %c0_51, %c0_52, %c0_53] : memref<2x2x1x20x128xbf16, #tpu.memory_space<vmem>>, vector<1x1x1x20x128xbf16>
    %57 = vector.shape_cast %56 : vector<1x1x1x20x128xbf16> to vector<20x128xbf16>
    %58 = vector.shape_cast %55 : vector<20x128xbf16> to vector<1x1x1x20x128xbf16>
    tpu.vector_store %arg4[%c1_49, %c0_50, %c0_51, %c0_52, %c0_53], %58 {strides = array<i32>} : memref<2x2x1x20x128xbf16, #tpu.memory_space<vmem>>, vector<1x1x1x20x128xbf16>,
    %c2_54 = arith.constant 2 : index
    %c2_55 = arith.constant 2 : index
    %c0_56 = arith.constant 0 : index
    %c0_57 = arith.constant 0 : index
    %59 = vector.load %arg2[%c2_54, %c2_55, %c0_56, %c0_57] : memref<3x3x128x128xbf16, #tpu.memory_space<vmem>>, vector<1x1x128x128xbf16>
    %60 = vector.shape_cast %59 : vector<1x1x128x128xbf16> to vector<128x128xbf16>
    %cst_58 = arith.constant dense<0.000000e+00> : vector<20x128xf32>
    %61 = tpu.matmul %1, %60, %cst_58 {dimension_numbers = #tpu.dot_dimension_numbers<[1], [0], [0], [1], [0, 0, 1, 1], [], []>} : vector<20x128xbf16>, vector<128x128xbf16>, vector<20x128xf32> -> vector<20x128xf32>
    %c2_59 = arith.constant 2 : index
    %c0_60 = arith.constant 0 : index
    %c0_61 = arith.constant 0 : index
    %c0_62 = arith.constant 0 : index
    %62 = vector.load %arg2[%c2_59, %c0_60, %c0_61, %c0_62] : memref<3x3x128x128xbf16, #tpu.memory_space<vmem>>, vector<1x1x128x128xbf16>
    %63 = vector.shape_cast %62 : vector<1x1x128x128xbf16> to vector<128x128xbf16>
    %cst_63 = arith.constant dense<0.000000e+00> : vector<20x128xf32>
    %64 = tpu.matmul %3, %63, %cst_63 {dimension_numbers = #tpu.dot_dimension_numbers<[1], [0], [0], [1], [0, 0, 1, 1], [], []>} : vector<20x128xbf16>, vector<128x128xbf16>, vector<20x128xf32> -> vector<20x128xf32>
    %65 = arith.addf %61, %64 : vector<20x128xf32>
    %c0_64 = arith.constant 0 : index
    %c2_65 = arith.constant 2 : index
    %c0_66 = arith.constant 0 : index
    %c0_67 = arith.constant 0 : index
    %66 = vector.load %arg2[%c0_64, %c2_65, %c0_66, %c0_67] : memref<3x3x128x128xbf16, #tpu.memory_space<vmem>>, vector<1x1x128x128xbf16>
    %67 = vector.shape_cast %66 : vector<1x1x128x128xbf16> to vector<128x128xbf16>
    %cst_68 = arith.constant dense<0.000000e+00> : vector<20x128xf32>
    %68 = tpu.matmul %5, %67, %cst_68 {dimension_numbers = #tpu.dot_dimension_numbers<[1], [0], [0], [1], [0, 0, 1, 1], [], []>} : vector<20x128xbf16>, vector<128x128xbf16>, vector<20x128xf32> -> vector<20x128xf32>
    %69 = arith.addf %65, %68 : vector<20x128xf32>
    %c0_69 = arith.constant 0 : index
    %c0_70 = arith.constant 0 : index
    %c0_71 = arith.constant 0 : index
    %c0_72 = arith.constant 0 : index
    %70 = vector.load %arg2[%c0_69, %c0_70, %c0_71, %c0_72] : memref<3x3x128x128xbf16, #tpu.memory_space<vmem>>, vector<1x1x128x128xbf16>
    %71 = vector.shape_cast %70 : vector<1x1x128x128xbf16> to vector<128x128xbf16>
    %cst_73 = arith.constant dense<0.000000e+00> : vector<20x128xf32>
    %72 = tpu.matmul %7, %71, %cst_73 {dimension_numbers = #tpu.dot_dimension_numbers<[1], [0], [0], [1], [0, 0, 1, 1], [], []>} : vector<20x128xbf16>, vector<128x128xbf16>, vector<20x128xf32> -> vector<20x128xf32>
    %73 = arith.addf %69, %72 : vector<20x128xf32>
    %74 = vector.broadcast %8 : vector<1x128xf32> to vector<20x128xf32>
    %75 = arith.addf %73, %74 : vector<20x128xf32>
    %cst_74 = arith.constant 0.000000e+00 : f32
    %76 = vector.broadcast %cst_74 : f32 to vector<20x128xf32>
    %77 = arith.cmpf oge, %75, %76 : vector<20x128xf32>
    %cst_75 = arith.constant 0.00999999977 : f32
    %78 = vector.broadcast %cst_75 : f32 to vector<20x128xf32>
    %79 = arith.mulf %78, %75 : vector<20x128xf32>
    %80 = arith.select %77, %75, %79 : vector<20x128xi1>, vector<20x128xf32>
    %81 = arith.truncf %80 : vector<20x128xf32> to vector<20x128xbf16>
    %c1_76 = arith.constant 1 : index
    %c1_77 = arith.constant 1 : index
    %c0_78 = arith.constant 0 : index
    %c0_79 = arith.constant 0 : index
    %c0_80 = arith.constant 0 : index
    %82 = vector.load %arg4[%c1_76, %c1_77, %c0_78, %c0_79, %c0_80] : memref<2x2x1x20x128xbf16, #tpu.memory_space<vmem>>, vector<1x1x1x20x128xbf16>
    %83 = vector.shape_cast %82 : vector<1x1x1x20x128xbf16> to vector<20x128xbf16>
    %84 = vector.shape_cast %81 : vector<20x128xbf16> to vector<1x1x1x20x128xbf16>
    tpu.vector_store %arg4[%c1_76, %c1_77, %c0_78, %c0_79, %c0_80], %84 {strides = array<i32>} : memref<2x2x1x20x128xbf16, #tpu.memory_space<vmem>>, vector<1x1x1x20x128xbf16>,
    return
  }
  func.func @transform_0(%arg0: i32) -> (i32, i32, i32) {
    %c0_i32 = arith.constant 0 : i32
    %c0_i32_0 = arith.constant 0 : i32
    %c0_i32_1 = arith.constant 0 : i32
    return %arg0, %c0_i32, %c0_i32_0 : i32, i32, i32
  }
  func.func @transform_1(%arg0: i32) -> (i32, i32, i32, i32) {
    %c0_i32 = arith.constant 0 : i32
    %c0_i32_0 = arith.constant 0 : i32
    %c0_i32_1 = arith.constant 0 : i32
    %c0_i32_2 = arith.constant 0 : i32
    %c0_i32_3 = arith.constant 0 : i32
    return %c0_i32, %c0_i32_0, %c0_i32_1, %c0_i32_2 : i32, i32, i32, i32
  }
  func.func @transform_2(%arg0: i32) -> (i32, i32) {
    %c0_i32 = arith.constant 0 : i32
    %c0_i32_0 = arith.constant 0 : i32
    %c0_i32_1 = arith.constant 0 : i32
    return %c0_i32, %c0_i32_0 : i32, i32
  }
  func.func @transform_3(%arg0: i32) -> (i32, i32, i32, i32, i32) {
    %c0_i32 = arith.constant 0 : i32
    %c0_i32_0 = arith.constant 0 : i32
    %c0_i32_1 = arith.constant 0 : i32
    %c0_i32_2 = arith.constant 0 : i32
    %c0_i32_3 = arith.constant 0 : i32
    return %c0_i32, %c0_i32_0, %arg0, %c0_i32_1, %c0_i32_2 : i32, i32, i32, i32, i32
  }
}

module attributes {stable_mosaic.version = 11 : i64} {
  func.func @_convT_s2_kernel(%arg0: i32, %arg1: memref<1x88x128xbf16, #tpu.memory_space<vmem>>, %arg2: memref<3x3x128x128xbf16, #tpu.memory_space<vmem>>, %arg3: memref<1x128xf32, #tpu.memory_space<vmem>>, %arg4: memref<2x2x1x72x128xf32, #tpu.memory_space<vmem>>) attributes {dimension_semantics = [#tpu.dimension_semantics<parallel>], iteration_bounds = array<i64: 2>, scalar_prefetch = 0 : i64, scratch_operands = 0 : i64, tpu.core_type = #tpu.core_type<tc>, window_params = [{transform_indices = @transform_0, window_bounds = array<i64: 1, 88, 128>}, {pipeline_mode = #tpu.pipeline_mode<synchronous>, transform_indices = @transform_1, window_bounds = array<i64: 3, 3, 128, 128>}, {pipeline_mode = #tpu.pipeline_mode<synchronous>, transform_indices = @transform_2, window_bounds = array<i64: 1, 128>}, {transform_indices = @transform_3, window_bounds = array<i64: 2, 2, 1, 72, 128>}]} {
    %c0 = arith.constant 0 : index
    %c0_0 = arith.constant 0 : index
    %c0_1 = arith.constant 0 : index
    %0 = vector.load %arg1[%c0, %c0_0, %c0_1] : memref<1x88x128xbf16, #tpu.memory_space<vmem>>, vector<1x72x128xbf16>
    %1 = vector.shape_cast %0 : vector<1x72x128xbf16> to vector<72x128xbf16>
    %c0_2 = arith.constant 0 : index
    %c1 = arith.constant 1 : index
    %c0_3 = arith.constant 0 : index
    %2 = vector.load %arg1[%c0_2, %c1, %c0_3] : memref<1x88x128xbf16, #tpu.memory_space<vmem>>, vector<1x72x128xbf16>
    %3 = vector.shape_cast %2 : vector<1x72x128xbf16> to vector<72x128xbf16>
    %c0_4 = arith.constant 0 : index
    %c9 = arith.constant 9 : index
    %c0_5 = arith.constant 0 : index
    %4 = vector.load %arg1[%c0_4, %c9, %c0_5] : memref<1x88x128xbf16, #tpu.memory_space<vmem>>, vector<1x72x128xbf16>
    %5 = vector.shape_cast %4 : vector<1x72x128xbf16> to vector<72x128xbf16>
    %c0_6 = arith.constant 0 : index
    %c10 = arith.constant 10 : index
    %c0_7 = arith.constant 0 : index
    %6 = vector.load %arg1[%c0_6, %c10, %c0_7] : memref<1x88x128xbf16, #tpu.memory_space<vmem>>, vector<1x72x128xbf16>
    %7 = vector.shape_cast %6 : vector<1x72x128xbf16> to vector<72x128xbf16>
    %c0_8 = arith.constant 0 : index
    %c0_9 = arith.constant 0 : index
    %8 = vector.load %arg3[%c0_8, %c0_9] : memref<1x128xf32, #tpu.memory_space<vmem>>, vector<1x128xf32>
    %c1_10 = arith.constant 1 : index
    %c1_11 = arith.constant 1 : index
    %c0_12 = arith.constant 0 : index
    %c0_13 = arith.constant 0 : index
    %9 = vector.load %arg2[%c1_10, %c1_11, %c0_12, %c0_13] : memref<3x3x128x128xbf16, #tpu.memory_space<vmem>>, vector<1x1x128x128xbf16>
    %10 = vector.shape_cast %9 : vector<1x1x128x128xbf16> to vector<128x128xbf16>
    %cst = arith.constant dense<0.000000e+00> : vector<72x128xf32>
    %11 = tpu.matmul %1, %10, %cst {dimension_numbers = #tpu.dot_dimension_numbers<[1], [0], [0], [1], [0, 0, 1, 1], [], []>} : vector<72x128xbf16>, vector<128x128xbf16>, vector<72x128xf32> -> vector<72x128xf32>
    %12 = vector.broadcast %8 : vector<1x128xf32> to vector<72x128xf32>
    %13 = arith.addf %11, %12 : vector<72x128xf32>
    %14 = math.tanh %13 : vector<72x128xf32>
    %c0_14 = arith.constant 0 : index
    %c0_15 = arith.constant 0 : index
    %c0_16 = arith.constant 0 : index
    %c0_17 = arith.constant 0 : index
    %c0_18 = arith.constant 0 : index
    %15 = vector.load %arg4[%c0_14, %c0_15, %c0_16, %c0_17, %c0_18] : memref<2x2x1x72x128xf32, #tpu.memory_space<vmem>>, vector<1x1x1x72x128xf32>
    %16 = vector.shape_cast %15 : vector<1x1x1x72x128xf32> to vector<72x128xf32>
    %17 = vector.shape_cast %14 : vector<72x128xf32> to vector<1x1x1x72x128xf32>
    tpu.vector_store %arg4[%c0_14, %c0_15, %c0_16, %c0_17, %c0_18], %17 {strides = array<i32>} : memref<2x2x1x72x128xf32, #tpu.memory_space<vmem>>, vector<1x1x1x72x128xf32>,
    %c1_19 = arith.constant 1 : index
    %c2 = arith.constant 2 : index
    %c0_20 = arith.constant 0 : index
    %c0_21 = arith.constant 0 : index
    %18 = vector.load %arg2[%c1_19, %c2, %c0_20, %c0_21] : memref<3x3x128x128xbf16, #tpu.memory_space<vmem>>, vector<1x1x128x128xbf16>
    %19 = vector.shape_cast %18 : vector<1x1x128x128xbf16> to vector<128x128xbf16>
    %cst_22 = arith.constant dense<0.000000e+00> : vector<72x128xf32>
    %20 = tpu.matmul %1, %19, %cst_22 {dimension_numbers = #tpu.dot_dimension_numbers<[1], [0], [0], [1], [0, 0, 1, 1], [], []>} : vector<72x128xbf16>, vector<128x128xbf16>, vector<72x128xf32> -> vector<72x128xf32>
    %c1_23 = arith.constant 1 : index
    %c0_24 = arith.constant 0 : index
    %c0_25 = arith.constant 0 : index
    %c0_26 = arith.constant 0 : index
    %21 = vector.load %arg2[%c1_23, %c0_24, %c0_25, %c0_26] : memref<3x3x128x128xbf16, #tpu.memory_space<vmem>>, vector<1x1x128x128xbf16>
    %22 = vector.shape_cast %21 : vector<1x1x128x128xbf16> to vector<128x128xbf16>
    %cst_27 = arith.constant dense<0.000000e+00> : vector<72x128xf32>
    %23 = tpu.matmul %3, %22, %cst_27 {dimension_numbers = #tpu.dot_dimension_numbers<[1], [0], [0], [1], [0, 0, 1, 1], [], []>} : vector<72x128xbf16>, vector<128x128xbf16>, vector<72x128xf32> -> vector<72x128xf32>
    %24 = arith.addf %20, %23 : vector<72x128xf32>
    %25 = vector.broadcast %8 : vector<1x128xf32> to vector<72x128xf32>
    %26 = arith.addf %24, %25 : vector<72x128xf32>
    %27 = math.tanh %26 : vector<72x128xf32>
    %c0_28 = arith.constant 0 : index
    %c1_29 = arith.constant 1 : index
    %c0_30 = arith.constant 0 : index
    %c0_31 = arith.constant 0 : index
    %c0_32 = arith.constant 0 : index
    %28 = vector.load %arg4[%c0_28, %c1_29, %c0_30, %c0_31, %c0_32] : memref<2x2x1x72x128xf32, #tpu.memory_space<vmem>>, vector<1x1x1x72x128xf32>
    %29 = vector.shape_cast %28 : vector<1x1x1x72x128xf32> to vector<72x128xf32>
    %30 = vector.shape_cast %27 : vector<72x128xf32> to vector<1x1x1x72x128xf32>
    tpu.vector_store %arg4[%c0_28, %c1_29, %c0_30, %c0_31, %c0_32], %30 {strides = array<i32>} : memref<2x2x1x72x128xf32, #tpu.memory_space<vmem>>, vector<1x1x1x72x128xf32>,
    %c2_33 = arith.constant 2 : index
    %c1_34 = arith.constant 1 : index
    %c0_35 = arith.constant 0 : index
    %c0_36 = arith.constant 0 : index
    %31 = vector.load %arg2[%c2_33, %c1_34, %c0_35, %c0_36] : memref<3x3x128x128xbf16, #tpu.memory_space<vmem>>, vector<1x1x128x128xbf16>
    %32 = vector.shape_cast %31 : vector<1x1x128x128xbf16> to vector<128x128xbf16>
    %cst_37 = arith.constant dense<0.000000e+00> : vector<72x128xf32>
    %33 = tpu.matmul %1, %32, %cst_37 {dimension_numbers = #tpu.dot_dimension_numbers<[1], [0], [0], [1], [0, 0, 1, 1], [], []>} : vector<72x128xbf16>, vector<128x128xbf16>, vector<72x128xf32> -> vector<72x128xf32>
    %c0_38 = arith.constant 0 : index
    %c1_39 = arith.constant 1 : index
    %c0_40 = arith.constant 0 : index
    %c0_41 = arith.constant 0 : index
    %34 = vector.load %arg2[%c0_38, %c1_39, %c0_40, %c0_41] : memref<3x3x128x128xbf16, #tpu.memory_space<vmem>>, vector<1x1x128x128xbf16>
    %35 = vector.shape_cast %34 : vector<1x1x128x128xbf16> to vector<128x128xbf16>
    %cst_42 = arith.constant dense<0.000000e+00> : vector<72x128xf32>
    %36 = tpu.matmul %5, %35, %cst_42 {dimension_numbers = #tpu.dot_dimension_numbers<[1], [0], [0], [1], [0, 0, 1, 1], [], []>} : vector<72x128xbf16>, vector<128x128xbf16>, vector<72x128xf32> -> vector<72x128xf32>
    %37 = arith.addf %33, %36 : vector<72x128xf32>
    %38 = vector.broadcast %8 : vector<1x128xf32> to vector<72x128xf32>
    %39 = arith.addf %37, %38 : vector<72x128xf32>
    %40 = math.tanh %39 : vector<72x128xf32>
    %c1_43 = arith.constant 1 : index
    %c0_44 = arith.constant 0 : index
    %c0_45 = arith.constant 0 : index
    %c0_46 = arith.constant 0 : index
    %c0_47 = arith.constant 0 : index
    %41 = vector.load %arg4[%c1_43, %c0_44, %c0_45, %c0_46, %c0_47] : memref<2x2x1x72x128xf32, #tpu.memory_space<vmem>>, vector<1x1x1x72x128xf32>
    %42 = vector.shape_cast %41 : vector<1x1x1x72x128xf32> to vector<72x128xf32>
    %43 = vector.shape_cast %40 : vector<72x128xf32> to vector<1x1x1x72x128xf32>
    tpu.vector_store %arg4[%c1_43, %c0_44, %c0_45, %c0_46, %c0_47], %43 {strides = array<i32>} : memref<2x2x1x72x128xf32, #tpu.memory_space<vmem>>, vector<1x1x1x72x128xf32>,
    %c2_48 = arith.constant 2 : index
    %c2_49 = arith.constant 2 : index
    %c0_50 = arith.constant 0 : index
    %c0_51 = arith.constant 0 : index
    %44 = vector.load %arg2[%c2_48, %c2_49, %c0_50, %c0_51] : memref<3x3x128x128xbf16, #tpu.memory_space<vmem>>, vector<1x1x128x128xbf16>
    %45 = vector.shape_cast %44 : vector<1x1x128x128xbf16> to vector<128x128xbf16>
    %cst_52 = arith.constant dense<0.000000e+00> : vector<72x128xf32>
    %46 = tpu.matmul %1, %45, %cst_52 {dimension_numbers = #tpu.dot_dimension_numbers<[1], [0], [0], [1], [0, 0, 1, 1], [], []>} : vector<72x128xbf16>, vector<128x128xbf16>, vector<72x128xf32> -> vector<72x128xf32>
    %c2_53 = arith.constant 2 : index
    %c0_54 = arith.constant 0 : index
    %c0_55 = arith.constant 0 : index
    %c0_56 = arith.constant 0 : index
    %47 = vector.load %arg2[%c2_53, %c0_54, %c0_55, %c0_56] : memref<3x3x128x128xbf16, #tpu.memory_space<vmem>>, vector<1x1x128x128xbf16>
    %48 = vector.shape_cast %47 : vector<1x1x128x128xbf16> to vector<128x128xbf16>
    %cst_57 = arith.constant dense<0.000000e+00> : vector<72x128xf32>
    %49 = tpu.matmul %3, %48, %cst_57 {dimension_numbers = #tpu.dot_dimension_numbers<[1], [0], [0], [1], [0, 0, 1, 1], [], []>} : vector<72x128xbf16>, vector<128x128xbf16>, vector<72x128xf32> -> vector<72x128xf32>
    %50 = arith.addf %46, %49 : vector<72x128xf32>
    %c0_58 = arith.constant 0 : index
    %c2_59 = arith.constant 2 : index
    %c0_60 = arith.constant 0 : index
    %c0_61 = arith.constant 0 : index
    %51 = vector.load %arg2[%c0_58, %c2_59, %c0_60, %c0_61] : memref<3x3x128x128xbf16, #tpu.memory_space<vmem>>, vector<1x1x128x128xbf16>
    %52 = vector.shape_cast %51 : vector<1x1x128x128xbf16> to vector<128x128xbf16>
    %cst_62 = arith.constant dense<0.000000e+00> : vector<72x128xf32>
    %53 = tpu.matmul %5, %52, %cst_62 {dimension_numbers = #tpu.dot_dimension_numbers<[1], [0], [0], [1], [0, 0, 1, 1], [], []>} : vector<72x128xbf16>, vector<128x128xbf16>, vector<72x128xf32> -> vector<72x128xf32>
    %54 = arith.addf %50, %53 : vector<72x128xf32>
    %c0_63 = arith.constant 0 : index
    %c0_64 = arith.constant 0 : index
    %c0_65 = arith.constant 0 : index
    %c0_66 = arith.constant 0 : index
    %55 = vector.load %arg2[%c0_63, %c0_64, %c0_65, %c0_66] : memref<3x3x128x128xbf16, #tpu.memory_space<vmem>>, vector<1x1x128x128xbf16>
    %56 = vector.shape_cast %55 : vector<1x1x128x128xbf16> to vector<128x128xbf16>
    %cst_67 = arith.constant dense<0.000000e+00> : vector<72x128xf32>
    %57 = tpu.matmul %7, %56, %cst_67 {dimension_numbers = #tpu.dot_dimension_numbers<[1], [0], [0], [1], [0, 0, 1, 1], [], []>} : vector<72x128xbf16>, vector<128x128xbf16>, vector<72x128xf32> -> vector<72x128xf32>
    %58 = arith.addf %54, %57 : vector<72x128xf32>
    %59 = vector.broadcast %8 : vector<1x128xf32> to vector<72x128xf32>
    %60 = arith.addf %58, %59 : vector<72x128xf32>
    %61 = math.tanh %60 : vector<72x128xf32>
    %c1_68 = arith.constant 1 : index
    %c1_69 = arith.constant 1 : index
    %c0_70 = arith.constant 0 : index
    %c0_71 = arith.constant 0 : index
    %c0_72 = arith.constant 0 : index
    %62 = vector.load %arg4[%c1_68, %c1_69, %c0_70, %c0_71, %c0_72] : memref<2x2x1x72x128xf32, #tpu.memory_space<vmem>>, vector<1x1x1x72x128xf32>
    %63 = vector.shape_cast %62 : vector<1x1x1x72x128xf32> to vector<72x128xf32>
    %64 = vector.shape_cast %61 : vector<72x128xf32> to vector<1x1x1x72x128xf32>
    tpu.vector_store %arg4[%c1_68, %c1_69, %c0_70, %c0_71, %c0_72], %64 {strides = array<i32>} : memref<2x2x1x72x128xf32, #tpu.memory_space<vmem>>, vector<1x1x1x72x128xf32>,
    return
  }
  func.func @transform_0(%arg0: i32) -> (i32, i32, i32) {
    %c0_i32 = arith.constant 0 : i32
    %c0_i32_0 = arith.constant 0 : i32
    %c0_i32_1 = arith.constant 0 : i32
    return %arg0, %c0_i32, %c0_i32_0 : i32, i32, i32
  }
  func.func @transform_1(%arg0: i32) -> (i32, i32, i32, i32) {
    %c0_i32 = arith.constant 0 : i32
    %c0_i32_0 = arith.constant 0 : i32
    %c0_i32_1 = arith.constant 0 : i32
    %c0_i32_2 = arith.constant 0 : i32
    %c0_i32_3 = arith.constant 0 : i32
    return %c0_i32, %c0_i32_0, %c0_i32_1, %c0_i32_2 : i32, i32, i32, i32
  }
  func.func @transform_2(%arg0: i32) -> (i32, i32) {
    %c0_i32 = arith.constant 0 : i32
    %c0_i32_0 = arith.constant 0 : i32
    %c0_i32_1 = arith.constant 0 : i32
    return %c0_i32, %c0_i32_0 : i32, i32
  }
  func.func @transform_3(%arg0: i32) -> (i32, i32, i32, i32, i32) {
    %c0_i32 = arith.constant 0 : i32
    %c0_i32_0 = arith.constant 0 : i32
    %c0_i32_1 = arith.constant 0 : i32
    %c0_i32_2 = arith.constant 0 : i32
    %c0_i32_3 = arith.constant 0 : i32
    return %c0_i32, %c0_i32_0, %arg0, %c0_i32_1, %c0_i32_2 : i32, i32, i32, i32, i32
  }
}

</mosaic_0001>

<llo_original>
// kernel: music_genre_forward.7
$region0: #{music_genre_forward.7}
  #allocation0 [shape = 'u32[]', space=smem, size = 0x4, offset = 0x4, fixed_abs, tag = 'smem constant byte address 0x4 - core index']
  #allocation1 [shape = 'u32[72,128]{1,0:T(1,128)}', space=vmem, size = 0x9000, scoped, tag = 'internal scratch']
  %s0 = inlined_call_operand.vmem [shape: bf16[4,2,32,128], index: 0, kind: input, shape index: {}]
  %s1 = inlined_call_operand.vmem [shape: bf16[9,128,128], index: 1, kind: input, shape index: {}]
  %s2 = inlined_call_operand.vmem [shape: f32[1,128], index: 2, kind: input, shape index: {}]
  %s3 = inlined_call_operand.vmem [shape: bf16[2,20,128], index: 3, kind: output, shape index: {}]
  %s4 = sld [smem:[#allocation0]]
  $region86: #{music_genre_forward.7} parent=0
    _
  %s6 = ssub.s32 1, %s4
  %s7 = scalar_select 0, %s6, %s4
  $region1: #{music_genre_forward.7} parent=0
    #allocation2 [shape = 'u8[65536]{0}', space=vmem, size = 0x10000, scoped, tag = 'input window, operand 0']
    loop: start=0, step=1, limit=4
    $region2: #{music_genre_forward.7} parent=1 // loop_pre_header
      _
    $region3: #{music_genre_forward.7} parent=1 // loop_header
      %s9 = sphi 0, %s13
      %p10 = scmp.ge.s32.totalorder %s9, 4
      %s19 = sphi 0, %s21
      %s22 = sphi 0, %s19
      %s23 = sphi 0, %s22
      %s39 = sphi 0, %s23
      %s43 = sphi 0, %s43
      %s45 = sphi 0, %s43
      %s46 = sphi 0, %s45
      %s60 = sphi 0, %s46
      %s64 = sphi 0, %s64
      %s66 = sphi 0, %s64
      %s67 = sphi 0, %s66
      %s81 = sphi 0, %s67
      %s87 = sphi 0, %s89
      %s90 = sphi 0, %s87
      %s91 = sphi 0, %s90
      %s107 = sphi 0, %s91
    $region4: #{music_genre_forward.7} parent=1 // loop_header_branch
      %12 = sbr.rel (%p10) target = $region8
    $region5: #{music_genre_forward.7} parent=1 // loop_body
      %s14 = ssub.s32 %s9, 1
      %s15 = ssub.s32 %s9, 2
      %s16 = sadd.s32 %s9, 1
      %s17 = ssub.s32 %s9, %s16
      %p18 = scmp.eq.s32.totalorder %s17, 0
      %s20 = sadd.s32 %s19, 1
      %s21 = scalar_select %p18, %s19, %s20
      %p24 = pneg %p18
      %p25 = scmp.eq.s32.totalorder %s9, 1
      %p26 = por %p24, %p25
      %p27 = scmp.ne.s32.totalorder %s19, %s22
      %p28 = scmp.eq.s32.totalorder %s9, 0
      %p29 = por %p27, %p28
      %p30 = scmp.ne.s32.totalorder %s19, %s22
      %p31 = scmp.eq.s32.totalorder %s14, 1
      %p32 = por %p30, %p31
      %p33 = scmp.ne.s32.totalorder %s22, %s23
      %p34 = scmp.eq.s32.totalorder %s14, 0
      %p35 = por %p33, %p34
      %p36 = scmp.ne.s32.totalorder %s22, %s23
      %p37 = scmp.eq.s32.totalorder %s15, 1
      %p38 = por %p36, %p37
      %p40 = scmp.ne.s32.totalorder %s23, %s39
      %p41 = scmp.eq.s32.totalorder %s15, 0
      %p42 = por %p40, %p41
      %s44 = sadd.s32 %s43, 1
      %p47 = scmp.eq.s32.totalorder %s9, 1
      %p48 = scmp.ne.s32.totalorder %s43, %s45
      %p49 = scmp.eq.s32.totalorder %s9, 0
      %p50 = por %p48, %p49
      %p51 = scmp.ne.s32.totalorder %s43, %s45
      %p52 = scmp.eq.s32.totalorder %s14, 1
      %p53 = por %p51, %p52
      %p54 = scmp.ne.s32.totalorder %s45, %s46
      %p55 = scmp.eq.s32.totalorder %s14, 0
      %p56 = por %p54, %p55
      %p57 = scmp.ne.s32.totalorder %s45, %s46
      %p58 = scmp.eq.s32.totalorder %s15, 1
      %p59 = por %p57, %p58
      %p61 = scmp.ne.s32.totalorder %s46, %s60
      %p62 = scmp.eq.s32.totalorder %s15, 0
      %p63 = por %p61, %p62
      %s65 = sadd.s32 %s64, 1
      %p68 = scmp.eq.s32.totalorder %s9, 1
      %p69 = scmp.ne.s32.totalorder %s64, %s66
      %p70 = scmp.eq.s32.totalorder %s9, 0
      %p71 = por %p69, %p70
      %p72 = scmp.ne.s32.totalorder %s64, %s66
      %p73 = scmp.eq.s32.totalorder %s14, 1
      %p74 = por %p72, %p73
      %p75 = scmp.ne.s32.totalorder %s66, %s67
      %p76 = scmp.eq.s32.totalorder %s14, 0
      %p77 = por %p75, %p76
      %p78 = scmp.ne.s32.totalorder %s66, %s67
      %p79 = scmp.eq.s32.totalorder %s15, 1
      %p80 = por %p78, %p79
      %p82 = scmp.ne.s32.totalorder %s67, %s81
      %p83 = scmp.eq.s32.totalorder %s15, 0
      %p84 = por %p82, %p83
      %s85 = ssub.s32 %s9, %s16
      %p86 = scmp.eq.s32.totalorder %s85, 0
      %s88 = sadd.s32 %s87, 1
      %s89 = scalar_select %p86, %s87, %s88
      %p92 = pneg %p86
      %p93 = scmp.eq.s32.totalorder %s9, 1
      %p94 = por %p92, %p93
      %p95 = scmp.ne.s32.totalorder %s87, %s90
      %p96 = scmp.eq.s32.totalorder %s9, 0
      %p97 = por %p95, %p96
      %p98 = scmp.ne.s32.totalorder %s87, %s90
      %p99 = scmp.eq.s32.totalorder %s14, 1
      %p100 = por %p98, %p99
      %p101 = scmp.ne.s32.totalorder %s90, %s91
      %p102 = scmp.eq.s32.totalorder %s14, 0
      %p103 = por %p101, %p102
      %p104 = scmp.ne.s32.totalorder %s90, %s91
      %p105 = scmp.eq.s32.totalorder %s15, 1
      %p106 = por %p104, %p105
      %p108 = scmp.ne.s32.totalorder %s91, %s107
      %p109 = scmp.eq.s32.totalorder %s15, 0
      %p110 = por %p108, %p109
      %p111 = scmp.le.s32.totalorder 1, %s9
      %p112 = scmp.lt.s32.totalorder %s9, 3
      %p113 = pnand %p111, %p112
      %p114 = pneg %p113
      // Predicated region
      $region9: #{music_genre_forward.7} parent=5 // pred_check
        _
      $region10: #{music_genre_forward.7} parent=5 // pred_check_branch
        %116 = sbr.rel (%p113) target = $region12
      $region11: #{music_genre_forward.7} parent=5 // pred_region
        %s117 = ssub.s32 %s9, 1
        // Predicated region
        $region13: #{music_genre_forward.7} parent=11 // pred_check
          %p118 = pneg %p56
        $region14: #{music_genre_forward.7} parent=11 // pred_check_branch
          %120 = sbr.rel (%p118) target = $region16
        $region15: #{music_genre_forward.7} parent=11 // pred_region
          _
        $region16: #{music_genre_forward.7} parent=11 // pred_fallthru
          _
        // Predicated region
        $region17: #{music_genre_forward.7} parent=11 // pred_check
          %p121 = pneg %p77
        $region18: #{music_genre_forward.7} parent=11 // pred_check_branch
          %123 = sbr.rel (%p121) target = $region20
        $region19: #{music_genre_forward.7} parent=11 // pred_region
          _
        $region20: #{music_genre_forward.7} parent=11 // pred_fallthru
          _
      $region12: #{music_genre_forward.7} parent=5 // pred_fallthru
        _
      %p124 = scmp.lt.s32.totalorder %s9, 2
      // Predicated region
      $region21: #{music_genre_forward.7} parent=5 // pred_check
        %p125 = pneg %p124
      $region22: #{music_genre_forward.7} parent=5 // pred_check_branch
        %127 = sbr.rel (%p125) target = $region24
      $region23: #{music_genre_forward.7} parent=5 // pred_region
        // Predicated region
        $region25: #{music_genre_forward.7} parent=23 // pred_check
          %p128 = pneg %p29
        $region26: #{music_genre_forward.7} parent=23 // pred_check_branch
          %130 = sbr.rel (%p128) target = $region28
        $region27: #{music_genre_forward.7} parent=23 // pred_region
          %s131 = sand.u32 %s19, 1
          %s132 = sand.u32 %s19, 1
          %s133 = smul.addr %s132, 64
          %s134 = scalar_lea.vmem [#allocation2], %s133
          %s135 = smul.addr %s9, 4
          %s136 = smul.addr %s135, 4
          %s137 = scalar_lea.vmem %s0, %s136
          // Predicated region
          $region29: #{music_genre_forward.7} parent=27 // pred_check
            _
          $region30: #{music_genre_forward.7} parent=27 // pred_check_branch
            %139 = sbr.rel (0) target = $region32
          $region31: #{music_genre_forward.7} parent=27 // pred_region
            // Predicated region
            $region33: #{music_genre_forward.7} parent=31 // pred_check
              _
            $region34: #{music_genre_forward.7} parent=31 // pred_check_branch
              %141 = sbr.rel target = $region36
            $region35: #{music_genre_forward.7} parent=31 // pred_region
              // Predicated region
              $region48: #{music_genre_forward.7} parent=35 // pred_check
                _
              $region49: #{music_genre_forward.7} parent=35 // pred_check_branch
                %187 = sbr.rel (0) target = $region51
              $region50: #{music_genre_forward.7} parent=35 // pred_region
                loop: start=0, step=1, limit=1
                $region52: #{music_genre_forward.7} parent=50 // loop_pre_header
                  _
                $region53: #{music_genre_forward.7} parent=50 // loop_header
                  %s189 = sphi 0, %s193
                  %p190 = scmp.ge.s32.totalorder %s189, 1
                  %s194 = sphi %s137, %s137
                  %s195 = sphi %s134, %s134
                $region54: #{music_genre_forward.7} parent=50 // loop_header_branch
                  %192 = sbr.rel (%p190) target = $region58
                $region55: #{music_genre_forward.7} parent=50 // loop_body
                  _
                $region56: #{music_genre_forward.7} parent=50 // loop_footer
                  %s193 = sadd.s32 1, %s189
                $region57: #{music_genre_forward.7} parent=50 // loop_footer_branch
                  %188 = sbr.rel target = $region53
                $region58: #{music_genre_forward.7} parent=50 // loop_exit
                  _
                %s197 = ssub.s32 16, 1
                loop: start=0, step=1, limit=1
                $region59: #{music_genre_forward.7} parent=50 // loop_pre_header
                  _
                $region60: #{music_genre_forward.7} parent=50 // loop_header
                  %s199 = sphi 0, %s203
                  %p200 = scmp.ge.s32.totalorder %s199, 1
                  %s204 = sphi %s137, %s137
                  %s205 = sphi %s134, %s134
                $region61: #{music_genre_forward.7} parent=50 // loop_header_branch
                  %202 = sbr.rel (%p200) target = $region65
                $region62: #{music_genre_forward.7} parent=50 // loop_body
                  %v206 = vld [vmem:[%s204] sm:%s197]
                  %207 = vst [vmem:[%s205] sm:%s197] %v206
                  %v208 = vld [vmem:[%s204 + $0x4] sm:%s197]
                  %209 = vst [vmem:[%s205 + $0x4] sm:%s197] %v208
                  %v210 = vld [vmem:[%s204 + $0x8] sm:%s197]
                  %211 = vst [vmem:[%s205 + $0x8] sm:%s197] %v210
                  %v212 = vld [vmem:[%s204 + $0xc] sm:%s197]
                  %213 = vst [vmem:[%s205 + $0xc] sm:%s197] %v212
                  %v214 = vld [vmem:[%s204 + $0x20] sm:%s197]
                  %215 = vst [vmem:[%s205 + $0x10] sm:%s197] %v214
                  %v216 = vld [vmem:[%s204 + $0x24] sm:%s197]
                  %217 = vst [vmem:[%s205 + $0x14] sm:%s197] %v216
                  %v218 = vld [vmem:[%s204 + $0x28] sm:%s197]
                  %219 = vst [vmem:[%s205 + $0x18] sm:%s197] %v218
                  %v220 = vld [vmem:[%s204 + $0x2c] sm:%s197]
                  %221 = vst [vmem:[%s205 + $0x1c] sm:%s197] %v220
                  %v222 = vld [vmem:[%s204 + $0x40] sm:%s197]
                  %223 = vst [vmem:[%s205 + $0x20] sm:%s197] %v222
                  %v224 = vld [vmem:[%s204 + $0x44] sm:%s197]
                  %225 = vst [vmem:[%s205 + $0x24] sm:%s197] %v224
                  %v226 = vld [vmem:[%s204 + $0x48] sm:%s197]
                  %227 = vst [vmem:[%s205 + $0x28] sm:%s197] %v226
                  %v228 = vld [vmem:[%s204 + $0x4c] sm:%s197]
                  %229 = vst [vmem:[%s205 + $0x2c] sm:%s197] %v228
                  %v230 = vld [vmem:[%s204 + $0x60] sm:%s197]
                  %231 = vst [vmem:[%s205 + $0x30] sm:%s197] %v230
                  %v232 = vld [vmem:[%s204 + $0x64] sm:%s197]
                  %233 = vst [vmem:[%s205 + $0x34] sm:%s197] %v232
                  %v234 = vld [vmem:[%s204 + $0x68] sm:%s197]
                  %235 = vst [vmem:[%s205 + $0x38] sm:%s197] %v234
                  %v236 = vld [vmem:[%s204 + $0x6c] sm:%s197]
                  %237 = vst [vmem:[%s205 + $0x3c] sm:%s197] %v236
                $region63: #{music_genre_forward.7} parent=50 // loop_footer
                  %s203 = sadd.s32 1, %s199
                $region64: #{music_genre_forward.7} parent=50 // loop_footer_branch
                  %198 = sbr.rel target = $region60
                $region65: #{music_genre_forward.7} parent=50 // loop_exit
                  _
              $region51: #{music_genre_forward.7} parent=35 // pred_fallthru
                _
            $region36: #{music_genre_forward.7} parent=31 // pred_fallthru
              _
            // Predicated region
            $region37: #{music_genre_forward.7} parent=31 // pred_check
              _
            $region38: #{music_genre_forward.7} parent=31 // pred_check_branch
              %143 = sbr.rel (0) target = $region40
            $region39: #{music_genre_forward.7} parent=31 // pred_region
              %s145 = ssub.s32 16, 1
              loop: start=0, step=1, limit=1
              $region41: #{music_genre_forward.7} parent=39 // loop_pre_header
                _
              $region42: #{music_genre_forward.7} parent=39 // loop_header
                %s147 = sphi 0, %s151
                %p148 = scmp.ge.s32.totalorder %s147, 1
                %s152 = sphi %s137, %s137
                %s153 = sphi %s134, %s134
              $region43: #{music_genre_forward.7} parent=39 // loop_header_branch
                %150 = sbr.rel (%p148) target = $region47
              $region44: #{music_genre_forward.7} parent=39 // loop_body
                %v154 = vld [vmem:[%s152] sm:%s145]
                %155 = vst [vmem:[%s153] sm:%s145] %v154
                %v156 = vld [vmem:[%s152 + $0x4] sm:%s145]
                %157 = vst [vmem:[%s153 + $0x4] sm:%s145] %v156
                %v158 = vld [vmem:[%s152 + $0x8] sm:%s145]
                %159 = vst [vmem:[%s153 + $0x8] sm:%s145] %v158
                %v160 = vld [vmem:[%s152 + $0xc] sm:%s145]
                %161 = vst [vmem:[%s153 + $0xc] sm:%s145] %v160
                %v162 = vld [vmem:[%s152 + $0x20] sm:%s145]
                %163 = vst [vmem:[%s153 + $0x10] sm:%s145] %v162
                %v164 = vld [vmem:[%s152 + $0x24] sm:%s145]
                %165 = vst [vmem:[%s153 + $0x14] sm:%s145] %v164
                %v166 = vld [vmem:[%s152 + $0x28] sm:%s145]
                %167 = vst [vmem:[%s153 + $0x18] sm:%s145] %v166
                %v168 = vld [vmem:[%s152 + $0x2c] sm:%s145]
                %169 = vst [vmem:[%s153 + $0x1c] sm:%s145] %v168
                %v170 = vld [vmem:[%s152 + $0x40] sm:%s145]
                %171 = vst [vmem:[%s153 + $0x20] sm:%s145] %v170
                %v172 = vld [vmem:[%s152 + $0x44] sm:%s145]
                %173 = vst [vmem:[%s153 + $0x24] sm:%s145] %v172
                %v174 = vld [vmem:[%s152 + $0x48] sm:%s145]
                %175 = vst [vmem:[%s153 + $0x28] sm:%s145] %v174
                %v176 = vld [vmem:[%s152 + $0x4c] sm:%s145]
                %177 = vst [vmem:[%s153 + $0x2c] sm:%s145] %v176
                %v178 = vld [vmem:[%s152 + $0x60] sm:%s145]
                %179 = vst [vmem:[%s153 + $0x30] sm:%s145] %v178
                %v180 = vld [vmem:[%s152 + $0x64] sm:%s145]
                %181 = vst [vmem:[%s153 + $0x34] sm:%s145] %v180
                %v182 = vld [vmem:[%s152 + $0x68] sm:%s145]
                %183 = vst [vmem:[%s153 + $0x38] sm:%s145] %v182
                %v184 = vld [vmem:[%s152 + $0x6c] sm:%s145]
                %185 = vst [vmem:[%s153 + $0x3c] sm:%s145] %v184
              $region45: #{music_genre_forward.7} parent=39 // loop_footer
                %s151 = sadd.s32 1, %s147
              $region46: #{music_genre_forward.7} parent=39 // loop_footer_branch
                %146 = sbr.rel target = $region42
              $region47: #{music_genre_forward.7} parent=39 // loop_exit
                _
            $region40: #{music_genre_forward.7} parent=31 // pred_fallthru
              _
          $region32: #{music_genre_forward.7} parent=27 // pred_fallthru
            _
          %238 = vnop
        $region28: #{music_genre_forward.7} parent=23 // pred_fallthru
          _
      $region24: #{music_genre_forward.7} parent=5 // pred_fallthru
        _
      %p239 = scmp.le.s32.totalorder 1, %s9
      %p240 = scmp.lt.s32.totalorder %s9, 3
      %p241 = pnand %p239, %p240
      %p242 = pneg %p241
      // Predicated region
      $region66: #{music_genre_forward.7} parent=5 // pred_check
        _
      $region67: #{music_genre_forward.7} parent=5 // pred_check_branch
        %244 = sbr.rel (%p241) target = $region69
      $region68: #{music_genre_forward.7} parent=5 // pred_region
        %s245 = ssub.s32 %s9, 1
        %s246 = sand.u32 %s22, 1
        %s247 = sand.u32 %s22, 1
        %s248 = smul.addr %s247, 64
        %s249 = scalar_lea.vmem [#allocation2], %s248
        // Predicated region
        $region70: #{music_genre_forward.7} parent=68 // pred_check
          %p250 = pneg %p35
        $region71: #{music_genre_forward.7} parent=68 // pred_check_branch
          %252 = sbr.rel (%p250) target = $region73
        $region72: #{music_genre_forward.7} parent=68 // pred_region
          _
        $region73: #{music_genre_forward.7} parent=68 // pred_fallthru
          _
        %s253 = sand.u32 %s22, 1
        %s254 = sand.u32 %s22, 1
        %s255 = smul.addr %s254, 64
        %s256 = scalar_lea.vmem [#allocation2], %s255
        %p257 = pneg %p35
        %p258 = pneg %p32
        %p259 = pneg %p56
        %p260 = pneg %p53
        %p261 = pneg %p77
        %p262 = pneg %p74
        %p263 = pneg %p103
        %p264 = pneg %p100
        %p265 = scmp.lt.s32.totalorder %s14, 1
        %s266 = scalar_select %p265, %s14, 1
        %s267 = smul.addr %s266, 3
        %s268 = smul.addr %s267, 4
        %s269 = scalar_lea.vmem %s3, %s268
        %p270 = scmp.lt.s32.totalorder %s14, 1
        %s271 = scalar_select %p270, %s14, 1
        %s272 = smul.addr %s271, 3
        %s273 = smul.addr %s272, 4
        %s274 = scalar_lea.vmem %s3, %s273
        %v275 = vld [vmem:[%s249] sm:$0xf]
        %v276 = vld [vmem:[%s249 + $0x4] sm:$0xf]
        %v277 = vld [vmem:[%s249 + $0x8] sm:$0x3]
        %v278 = vld [vmem:[%s1] sm:$0xf]
        %v279 = vld [vmem:[%s1 + $0x4] sm:$0xf]
        %v280 = vld [vmem:[%s1 + $0x8] sm:$0xf]
        %v281 = vld [vmem:[%s1 + $0xc] sm:$0xf]
        %v282 = vld [vmem:[%s1 + $0x10] sm:$0xf]
        %v283 = vld [vmem:[%s1 + $0x14] sm:$0xf]
        %v284 = vld [vmem:[%s1 + $0x18] sm:$0xf]
        %v285 = vld [vmem:[%s1 + $0x1c] sm:$0xf]
        %v286 = vld [vmem:[%s1 + $0x20] sm:$0xf]
        %v287 = vld [vmem:[%s1 + $0x24] sm:$0xf]
        %v288 = vld [vmem:[%s1 + $0x28] sm:$0xf]
        %v289 = vld [vmem:[%s1 + $0x2c] sm:$0xf]
        %v290 = vld [vmem:[%s1 + $0x30] sm:$0xf]
        %v291 = vld [vmem:[%s1 + $0x34] sm:$0xf]
        %v292 = vld [vmem:[%s1 + $0x38] sm:$0xf]
        %v293 = vld [vmem:[%s1 + $0x3c] sm:$0xf]
        %s294 = scalar_lea.vmem %s249, 16 [#allocation2]
        %v295 = vld [vmem:[%s294] sm:$0xf]
        %v296 = vld [vmem:[%s294 + $0x4] sm:$0xf]
        %v297 = vld [vmem:[%s294 + $0x8] sm:$0x3]
        %s298 = scalar_lea.vmem %s1, 64
        %v299 = vld [vmem:[%s298] sm:$0xf]
        %v300 = vld [vmem:[%s298 + $0x4] sm:$0xf]
        %v301 = vld [vmem:[%s298 + $0x8] sm:$0xf]
        %v302 = vld [vmem:[%s298 + $0xc] sm:$0xf]
        %v303 = vld [vmem:[%s298 + $0x10] sm:$0xf]
        %v304 = vld [vmem:[%s298 + $0x14] sm:$0xf]
        %v305 = vld [vmem:[%s298 + $0x18] sm:$0xf]
        %v306 = vld [vmem:[%s298 + $0x1c] sm:$0xf]
        %v307 = vld [vmem:[%s298 + $0x20] sm:$0xf]
        %v308 = vld [vmem:[%s298 + $0x24] sm:$0xf]
        %v309 = vld [vmem:[%s298 + $0x28] sm:$0xf]
        %v310 = vld [vmem:[%s298 + $0x2c] sm:$0xf]
        %v311 = vld [vmem:[%s298 + $0x30] sm:$0xf]
        %v312 = vld [vmem:[%s298 + $0x34] sm:$0xf]
        %v313 = vld [vmem:[%s298 + $0x38] sm:$0xf]
        %v314 = vld [vmem:[%s298 + $0x3c] sm:$0xf]
        %v318 = vunpack.c.l.b16 %v295
        %v319 = vunpack.c.l.b16 %v296
        %v320 = vunpack.c.l.b16 %v297
        %v321 = vpack.c.b16 %v319, %v318
        %v322 = vpack.c.b16 %v320, %v320
        %v341 = vunpack.c.l.b16 %v299
        %v342 = vunpack.c.l.b16 %v300
        %v343 = vunpack.c.l.b16 %v301
        %v344 = vunpack.c.l.b16 %v302
        %v345 = vunpack.c.l.b16 %v303
        %v346 = vunpack.c.l.b16 %v304
        %v347 = vunpack.c.l.b16 %v305
        %v348 = vunpack.c.l.b16 %v306
        %v349 = vunpack.c.l.b16 %v307
        %v350 = vunpack.c.l.b16 %v308
        %v351 = vunpack.c.l.b16 %v309
        %v352 = vunpack.c.l.b16 %v310
        %v353 = vunpack.c.l.b16 %v311
        %v354 = vunpack.c.l.b16 %v312
        %v355 = vunpack.c.l.b16 %v313
        %v356 = vunpack.c.l.b16 %v314
        %v357 = vpack.c.b16 %v342, %v341
        %v358 = vpack.c.b16 %v344, %v343
        %v359 = vpack.c.b16 %v346, %v345
        %v360 = vpack.c.b16 %v348, %v347
        %v361 = vpack.c.b16 %v350, %v349
        %v362 = vpack.c.b16 %v352, %v351
        %v363 = vpack.c.b16 %v354, %v353
        %v364 = vpack.c.b16 %v356, %v355
        %373 = vmatpush.bf16.msra.mxu0 %v364
        %374 = vmatpush.bf16.msra.mxu0 %v363
        %375 = vmatpush.bf16.msra.mxu0 %v362
        %376 = vmatpush.bf16.msra.mxu0 %v361
        %377 = vmatpush.bf16.msra.mxu0 %v360
        %378 = vmatpush.bf16.msra.mxu0 %v359
        %379 = vmatpush.bf16.msra.mxu0 %v358
        %380 = vmatpush.bf16.msra.mxu0 %v357
        %381 = vmatmul.bf16.gmra.mxu0 %v321
        %v382 = vpop.f32.mrf.mxu0
        %v383 = vadd.f32 0.0, %v382
        %v384 = vpop.f32.mrf.mxu0
        %v385 = vadd.f32 0.0, %v384
        %386 = vmatmul.bf16.gmra.mxu0 %v322
        %v387 = vpop.f32.mrf.mxu0
        %v388 = vadd.f32 0.0, %v387
        %v389 = vpop.f32.mrf.mxu0
        %390 = vdwg.mxu0
        %v394 = vunpack.c.l.b16 %v275
        %v395 = vunpack.c.l.b16 %v276
        %v396 = vunpack.c.l.b16 %v277
        %v397 = vpack.c.b16 %v395, %v394
        %v398 = vpack.c.b16 %v396, %v396
        %v417 = vunpack.c.l.b16 %v278
        %v418 = vunpack.c.l.b16 %v279
        %v419 = vunpack.c.l.b16 %v280
        %v420 = vunpack.c.l.b16 %v281
        %v421 = vunpack.c.l.b16 %v282
        %v422 = vunpack.c.l.b16 %v283
        %v423 = vunpack.c.l.b16 %v284
        %v424 = vunpack.c.l.b16 %v285
        %v425 = vunpack.c.l.b16 %v286
        %v426 = vunpack.c.l.b16 %v287
        %v427 = vunpack.c.l.b16 %v288
        %v428 = vunpack.c.l.b16 %v289
        %v429 = vunpack.c.l.b16 %v290
        %v430 = vunpack.c.l.b16 %v291
        %v431 = vunpack.c.l.b16 %v292
        %v432 = vunpack.c.l.b16 %v293
        %v433 = vpack.c.b16 %v418, %v417
        %v434 = vpack.c.b16 %v420, %v419
        %v435 = vpack.c.b16 %v422, %v421
        %v436 = vpack.c.b16 %v424, %v423
        %v437 = vpack.c.b16 %v426, %v425
        %v438 = vpack.c.b16 %v428, %v427
        %v439 = vpack.c.b16 %v430, %v429
        %v440 = vpack.c.b16 %v432, %v431
        %449 = vmatpush.bf16.msra.mxu0 %v440
        %450 = vmatpush.bf16.msra.mxu0 %v439
        %451 = vmatpush.bf16.msra.mxu0 %v438
        %452 = vmatpush.bf16.msra.mxu0 %v437
        %453 = vmatpush.bf16.msra.mxu0 %v436
        %454 = vmatpush.bf16.msra.mxu0 %v435
        %455 = vmatpush.bf16.msra.mxu0 %v434
        %456 = vmatpush.bf16.msra.mxu0 %v433
        %457 = vmatmul.bf16.gmra.mxu0 %v397
        %v458 = vpop.f32.mrf.mxu0
        %v459 = vadd.f32 %v383, %v458
        %v460 = vpop.f32.mrf.mxu0
        %v461 = vadd.f32 %v385, %v460
        %462 = vmatmul.bf16.gmra.mxu0 %v398
        %v463 = vpop.f32.mrf.mxu0
        %v464 = vadd.f32 %v388, %v463
        %v465 = vpop.f32.mrf.mxu0
        %466 = vdwg.mxu0
        %v467 = vld [vmem:[%s249 + $0x8] sm:$0x7]
        %s468 = scalar_lea.vmem %s1, 128
        %v469 = vld [vmem:[%s468] sm:$0xf]
        %v470 = vld [vmem:[%s468 + $0x4] sm:$0xf]
        %v471 = vld [vmem:[%s468 + $0x8] sm:$0xf]
        %v472 = vld [vmem:[%s468 + $0xc] sm:$0xf]
        %v473 = vld [vmem:[%s468 + $0x10] sm:$0xf]
        %v474 = vld [vmem:[%s468 + $0x14] sm:$0xf]
        %v475 = vld [vmem:[%s468 + $0x18] sm:$0xf]
        %v476 = vld [vmem:[%s468 + $0x1c] sm:$0xf]
        %v477 = vld [vmem:[%s468 + $0x20] sm:$0xf]
        %v478 = vld [vmem:[%s468 + $0x24] sm:$0xf]
        %v479 = vld [vmem:[%s468 + $0x28] sm:$0xf]
        %v480 = vld [vmem:[%s468 + $0x2c] sm:$0xf]
        %v481 = vld [vmem:[%s468 + $0x30] sm:$0xf]
        %v482 = vld [vmem:[%s468 + $0x34] sm:$0xf]
        %v483 = vld [vmem:[%s468 + $0x38] sm:$0xf]
        %v484 = vld [vmem:[%s468 + $0x3c] sm:$0xf]
        %v486 = vunpack.c.l.b16 %v467
        %v487 = vpack.c.b16 %v486, %v486
        %vm488 = vsmask.f32 7424
        %v490 = vshrl.u32 %v397, 16
        %v492 = vshll.u32 %v397, 16
        %v494 = vrot.slane %v492, 1
        %v495 = vor.u32 %v490, %v494
        %v497 = vshll.u32 %v487, 16
        %v499 = vrot.slane %v497, 1
        %v500 = vsel %vm488, %v495, %v499
        %v501 = vshrl.u32 %v487, 16
        %v503 = vor.u32 %v501, %v499
        %v522 = vunpack.c.l.b16 %v469
        %v523 = vunpack.c.l.b16 %v470
        %v524 = vunpack.c.l.b16 %v471
        %v525 = vunpack.c.l.b16 %v472
        %v526 = vunpack.c.l.b16 %v473
        %v527 = vunpack.c.l.b16 %v474
        %v528 = vunpack.c.l.b16 %v475
        %v529 = vunpack.c.l.b16 %v476
        %v530 = vunpack.c.l.b16 %v477
        %v531 = vunpack.c.l.b16 %v478
        %v532 = vunpack.c.l.b16 %v479
        %v533 = vunpack.c.l.b16 %v480
        %v534 = vunpack.c.l.b16 %v481
        %v535 = vunpack.c.l.b16 %v482
        %v536 = vunpack.c.l.b16 %v483
        %v537 = vunpack.c.l.b16 %v484
        %v538 = vpack.c.b16 %v523, %v522
        %v539 = vpack.c.b16 %v525, %v524
        %v540 = vpack.c.b16 %v527, %v526
        %v541 = vpack.c.b16 %v529, %v528
        %v542 = vpack.c.b16 %v531, %v530
        %v543 = vpack.c.b16 %v533, %v532
        %v544 = vpack.c.b16 %v535, %v534
        %v545 = vpack.c.b16 %v537, %v536
        %554 = vmatpush.bf16.msra.mxu0 %v545
        %555 = vmatpush.bf16.msra.mxu0 %v544
        %556 = vmatpush.bf16.msra.mxu0 %v543
        %557 = vmatpush.bf16.msra.mxu0 %v542
        %558 = vmatpush.bf16.msra.mxu0 %v541
        %559 = vmatpush.bf16.msra.mxu0 %v540
        %560 = vmatpush.bf16.msra.mxu0 %v539
        %561 = vmatpush.bf16.msra.mxu0 %v538
        %562 = vmatmul.bf16.gmra.mxu0 %v500
        %v563 = vpop.f32.mrf.mxu0
        %v564 = vadd.f32 0.0, %v563
        %v565 = vpop.f32.mrf.mxu0
        %v566 = vadd.f32 0.0, %v565
        %567 = vmatmul.bf16.gmra.mxu0 %v503
        %v568 = vpop.f32.mrf.mxu0
        %v569 = vadd.f32 0.0, %v568
        %v570 = vpop.f32.mrf.mxu0
        %571 = vdwg.mxu0
        %v572 = vadd.f32 %v459, %v564
        %v573 = vadd.f32 %v461, %v566
        %v574 = vadd.f32 %v464, %v569
        %s575 = scalar_lea.vmem %s249, 32 [#allocation2]
        %v576 = vld [vmem:[%s575] sm:$0xf]
        %v577 = vld [vmem:[%s575 + $0x4] sm:$0xf]
        %v578 = vld [vmem:[%s575 + $0x8] sm:$0x3]
        %s579 = scalar_lea.vmem %s1, 192
        %v580 = vld [vmem:[%s579] sm:$0xf]
        %v581 = vld [vmem:[%s579 + $0x4] sm:$0xf]
        %v582 = vld [vmem:[%s579 + $0x8] sm:$0xf]
        %v583 = vld [vmem:[%s579 + $0xc] sm:$0xf]
        %v584 = vld [vmem:[%s579 + $0x10] sm:$0xf]
        %v585 = vld [vmem:[%s579 + $0x14] sm:$0xf]
        %v586 = vld [vmem:[%s579 + $0x18] sm:$0xf]
        %v587 = vld [vmem:[%s579 + $0x1c] sm:$0xf]
        %v588 = vld [vmem:[%s579 + $0x20] sm:$0xf]
        %v589 = vld [vmem:[%s579 + $0x24] sm:$0xf]
        %v590 = vld [vmem:[%s579 + $0x28] sm:$0xf]
        %v591 = vld [vmem:[%s579 + $0x2c] sm:$0xf]
        %v592 = vld [vmem:[%s579 + $0x30] sm:$0xf]
        %v593 = vld [vmem:[%s579 + $0x34] sm:$0xf]
        %v594 = vld [vmem:[%s579 + $0x38] sm:$0xf]
        %v595 = vld [vmem:[%s579 + $0x3c] sm:$0xf]
        %v599 = vunpack.c.l.b16 %v576
        %v600 = vunpack.c.l.b16 %v577
        %v601 = vunpack.c.l.b16 %v578
        %v602 = vpack.c.b16 %v600, %v599
        %v603 = vpack.c.b16 %v601, %v601
        %v622 = vunpack.c.l.b16 %v580
        %v623 = vunpack.c.l.b16 %v581
        %v624 = vunpack.c.l.b16 %v582
        %v625 = vunpack.c.l.b16 %v583
        %v626 = vunpack.c.l.b16 %v584
        %v627 = vunpack.c.l.b16 %v585
        %v628 = vunpack.c.l.b16 %v586
        %v629 = vunpack.c.l.b16 %v587
        %v630 = vunpack.c.l.b16 %v588
        %v631 = vunpack.c.l.b16 %v589
        %v632 = vunpack.c.l.b16 %v590
        %v633 = vunpack.c.l.b16 %v591
        %v634 = vunpack.c.l.b16 %v592
        %v635 = vunpack.c.l.b16 %v593
        %v636 = vunpack.c.l.b16 %v594
        %v637 = vunpack.c.l.b16 %v595
        %v638 = vpack.c.b16 %v623, %v622
        %v639 = vpack.c.b16 %v625, %v624
        %v640 = vpack.c.b16 %v627, %v626
        %v641 = vpack.c.b16 %v629, %v628
        %v642 = vpack.c.b16 %v631, %v630
        %v643 = vpack.c.b16 %v633, %v632
        %v644 = vpack.c.b16 %v635, %v634
        %v645 = vpack.c.b16 %v637, %v636
        %654 = vmatpush.bf16.msra.mxu0 %v645
        %655 = vmatpush.bf16.msra.mxu0 %v644
        %656 = vmatpush.bf16.msra.mxu0 %v643
        %657 = vmatpush.bf16.msra.mxu0 %v642
        %658 = vmatpush.bf16.msra.mxu0 %v641
        %659 = vmatpush.bf16.msra.mxu0 %v640
        %660 = vmatpush.bf16.msra.mxu0 %v639
        %661 = vmatpush.bf16.msra.mxu0 %v638
        %662 = vmatmul.bf16.gmra.mxu0 %v602
        %v663 = vpop.f32.mrf.mxu0
        %v664 = vadd.f32 0.0, %v663
        %v665 = vpop.f32.mrf.mxu0
        %v666 = vadd.f32 0.0, %v665
        %667 = vmatmul.bf16.gmra.mxu0 %v603
        %v668 = vpop.f32.mrf.mxu0
        %v669 = vadd.f32 0.0, %v668
        %v670 = vpop.f32.mrf.mxu0
        %671 = vdwg.mxu0
        %v672 = vadd.f32 %v572, %v664
        %v673 = vadd.f32 %v573, %v666
        %v674 = vadd.f32 %v574, %v669
        %s675 = scalar_lea.vmem %s249, 48 [#allocation2]
        %v676 = vld [vmem:[%s675] sm:$0xf]
        %v677 = vld [vmem:[%s675 + $0x4] sm:$0xf]
        %v678 = vld [vmem:[%s675 + $0x8] sm:$0x3]
        %s679 = scalar_lea.vmem %s1, 256
        %v680 = vld [vmem:[%s679] sm:$0xf]
        %v681 = vld [vmem:[%s679 + $0x4] sm:$0xf]
        %v682 = vld [vmem:[%s679 + $0x8] sm:$0xf]
        %v683 = vld [vmem:[%s679 + $0xc] sm:$0xf]
        %v684 = vld [vmem:[%s679 + $0x10] sm:$0xf]
        %v685 = vld [vmem:[%s679 + $0x14] sm:$0xf]
        %v686 = vld [vmem:[%s679 + $0x18] sm:$0xf]
        %v687 = vld [vmem:[%s679 + $0x1c] sm:$0xf]
        %v688 = vld [vmem:[%s679 + $0x20] sm:$0xf]
        %v689 = vld [vmem:[%s679 + $0x24] sm:$0xf]
        %v690 = vld [vmem:[%s679 + $0x28] sm:$0xf]
        %v691 = vld [vmem:[%s679 + $0x2c] sm:$0xf]
        %v692 = vld [vmem:[%s679 + $0x30] sm:$0xf]
        %v693 = vld [vmem:[%s679 + $0x34] sm:$0xf]
        %v694 = vld [vmem:[%s679 + $0x38] sm:$0xf]
        %v695 = vld [vmem:[%s679 + $0x3c] sm:$0xf]
        %v699 = vunpack.c.l.b16 %v676
        %v700 = vunpack.c.l.b16 %v677
        %v701 = vunpack.c.l.b16 %v678
        %v702 = vpack.c.b16 %v700, %v699
        %v703 = vpack.c.b16 %v701, %v701
        %v722 = vunpack.c.l.b16 %v680
        %v723 = vunpack.c.l.b16 %v681
        %v724 = vunpack.c.l.b16 %v682
        %v725 = vunpack.c.l.b16 %v683
        %v726 = vunpack.c.l.b16 %v684
        %v727 = vunpack.c.l.b16 %v685
        %v728 = vunpack.c.l.b16 %v686
        %v729 = vunpack.c.l.b16 %v687
        %v730 = vunpack.c.l.b16 %v688
        %v731 = vunpack.c.l.b16 %v689
        %v732 = vunpack.c.l.b16 %v690
        %v733 = vunpack.c.l.b16 %v691
        %v734 = vunpack.c.l.b16 %v692
        %v735 = vunpack.c.l.b16 %v693
        %v736 = vunpack.c.l.b16 %v694
        %v737 = vunpack.c.l.b16 %v695
        %v738 = vpack.c.b16 %v723, %v722
        %v739 = vpack.c.b16 %v725, %v724
        %v740 = vpack.c.b16 %v727, %v726
        %v741 = vpack.c.b16 %v729, %v728
        %v742 = vpack.c.b16 %v731, %v730
        %v743 = vpack.c.b16 %v733, %v732
        %v744 = vpack.c.b16 %v735, %v734
        %v745 = vpack.c.b16 %v737, %v736
        %754 = vmatpush.bf16.msra.mxu0 %v745
        %755 = vmatpush.bf16.msra.mxu0 %v744
        %756 = vmatpush.bf16.msra.mxu0 %v743
        %757 = vmatpush.bf16.msra.mxu0 %v742
        %758 = vmatpush.bf16.msra.mxu0 %v741
        %759 = vmatpush.bf16.msra.mxu0 %v740
        %760 = vmatpush.bf16.msra.mxu0 %v739
        %761 = vmatpush.bf16.msra.mxu0 %v738
        %762 = vmatmul.bf16.gmra.mxu0 %v702
        %v763 = vpop.f32.mrf.mxu0
        %v764 = vadd.f32 0.0, %v763
        %v765 = vpop.f32.mrf.mxu0
        %v766 = vadd.f32 0.0, %v765
        %767 = vmatmul.bf16.gmra.mxu0 %v703
        %v768 = vpop.f32.mrf.mxu0
        %v769 = vadd.f32 0.0, %v768
        %v770 = vpop.f32.mrf.mxu0
        %771 = vdwg.mxu0
        %v772 = vadd.f32 %v672, %v764
        %v773 = vadd.f32 %v673, %v766
        %v774 = vadd.f32 %v674, %v769
        %v775 = vld [vmem:[%s575 + $0x8] sm:$0x7]
        %s776 = scalar_lea.vmem %s1, 320
        %v777 = vld [vmem:[%s776] sm:$0xf]
        %v778 = vld [vmem:[%s776 + $0x4] sm:$0xf]
        %v779 = vld [vmem:[%s776 + $0x8] sm:$0xf]
        %v780 = vld [vmem:[%s776 + $0xc] sm:$0xf]
        %v781 = vld [vmem:[%s776 + $0x10] sm:$0xf]
        %v782 = vld [vmem:[%s776 + $0x14] sm:$0xf]
        %v783 = vld [vmem:[%s776 + $0x18] sm:$0xf]
        %v784 = vld [vmem:[%s776 + $0x1c] sm:$0xf]
        %v785 = vld [vmem:[%s776 + $0x20] sm:$0xf]
        %v786 = vld [vmem:[%s776 + $0x24] sm:$0xf]
        %v787 = vld [vmem:[%s776 + $0x28] sm:$0xf]
        %v788 = vld [vmem:[%s776 + $0x2c] sm:$0xf]
        %v789 = vld [vmem:[%s776 + $0x30] sm:$0xf]
        %v790 = vld [vmem:[%s776 + $0x34] sm:$0xf]
        %v791 = vld [vmem:[%s776 + $0x38] sm:$0xf]
        %v792 = vld [vmem:[%s776 + $0x3c] sm:$0xf]
        %v794 = vunpack.c.l.b16 %v775
        %v795 = vpack.c.b16 %v794, %v794
        %v797 = vshrl.u32 %v602, 16
        %v799 = vshll.u32 %v602, 16
        %v801 = vrot.slane %v799, 1
        %v802 = vor.u32 %v797, %v801
        %v804 = vshll.u32 %v795, 16
        %v806 = vrot.slane %v804, 1
        %v807 = vsel %vm488, %v802, %v806
        %v808 = vshrl.u32 %v795, 16
        %v810 = vor.u32 %v808, %v806
        %v829 = vunpack.c.l.b16 %v777
        %v830 = vunpack.c.l.b16 %v778
        %v831 = vunpack.c.l.b16 %v779
        %v832 = vunpack.c.l.b16 %v780
        %v833 = vunpack.c.l.b16 %v781
        %v834 = vunpack.c.l.b16 %v782
        %v835 = vunpack.c.l.b16 %v783
        %v836 = vunpack.c.l.b16 %v784
        %v837 = vunpack.c.l.b16 %v785
        %v838 = vunpack.c.l.b16 %v786
        %v839 = vunpack.c.l.b16 %v787
        %v840 = vunpack.c.l.b16 %v788
        %v841 = vunpack.c.l.b16 %v789
        %v842 = vunpack.c.l.b16 %v790
        %v843 = vunpack.c.l.b16 %v791
        %v844 = vunpack.c.l.b16 %v792
        %v845 = vpack.c.b16 %v830, %v829
        %v846 = vpack.c.b16 %v832, %v831
        %v847 = vpack.c.b16 %v834, %v833
        %v848 = vpack.c.b16 %v836, %v835
        %v849 = vpack.c.b16 %v838, %v837
        %v850 = vpack.c.b16 %v840, %v839
        %v851 = vpack.c.b16 %v842, %v841
        %v852 = vpack.c.b16 %v844, %v843
        %861 = vmatpush.bf16.msra.mxu0 %v852
        %862 = vmatpush.bf16.msra.mxu0 %v851
        %863 = vmatpush.bf16.msra.mxu0 %v850
        %864 = vmatpush.bf16.msra.mxu0 %v849
        %865 = vmatpush.bf16.msra.mxu0 %v848
        %866 = vmatpush.bf16.msra.mxu0 %v847
        %867 = vmatpush.bf16.msra.mxu0 %v846
        %868 = vmatpush.bf16.msra.mxu0 %v845
        %869 = vmatmul.bf16.gmra.mxu0 %v807
        %v870 = vpop.f32.mrf.mxu0
        %v871 = vadd.f32 0.0, %v870
        %v872 = vpop.f32.mrf.mxu0
        %v873 = vadd.f32 0.0, %v872
        %874 = vmatmul.bf16.gmra.mxu0 %v810
        %v875 = vpop.f32.mrf.mxu0
        %v876 = vadd.f32 0.0, %v875
        %v877 = vpop.f32.mrf.mxu0
        %878 = vdwg.mxu0
        %v879 = vadd.f32 %v772, %v871
        %v880 = vadd.f32 %v773, %v873
        %v881 = vadd.f32 %v774, %v876
        %v882 = vld [vmem:[%s249] sm:$0xc]
        %v883 = vld [vmem:[%s249 + $0x4] sm:$0xf]
        %v884 = vld [vmem:[%s249 + $0x8] sm:$0xf]
        %v885 = vld [vmem:[%s249 + $0xc] sm:$0x1]
        %s886 = scalar_lea.vmem %s1, 384
        %v887 = vld [vmem:[%s886] sm:$0xf]
        %v888 = vld [vmem:[%s886 + $0x4] sm:$0xf]
        %v889 = vld [vmem:[%s886 + $0x8] sm:$0xf]
        %v890 = vld [vmem:[%s886 + $0xc] sm:$0xf]
        %v891 = vld [vmem:[%s886 + $0x10] sm:$0xf]
        %v892 = vld [vmem:[%s886 + $0x14] sm:$0xf]
        %v893 = vld [vmem:[%s886 + $0x18] sm:$0xf]
        %v894 = vld [vmem:[%s886 + $0x1c] sm:$0xf]
        %v895 = vld [vmem:[%s886 + $0x20] sm:$0xf]
        %v896 = vld [vmem:[%s886 + $0x24] sm:$0xf]
        %v897 = vld [vmem:[%s886 + $0x28] sm:$0xf]
        %v898 = vld [vmem:[%s886 + $0x2c] sm:$0xf]
        %v899 = vld [vmem:[%s886 + $0x30] sm:$0xf]
        %v900 = vld [vmem:[%s886 + $0x34] sm:$0xf]
        %v901 = vld [vmem:[%s886 + $0x38] sm:$0xf]
        %v902 = vld [vmem:[%s886 + $0x3c] sm:$0xf]
        %v907 = vunpack.c.l.b16 %v882
        %v908 = vunpack.c.l.b16 %v883
        %v909 = vunpack.c.l.b16 %v884
        %v910 = vunpack.c.l.b16 %v885
        %v911 = vpack.c.b16 %v908, %v907
        %v912 = vpack.c.b16 %v910, %v909
        %vm913 = vsmask.f32 5376
        %v915 = vshrl.u32 %v911, 16
        %v917 = vrot.slane %v915, 2
        %v918 = vshll.u32 %v911, 16
        %v920 = vrot.slane %v918, 3
        %v921 = vor.u32 %v917, %v920
        %v923 = vshrl.u32 %v912, 16
        %v925 = vrot.slane %v923, 2
        %v926 = vshll.u32 %v912, 16
        %v928 = vrot.slane %v926, 3
        %v929 = vor.u32 %v925, %v928
        %v930 = vsel %vm913, %v921, %v929
        %v949 = vunpack.c.l.b16 %v887
        %v950 = vunpack.c.l.b16 %v888
        %v951 = vunpack.c.l.b16 %v889
        %v952 = vunpack.c.l.b16 %v890
        %v953 = vunpack.c.l.b16 %v891
        %v954 = vunpack.c.l.b16 %v892
        %v955 = vunpack.c.l.b16 %v893
        %v956 = vunpack.c.l.b16 %v894
        %v957 = vunpack.c.l.b16 %v895
        %v958 = vunpack.c.l.b16 %v896
        %v959 = vunpack.c.l.b16 %v897
        %v960 = vunpack.c.l.b16 %v898
        %v961 = vunpack.c.l.b16 %v899
        %v962 = vunpack.c.l.b16 %v900
        %v963 = vunpack.c.l.b16 %v901
        %v964 = vunpack.c.l.b16 %v902
        %v965 = vpack.c.b16 %v950, %v949
        %v966 = vpack.c.b16 %v952, %v951
        %v967 = vpack.c.b16 %v954, %v953
        %v968 = vpack.c.b16 %v956, %v955
        %v969 = vpack.c.b16 %v958, %v957
        %v970 = vpack.c.b16 %v960, %v959
        %v971 = vpack.c.b16 %v962, %v961
        %v972 = vpack.c.b16 %v964, %v963
        %981 = vmatpush.bf16.msra.mxu0 %v972
        %982 = vmatpush.bf16.msra.mxu0 %v971
        %983 = vmatpush.bf16.msra.mxu0 %v970
        %984 = vmatpush.bf16.msra.mxu0 %v969
        %985 = vmatpush.bf16.msra.mxu0 %v968
        %986 = vmatpush.bf16.msra.mxu0 %v967
        %987 = vmatpush.bf16.msra.mxu0 %v966
        %988 = vmatpush.bf16.msra.mxu0 %v965
        %989 = vmatmul.bf16.gmra.mxu0 %v930
        %v990 = vpop.f32.mrf.mxu0
        %v991 = vadd.f32 0.0, %v990
        %v992 = vpop.f32.mrf.mxu0
        %v993 = vadd.f32 0.0, %v992
        %994 = vmatmul.bf16.gmra.mxu0 %v929
        %v995 = vpop.f32.mrf.mxu0
        %v996 = vadd.f32 0.0, %v995
        %v997 = vpop.f32.mrf.mxu0
        %998 = vdwg.mxu0
        %v999 = vadd.f32 %v879, %v991
        %v1000 = vadd.f32 %v880, %v993
        %v1001 = vadd.f32 %v881, %v996
        %v1002 = vld [vmem:[%s294] sm:$0xc]
        %v1003 = vld [vmem:[%s294 + $0x4] sm:$0xf]
        %v1004 = vld [vmem:[%s294 + $0x8] sm:$0xf]
        %v1005 = vld [vmem:[%s294 + $0xc] sm:$0x1]
        %s1006 = scalar_lea.vmem %s1, 448
        %v1007 = vld [vmem:[%s1006] sm:$0xf]
        %v1008 = vld [vmem:[%s1006 + $0x4] sm:$0xf]
        %v1009 = vld [vmem:[%s1006 + $0x8] sm:$0xf]
        %v1010 = vld [vmem:[%s1006 + $0xc] sm:$0xf]
        %v1011 = vld [vmem:[%s1006 + $0x10] sm:$0xf]
        %v1012 = vld [vmem:[%s1006 + $0x14] sm:$0xf]
        %v1013 = vld [vmem:[%s1006 + $0x18] sm:$0xf]
        %v1014 = vld [vmem:[%s1006 + $0x1c] sm:$0xf]
        %v1015 = vld [vmem:[%s1006 + $0x20] sm:$0xf]
        %v1016 = vld [vmem:[%s1006 + $0x24] sm:$0xf]
        %v1017 = vld [vmem:[%s1006 + $0x28] sm:$0xf]
        %v1018 = vld [vmem:[%s1006 + $0x2c] sm:$0xf]
        %v1019 = vld [vmem:[%s1006 + $0x30] sm:$0xf]
        %v1020 = vld [vmem:[%s1006 + $0x34] sm:$0xf]
        %v1021 = vld [vmem:[%s1006 + $0x38] sm:$0xf]
        %v1022 = vld [vmem:[%s1006 + $0x3c] sm:$0xf]
        %v1027 = vunpack.c.l.b16 %v1002
        %v1028 = vunpack.c.l.b16 %v1003
        %v1029 = vunpack.c.l.b16 %v1004
        %v1030 = vunpack.c.l.b16 %v1005
        %v1031 = vpack.c.b16 %v1028, %v1027
        %v1032 = vpack.c.b16 %v1030, %v1029
        %v1034 = vshrl.u32 %v1031, 16
        %v1036 = vrot.slane %v1034, 2
        %v1037 = vshll.u32 %v1031, 16
        %v1039 = vrot.slane %v1037, 3
        %v1040 = vor.u32 %v1036, %v1039
        %v1042 = vshrl.u32 %v1032, 16
        %v1044 = vrot.slane %v1042, 2
        %v1045 = vshll.u32 %v1032, 16
        %v1047 = vrot.slane %v1045, 3
        %v1048 = vor.u32 %v1044, %v1047
        %v1049 = vsel %vm913, %v1040, %v1048
        %v1068 = vunpack.c.l.b16 %v1007
        %v1069 = vunpack.c.l.b16 %v1008
        %v1070 = vunpack.c.l.b16 %v1009
        %v1071 = vunpack.c.l.b16 %v1010
        %v1072 = vunpack.c.l.b16 %v1011
        %v1073 = vunpack.c.l.b16 %v1012
        %v1074 = vunpack.c.l.b16 %v1013
        %v1075 = vunpack.c.l.b16 %v1014
        %v1076 = vunpack.c.l.b16 %v1015
        %v1077 = vunpack.c.l.b16 %v1016
        %v1078 = vunpack.c.l.b16 %v1017
        %v1079 = vunpack.c.l.b16 %v1018
        %v1080 = vunpack.c.l.b16 %v1019
        %v1081 = vunpack.c.l.b16 %v1020
        %v1082 = vunpack.c.l.b16 %v1021
        %v1083 = vunpack.c.l.b16 %v1022
        %v1084 = vpack.c.b16 %v1069, %v1068
        %v1085 = vpack.c.b16 %v1071, %v1070
        %v1086 = vpack.c.b16 %v1073, %v1072
        %v1087 = vpack.c.b16 %v1075, %v1074
        %v1088 = vpack.c.b16 %v1077, %v1076
        %v1089 = vpack.c.b16 %v1079, %v1078
        %v1090 = vpack.c.b16 %v1081, %v1080
        %v1091 = vpack.c.b16 %v1083, %v1082
        %1100 = vmatpush.bf16.msra.mxu0 %v1091
        %1101 = vmatpush.bf16.msra.mxu0 %v1090
        %1102 = vmatpush.bf16.msra.mxu0 %v1089
        %1103 = vmatpush.bf16.msra.mxu0 %v1088
        %1104 = vmatpush.bf16.msra.mxu0 %v1087
        %1105 = vmatpush.bf16.msra.mxu0 %v1086
        %1106 = vmatpush.bf16.msra.mxu0 %v1085
        %1107 = vmatpush.bf16.msra.mxu0 %v1084
        %1108 = vmatmul.bf16.gmra.mxu0 %v1049
        %v1109 = vpop.f32.mrf.mxu0
        %v1110 = vadd.f32 0.0, %v1109
        %v1111 = vpop.f32.mrf.mxu0
        %v1112 = vadd.f32 0.0, %v1111
        %1113 = vmatmul.bf16.gmra.mxu0 %v1048
        %v1114 = vpop.f32.mrf.mxu0
        %v1115 = vadd.f32 0.0, %v1114
        %v1116 = vpop.f32.mrf.mxu0
        %1117 = vdwg.mxu0
        %v1118 = vadd.f32 %v999, %v1110
        %v1119 = vadd.f32 %v1000, %v1112
        %v1120 = vadd.f32 %v1001, %v1115
        %v1121 = vld [vmem:[%s249] sm:$0x8]
        %s1122 = scalar_lea.vmem %s1, 512
        %v1123 = vld [vmem:[%s1122] sm:$0xf]
        %v1124 = vld [vmem:[%s1122 + $0x4] sm:$0xf]
        %v1125 = vld [vmem:[%s1122 + $0x8] sm:$0xf]
        %v1126 = vld [vmem:[%s1122 + $0xc] sm:$0xf]
        %v1127 = vld [vmem:[%s1122 + $0x10] sm:$0xf]
        %v1128 = vld [vmem:[%s1122 + $0x14] sm:$0xf]
        %v1129 = vld [vmem:[%s1122 + $0x18] sm:$0xf]
        %v1130 = vld [vmem:[%s1122 + $0x1c] sm:$0xf]
        %v1131 = vld [vmem:[%s1122 + $0x20] sm:$0xf]
        %v1132 = vld [vmem:[%s1122 + $0x24] sm:$0xf]
        %v1133 = vld [vmem:[%s1122 + $0x28] sm:$0xf]
        %v1134 = vld [vmem:[%s1122 + $0x2c] sm:$0xf]
        %v1135 = vld [vmem:[%s1122 + $0x30] sm:$0xf]
        %v1136 = vld [vmem:[%s1122 + $0x34] sm:$0xf]
        %v1137 = vld [vmem:[%s1122 + $0x38] sm:$0xf]
        %v1138 = vld [vmem:[%s1122 + $0x3c] sm:$0xf]
        %v1140 = vunpack.c.l.b16 %v1121
        %v1141 = vpack.c.b16 %v908, %v1140
        %vm1142 = vcmask 1044480
        %v1143 = vrot.slane %v1141, 3
        %v1144 = vrot.slane %v912, 3
        %v1145 = vsel %vm1142, %v1143, %v1144
        %v1164 = vunpack.c.l.b16 %v1123
        %v1165 = vunpack.c.l.b16 %v1124
        %v1166 = vunpack.c.l.b16 %v1125
        %v1167 = vunpack.c.l.b16 %v1126
        %v1168 = vunpack.c.l.b16 %v1127
        %v1169 = vunpack.c.l.b16 %v1128
        %v1170 = vunpack.c.l.b16 %v1129
        %v1171 = vunpack.c.l.b16 %v1130
        %v1172 = vunpack.c.l.b16 %v1131
        %v1173 = vunpack.c.l.b16 %v1132
        %v1174 = vunpack.c.l.b16 %v1133
        %v1175 = vunpack.c.l.b16 %v1134
        %v1176 = vunpack.c.l.b16 %v1135
        %v1177 = vunpack.c.l.b16 %v1136
        %v1178 = vunpack.c.l.b16 %v1137
        %v1179 = vunpack.c.l.b16 %v1138
        %v1180 = vpack.c.b16 %v1165, %v1164
        %v1181 = vpack.c.b16 %v1167, %v1166
        %v1182 = vpack.c.b16 %v1169, %v1168
        %v1183 = vpack.c.b16 %v1171, %v1170
        %v1184 = vpack.c.b16 %v1173, %v1172
        %v1185 = vpack.c.b16 %v1175, %v1174
        %v1186 = vpack.c.b16 %v1177, %v1176
        %v1187 = vpack.c.b16 %v1179, %v1178
        %1196 = vmatpush.bf16.msra.mxu0 %v1187
        %1197 = vmatpush.bf16.msra.mxu0 %v1186
        %1198 = vmatpush.bf16.msra.mxu0 %v1185
        %1199 = vmatpush.bf16.msra.mxu0 %v1184
        %1200 = vmatpush.bf16.msra.mxu0 %v1183
        %1201 = vmatpush.bf16.msra.mxu0 %v1182
        %1202 = vmatpush.bf16.msra.mxu0 %v1181
        %1203 = vmatpush.bf16.msra.mxu0 %v1180
        %1204 = vmatmul.bf16.gmra.mxu0 %v1145
        %v1205 = vpop.f32.mrf.mxu0
        %v1206 = vadd.f32 0.0, %v1205
        %v1207 = vpop.f32.mrf.mxu0
        %v1208 = vadd.f32 0.0, %v1207
        %1209 = vmatmul.bf16.gmra.mxu0 %v1144
        %v1210 = vpop.f32.mrf.mxu0
        %v1211 = vadd.f32 0.0, %v1210
        %v1212 = vpop.f32.mrf.mxu0
        %1213 = vdwg.mxu0
        %v1214 = vadd.f32 %v1118, %v1206
        %v1215 = vadd.f32 %v1119, %v1208
        %v1216 = vadd.f32 %v1120, %v1211
        %v1217 = vld [vmem:[%s2] sm:$0x1]
        %v1219 = vperm.slane %v1217, 0
        %v1221 = vadd.f32 %v1214, %v1219
        %v1222 = vadd.f32 %v1215, %v1219
        %v1223 = vadd.f32 %v1216, %v1219
        %vm1224 = vcmp.ge.f32.partialorder %v1221, 0.0
        %vm1225 = vcmp.ge.f32.partialorder %v1222, 0.0
        %vm1226 = vcmp.ge.f32.partialorder %v1223, 0.0
        %v1227 = vmul.f32 %v1221, 0.01
        %v1228 = vmul.f32 %v1222, 0.01
        %v1229 = vmul.f32 %v1223, 0.01
        %v1230 = vsel %vm1224, %v1221, %v1227
        %v1231 = vsel %vm1225, %v1222, %v1228
        %v1232 = vsel %vm1226, %v1223, %v1229
        %v1233 = vpack.c.bf16 %v1230, %v1230
        %v1234 = vpack.c.bf16 %v1231, %v1231
        %v1235 = vpack.c.bf16 %v1232, %v1232
        %1236 = vst [vmem:[%s274] sm:$0xf] %v1233
        %1237 = vst [vmem:[%s274 + $0x4] sm:$0xf] %v1234
        %1238 = vst [vmem:[%s274 + $0x8] sm:$0x3] %v1235
        %p1239 = scmp.lt.s32.totalorder %s14, 1
        %s1240 = scalar_select %p1239, %s14, 1
        %s1241 = smul.addr %s1240, 3
        %s1242 = smul.addr %s1241, 4
        %s1243 = scalar_lea.vmem %s3, %s1242
        // Predicated region
        $region74: #{music_genre_forward.7} parent=68 // pred_check
          %p1244 = pneg %p100
        $region75: #{music_genre_forward.7} parent=68 // pred_check_branch
          %1246 = sbr.rel (%p1244) target = $region77
        $region76: #{music_genre_forward.7} parent=68 // pred_region
          _
        $region77: #{music_genre_forward.7} parent=68 // pred_fallthru
          _
      $region69: #{music_genre_forward.7} parent=5 // pred_fallthru
        _
      %p1247 = scmp.le.s32.totalorder 2, %s9
      // Predicated region
      $region78: #{music_genre_forward.7} parent=5 // pred_check
        %p1248 = pneg %p1247
      $region79: #{music_genre_forward.7} parent=5 // pred_check_branch
        %1250 = sbr.rel (%p1248) target = $region81
      $region80: #{music_genre_forward.7} parent=5 // pred_region
        %s1251 = ssub.s32 %s9, 2
        // Predicated region
        $region82: #{music_genre_forward.7} parent=80 // pred_check
          %p1252 = pneg %p106
        $region83: #{music_genre_forward.7} parent=80 // pred_check_branch
          %1254 = sbr.rel (%p1252) target = $region85
        $region84: #{music_genre_forward.7} parent=80 // pred_region
          %p1255 = scmp.lt.s32.totalorder %s15, 1
          %s1256 = scalar_select %p1255, %s15, 1
          %s1257 = smul.addr %s1256, 3
          %s1258 = smul.addr %s1257, 4
          %s1259 = scalar_lea.vmem %s3, %s1258
        $region85: #{music_genre_forward.7} parent=80 // pred_fallthru
          _
      $region81: #{music_genre_forward.7} parent=5 // pred_fallthru
        _
    $region6: #{music_genre_forward.7} parent=1 // loop_footer
      %s13 = sadd.s32 1, %s9
    $region7: #{music_genre_forward.7} parent=1 // loop_footer_branch
      %8 = sbr.rel target = $region3
    $region8: #{music_genre_forward.7} parent=1 // loop_exit
      _

// kernel: music_genre_forward.6
$region0: #{music_genre_forward.6}
  #allocation0 [shape = 'u32[]', space=smem, size = 0x4, offset = 0x4, fixed_abs, tag = 'smem constant byte address 0x4 - core index']
  #allocation1 [shape = 'u32[72,128]{1,0:T(1,128)}', space=vmem, size = 0x9000, scoped, tag = 'internal scratch']
  %s0 = inlined_call_operand.vmem [shape: bf16[4,2,88,128], index: 0, kind: input, shape index: {}]
  %s1 = inlined_call_operand.vmem [shape: bf16[9,128,128], index: 1, kind: input, shape index: {}]
  %s2 = inlined_call_operand.vmem [shape: f32[1,128], index: 2, kind: input, shape index: {}]
  %s3 = inlined_call_operand.vmem [shape: bf16[2,72,128], index: 3, kind: output, shape index: {}]
  %s4 = sld [smem:[#allocation0]]
  $region86: #{music_genre_forward.6} parent=0
    _
  %s6 = ssub.s32 1, %s4
  %s7 = scalar_select 0, %s6, %s4
  $region1: #{music_genre_forward.6} parent=0
    #allocation2 [shape = 'u8[180224]{0}', space=vmem, size = 0x2c000, scoped, tag = 'input window, operand 0']
    loop: start=0, step=1, limit=4
    $region2: #{music_genre_forward.6} parent=1 // loop_pre_header
      _
    $region3: #{music_genre_forward.6} parent=1 // loop_header
      %s9 = sphi 0, %s13
      %p10 = scmp.ge.s32.totalorder %s9, 4
      %s19 = sphi 0, %s21
      %s22 = sphi 0, %s19
      %s23 = sphi 0, %s22
      %s39 = sphi 0, %s23
      %s43 = sphi 0, %s43
      %s45 = sphi 0, %s43
      %s46 = sphi 0, %s45
      %s60 = sphi 0, %s46
      %s64 = sphi 0, %s64
      %s66 = sphi 0, %s64
      %s67 = sphi 0, %s66
      %s81 = sphi 0, %s67
      %s87 = sphi 0, %s89
      %s90 = sphi 0, %s87
      %s91 = sphi 0, %s90
      %s107 = sphi 0, %s91
    $region4: #{music_genre_forward.6} parent=1 // loop_header_branch
      %12 = sbr.rel (%p10) target = $region8
    $region5: #{music_genre_forward.6} parent=1 // loop_body
      %s14 = ssub.s32 %s9, 1
      %s15 = ssub.s32 %s9, 2
      %s16 = sadd.s32 %s9, 1
      %s17 = ssub.s32 %s9, %s16
      %p18 = scmp.eq.s32.totalorder %s17, 0
      %s20 = sadd.s32 %s19, 1
      %s21 = scalar_select %p18, %s19, %s20
      %p24 = pneg %p18
      %p25 = scmp.eq.s32.totalorder %s9, 1
      %p26 = por %p24, %p25
      %p27 = scmp.ne.s32.totalorder %s19, %s22
      %p28 = scmp.eq.s32.totalorder %s9, 0
      %p29 = por %p27, %p28
      %p30 = scmp.ne.s32.totalorder %s19, %s22
      %p31 = scmp.eq.s32.totalorder %s14, 1
      %p32 = por %p30, %p31
      %p33 = scmp.ne.s32.totalorder %s22, %s23
      %p34 = scmp.eq.s32.totalorder %s14, 0
      %p35 = por %p33, %p34
      %p36 = scmp.ne.s32.totalorder %s22, %s23
      %p37 = scmp.eq.s32.totalorder %s15, 1
      %p38 = por %p36, %p37
      %p40 = scmp.ne.s32.totalorder %s23, %s39
      %p41 = scmp.eq.s32.totalorder %s15, 0
      %p42 = por %p40, %p41
      %s44 = sadd.s32 %s43, 1
      %p47 = scmp.eq.s32.totalorder %s9, 1
      %p48 = scmp.ne.s32.totalorder %s43, %s45
      %p49 = scmp.eq.s32.totalorder %s9, 0
      %p50 = por %p48, %p49
      %p51 = scmp.ne.s32.totalorder %s43, %s45
      %p52 = scmp.eq.s32.totalorder %s14, 1
      %p53 = por %p51, %p52
      %p54 = scmp.ne.s32.totalorder %s45, %s46
      %p55 = scmp.eq.s32.totalorder %s14, 0
      %p56 = por %p54, %p55
      %p57 = scmp.ne.s32.totalorder %s45, %s46
      %p58 = scmp.eq.s32.totalorder %s15, 1
      %p59 = por %p57, %p58
      %p61 = scmp.ne.s32.totalorder %s46, %s60
      %p62 = scmp.eq.s32.totalorder %s15, 0
      %p63 = por %p61, %p62
      %s65 = sadd.s32 %s64, 1
      %p68 = scmp.eq.s32.totalorder %s9, 1
      %p69 = scmp.ne.s32.totalorder %s64, %s66
      %p70 = scmp.eq.s32.totalorder %s9, 0
      %p71 = por %p69, %p70
      %p72 = scmp.ne.s32.totalorder %s64, %s66
      %p73 = scmp.eq.s32.totalorder %s14, 1
      %p74 = por %p72, %p73
      %p75 = scmp.ne.s32.totalorder %s66, %s67
      %p76 = scmp.eq.s32.totalorder %s14, 0
      %p77 = por %p75, %p76
      %p78 = scmp.ne.s32.totalorder %s66, %s67
      %p79 = scmp.eq.s32.totalorder %s15, 1
      %p80 = por %p78, %p79
      %p82 = scmp.ne.s32.totalorder %s67, %s81
      %p83 = scmp.eq.s32.totalorder %s15, 0
      %p84 = por %p82, %p83
      %s85 = ssub.s32 %s9, %s16
      %p86 = scmp.eq.s32.totalorder %s85, 0
      %s88 = sadd.s32 %s87, 1
      %s89 = scalar_select %p86, %s87, %s88
      %p92 = pneg %p86
      %p93 = scmp.eq.s32.totalorder %s9, 1
      %p94 = por %p92, %p93
      %p95 = scmp.ne.s32.totalorder %s87, %s90
      %p96 = scmp.eq.s32.totalorder %s9, 0
      %p97 = por %p95, %p96
      %p98 = scmp.ne.s32.totalorder %s87, %s90
      %p99 = scmp.eq.s32.totalorder %s14, 1
      %p100 = por %p98, %p99
      %p101 = scmp.ne.s32.totalorder %s90, %s91
      %p102 = scmp.eq.s32.totalorder %s14, 0
      %p103 = por %p101, %p102
      %p104 = scmp.ne.s32.totalorder %s90, %s91
      %p105 = scmp.eq.s32.totalorder %s15, 1
      %p106 = por %p104, %p105
      %p108 = scmp.ne.s32.totalorder %s91, %s107
      %p109 = scmp.eq.s32.totalorder %s15, 0
      %p110 = por %p108, %p109
      %p111 = scmp.le.s32.totalorder 1, %s9
      %p112 = scmp.lt.s32.totalorder %s9, 3
      %p113 = pnand %p111, %p112
      %p114 = pneg %p113
      // Predicated region
      $region9: #{music_genre_forward.6} parent=5 // pred_check
        _
      $region10: #{music_genre_forward.6} parent=5 // pred_check_branch
        %116 = sbr.rel (%p113) target = $region12
      $region11: #{music_genre_forward.6} parent=5 // pred_region
        %s117 = ssub.s32 %s9, 1
        // Predicated region
        $region13: #{music_genre_forward.6} parent=11 // pred_check
          %p118 = pneg %p56
        $region14: #{music_genre_forward.6} parent=11 // pred_check_branch
          %120 = sbr.rel (%p118) target = $region16
        $region15: #{music_genre_forward.6} parent=11 // pred_region
          _
        $region16: #{music_genre_forward.6} parent=11 // pred_fallthru
          _
        // Predicated region
        $region17: #{music_genre_forward.6} parent=11 // pred_check
          %p121 = pneg %p77
        $region18: #{music_genre_forward.6} parent=11 // pred_check_branch
          %123 = sbr.rel (%p121) target = $region20
        $region19: #{music_genre_forward.6} parent=11 // pred_region
          _
        $region20: #{music_genre_forward.6} parent=11 // pred_fallthru
          _
      $region12: #{music_genre_forward.6} parent=5 // pred_fallthru
        _
      %p124 = scmp.lt.s32.totalorder %s9, 2
      // Predicated region
      $region21: #{music_genre_forward.6} parent=5 // pred_check
        %p125 = pneg %p124
      $region22: #{music_genre_forward.6} parent=5 // pred_check_branch
        %127 = sbr.rel (%p125) target = $region24
      $region23: #{music_genre_forward.6} parent=5 // pred_region
        // Predicated region
        $region25: #{music_genre_forward.6} parent=23 // pred_check
          %p128 = pneg %p29
        $region26: #{music_genre_forward.6} parent=23 // pred_check_branch
          %130 = sbr.rel (%p128) target = $region28
        $region27: #{music_genre_forward.6} parent=23 // pred_region
          %s131 = sand.u32 %s19, 1
          %s132 = sand.u32 %s19, 1
          %s133 = smul.addr %s132, 176
          %s134 = scalar_lea.vmem [#allocation2], %s133
          %s135 = smul.addr %s9, 11
          %s136 = smul.addr %s135, 4
          %s137 = scalar_lea.vmem %s0, %s136
          // Predicated region
          $region29: #{music_genre_forward.6} parent=27 // pred_check
            _
          $region30: #{music_genre_forward.6} parent=27 // pred_check_branch
            %139 = sbr.rel (0) target = $region32
          $region31: #{music_genre_forward.6} parent=27 // pred_region
            // Predicated region
            $region33: #{music_genre_forward.6} parent=31 // pred_check
              _
            $region34: #{music_genre_forward.6} parent=31 // pred_check_branch
              %141 = sbr.rel target = $region36
            $region35: #{music_genre_forward.6} parent=31 // pred_region
              // Predicated region
              $region48: #{music_genre_forward.6} parent=35 // pred_check
                _
              $region49: #{music_genre_forward.6} parent=35 // pred_check_branch
                %243 = sbr.rel (0) target = $region51
              $region50: #{music_genre_forward.6} parent=35 // pred_region
                loop: start=0, step=1, limit=1
                $region52: #{music_genre_forward.6} parent=50 // loop_pre_header
                  _
                $region53: #{music_genre_forward.6} parent=50 // loop_header
                  %s245 = sphi 0, %s249
                  %p246 = scmp.ge.s32.totalorder %s245, 1
                  %s250 = sphi %s137, %s137
                  %s251 = sphi %s134, %s134
                $region54: #{music_genre_forward.6} parent=50 // loop_header_branch
                  %248 = sbr.rel (%p246) target = $region58
                $region55: #{music_genre_forward.6} parent=50 // loop_body
                  _
                $region56: #{music_genre_forward.6} parent=50 // loop_footer
                  %s249 = sadd.s32 1, %s245
                $region57: #{music_genre_forward.6} parent=50 // loop_footer_branch
                  %244 = sbr.rel target = $region53
                $region58: #{music_genre_forward.6} parent=50 // loop_exit
                  _
                %s253 = ssub.s32 16, 1
                loop: start=0, step=1, limit=1
                $region59: #{music_genre_forward.6} parent=50 // loop_pre_header
                  _
                $region60: #{music_genre_forward.6} parent=50 // loop_header
                  %s255 = sphi 0, %s259
                  %p256 = scmp.ge.s32.totalorder %s255, 1
                  %s260 = sphi %s137, %s137
                  %s261 = sphi %s134, %s134
                $region61: #{music_genre_forward.6} parent=50 // loop_header_branch
                  %258 = sbr.rel (%p256) target = $region65
                $region62: #{music_genre_forward.6} parent=50 // loop_body
                  %v262 = vld [vmem:[%s260] sm:%s253]
                  %263 = vst [vmem:[%s261] sm:%s253] %v262
                  %v264 = vld [vmem:[%s260 + $0x4] sm:%s253]
                  %265 = vst [vmem:[%s261 + $0x4] sm:%s253] %v264
                  %v266 = vld [vmem:[%s260 + $0x8] sm:%s253]
                  %267 = vst [vmem:[%s261 + $0x8] sm:%s253] %v266
                  %v268 = vld [vmem:[%s260 + $0xc] sm:%s253]
                  %269 = vst [vmem:[%s261 + $0xc] sm:%s253] %v268
                  %v270 = vld [vmem:[%s260 + $0x10] sm:%s253]
                  %271 = vst [vmem:[%s261 + $0x10] sm:%s253] %v270
                  %v272 = vld [vmem:[%s260 + $0x14] sm:%s253]
                  %273 = vst [vmem:[%s261 + $0x14] sm:%s253] %v272
                  %v274 = vld [vmem:[%s260 + $0x18] sm:%s253]
                  %275 = vst [vmem:[%s261 + $0x18] sm:%s253] %v274
                  %v276 = vld [vmem:[%s260 + $0x1c] sm:%s253]
                  %277 = vst [vmem:[%s261 + $0x1c] sm:%s253] %v276
                  %v278 = vld [vmem:[%s260 + $0x20] sm:%s253]
                  %279 = vst [vmem:[%s261 + $0x20] sm:%s253] %v278
                  %v280 = vld [vmem:[%s260 + $0x24] sm:%s253]
                  %281 = vst [vmem:[%s261 + $0x24] sm:%s253] %v280
                  %v282 = vld [vmem:[%s260 + $0x28] sm:%s253]
                  %283 = vst [vmem:[%s261 + $0x28] sm:%s253] %v282
                  %v284 = vld [vmem:[%s260 + $0x58] sm:%s253]
                  %285 = vst [vmem:[%s261 + $0x2c] sm:%s253] %v284
                  %v286 = vld [vmem:[%s260 + $0x5c] sm:%s253]
                  %287 = vst [vmem:[%s261 + $0x30] sm:%s253] %v286
                  %v288 = vld [vmem:[%s260 + $0x60] sm:%s253]
                  %289 = vst [vmem:[%s261 + $0x34] sm:%s253] %v288
                  %v290 = vld [vmem:[%s260 + $0x64] sm:%s253]
                  %291 = vst [vmem:[%s261 + $0x38] sm:%s253] %v290
                  %v292 = vld [vmem:[%s260 + $0x68] sm:%s253]
                  %293 = vst [vmem:[%s261 + $0x3c] sm:%s253] %v292
                  %v294 = vld [vmem:[%s260 + $0x6c] sm:%s253]
                  %295 = vst [vmem:[%s261 + $0x40] sm:%s253] %v294
                  %v296 = vld [vmem:[%s260 + $0x70] sm:%s253]
                  %297 = vst [vmem:[%s261 + $0x44] sm:%s253] %v296
                  %v298 = vld [vmem:[%s260 + $0x74] sm:%s253]
                  %299 = vst [vmem:[%s261 + $0x48] sm:%s253] %v298
                  %v300 = vld [vmem:[%s260 + $0x78] sm:%s253]
                  %301 = vst [vmem:[%s261 + $0x4c] sm:%s253] %v300
                  %v302 = vld [vmem:[%s260 + $0x7c] sm:%s253]
                  %303 = vst [vmem:[%s261 + $0x50] sm:%s253] %v302
                  %v304 = vld [vmem:[%s260 + $0x80] sm:%s253]
                  %305 = vst [vmem:[%s261 + $0x54] sm:%s253] %v304
                  %v306 = vld [vmem:[%s260 + $0xb0] sm:%s253]
                  %307 = vst [vmem:[%s261 + $0x58] sm:%s253] %v306
                  %v308 = vld [vmem:[%s260 + $0xb4] sm:%s253]
                  %309 = vst [vmem:[%s261 + $0x5c] sm:%s253] %v308
                  %v310 = vld [vmem:[%s260 + $0xb8] sm:%s253]
                  %311 = vst [vmem:[%s261 + $0x60] sm:%s253] %v310
                  %v312 = vld [vmem:[%s260 + $0xbc] sm:%s253]
                  %313 = vst [vmem:[%s261 + $0x64] sm:%s253] %v312
                  %v314 = vld [vmem:[%s260 + $0xc0] sm:%s253]
                  %315 = vst [vmem:[%s261 + $0x68] sm:%s253] %v314
                  %v316 = vld [vmem:[%s260 + $0xc4] sm:%s253]
                  %317 = vst [vmem:[%s261 + $0x6c] sm:%s253] %v316
                  %v318 = vld [vmem:[%s260 + $0xc8] sm:%s253]
                  %319 = vst [vmem:[%s261 + $0x70] sm:%s253] %v318
                  %v320 = vld [vmem:[%s260 + $0xcc] sm:%s253]
                  %321 = vst [vmem:[%s261 + $0x74] sm:%s253] %v320
                  %v322 = vld [vmem:[%s260 + $0xd0] sm:%s253]
                  %323 = vst [vmem:[%s261 + $0x78] sm:%s253] %v322
                  %v324 = vld [vmem:[%s260 + $0xd4] sm:%s253]
                  %325 = vst [vmem:[%s261 + $0x7c] sm:%s253] %v324
                  %v326 = vld [vmem:[%s260 + $0xd8] sm:%s253]
                  %327 = vst [vmem:[%s261 + $0x80] sm:%s253] %v326
                  %v328 = vld [vmem:[%s260 + $0x108] sm:%s253]
                  %329 = vst [vmem:[%s261 + $0x84] sm:%s253] %v328
                  %v330 = vld [vmem:[%s260 + $0x10c] sm:%s253]
                  %331 = vst [vmem:[%s261 + $0x88] sm:%s253] %v330
                  %v332 = vld [vmem:[%s260 + $0x110] sm:%s253]
                  %333 = vst [vmem:[%s261 + $0x8c] sm:%s253] %v332
                  %v334 = vld [vmem:[%s260 + $0x114] sm:%s253]
                  %335 = vst [vmem:[%s261 + $0x90] sm:%s253] %v334
                  %v336 = vld [vmem:[%s260 + $0x118] sm:%s253]
                  %337 = vst [vmem:[%s261 + $0x94] sm:%s253] %v336
                  %v338 = vld [vmem:[%s260 + $0x11c] sm:%s253]
                  %339 = vst [vmem:[%s261 + $0x98] sm:%s253] %v338
                  %v340 = vld [vmem:[%s260 + $0x120] sm:%s253]
                  %341 = vst [vmem:[%s261 + $0x9c] sm:%s253] %v340
                  %v342 = vld [vmem:[%s260 + $0x124] sm:%s253]
                  %343 = vst [vmem:[%s261 + $0xa0] sm:%s253] %v342
                  %v344 = vld [vmem:[%s260 + $0x128] sm:%s253]
                  %345 = vst [vmem:[%s261 + $0xa4] sm:%s253] %v344
                  %v346 = vld [vmem:[%s260 + $0x12c] sm:%s253]
                  %347 = vst [vmem:[%s261 + $0xa8] sm:%s253] %v346
                  %v348 = vld [vmem:[%s260 + $0x130] sm:%s253]
                  %349 = vst [vmem:[%s261 + $0xac] sm:%s253] %v348
                $region63: #{music_genre_forward.6} parent=50 // loop_footer
                  %s259 = sadd.s32 1, %s255
                $region64: #{music_genre_forward.6} parent=50 // loop_footer_branch
                  %254 = sbr.rel target = $region60
                $region65: #{music_genre_forward.6} parent=50 // loop_exit
                  _
              $region51: #{music_genre_forward.6} parent=35 // pred_fallthru
                _
            $region36: #{music_genre_forward.6} parent=31 // pred_fallthru
              _
            // Predicated region
            $region37: #{music_genre_forward.6} parent=31 // pred_check
              _
            $region38: #{music_genre_forward.6} parent=31 // pred_check_branch
              %143 = sbr.rel (0) target = $region40
            $region39: #{music_genre_forward.6} parent=31 // pred_region
              %s145 = ssub.s32 16, 1
              loop: start=0, step=1, limit=1
              $region41: #{music_genre_forward.6} parent=39 // loop_pre_header
                _
              $region42: #{music_genre_forward.6} parent=39 // loop_header
                %s147 = sphi 0, %s151
                %p148 = scmp.ge.s32.totalorder %s147, 1
                %s152 = sphi %s137, %s137
                %s153 = sphi %s134, %s134
              $region43: #{music_genre_forward.6} parent=39 // loop_header_branch
                %150 = sbr.rel (%p148) target = $region47
              $region44: #{music_genre_forward.6} parent=39 // loop_body
                %v154 = vld [vmem:[%s152] sm:%s145]
                %155 = vst [vmem:[%s153] sm:%s145] %v154
                %v156 = vld [vmem:[%s152 + $0x4] sm:%s145]
                %157 = vst [vmem:[%s153 + $0x4] sm:%s145] %v156
                %v158 = vld [vmem:[%s152 + $0x8] sm:%s145]
                %159 = vst [vmem:[%s153 + $0x8] sm:%s145] %v158
                %v160 = vld [vmem:[%s152 + $0xc] sm:%s145]
                %161 = vst [vmem:[%s153 + $0xc] sm:%s145] %v160
                %v162 = vld [vmem:[%s152 + $0x10] sm:%s145]
                %163 = vst [vmem:[%s153 + $0x10] sm:%s145] %v162
                %v164 = vld [vmem:[%s152 + $0x14] sm:%s145]
                %165 = vst [vmem:[%s153 + $0x14] sm:%s145] %v164
                %v166 = vld [vmem:[%s152 + $0x18] sm:%s145]
                %167 = vst [vmem:[%s153 + $0x18] sm:%s145] %v166
                %v168 = vld [vmem:[%s152 + $0x1c] sm:%s145]
                %169 = vst [vmem:[%s153 + $0x1c] sm:%s145] %v168
                %v170 = vld [vmem:[%s152 + $0x20] sm:%s145]
                %171 = vst [vmem:[%s153 + $0x20] sm:%s145] %v170
                %v172 = vld [vmem:[%s152 + $0x24] sm:%s145]
                %173 = vst [vmem:[%s153 + $0x24] sm:%s145] %v172
                %v174 = vld [vmem:[%s152 + $0x28] sm:%s145]
                %175 = vst [vmem:[%s153 + $0x28] sm:%s145] %v174
                %v176 = vld [vmem:[%s152 + $0x58] sm:%s145]
                %177 = vst [vmem:[%s153 + $0x2c] sm:%s145] %v176
                %v178 = vld [vmem:[%s152 + $0x5c] sm:%s145]
                %179 = vst [vmem:[%s153 + $0x30] sm:%s145] %v178
                %v180 = vld [vmem:[%s152 + $0x60] sm:%s145]
                %181 = vst [vmem:[%s153 + $0x34] sm:%s145] %v180
                %v182 = vld [vmem:[%s152 + $0x64] sm:%s145]
                %183 = vst [vmem:[%s153 + $0x38] sm:%s145] %v182
                %v184 = vld [vmem:[%s152 + $0x68] sm:%s145]
                %185 = vst [vmem:[%s153 + $0x3c] sm:%s145] %v184
                %v186 = vld [vmem:[%s152 + $0x6c] sm:%s145]
                %187 = vst [vmem:[%s153 + $0x40] sm:%s145] %v186
                %v188 = vld [vmem:[%s152 + $0x70] sm:%s145]
                %189 = vst [vmem:[%s153 + $0x44] sm:%s145] %v188
                %v190 = vld [vmem:[%s152 + $0x74] sm:%s145]
                %191 = vst [vmem:[%s153 + $0x48] sm:%s145] %v190
                %v192 = vld [vmem:[%s152 + $0x78] sm:%s145]
                %193 = vst [vmem:[%s153 + $0x4c] sm:%s145] %v192
                %v194 = vld [vmem:[%s152 + $0x7c] sm:%s145]
                %195 = vst [vmem:[%s153 + $0x50] sm:%s145] %v194
                %v196 = vld [vmem:[%s152 + $0x80] sm:%s145]
                %197 = vst [vmem:[%s153 + $0x54] sm:%s145] %v196
                %v198 = vld [vmem:[%s152 + $0xb0] sm:%s145]
                %199 = vst [vmem:[%s153 + $0x58] sm:%s145] %v198
                %v200 = vld [vmem:[%s152 + $0xb4] sm:%s145]
                %201 = vst [vmem:[%s153 + $0x5c] sm:%s145] %v200
                %v202 = vld [vmem:[%s152 + $0xb8] sm:%s145]
                %203 = vst [vmem:[%s153 + $0x60] sm:%s145] %v202
                %v204 = vld [vmem:[%s152 + $0xbc] sm:%s145]
                %205 = vst [vmem:[%s153 + $0x64] sm:%s145] %v204
                %v206 = vld [vmem:[%s152 + $0xc0] sm:%s145]
                %207 = vst [vmem:[%s153 + $0x68] sm:%s145] %v206
                %v208 = vld [vmem:[%s152 + $0xc4] sm:%s145]
                %209 = vst [vmem:[%s153 + $0x6c] sm:%s145] %v208
                %v210 = vld [vmem:[%s152 + $0xc8] sm:%s145]
                %211 = vst [vmem:[%s153 + $0x70] sm:%s145] %v210
                %v212 = vld [vmem:[%s152 + $0xcc] sm:%s145]
                %213 = vst [vmem:[%s153 + $0x74] sm:%s145] %v212
                %v214 = vld [vmem:[%s152 + $0xd0] sm:%s145]
                %215 = vst [vmem:[%s153 + $0x78] sm:%s145] %v214
                %v216 = vld [vmem:[%s152 + $0xd4] sm:%s145]
                %217 = vst [vmem:[%s153 + $0x7c] sm:%s145] %v216
                %v218 = vld [vmem:[%s152 + $0xd8] sm:%s145]
                %219 = vst [vmem:[%s153 + $0x80] sm:%s145] %v218
                %v220 = vld [vmem:[%s152 + $0x108] sm:%s145]
                %221 = vst [vmem:[%s153 + $0x84] sm:%s145] %v220
                %v222 = vld [vmem:[%s152 + $0x10c] sm:%s145]
                %223 = vst [vmem:[%s153 + $0x88] sm:%s145] %v222
                %v224 = vld [vmem:[%s152 + $0x110] sm:%s145]
                %225 = vst [vmem:[%s153 + $0x8c] sm:%s145] %v224
                %v226 = vld [vmem:[%s152 + $0x114] sm:%s145]
                %227 = vst [vmem:[%s153 + $0x90] sm:%s145] %v226
                %v228 = vld [vmem:[%s152 + $0x118] sm:%s145]
                %229 = vst [vmem:[%s153 + $0x94] sm:%s145] %v228
                %v230 = vld [vmem:[%s152 + $0x11c] sm:%s145]
                %231 = vst [vmem:[%s153 + $0x98] sm:%s145] %v230
                %v232 = vld [vmem:[%s152 + $0x120] sm:%s145]
                %233 = vst [vmem:[%s153 + $0x9c] sm:%s145] %v232
                %v234 = vld [vmem:[%s152 + $0x124] sm:%s145]
                %235 = vst [vmem:[%s153 + $0xa0] sm:%s145] %v234
                %v236 = vld [vmem:[%s152 + $0x128] sm:%s145]
                %237 = vst [vmem:[%s153 + $0xa4] sm:%s145] %v236
                %v238 = vld [vmem:[%s152 + $0x12c] sm:%s145]
                %239 = vst [vmem:[%s153 + $0xa8] sm:%s145] %v238
                %v240 = vld [vmem:[%s152 + $0x130] sm:%s145]
                %241 = vst [vmem:[%s153 + $0xac] sm:%s145] %v240
              $region45: #{music_genre_forward.6} parent=39 // loop_footer
                %s151 = sadd.s32 1, %s147
              $region46: #{music_genre_forward.6} parent=39 // loop_footer_branch
                %146 = sbr.rel target = $region42
              $region47: #{music_genre_forward.6} parent=39 // loop_exit
                _
            $region40: #{music_genre_forward.6} parent=31 // pred_fallthru
              _
          $region32: #{music_genre_forward.6} parent=27 // pred_fallthru
            _
          %350 = vnop
        $region28: #{music_genre_forward.6} parent=23 // pred_fallthru
          _
      $region24: #{music_genre_forward.6} parent=5 // pred_fallthru
        _
      %p351 = scmp.le.s32.totalorder 1, %s9
      %p352 = scmp.lt.s32.totalorder %s9, 3
      %p353 = pnand %p351, %p352
      %p354 = pneg %p353
      // Predicated region
      $region66: #{music_genre_forward.6} parent=5 // pred_check
        _
      $region67: #{music_genre_forward.6} parent=5 // pred_check_branch
        %356 = sbr.rel (%p353) target = $region69
      $region68: #{music_genre_forward.6} parent=5 // pred_region
        %s357 = ssub.s32 %s9, 1
        %s358 = sand.u32 %s22, 1
        %s359 = sand.u32 %s22, 1
        %s360 = smul.addr %s359, 176
        %s361 = scalar_lea.vmem [#allocation2], %s360
        // Predicated region
        $region70: #{music_genre_forward.6} parent=68 // pred_check
          %p362 = pneg %p35
        $region71: #{music_genre_forward.6} parent=68 // pred_check_branch
          %364 = sbr.rel (%p362) target = $region73
        $region72: #{music_genre_forward.6} parent=68 // pred_region
          _
        $region73: #{music_genre_forward.6} parent=68 // pred_fallthru
          _
        %s365 = sand.u32 %s22, 1
        %s366 = sand.u32 %s22, 1
        %s367 = smul.addr %s366, 176
        %s368 = scalar_lea.vmem [#allocation2], %s367
        %p369 = pneg %p35
        %p370 = pneg %p32
        %p371 = pneg %p56
        %p372 = pneg %p53
        %p373 = pneg %p77
        %p374 = pneg %p74
        %p375 = pneg %p103
        %p376 = pneg %p100
        %p377 = scmp.lt.s32.totalorder %s14, 1
        %s378 = scalar_select %p377, %s14, 1
        %s379 = smul.addr %s378, 9
        %s380 = smul.addr %s379, 4
        %s381 = scalar_lea.vmem %s3, %s380
        %p382 = scmp.lt.s32.totalorder %s14, 1
        %s383 = scalar_select %p382, %s14, 1
        %s384 = smul.addr %s383, 9
        %s385 = smul.addr %s384, 4
        %s386 = scalar_lea.vmem %s3, %s385
        %v387 = vld [vmem:[%s361] sm:$0xf]
        %v388 = vld [vmem:[%s361 + $0x4] sm:$0xf]
        %v389 = vld [vmem:[%s361 + $0x8] sm:$0xf]
        %v390 = vld [vmem:[%s361 + $0xc] sm:$0xf]
        %v391 = vld [vmem:[%s361 + $0x10] sm:$0xf]
        %v392 = vld [vmem:[%s361 + $0x14] sm:$0xf]
        %v393 = vld [vmem:[%s361 + $0x18] sm:$0xf]
        %v394 = vld [vmem:[%s361 + $0x1c] sm:$0xf]
        %v395 = vld [vmem:[%s361 + $0x20] sm:$0xf]
        %v396 = vld [vmem:[%s1] sm:$0xf]
        %v397 = vld [vmem:[%s1 + $0x4] sm:$0xf]
        %v398 = vld [vmem:[%s1 + $0x8] sm:$0xf]
        %v399 = vld [vmem:[%s1 + $0xc] sm:$0xf]
        %v400 = vld [vmem:[%s1 + $0x10] sm:$0xf]
        %v401 = vld [vmem:[%s1 + $0x14] sm:$0xf]
        %v402 = vld [vmem:[%s1 + $0x18] sm:$0xf]
        %v403 = vld [vmem:[%s1 + $0x1c] sm:$0xf]
        %v404 = vld [vmem:[%s1 + $0x20] sm:$0xf]
        %v405 = vld [vmem:[%s1 + $0x24] sm:$0xf]
        %v406 = vld [vmem:[%s1 + $0x28] sm:$0xf]
        %v407 = vld [vmem:[%s1 + $0x2c] sm:$0xf]
        %v408 = vld [vmem:[%s1 + $0x30] sm:$0xf]
        %v409 = vld [vmem:[%s1 + $0x34] sm:$0xf]
        %v410 = vld [vmem:[%s1 + $0x38] sm:$0xf]
        %v411 = vld [vmem:[%s1 + $0x3c] sm:$0xf]
        %s412 = scalar_lea.vmem %s361, 44 [#allocation2]
        %v413 = vld [vmem:[%s412] sm:$0xf]
        %v414 = vld [vmem:[%s412 + $0x4] sm:$0xf]
        %v415 = vld [vmem:[%s412 + $0x8] sm:$0xf]
        %v416 = vld [vmem:[%s412 + $0xc] sm:$0xf]
        %v417 = vld [vmem:[%s412 + $0x10] sm:$0xf]
        %v418 = vld [vmem:[%s412 + $0x14] sm:$0xf]
        %v419 = vld [vmem:[%s412 + $0x18] sm:$0xf]
        %v420 = vld [vmem:[%s412 + $0x1c] sm:$0xf]
        %v421 = vld [vmem:[%s412 + $0x20] sm:$0xf]
        %s422 = scalar_lea.vmem %s1, 64
        %v423 = vld [vmem:[%s422] sm:$0xf]
        %v424 = vld [vmem:[%s422 + $0x4] sm:$0xf]
        %v425 = vld [vmem:[%s422 + $0x8] sm:$0xf]
        %v426 = vld [vmem:[%s422 + $0xc] sm:$0xf]
        %v427 = vld [vmem:[%s422 + $0x10] sm:$0xf]
        %v428 = vld [vmem:[%s422 + $0x14] sm:$0xf]
        %v429 = vld [vmem:[%s422 + $0x18] sm:$0xf]
        %v430 = vld [vmem:[%s422 + $0x1c] sm:$0xf]
        %v431 = vld [vmem:[%s422 + $0x20] sm:$0xf]
        %v432 = vld [vmem:[%s422 + $0x24] sm:$0xf]
        %v433 = vld [vmem:[%s422 + $0x28] sm:$0xf]
        %v434 = vld [vmem:[%s422 + $0x2c] sm:$0xf]
        %v435 = vld [vmem:[%s422 + $0x30] sm:$0xf]
        %v436 = vld [vmem:[%s422 + $0x34] sm:$0xf]
        %v437 = vld [vmem:[%s422 + $0x38] sm:$0xf]
        %v438 = vld [vmem:[%s422 + $0x3c] sm:$0xf]
        %v448 = vunpack.c.l.b16 %v413
        %v449 = vunpack.c.l.b16 %v414
        %v450 = vunpack.c.l.b16 %v415
        %v451 = vunpack.c.l.b16 %v416
        %v452 = vunpack.c.l.b16 %v417
        %v453 = vunpack.c.l.b16 %v418
        %v454 = vunpack.c.l.b16 %v419
        %v455 = vunpack.c.l.b16 %v420
        %v456 = vunpack.c.l.b16 %v421
        %v457 = vpack.c.b16 %v449, %v448
        %v458 = vpack.c.b16 %v451, %v450
        %v459 = vpack.c.b16 %v453, %v452
        %v460 = vpack.c.b16 %v455, %v454
        %v461 = vpack.c.b16 %v456, %v456
        %v483 = vunpack.c.l.b16 %v423
        %v484 = vunpack.c.l.b16 %v424
        %v485 = vunpack.c.l.b16 %v425
        %v486 = vunpack.c.l.b16 %v426
        %v487 = vunpack.c.l.b16 %v427
        %v488 = vunpack.c.l.b16 %v428
        %v489 = vunpack.c.l.b16 %v429
        %v490 = vunpack.c.l.b16 %v430
        %v491 = vunpack.c.l.b16 %v431
        %v492 = vunpack.c.l.b16 %v432
        %v493 = vunpack.c.l.b16 %v433
        %v494 = vunpack.c.l.b16 %v434
        %v495 = vunpack.c.l.b16 %v435
        %v496 = vunpack.c.l.b16 %v436
        %v497 = vunpack.c.l.b16 %v437
        %v498 = vunpack.c.l.b16 %v438
        %v499 = vpack.c.b16 %v484, %v483
        %v500 = vpack.c.b16 %v486, %v485
        %v501 = vpack.c.b16 %v488, %v487
        %v502 = vpack.c.b16 %v490, %v489
        %v503 = vpack.c.b16 %v492, %v491
        %v504 = vpack.c.b16 %v494, %v493
        %v505 = vpack.c.b16 %v496, %v495
        %v506 = vpack.c.b16 %v498, %v497
        %515 = vmatpush.bf16.msra.mxu0 %v506
        %516 = vmatpush.bf16.msra.mxu0 %v505
        %517 = vmatpush.bf16.msra.mxu0 %v504
        %518 = vmatpush.bf16.msra.mxu0 %v503
        %519 = vmatpush.bf16.msra.mxu0 %v502
        %520 = vmatpush.bf16.msra.mxu0 %v501
        %521 = vmatpush.bf16.msra.mxu0 %v500
        %522 = vmatpush.bf16.msra.mxu0 %v499
        %523 = vmatmul.bf16.gmra.mxu0 %v457
        %v524 = vpop.f32.mrf.mxu0
        %v525 = vadd.f32 0.0, %v524
        %v526 = vpop.f32.mrf.mxu0
        %v527 = vadd.f32 0.0, %v526
        %528 = vmatmul.bf16.gmra.mxu0 %v458
        %v529 = vpop.f32.mrf.mxu0
        %v530 = vadd.f32 0.0, %v529
        %v531 = vpop.f32.mrf.mxu0
        %v532 = vadd.f32 0.0, %v531
        %533 = vmatmul.bf16.gmra.mxu0 %v459
        %v534 = vpop.f32.mrf.mxu0
        %v535 = vadd.f32 0.0, %v534
        %v536 = vpop.f32.mrf.mxu0
        %v537 = vadd.f32 0.0, %v536
        %538 = vmatmul.bf16.gmra.mxu0 %v460
        %v539 = vpop.f32.mrf.mxu0
        %v540 = vadd.f32 0.0, %v539
        %v541 = vpop.f32.mrf.mxu0
        %v542 = vadd.f32 0.0, %v541
        %543 = vmatmul.bf16.gmra.mxu0 %v461
        %v544 = vpop.f32.mrf.mxu0
        %v545 = vadd.f32 0.0, %v544
        %v546 = vpop.f32.mrf.mxu0
        %547 = vdwg.mxu0
        %v557 = vunpack.c.l.b16 %v387
        %v558 = vunpack.c.l.b16 %v388
        %v559 = vunpack.c.l.b16 %v389
        %v560 = vunpack.c.l.b16 %v390
        %v561 = vunpack.c.l.b16 %v391
        %v562 = vunpack.c.l.b16 %v392
        %v563 = vunpack.c.l.b16 %v393
        %v564 = vunpack.c.l.b16 %v394
        %v565 = vunpack.c.l.b16 %v395
        %v566 = vpack.c.b16 %v558, %v557
        %v567 = vpack.c.b16 %v560, %v559
        %v568 = vpack.c.b16 %v562, %v561
        %v569 = vpack.c.b16 %v564, %v563
        %v570 = vpack.c.b16 %v565, %v565
        %v592 = vunpack.c.l.b16 %v396
        %v593 = vunpack.c.l.b16 %v397
        %v594 = vunpack.c.l.b16 %v398
        %v595 = vunpack.c.l.b16 %v399
        %v596 = vunpack.c.l.b16 %v400
        %v597 = vunpack.c.l.b16 %v401
        %v598 = vunpack.c.l.b16 %v402
        %v599 = vunpack.c.l.b16 %v403
        %v600 = vunpack.c.l.b16 %v404
        %v601 = vunpack.c.l.b16 %v405
        %v602 = vunpack.c.l.b16 %v406
        %v603 = vunpack.c.l.b16 %v407
        %v604 = vunpack.c.l.b16 %v408
        %v605 = vunpack.c.l.b16 %v409
        %v606 = vunpack.c.l.b16 %v410
        %v607 = vunpack.c.l.b16 %v411
        %v608 = vpack.c.b16 %v593, %v592
        %v609 = vpack.c.b16 %v595, %v594
        %v610 = vpack.c.b16 %v597, %v596
        %v611 = vpack.c.b16 %v599, %v598
        %v612 = vpack.c.b16 %v601, %v600
        %v613 = vpack.c.b16 %v603, %v602
        %v614 = vpack.c.b16 %v605, %v604
        %v615 = vpack.c.b16 %v607, %v606
        %624 = vmatpush.bf16.msra.mxu0 %v615
        %625 = vmatpush.bf16.msra.mxu0 %v614
        %626 = vmatpush.bf16.msra.mxu0 %v613
        %627 = vmatpush.bf16.msra.mxu0 %v612
        %628 = vmatpush.bf16.msra.mxu0 %v611
        %629 = vmatpush.bf16.msra.mxu0 %v610
        %630 = vmatpush.bf16.msra.mxu0 %v609
        %631 = vmatpush.bf16.msra.mxu0 %v608
        %632 = vmatmul.bf16.gmra.mxu0 %v566
        %v633 = vpop.f32.mrf.mxu0
        %v634 = vadd.f32 %v525, %v633
        %v635 = vpop.f32.mrf.mxu0
        %v636 = vadd.f32 %v527, %v635
        %637 = vmatmul.bf16.gmra.mxu0 %v567
        %v638 = vpop.f32.mrf.mxu0
        %v639 = vadd.f32 %v530, %v638
        %v640 = vpop.f32.mrf.mxu0
        %v641 = vadd.f32 %v532, %v640
        %642 = vmatmul.bf16.gmra.mxu0 %v568
        %v643 = vpop.f32.mrf.mxu0
        %v644 = vadd.f32 %v535, %v643
        %v645 = vpop.f32.mrf.mxu0
        %v646 = vadd.f32 %v537, %v645
        %647 = vmatmul.bf16.gmra.mxu0 %v569
        %v648 = vpop.f32.mrf.mxu0
        %v649 = vadd.f32 %v540, %v648
        %v650 = vpop.f32.mrf.mxu0
        %v651 = vadd.f32 %v542, %v650
        %652 = vmatmul.bf16.gmra.mxu0 %v570
        %v653 = vpop.f32.mrf.mxu0
        %v654 = vadd.f32 %v545, %v653
        %v655 = vpop.f32.mrf.mxu0
        %656 = vdwg.mxu0
        %v657 = vld [vmem:[%s361] sm:$0xf]
        %v658 = vld [vmem:[%s361 + $0x4] sm:$0xf]
        %v659 = vld [vmem:[%s361 + $0x8] sm:$0xf]
        %v660 = vld [vmem:[%s361 + $0xc] sm:$0xf]
        %v661 = vld [vmem:[%s361 + $0x10] sm:$0xf]
        %v662 = vld [vmem:[%s361 + $0x14] sm:$0xf]
        %v663 = vld [vmem:[%s361 + $0x18] sm:$0xf]
        %v664 = vld [vmem:[%s361 + $0x1c] sm:$0xf]
        %v665 = vld [vmem:[%s361 + $0x20] sm:$0xf]
        %v666 = vld [vmem:[%s361 + $0x24] sm:$0x1]
        %s667 = scalar_lea.vmem %s1, 128
        %v668 = vld [vmem:[%s667] sm:$0xf]
        %v669 = vld [vmem:[%s667 + $0x4] sm:$0xf]
        %v670 = vld [vmem:[%s667 + $0x8] sm:$0xf]
        %v671 = vld [vmem:[%s667 + $0xc] sm:$0xf]
        %v672 = vld [vmem:[%s667 + $0x10] sm:$0xf]
        %v673 = vld [vmem:[%s667 + $0x14] sm:$0xf]
        %v674 = vld [vmem:[%s667 + $0x18] sm:$0xf]
        %v675 = vld [vmem:[%s667 + $0x1c] sm:$0xf]
        %v676 = vld [vmem:[%s667 + $0x20] sm:$0xf]
        %v677 = vld [vmem:[%s667 + $0x24] sm:$0xf]
        %v678 = vld [vmem:[%s667 + $0x28] sm:$0xf]
        %v679 = vld [vmem:[%s667 + $0x2c] sm:$0xf]
        %v680 = vld [vmem:[%s667 + $0x30] sm:$0xf]
        %v681 = vld [vmem:[%s667 + $0x34] sm:$0xf]
        %v682 = vld [vmem:[%s667 + $0x38] sm:$0xf]
        %v683 = vld [vmem:[%s667 + $0x3c] sm:$0xf]
        %v694 = vunpack.c.l.b16 %v657
        %v695 = vunpack.c.l.b16 %v658
        %v696 = vunpack.c.l.b16 %v659
        %v697 = vunpack.c.l.b16 %v660
        %v698 = vunpack.c.l.b16 %v661
        %v699 = vunpack.c.l.b16 %v662
        %v700 = vunpack.c.l.b16 %v663
        %v701 = vunpack.c.l.b16 %v664
        %v702 = vunpack.c.l.b16 %v665
        %v703 = vunpack.c.l.b16 %v666
        %v704 = vpack.c.b16 %v695, %v694
        %v705 = vpack.c.b16 %v697, %v696
        %v706 = vpack.c.b16 %v699, %v698
        %v707 = vpack.c.b16 %v701, %v700
        %v708 = vpack.c.b16 %v703, %v702
        %vm709 = vsmask.f32 7424
        %v711 = vshrl.u32 %v704, 16
        %v713 = vshll.u32 %v704, 16
        %v715 = vrot.slane %v713, 1
        %v716 = vor.u32 %v711, %v715
        %v718 = vshll.u32 %v705, 16
        %v720 = vrot.slane %v718, 1
        %v721 = vsel %vm709, %v716, %v720
        %v722 = vshrl.u32 %v705, 16
        %v724 = vor.u32 %v722, %v720
        %v726 = vshll.u32 %v706, 16
        %v728 = vrot.slane %v726, 1
        %v729 = vsel %vm709, %v724, %v728
        %v730 = vshrl.u32 %v706, 16
        %v732 = vor.u32 %v730, %v728
        %v734 = vshll.u32 %v707, 16
        %v736 = vrot.slane %v734, 1
        %v737 = vsel %vm709, %v732, %v736
        %v738 = vshrl.u32 %v707, 16
        %v740 = vor.u32 %v738, %v736
        %v742 = vshll.u32 %v708, 16
        %v744 = vrot.slane %v742, 1
        %v745 = vsel %vm709, %v740, %v744
        %v746 = vshrl.u32 %v708, 16
        %v748 = vor.u32 %v746, %v744
        %v770 = vunpack.c.l.b16 %v668
        %v771 = vunpack.c.l.b16 %v669
        %v772 = vunpack.c.l.b16 %v670
        %v773 = vunpack.c.l.b16 %v671
        %v774 = vunpack.c.l.b16 %v672
        %v775 = vunpack.c.l.b16 %v673
        %v776 = vunpack.c.l.b16 %v674
        %v777 = vunpack.c.l.b16 %v675
        %v778 = vunpack.c.l.b16 %v676
        %v779 = vunpack.c.l.b16 %v677
        %v780 = vunpack.c.l.b16 %v678
        %v781 = vunpack.c.l.b16 %v679
        %v782 = vunpack.c.l.b16 %v680
        %v783 = vunpack.c.l.b16 %v681
        %v784 = vunpack.c.l.b16 %v682
        %v785 = vunpack.c.l.b16 %v683
        %v786 = vpack.c.b16 %v771, %v770
        %v787 = vpack.c.b16 %v773, %v772
        %v788 = vpack.c.b16 %v775, %v774
        %v789 = vpack.c.b16 %v777, %v776
        %v790 = vpack.c.b16 %v779, %v778
        %v791 = vpack.c.b16 %v781, %v780
        %v792 = vpack.c.b16 %v783, %v782
        %v793 = vpack.c.b16 %v785, %v784
        %802 = vmatpush.bf16.msra.mxu0 %v793
        %803 = vmatpush.bf16.msra.mxu0 %v792
        %804 = vmatpush.bf16.msra.mxu0 %v791
        %805 = vmatpush.bf16.msra.mxu0 %v790
        %806 = vmatpush.bf16.msra.mxu0 %v789
        %807 = vmatpush.bf16.msra.mxu0 %v788
        %808 = vmatpush.bf16.msra.mxu0 %v787
        %809 = vmatpush.bf16.msra.mxu0 %v786
        %810 = vmatmul.bf16.gmra.mxu0 %v721
        %v811 = vpop.f32.mrf.mxu0
        %v812 = vadd.f32 0.0, %v811
        %v813 = vpop.f32.mrf.mxu0
        %v814 = vadd.f32 0.0, %v813
        %815 = vmatmul.bf16.gmra.mxu0 %v729
        %v816 = vpop.f32.mrf.mxu0
        %v817 = vadd.f32 0.0, %v816
        %v818 = vpop.f32.mrf.mxu0
        %v819 = vadd.f32 0.0, %v818
        %820 = vmatmul.bf16.gmra.mxu0 %v737
        %v821 = vpop.f32.mrf.mxu0
        %v822 = vadd.f32 0.0, %v821
        %v823 = vpop.f32.mrf.mxu0
        %v824 = vadd.f32 0.0, %v823
        %825 = vmatmul.bf16.gmra.mxu0 %v745
        %v826 = vpop.f32.mrf.mxu0
        %v827 = vadd.f32 0.0, %v826
        %v828 = vpop.f32.mrf.mxu0
        %v829 = vadd.f32 0.0, %v828
        %830 = vmatmul.bf16.gmra.mxu0 %v748
        %v831 = vpop.f32.mrf.mxu0
        %v832 = vadd.f32 0.0, %v831
        %v833 = vpop.f32.mrf.mxu0
        %834 = vdwg.mxu0
        %v835 = vadd.f32 %v634, %v812
        %v836 = vadd.f32 %v636, %v814
        %v837 = vadd.f32 %v639, %v817
        %v838 = vadd.f32 %v641, %v819
        %v839 = vadd.f32 %v644, %v822
        %v840 = vadd.f32 %v646, %v824
        %v841 = vadd.f32 %v649, %v827
        %v842 = vadd.f32 %v651, %v829
        %v843 = vadd.f32 %v654, %v832
        %s844 = scalar_lea.vmem %s361, 88 [#allocation2]
        %v845 = vld [vmem:[%s844] sm:$0xf]
        %v846 = vld [vmem:[%s844 + $0x4] sm:$0xf]
        %v847 = vld [vmem:[%s844 + $0x8] sm:$0xf]
        %v848 = vld [vmem:[%s844 + $0xc] sm:$0xf]
        %v849 = vld [vmem:[%s844 + $0x10] sm:$0xf]
        %v850 = vld [vmem:[%s844 + $0x14] sm:$0xf]
        %v851 = vld [vmem:[%s844 + $0x18] sm:$0xf]
        %v852 = vld [vmem:[%s844 + $0x1c] sm:$0xf]
        %v853 = vld [vmem:[%s844 + $0x20] sm:$0xf]
        %s854 = scalar_lea.vmem %s1, 192
        %v855 = vld [vmem:[%s854] sm:$0xf]
        %v856 = vld [vmem:[%s854 + $0x4] sm:$0xf]
        %v857 = vld [vmem:[%s854 + $0x8] sm:$0xf]
        %v858 = vld [vmem:[%s854 + $0xc] sm:$0xf]
        %v859 = vld [vmem:[%s854 + $0x10] sm:$0xf]
        %v860 = vld [vmem:[%s854 + $0x14] sm:$0xf]
        %v861 = vld [vmem:[%s854 + $0x18] sm:$0xf]
        %v862 = vld [vmem:[%s854 + $0x1c] sm:$0xf]
        %v863 = vld [vmem:[%s854 + $0x20] sm:$0xf]
        %v864 = vld [vmem:[%s854 + $0x24] sm:$0xf]
        %v865 = vld [vmem:[%s854 + $0x28] sm:$0xf]
        %v866 = vld [vmem:[%s854 + $0x2c] sm:$0xf]
        %v867 = vld [vmem:[%s854 + $0x30] sm:$0xf]
        %v868 = vld [vmem:[%s854 + $0x34] sm:$0xf]
        %v869 = vld [vmem:[%s854 + $0x38] sm:$0xf]
        %v870 = vld [vmem:[%s854 + $0x3c] sm:$0xf]
        %v880 = vunpack.c.l.b16 %v845
        %v881 = vunpack.c.l.b16 %v846
        %v882 = vunpack.c.l.b16 %v847
        %v883 = vunpack.c.l.b16 %v848
        %v884 = vunpack.c.l.b16 %v849
        %v885 = vunpack.c.l.b16 %v850
        %v886 = vunpack.c.l.b16 %v851
        %v887 = vunpack.c.l.b16 %v852
        %v888 = vunpack.c.l.b16 %v853
        %v889 = vpack.c.b16 %v881, %v880
        %v890 = vpack.c.b16 %v883, %v882
        %v891 = vpack.c.b16 %v885, %v884
        %v892 = vpack.c.b16 %v887, %v886
        %v893 = vpack.c.b16 %v888, %v888
        %v915 = vunpack.c.l.b16 %v855
        %v916 = vunpack.c.l.b16 %v856
        %v917 = vunpack.c.l.b16 %v857
        %v918 = vunpack.c.l.b16 %v858
        %v919 = vunpack.c.l.b16 %v859
        %v920 = vunpack.c.l.b16 %v860
        %v921 = vunpack.c.l.b16 %v861
        %v922 = vunpack.c.l.b16 %v862
        %v923 = vunpack.c.l.b16 %v863
        %v924 = vunpack.c.l.b16 %v864
        %v925 = vunpack.c.l.b16 %v865
        %v926 = vunpack.c.l.b16 %v866
        %v927 = vunpack.c.l.b16 %v867
        %v928 = vunpack.c.l.b16 %v868
        %v929 = vunpack.c.l.b16 %v869
        %v930 = vunpack.c.l.b16 %v870
        %v931 = vpack.c.b16 %v916, %v915
        %v932 = vpack.c.b16 %v918, %v917
        %v933 = vpack.c.b16 %v920, %v919
        %v934 = vpack.c.b16 %v922, %v921
        %v935 = vpack.c.b16 %v924, %v923
        %v936 = vpack.c.b16 %v926, %v925
        %v937 = vpack.c.b16 %v928, %v927
        %v938 = vpack.c.b16 %v930, %v929
        %947 = vmatpush.bf16.msra.mxu0 %v938
        %948 = vmatpush.bf16.msra.mxu0 %v937
        %949 = vmatpush.bf16.msra.mxu0 %v936
        %950 = vmatpush.bf16.msra.mxu0 %v935
        %951 = vmatpush.bf16.msra.mxu0 %v934
        %952 = vmatpush.bf16.msra.mxu0 %v933
        %953 = vmatpush.bf16.msra.mxu0 %v932
        %954 = vmatpush.bf16.msra.mxu0 %v931
        %955 = vmatmul.bf16.gmra.mxu0 %v889
        %v956 = vpop.f32.mrf.mxu0
        %v957 = vadd.f32 0.0, %v956
        %v958 = vpop.f32.mrf.mxu0
        %v959 = vadd.f32 0.0, %v958
        %960 = vmatmul.bf16.gmra.mxu0 %v890
        %v961 = vpop.f32.mrf.mxu0
        %v962 = vadd.f32 0.0, %v961
        %v963 = vpop.f32.mrf.mxu0
        %v964 = vadd.f32 0.0, %v963
        %965 = vmatmul.bf16.gmra.mxu0 %v891
        %v966 = vpop.f32.mrf.mxu0
        %v967 = vadd.f32 0.0, %v966
        %v968 = vpop.f32.mrf.mxu0
        %v969 = vadd.f32 0.0, %v968
        %970 = vmatmul.bf16.gmra.mxu0 %v892
        %v971 = vpop.f32.mrf.mxu0
        %v972 = vadd.f32 0.0, %v971
        %v973 = vpop.f32.mrf.mxu0
        %v974 = vadd.f32 0.0, %v973
        %975 = vmatmul.bf16.gmra.mxu0 %v893
        %v976 = vpop.f32.mrf.mxu0
        %v977 = vadd.f32 0.0, %v976
        %v978 = vpop.f32.mrf.mxu0
        %979 = vdwg.mxu0
        %v980 = vadd.f32 %v835, %v957
        %v981 = vadd.f32 %v836, %v959
        %v982 = vadd.f32 %v837, %v962
        %v983 = vadd.f32 %v838, %v964
        %v984 = vadd.f32 %v839, %v967
        %v985 = vadd.f32 %v840, %v969
        %v986 = vadd.f32 %v841, %v972
        %v987 = vadd.f32 %v842, %v974
        %v988 = vadd.f32 %v843, %v977
        %s989 = scalar_lea.vmem %s361, 132 [#allocation2]
        %v990 = vld [vmem:[%s989] sm:$0xf]
        %v991 = vld [vmem:[%s989 + $0x4] sm:$0xf]
        %v992 = vld [vmem:[%s989 + $0x8] sm:$0xf]
        %v993 = vld [vmem:[%s989 + $0xc] sm:$0xf]
        %v994 = vld [vmem:[%s989 + $0x10] sm:$0xf]
        %v995 = vld [vmem:[%s989 + $0x14] sm:$0xf]
        %v996 = vld [vmem:[%s989 + $0x18] sm:$0xf]
        %v997 = vld [vmem:[%s989 + $0x1c] sm:$0xf]
        %v998 = vld [vmem:[%s989 + $0x20] sm:$0xf]
        %s999 = scalar_lea.vmem %s1, 256
        %v1000 = vld [vmem:[%s999] sm:$0xf]
        %v1001 = vld [vmem:[%s999 + $0x4] sm:$0xf]
        %v1002 = vld [vmem:[%s999 + $0x8] sm:$0xf]
        %v1003 = vld [vmem:[%s999 + $0xc] sm:$0xf]
        %v1004 = vld [vmem:[%s999 + $0x10] sm:$0xf]
        %v1005 = vld [vmem:[%s999 + $0x14] sm:$0xf]
        %v1006 = vld [vmem:[%s999 + $0x18] sm:$0xf]
        %v1007 = vld [vmem:[%s999 + $0x1c] sm:$0xf]
        %v1008 = vld [vmem:[%s999 + $0x20] sm:$0xf]
        %v1009 = vld [vmem:[%s999 + $0x24] sm:$0xf]
        %v1010 = vld [vmem:[%s999 + $0x28] sm:$0xf]
        %v1011 = vld [vmem:[%s999 + $0x2c] sm:$0xf]
        %v1012 = vld [vmem:[%s999 + $0x30] sm:$0xf]
        %v1013 = vld [vmem:[%s999 + $0x34] sm:$0xf]
        %v1014 = vld [vmem:[%s999 + $0x38] sm:$0xf]
        %v1015 = vld [vmem:[%s999 + $0x3c] sm:$0xf]
        %v1025 = vunpack.c.l.b16 %v990
        %v1026 = vunpack.c.l.b16 %v991
        %v1027 = vunpack.c.l.b16 %v992
        %v1028 = vunpack.c.l.b16 %v993
        %v1029 = vunpack.c.l.b16 %v994
        %v1030 = vunpack.c.l.b16 %v995
        %v1031 = vunpack.c.l.b16 %v996
        %v1032 = vunpack.c.l.b16 %v997
        %v1033 = vunpack.c.l.b16 %v998
        %v1034 = vpack.c.b16 %v1026, %v1025
        %v1035 = vpack.c.b16 %v1028, %v1027
        %v1036 = vpack.c.b16 %v1030, %v1029
        %v1037 = vpack.c.b16 %v1032, %v1031
        %v1038 = vpack.c.b16 %v1033, %v1033
        %v1060 = vunpack.c.l.b16 %v1000
        %v1061 = vunpack.c.l.b16 %v1001
        %v1062 = vunpack.c.l.b16 %v1002
        %v1063 = vunpack.c.l.b16 %v1003
        %v1064 = vunpack.c.l.b16 %v1004
        %v1065 = vunpack.c.l.b16 %v1005
        %v1066 = vunpack.c.l.b16 %v1006
        %v1067 = vunpack.c.l.b16 %v1007
        %v1068 = vunpack.c.l.b16 %v1008
        %v1069 = vunpack.c.l.b16 %v1009
        %v1070 = vunpack.c.l.b16 %v1010
        %v1071 = vunpack.c.l.b16 %v1011
        %v1072 = vunpack.c.l.b16 %v1012
        %v1073 = vunpack.c.l.b16 %v1013
        %v1074 = vunpack.c.l.b16 %v1014
        %v1075 = vunpack.c.l.b16 %v1015
        %v1076 = vpack.c.b16 %v1061, %v1060
        %v1077 = vpack.c.b16 %v1063, %v1062
        %v1078 = vpack.c.b16 %v1065, %v1064
        %v1079 = vpack.c.b16 %v1067, %v1066
        %v1080 = vpack.c.b16 %v1069, %v1068
        %v1081 = vpack.c.b16 %v1071, %v1070
        %v1082 = vpack.c.b16 %v1073, %v1072
        %v1083 = vpack.c.b16 %v1075, %v1074
        %1092 = vmatpush.bf16.msra.mxu0 %v1083
        %1093 = vmatpush.bf16.msra.mxu0 %v1082
        %1094 = vmatpush.bf16.msra.mxu0 %v1081
        %1095 = vmatpush.bf16.msra.mxu0 %v1080
        %1096 = vmatpush.bf16.msra.mxu0 %v1079
        %1097 = vmatpush.bf16.msra.mxu0 %v1078
        %1098 = vmatpush.bf16.msra.mxu0 %v1077
        %1099 = vmatpush.bf16.msra.mxu0 %v1076
        %1100 = vmatmul.bf16.gmra.mxu0 %v1034
        %v1101 = vpop.f32.mrf.mxu0
        %v1102 = vadd.f32 0.0, %v1101
        %v1103 = vpop.f32.mrf.mxu0
        %v1104 = vadd.f32 0.0, %v1103
        %1105 = vmatmul.bf16.gmra.mxu0 %v1035
        %v1106 = vpop.f32.mrf.mxu0
        %v1107 = vadd.f32 0.0, %v1106
        %v1108 = vpop.f32.mrf.mxu0
        %v1109 = vadd.f32 0.0, %v1108
        %1110 = vmatmul.bf16.gmra.mxu0 %v1036
        %v1111 = vpop.f32.mrf.mxu0
        %v1112 = vadd.f32 0.0, %v1111
        %v1113 = vpop.f32.mrf.mxu0
        %v1114 = vadd.f32 0.0, %v1113
        %1115 = vmatmul.bf16.gmra.mxu0 %v1037
        %v1116 = vpop.f32.mrf.mxu0
        %v1117 = vadd.f32 0.0, %v1116
        %v1118 = vpop.f32.mrf.mxu0
        %v1119 = vadd.f32 0.0, %v1118
        %1120 = vmatmul.bf16.gmra.mxu0 %v1038
        %v1121 = vpop.f32.mrf.mxu0
        %v1122 = vadd.f32 0.0, %v1121
        %v1123 = vpop.f32.mrf.mxu0
        %1124 = vdwg.mxu0
        %v1125 = vadd.f32 %v980, %v1102
        %v1126 = vadd.f32 %v981, %v1104
        %v1127 = vadd.f32 %v982, %v1107
        %v1128 = vadd.f32 %v983, %v1109
        %v1129 = vadd.f32 %v984, %v1112
        %v1130 = vadd.f32 %v985, %v1114
        %v1131 = vadd.f32 %v986, %v1117
        %v1132 = vadd.f32 %v987, %v1119
        %v1133 = vadd.f32 %v988, %v1122
        %v1134 = vld [vmem:[%s844] sm:$0xf]
        %v1135 = vld [vmem:[%s844 + $0x4] sm:$0xf]
        %v1136 = vld [vmem:[%s844 + $0x8] sm:$0xf]
        %v1137 = vld [vmem:[%s844 + $0xc] sm:$0xf]
        %v1138 = vld [vmem:[%s844 + $0x10] sm:$0xf]
        %v1139 = vld [vmem:[%s844 + $0x14] sm:$0xf]
        %v1140 = vld [vmem:[%s844 + $0x18] sm:$0xf]
        %v1141 = vld [vmem:[%s844 + $0x1c] sm:$0xf]
        %v1142 = vld [vmem:[%s844 + $0x20] sm:$0xf]
        %v1143 = vld [vmem:[%s844 + $0x24] sm:$0x1]
        %s1144 = scalar_lea.vmem %s1, 320
        %v1145 = vld [vmem:[%s1144] sm:$0xf]
        %v1146 = vld [vmem:[%s1144 + $0x4] sm:$0xf]
        %v1147 = vld [vmem:[%s1144 + $0x8] sm:$0xf]
        %v1148 = vld [vmem:[%s1144 + $0xc] sm:$0xf]
        %v1149 = vld [vmem:[%s1144 + $0x10] sm:$0xf]
        %v1150 = vld [vmem:[%s1144 + $0x14] sm:$0xf]
        %v1151 = vld [vmem:[%s1144 + $0x18] sm:$0xf]
        %v1152 = vld [vmem:[%s1144 + $0x1c] sm:$0xf]
        %v1153 = vld [vmem:[%s1144 + $0x20] sm:$0xf]
        %v1154 = vld [vmem:[%s1144 + $0x24] sm:$0xf]
        %v1155 = vld [vmem:[%s1144 + $0x28] sm:$0xf]
        %v1156 = vld [vmem:[%s1144 + $0x2c] sm:$0xf]
        %v1157 = vld [vmem:[%s1144 + $0x30] sm:$0xf]
        %v1158 = vld [vmem:[%s1144 + $0x34] sm:$0xf]
        %v1159 = vld [vmem:[%s1144 + $0x38] sm:$0xf]
        %v1160 = vld [vmem:[%s1144 + $0x3c] sm:$0xf]
        %v1171 = vunpack.c.l.b16 %v1134
        %v1172 = vunpack.c.l.b16 %v1135
        %v1173 = vunpack.c.l.b16 %v1136
        %v1174 = vunpack.c.l.b16 %v1137
        %v1175 = vunpack.c.l.b16 %v1138
        %v1176 = vunpack.c.l.b16 %v1139
        %v1177 = vunpack.c.l.b16 %v1140
        %v1178 = vunpack.c.l.b16 %v1141
        %v1179 = vunpack.c.l.b16 %v1142
        %v1180 = vunpack.c.l.b16 %v1143
        %v1181 = vpack.c.b16 %v1172, %v1171
        %v1182 = vpack.c.b16 %v1174, %v1173
        %v1183 = vpack.c.b16 %v1176, %v1175
        %v1184 = vpack.c.b16 %v1178, %v1177
        %v1185 = vpack.c.b16 %v1180, %v1179
        %v1187 = vshrl.u32 %v1181, 16
        %v1189 = vshll.u32 %v1181, 16
        %v1191 = vrot.slane %v1189, 1
        %v1192 = vor.u32 %v1187, %v1191
        %v1194 = vshll.u32 %v1182, 16
        %v1196 = vrot.slane %v1194, 1
        %v1197 = vsel %vm709, %v1192, %v1196
        %v1198 = vshrl.u32 %v1182, 16
        %v1200 = vor.u32 %v1198, %v1196
        %v1202 = vshll.u32 %v1183, 16
        %v1204 = vrot.slane %v1202, 1
        %v1205 = vsel %vm709, %v1200, %v1204
        %v1206 = vshrl.u32 %v1183, 16
        %v1208 = vor.u32 %v1206, %v1204
        %v1210 = vshll.u32 %v1184, 16
        %v1212 = vrot.slane %v1210, 1
        %v1213 = vsel %vm709, %v1208, %v1212
        %v1214 = vshrl.u32 %v1184, 16
        %v1216 = vor.u32 %v1214, %v1212
        %v1218 = vshll.u32 %v1185, 16
        %v1220 = vrot.slane %v1218, 1
        %v1221 = vsel %vm709, %v1216, %v1220
        %v1222 = vshrl.u32 %v1185, 16
        %v1224 = vor.u32 %v1222, %v1220
        %v1246 = vunpack.c.l.b16 %v1145
        %v1247 = vunpack.c.l.b16 %v1146
        %v1248 = vunpack.c.l.b16 %v1147
        %v1249 = vunpack.c.l.b16 %v1148
        %v1250 = vunpack.c.l.b16 %v1149
        %v1251 = vunpack.c.l.b16 %v1150
        %v1252 = vunpack.c.l.b16 %v1151
        %v1253 = vunpack.c.l.b16 %v1152
        %v1254 = vunpack.c.l.b16 %v1153
        %v1255 = vunpack.c.l.b16 %v1154
        %v1256 = vunpack.c.l.b16 %v1155
        %v1257 = vunpack.c.l.b16 %v1156
        %v1258 = vunpack.c.l.b16 %v1157
        %v1259 = vunpack.c.l.b16 %v1158
        %v1260 = vunpack.c.l.b16 %v1159
        %v1261 = vunpack.c.l.b16 %v1160
        %v1262 = vpack.c.b16 %v1247, %v1246
        %v1263 = vpack.c.b16 %v1249, %v1248
        %v1264 = vpack.c.b16 %v1251, %v1250
        %v1265 = vpack.c.b16 %v1253, %v1252
        %v1266 = vpack.c.b16 %v1255, %v1254
        %v1267 = vpack.c.b16 %v1257, %v1256
        %v1268 = vpack.c.b16 %v1259, %v1258
        %v1269 = vpack.c.b16 %v1261, %v1260
        %1278 = vmatpush.bf16.msra.mxu0 %v1269
        %1279 = vmatpush.bf16.msra.mxu0 %v1268
        %1280 = vmatpush.bf16.msra.mxu0 %v1267
        %1281 = vmatpush.bf16.msra.mxu0 %v1266
        %1282 = vmatpush.bf16.msra.mxu0 %v1265
        %1283 = vmatpush.bf16.msra.mxu0 %v1264
        %1284 = vmatpush.bf16.msra.mxu0 %v1263
        %1285 = vmatpush.bf16.msra.mxu0 %v1262
        %1286 = vmatmul.bf16.gmra.mxu0 %v1197
        %v1287 = vpop.f32.mrf.mxu0
        %v1288 = vadd.f32 0.0, %v1287
        %v1289 = vpop.f32.mrf.mxu0
        %v1290 = vadd.f32 0.0, %v1289
        %1291 = vmatmul.bf16.gmra.mxu0 %v1205
        %v1292 = vpop.f32.mrf.mxu0
        %v1293 = vadd.f32 0.0, %v1292
        %v1294 = vpop.f32.mrf.mxu0
        %v1295 = vadd.f32 0.0, %v1294
        %1296 = vmatmul.bf16.gmra.mxu0 %v1213
        %v1297 = vpop.f32.mrf.mxu0
        %v1298 = vadd.f32 0.0, %v1297
        %v1299 = vpop.f32.mrf.mxu0
        %v1300 = vadd.f32 0.0, %v1299
        %1301 = vmatmul.bf16.gmra.mxu0 %v1221
        %v1302 = vpop.f32.mrf.mxu0
        %v1303 = vadd.f32 0.0, %v1302
        %v1304 = vpop.f32.mrf.mxu0
        %v1305 = vadd.f32 0.0, %v1304
        %1306 = vmatmul.bf16.gmra.mxu0 %v1224
        %v1307 = vpop.f32.mrf.mxu0
        %v1308 = vadd.f32 0.0, %v1307
        %v1309 = vpop.f32.mrf.mxu0
        %1310 = vdwg.mxu0
        %v1311 = vadd.f32 %v1125, %v1288
        %v1312 = vadd.f32 %v1126, %v1290
        %v1313 = vadd.f32 %v1127, %v1293
        %v1314 = vadd.f32 %v1128, %v1295
        %v1315 = vadd.f32 %v1129, %v1298
        %v1316 = vadd.f32 %v1130, %v1300
        %v1317 = vadd.f32 %v1131, %v1303
        %v1318 = vadd.f32 %v1132, %v1305
        %v1319 = vadd.f32 %v1133, %v1308
        %v1320 = vld [vmem:[%s361 + $0x4] sm:$0xf]
        %v1321 = vld [vmem:[%s361 + $0x8] sm:$0xf]
        %v1322 = vld [vmem:[%s361 + $0xc] sm:$0xf]
        %v1323 = vld [vmem:[%s361 + $0x10] sm:$0xf]
        %v1324 = vld [vmem:[%s361 + $0x14] sm:$0xf]
        %v1325 = vld [vmem:[%s361 + $0x18] sm:$0xf]
        %v1326 = vld [vmem:[%s361 + $0x1c] sm:$0xf]
        %v1327 = vld [vmem:[%s361 + $0x20] sm:$0xf]
        %v1328 = vld [vmem:[%s361 + $0x24] sm:$0xf]
        %v1329 = vld [vmem:[%s361 + $0x28] sm:$0x1]
        %s1330 = scalar_lea.vmem %s1, 384
        %v1331 = vld [vmem:[%s1330] sm:$0xf]
        %v1332 = vld [vmem:[%s1330 + $0x4] sm:$0xf]
        %v1333 = vld [vmem:[%s1330 + $0x8] sm:$0xf]
        %v1334 = vld [vmem:[%s1330 + $0xc] sm:$0xf]
        %v1335 = vld [vmem:[%s1330 + $0x10] sm:$0xf]
        %v1336 = vld [vmem:[%s1330 + $0x14] sm:$0xf]
        %v1337 = vld [vmem:[%s1330 + $0x18] sm:$0xf]
        %v1338 = vld [vmem:[%s1330 + $0x1c] sm:$0xf]
        %v1339 = vld [vmem:[%s1330 + $0x20] sm:$0xf]
        %v1340 = vld [vmem:[%s1330 + $0x24] sm:$0xf]
        %v1341 = vld [vmem:[%s1330 + $0x28] sm:$0xf]
        %v1342 = vld [vmem:[%s1330 + $0x2c] sm:$0xf]
        %v1343 = vld [vmem:[%s1330 + $0x30] sm:$0xf]
        %v1344 = vld [vmem:[%s1330 + $0x34] sm:$0xf]
        %v1345 = vld [vmem:[%s1330 + $0x38] sm:$0xf]
        %v1346 = vld [vmem:[%s1330 + $0x3c] sm:$0xf]
        %v1357 = vunpack.c.l.b16 %v1320
        %v1358 = vunpack.c.l.b16 %v1321
        %v1359 = vunpack.c.l.b16 %v1322
        %v1360 = vunpack.c.l.b16 %v1323
        %v1361 = vunpack.c.l.b16 %v1324
        %v1362 = vunpack.c.l.b16 %v1325
        %v1363 = vunpack.c.l.b16 %v1326
        %v1364 = vunpack.c.l.b16 %v1327
        %v1365 = vunpack.c.l.b16 %v1328
        %v1366 = vunpack.c.l.b16 %v1329
        %v1367 = vpack.c.b16 %v1358, %v1357
        %v1368 = vpack.c.b16 %v1360, %v1359
        %v1369 = vpack.c.b16 %v1362, %v1361
        %v1370 = vpack.c.b16 %v1364, %v1363
        %v1371 = vpack.c.b16 %v1366, %v1365
        %v1373 = vshrl.u32 %v1367, 16
        %v1375 = vshll.u32 %v1367, 16
        %v1377 = vrot.slane %v1375, 1
        %v1378 = vor.u32 %v1373, %v1377
        %v1380 = vshll.u32 %v1368, 16
        %v1382 = vrot.slane %v1380, 1
        %v1383 = vsel %vm709, %v1378, %v1382
        %v1384 = vshrl.u32 %v1368, 16
        %v1386 = vor.u32 %v1384, %v1382
        %v1388 = vshll.u32 %v1369, 16
        %v1390 = vrot.slane %v1388, 1
        %v1391 = vsel %vm709, %v1386, %v1390
        %v1392 = vshrl.u32 %v1369, 16
        %v1394 = vor.u32 %v1392, %v1390
        %v1396 = vshll.u32 %v1370, 16
        %v1398 = vrot.slane %v1396, 1
        %v1399 = vsel %vm709, %v1394, %v1398
        %v1400 = vshrl.u32 %v1370, 16
        %v1402 = vor.u32 %v1400, %v1398
        %v1404 = vshll.u32 %v1371, 16
        %v1406 = vrot.slane %v1404, 1
        %v1407 = vsel %vm709, %v1402, %v1406
        %v1408 = vshrl.u32 %v1371, 16
        %v1410 = vor.u32 %v1408, %v1406
        %v1432 = vunpack.c.l.b16 %v1331
        %v1433 = vunpack.c.l.b16 %v1332
        %v1434 = vunpack.c.l.b16 %v1333
        %v1435 = vunpack.c.l.b16 %v1334
        %v1436 = vunpack.c.l.b16 %v1335
        %v1437 = vunpack.c.l.b16 %v1336
        %v1438 = vunpack.c.l.b16 %v1337
        %v1439 = vunpack.c.l.b16 %v1338
        %v1440 = vunpack.c.l.b16 %v1339
        %v1441 = vunpack.c.l.b16 %v1340
        %v1442 = vunpack.c.l.b16 %v1341
        %v1443 = vunpack.c.l.b16 %v1342
        %v1444 = vunpack.c.l.b16 %v1343
        %v1445 = vunpack.c.l.b16 %v1344
        %v1446 = vunpack.c.l.b16 %v1345
        %v1447 = vunpack.c.l.b16 %v1346
        %v1448 = vpack.c.b16 %v1433, %v1432
        %v1449 = vpack.c.b16 %v1435, %v1434
        %v1450 = vpack.c.b16 %v1437, %v1436
        %v1451 = vpack.c.b16 %v1439, %v1438
        %v1452 = vpack.c.b16 %v1441, %v1440
        %v1453 = vpack.c.b16 %v1443, %v1442
        %v1454 = vpack.c.b16 %v1445, %v1444
        %v1455 = vpack.c.b16 %v1447, %v1446
        %1464 = vmatpush.bf16.msra.mxu0 %v1455
        %1465 = vmatpush.bf16.msra.mxu0 %v1454
        %1466 = vmatpush.bf16.msra.mxu0 %v1453
        %1467 = vmatpush.bf16.msra.mxu0 %v1452
        %1468 = vmatpush.bf16.msra.mxu0 %v1451
        %1469 = vmatpush.bf16.msra.mxu0 %v1450
        %1470 = vmatpush.bf16.msra.mxu0 %v1449
        %1471 = vmatpush.bf16.msra.mxu0 %v1448
        %1472 = vmatmul.bf16.gmra.mxu0 %v1383
        %v1473 = vpop.f32.mrf.mxu0
        %v1474 = vadd.f32 0.0, %v1473
        %v1475 = vpop.f32.mrf.mxu0
        %v1476 = vadd.f32 0.0, %v1475
        %1477 = vmatmul.bf16.gmra.mxu0 %v1391
        %v1478 = vpop.f32.mrf.mxu0
        %v1479 = vadd.f32 0.0, %v1478
        %v1480 = vpop.f32.mrf.mxu0
        %v1481 = vadd.f32 0.0, %v1480
        %1482 = vmatmul.bf16.gmra.mxu0 %v1399
        %v1483 = vpop.f32.mrf.mxu0
        %v1484 = vadd.f32 0.0, %v1483
        %v1485 = vpop.f32.mrf.mxu0
        %v1486 = vadd.f32 0.0, %v1485
        %1487 = vmatmul.bf16.gmra.mxu0 %v1407
        %v1488 = vpop.f32.mrf.mxu0
        %v1489 = vadd.f32 0.0, %v1488
        %v1490 = vpop.f32.mrf.mxu0
        %v1491 = vadd.f32 0.0, %v1490
        %1492 = vmatmul.bf16.gmra.mxu0 %v1410
        %v1493 = vpop.f32.mrf.mxu0
        %v1494 = vadd.f32 0.0, %v1493
        %v1495 = vpop.f32.mrf.mxu0
        %1496 = vdwg.mxu0
        %v1497 = vadd.f32 %v1311, %v1474
        %v1498 = vadd.f32 %v1312, %v1476
        %v1499 = vadd.f32 %v1313, %v1479
        %v1500 = vadd.f32 %v1314, %v1481
        %v1501 = vadd.f32 %v1315, %v1484
        %v1502 = vadd.f32 %v1316, %v1486
        %v1503 = vadd.f32 %v1317, %v1489
        %v1504 = vadd.f32 %v1318, %v1491
        %v1505 = vadd.f32 %v1319, %v1494
        %v1506 = vld [vmem:[%s412 + $0x4] sm:$0xf]
        %v1507 = vld [vmem:[%s412 + $0x8] sm:$0xf]
        %v1508 = vld [vmem:[%s412 + $0xc] sm:$0xf]
        %v1509 = vld [vmem:[%s412 + $0x10] sm:$0xf]
        %v1510 = vld [vmem:[%s412 + $0x14] sm:$0xf]
        %v1511 = vld [vmem:[%s412 + $0x18] sm:$0xf]
        %v1512 = vld [vmem:[%s412 + $0x1c] sm:$0xf]
        %v1513 = vld [vmem:[%s412 + $0x20] sm:$0xf]
        %v1514 = vld [vmem:[%s412 + $0x24] sm:$0xf]
        %v1515 = vld [vmem:[%s412 + $0x28] sm:$0x1]
        %s1516 = scalar_lea.vmem %s1, 448
        %v1517 = vld [vmem:[%s1516] sm:$0xf]
        %v1518 = vld [vmem:[%s1516 + $0x4] sm:$0xf]
        %v1519 = vld [vmem:[%s1516 + $0x8] sm:$0xf]
        %v1520 = vld [vmem:[%s1516 + $0xc] sm:$0xf]
        %v1521 = vld [vmem:[%s1516 + $0x10] sm:$0xf]
        %v1522 = vld [vmem:[%s1516 + $0x14] sm:$0xf]
        %v1523 = vld [vmem:[%s1516 + $0x18] sm:$0xf]
        %v1524 = vld [vmem:[%s1516 + $0x1c] sm:$0xf]
        %v1525 = vld [vmem:[%s1516 + $0x20] sm:$0xf]
        %v1526 = vld [vmem:[%s1516 + $0x24] sm:$0xf]
        %v1527 = vld [vmem:[%s1516 + $0x28] sm:$0xf]
        %v1528 = vld [vmem:[%s1516 + $0x2c] sm:$0xf]
        %v1529 = vld [vmem:[%s1516 + $0x30] sm:$0xf]
        %v1530 = vld [vmem:[%s1516 + $0x34] sm:$0xf]
        %v1531 = vld [vmem:[%s1516 + $0x38] sm:$0xf]
        %v1532 = vld [vmem:[%s1516 + $0x3c] sm:$0xf]
        %v1543 = vunpack.c.l.b16 %v1506
        %v1544 = vunpack.c.l.b16 %v1507
        %v1545 = vunpack.c.l.b16 %v1508
        %v1546 = vunpack.c.l.b16 %v1509
        %v1547 = vunpack.c.l.b16 %v1510
        %v1548 = vunpack.c.l.b16 %v1511
        %v1549 = vunpack.c.l.b16 %v1512
        %v1550 = vunpack.c.l.b16 %v1513
        %v1551 = vunpack.c.l.b16 %v1514
        %v1552 = vunpack.c.l.b16 %v1515
        %v1553 = vpack.c.b16 %v1544, %v1543
        %v1554 = vpack.c.b16 %v1546, %v1545
        %v1555 = vpack.c.b16 %v1548, %v1547
        %v1556 = vpack.c.b16 %v1550, %v1549
        %v1557 = vpack.c.b16 %v1552, %v1551
        %v1559 = vshrl.u32 %v1553, 16
        %v1561 = vshll.u32 %v1553, 16
        %v1563 = vrot.slane %v1561, 1
        %v1564 = vor.u32 %v1559, %v1563
        %v1566 = vshll.u32 %v1554, 16
        %v1568 = vrot.slane %v1566, 1
        %v1569 = vsel %vm709, %v1564, %v1568
        %v1570 = vshrl.u32 %v1554, 16
        %v1572 = vor.u32 %v1570, %v1568
        %v1574 = vshll.u32 %v1555, 16
        %v1576 = vrot.slane %v1574, 1
        %v1577 = vsel %vm709, %v1572, %v1576
        %v1578 = vshrl.u32 %v1555, 16
        %v1580 = vor.u32 %v1578, %v1576
        %v1582 = vshll.u32 %v1556, 16
        %v1584 = vrot.slane %v1582, 1
        %v1585 = vsel %vm709, %v1580, %v1584
        %v1586 = vshrl.u32 %v1556, 16
        %v1588 = vor.u32 %v1586, %v1584
        %v1590 = vshll.u32 %v1557, 16
        %v1592 = vrot.slane %v1590, 1
        %v1593 = vsel %vm709, %v1588, %v1592
        %v1594 = vshrl.u32 %v1557, 16
        %v1596 = vor.u32 %v1594, %v1592
        %v1618 = vunpack.c.l.b16 %v1517
        %v1619 = vunpack.c.l.b16 %v1518
        %v1620 = vunpack.c.l.b16 %v1519
        %v1621 = vunpack.c.l.b16 %v1520
        %v1622 = vunpack.c.l.b16 %v1521
        %v1623 = vunpack.c.l.b16 %v1522
        %v1624 = vunpack.c.l.b16 %v1523
        %v1625 = vunpack.c.l.b16 %v1524
        %v1626 = vunpack.c.l.b16 %v1525
        %v1627 = vunpack.c.l.b16 %v1526
        %v1628 = vunpack.c.l.b16 %v1527
        %v1629 = vunpack.c.l.b16 %v1528
        %v1630 = vunpack.c.l.b16 %v1529
        %v1631 = vunpack.c.l.b16 %v1530
        %v1632 = vunpack.c.l.b16 %v1531
        %v1633 = vunpack.c.l.b16 %v1532
        %v1634 = vpack.c.b16 %v1619, %v1618
        %v1635 = vpack.c.b16 %v1621, %v1620
        %v1636 = vpack.c.b16 %v1623, %v1622
        %v1637 = vpack.c.b16 %v1625, %v1624
        %v1638 = vpack.c.b16 %v1627, %v1626
        %v1639 = vpack.c.b16 %v1629, %v1628
        %v1640 = vpack.c.b16 %v1631, %v1630
        %v1641 = vpack.c.b16 %v1633, %v1632
        %1650 = vmatpush.bf16.msra.mxu0 %v1641
        %1651 = vmatpush.bf16.msra.mxu0 %v1640
        %1652 = vmatpush.bf16.msra.mxu0 %v1639
        %1653 = vmatpush.bf16.msra.mxu0 %v1638
        %1654 = vmatpush.bf16.msra.mxu0 %v1637
        %1655 = vmatpush.bf16.msra.mxu0 %v1636
        %1656 = vmatpush.bf16.msra.mxu0 %v1635
        %1657 = vmatpush.bf16.msra.mxu0 %v1634
        %1658 = vmatmul.bf16.gmra.mxu0 %v1569
        %v1659 = vpop.f32.mrf.mxu0
        %v1660 = vadd.f32 0.0, %v1659
        %v1661 = vpop.f32.mrf.mxu0
        %v1662 = vadd.f32 0.0, %v1661
        %1663 = vmatmul.bf16.gmra.mxu0 %v1577
        %v1664 = vpop.f32.mrf.mxu0
        %v1665 = vadd.f32 0.0, %v1664
        %v1666 = vpop.f32.mrf.mxu0
        %v1667 = vadd.f32 0.0, %v1666
        %1668 = vmatmul.bf16.gmra.mxu0 %v1585
        %v1669 = vpop.f32.mrf.mxu0
        %v1670 = vadd.f32 0.0, %v1669
        %v1671 = vpop.f32.mrf.mxu0
        %v1672 = vadd.f32 0.0, %v1671
        %1673 = vmatmul.bf16.gmra.mxu0 %v1593
        %v1674 = vpop.f32.mrf.mxu0
        %v1675 = vadd.f32 0.0, %v1674
        %v1676 = vpop.f32.mrf.mxu0
        %v1677 = vadd.f32 0.0, %v1676
        %1678 = vmatmul.bf16.gmra.mxu0 %v1596
        %v1679 = vpop.f32.mrf.mxu0
        %v1680 = vadd.f32 0.0, %v1679
        %v1681 = vpop.f32.mrf.mxu0
        %1682 = vdwg.mxu0
        %v1683 = vadd.f32 %v1497, %v1660
        %v1684 = vadd.f32 %v1498, %v1662
        %v1685 = vadd.f32 %v1499, %v1665
        %v1686 = vadd.f32 %v1500, %v1667
        %v1687 = vadd.f32 %v1501, %v1670
        %v1688 = vadd.f32 %v1502, %v1672
        %v1689 = vadd.f32 %v1503, %v1675
        %v1690 = vadd.f32 %v1504, %v1677
        %v1691 = vadd.f32 %v1505, %v1680
        %v1692 = vld [vmem:[%s361 + $0x4] sm:$0xe]
        %s1693 = scalar_lea.vmem %s1, 512
        %v1694 = vld [vmem:[%s1693] sm:$0xf]
        %v1695 = vld [vmem:[%s1693 + $0x4] sm:$0xf]
        %v1696 = vld [vmem:[%s1693 + $0x8] sm:$0xf]
        %v1697 = vld [vmem:[%s1693 + $0xc] sm:$0xf]
        %v1698 = vld [vmem:[%s1693 + $0x10] sm:$0xf]
        %v1699 = vld [vmem:[%s1693 + $0x14] sm:$0xf]
        %v1700 = vld [vmem:[%s1693 + $0x18] sm:$0xf]
        %v1701 = vld [vmem:[%s1693 + $0x1c] sm:$0xf]
        %v1702 = vld [vmem:[%s1693 + $0x20] sm:$0xf]
        %v1703 = vld [vmem:[%s1693 + $0x24] sm:$0xf]
        %v1704 = vld [vmem:[%s1693 + $0x28] sm:$0xf]
        %v1705 = vld [vmem:[%s1693 + $0x2c] sm:$0xf]
        %v1706 = vld [vmem:[%s1693 + $0x30] sm:$0xf]
        %v1707 = vld [vmem:[%s1693 + $0x34] sm:$0xf]
        %v1708 = vld [vmem:[%s1693 + $0x38] sm:$0xf]
        %v1709 = vld [vmem:[%s1693 + $0x3c] sm:$0xf]
        %v1711 = vunpack.c.l.b16 %v1692
        %v1712 = vpack.c.b16 %v1358, %v1711
        %vm1713 = vcmask 1046528
        %v1714 = vrot.slane %v1712, 1
        %v1715 = vrot.slane %v1368, 1
        %v1716 = vsel %vm1713, %v1714, %v1715
        %v1717 = vrot.slane %v1369, 1
        %v1718 = vsel %vm1713, %v1715, %v1717
        %v1719 = vrot.slane %v1370, 1
        %v1720 = vsel %vm1713, %v1717, %v1719
        %v1721 = vrot.slane %v1371, 1
        %v1722 = vsel %vm1713, %v1719, %v1721
        %v1744 = vunpack.c.l.b16 %v1694
        %v1745 = vunpack.c.l.b16 %v1695
        %v1746 = vunpack.c.l.b16 %v1696
        %v1747 = vunpack.c.l.b16 %v1697
        %v1748 = vunpack.c.l.b16 %v1698
        %v1749 = vunpack.c.l.b16 %v1699
        %v1750 = vunpack.c.l.b16 %v1700
        %v1751 = vunpack.c.l.b16 %v1701
        %v1752 = vunpack.c.l.b16 %v1702
        %v1753 = vunpack.c.l.b16 %v1703
        %v1754 = vunpack.c.l.b16 %v1704
        %v1755 = vunpack.c.l.b16 %v1705
        %v1756 = vunpack.c.l.b16 %v1706
        %v1757 = vunpack.c.l.b16 %v1707
        %v1758 = vunpack.c.l.b16 %v1708
        %v1759 = vunpack.c.l.b16 %v1709
        %v1760 = vpack.c.b16 %v1745, %v1744
        %v1761 = vpack.c.b16 %v1747, %v1746
        %v1762 = vpack.c.b16 %v1749, %v1748
        %v1763 = vpack.c.b16 %v1751, %v1750
        %v1764 = vpack.c.b16 %v1753, %v1752
        %v1765 = vpack.c.b16 %v1755, %v1754
        %v1766 = vpack.c.b16 %v1757, %v1756
        %v1767 = vpack.c.b16 %v1759, %v1758
        %1776 = vmatpush.bf16.msra.mxu0 %v1767
        %1777 = vmatpush.bf16.msra.mxu0 %v1766
        %1778 = vmatpush.bf16.msra.mxu0 %v1765
        %1779 = vmatpush.bf16.msra.mxu0 %v1764
        %1780 = vmatpush.bf16.msra.mxu0 %v1763
        %1781 = vmatpush.bf16.msra.mxu0 %v1762
        %1782 = vmatpush.bf16.msra.mxu0 %v1761
        %1783 = vmatpush.bf16.msra.mxu0 %v1760
        %1784 = vmatmul.bf16.gmra.mxu0 %v1716
        %v1785 = vpop.f32.mrf.mxu0
        %v1786 = vadd.f32 0.0, %v1785
        %v1787 = vpop.f32.mrf.mxu0
        %v1788 = vadd.f32 0.0, %v1787
        %1789 = vmatmul.bf16.gmra.mxu0 %v1718
        %v1790 = vpop.f32.mrf.mxu0
        %v1791 = vadd.f32 0.0, %v1790
        %v1792 = vpop.f32.mrf.mxu0
        %v1793 = vadd.f32 0.0, %v1792
        %1794 = vmatmul.bf16.gmra.mxu0 %v1720
        %v1795 = vpop.f32.mrf.mxu0
        %v1796 = vadd.f32 0.0, %v1795
        %v1797 = vpop.f32.mrf.mxu0
        %v1798 = vadd.f32 0.0, %v1797
        %1799 = vmatmul.bf16.gmra.mxu0 %v1722
        %v1800 = vpop.f32.mrf.mxu0
        %v1801 = vadd.f32 0.0, %v1800
        %v1802 = vpop.f32.mrf.mxu0
        %v1803 = vadd.f32 0.0, %v1802
        %1804 = vmatmul.bf16.gmra.mxu0 %v1721
        %v1805 = vpop.f32.mrf.mxu0
        %v1806 = vadd.f32 0.0, %v1805
        %v1807 = vpop.f32.mrf.mxu0
        %1808 = vdwg.mxu0
        %v1809 = vadd.f32 %v1683, %v1786
        %v1810 = vadd.f32 %v1684, %v1788
        %v1811 = vadd.f32 %v1685, %v1791
        %v1812 = vadd.f32 %v1686, %v1793
        %v1813 = vadd.f32 %v1687, %v1796
        %v1814 = vadd.f32 %v1688, %v1798
        %v1815 = vadd.f32 %v1689, %v1801
        %v1816 = vadd.f32 %v1690, %v1803
        %v1817 = vadd.f32 %v1691, %v1806
        %v1818 = vld [vmem:[%s2] sm:$0x1]
        %v1820 = vperm.slane %v1818, 0
        %v1822 = vadd.f32 %v1809, %v1820
        %v1823 = vadd.f32 %v1810, %v1820
        %v1824 = vadd.f32 %v1811, %v1820
        %v1825 = vadd.f32 %v1812, %v1820
        %v1826 = vadd.f32 %v1813, %v1820
        %v1827 = vadd.f32 %v1814, %v1820
        %v1828 = vadd.f32 %v1815, %v1820
        %v1829 = vadd.f32 %v1816, %v1820
        %v1830 = vadd.f32 %v1817, %v1820
        %vm1831 = vcmp.ge.f32.partialorder %v1822, 0.0
        %vm1832 = vcmp.ge.f32.partialorder %v1823, 0.0
        %vm1833 = vcmp.ge.f32.partialorder %v1824, 0.0
        %vm1834 = vcmp.ge.f32.partialorder %v1825, 0.0
        %vm1835 = vcmp.ge.f32.partialorder %v1826, 0.0
        %vm1836 = vcmp.ge.f32.partialorder %v1827, 0.0
        %vm1837 = vcmp.ge.f32.partialorder %v1828, 0.0
        %vm1838 = vcmp.ge.f32.partialorder %v1829, 0.0
        %vm1839 = vcmp.ge.f32.partialorder %v1830, 0.0
        %v1840 = vmul.f32 %v1822, 0.01
        %v1841 = vmul.f32 %v1823, 0.01
        %v1842 = vmul.f32 %v1824, 0.01
        %v1843 = vmul.f32 %v1825, 0.01
        %v1844 = vmul.f32 %v1826, 0.01
        %v1845 = vmul.f32 %v1827, 0.01
        %v1846 = vmul.f32 %v1828, 0.01
        %v1847 = vmul.f32 %v1829, 0.01
        %v1848 = vmul.f32 %v1830, 0.01
        %v1849 = vsel %vm1831, %v1822, %v1840
        %v1850 = vsel %vm1832, %v1823, %v1841
        %v1851 = vsel %vm1833, %v1824, %v1842
        %v1852 = vsel %vm1834, %v1825, %v1843
        %v1853 = vsel %vm1835, %v1826, %v1844
        %v1854 = vsel %vm1836, %v1827, %v1845
        %v1855 = vsel %vm1837, %v1828, %v1846
        %v1856 = vsel %vm1838, %v1829, %v1847
        %v1857 = vsel %vm1839, %v1830, %v1848
        %v1858 = vpack.c.bf16 %v1849, %v1849
        %v1859 = vpack.c.bf16 %v1850, %v1850
        %v1860 = vpack.c.bf16 %v1851, %v1851
        %v1861 = vpack.c.bf16 %v1852, %v1852
        %v1862 = vpack.c.bf16 %v1853, %v1853
        %v1863 = vpack.c.bf16 %v1854, %v1854
        %v1864 = vpack.c.bf16 %v1855, %v1855
        %v1865 = vpack.c.bf16 %v1856, %v1856
        %v1866 = vpack.c.bf16 %v1857, %v1857
        %1867 = vst [vmem:[%s386] sm:$0xf] %v1858
        %1868 = vst [vmem:[%s386 + $0x4] sm:$0xf] %v1859
        %1869 = vst [vmem:[%s386 + $0x8] sm:$0xf] %v1860
        %1870 = vst [vmem:[%s386 + $0xc] sm:$0xf] %v1861
        %1871 = vst [vmem:[%s386 + $0x10] sm:$0xf] %v1862
        %1872 = vst [vmem:[%s386 + $0x14] sm:$0xf] %v1863
        %1873 = vst [vmem:[%s386 + $0x18] sm:$0xf] %v1864
        %1874 = vst [vmem:[%s386 + $0x1c] sm:$0xf] %v1865
        %1875 = vst [vmem:[%s386 + $0x20] sm:$0xf] %v1866
        %p1876 = scmp.lt.s32.totalorder %s14, 1
        %s1877 = scalar_select %p1876, %s14, 1
        %s1878 = smul.addr %s1877, 9
        %s1879 = smul.addr %s1878, 4
        %s1880 = scalar_lea.vmem %s3, %s1879
        // Predicated region
        $region74: #{music_genre_forward.6} parent=68 // pred_check
          %p1881 = pneg %p100
        $region75: #{music_genre_forward.6} parent=68 // pred_check_branch
          %1883 = sbr.rel (%p1881) target = $region77
        $region76: #{music_genre_forward.6} parent=68 // pred_region
          _
        $region77: #{music_genre_forward.6} parent=68 // pred_fallthru
          _
      $region69: #{music_genre_forward.6} parent=5 // pred_fallthru
        _
      %p1884 = scmp.le.s32.totalorder 2, %s9
      // Predicated region
      $region78: #{music_genre_forward.6} parent=5 // pred_check
        %p1885 = pneg %p1884
      $region79: #{music_genre_forward.6} parent=5 // pred_check_branch
        %1887 = sbr.rel (%p1885) target = $region81
      $region80: #{music_genre_forward.6} parent=5 // pred_region
        %s1888 = ssub.s32 %s9, 2
        // Predicated region
        $region82: #{music_genre_forward.6} parent=80 // pred_check
          %p1889 = pneg %p106
        $region83: #{music_genre_forward.6} parent=80 // pred_check_branch
          %1891 = sbr.rel (%p1889) target = $region85
        $region84: #{music_genre_forward.6} parent=80 // pred_region
          %p1892 = scmp.lt.s32.totalorder %s15, 1
          %s1893 = scalar_select %p1892, %s15, 1
          %s1894 = smul.addr %s1893, 9
          %s1895 = smul.addr %s1894, 4
          %s1896 = scalar_lea.vmem %s3, %s1895
        $region85: #{music_genre_forward.6} parent=80 // pred_fallthru
          _
      $region81: #{music_genre_forward.6} parent=5 // pred_fallthru
        _
    $region6: #{music_genre_forward.6} parent=1 // loop_footer
      %s13 = sadd.s32 1, %s9
    $region7: #{music_genre_forward.6} parent=1 // loop_footer_branch
      %8 = sbr.rel target = $region3
    $region8: #{music_genre_forward.6} parent=1 // loop_exit
      _

// kernel: music_genre_forward.8
$region0: #{music_genre_forward.8}
  #allocation0 [shape = 'u32[]', space=smem, size = 0x4, offset = 0x4, fixed_abs, tag = 'smem constant byte address 0x4 - core index']
  #allocation1 [shape = 'u32[72,128]{1,0:T(1,128)}', space=vmem, size = 0x9000, scoped, tag = 'internal scratch']
  %s0 = inlined_call_operand.vmem [shape: bf16[4,2,16,128], index: 0, kind: input, shape index: {}]
  %s1 = inlined_call_operand.vmem [shape: bf16[9,128,128], index: 1, kind: input, shape index: {}]
  %s2 = inlined_call_operand.vmem [shape: f32[1,128], index: 2, kind: input, shape index: {}]
  %s3 = inlined_call_operand.vmem [shape: bf16[2,6,128], index: 3, kind: output, shape index: {}]
  %s4 = sld [smem:[#allocation0]]
  $region86: #{music_genre_forward.8} parent=0
    _
  %s6 = ssub.s32 1, %s4
  %s7 = scalar_select 0, %s6, %s4
  $region1: #{music_genre_forward.8} parent=0
    #allocation2 [shape = 'u8[32768]{0}', space=vmem, size = 0x8000, scoped, tag = 'input window, operand 0']
    loop: start=0, step=1, limit=4
    $region2: #{music_genre_forward.8} parent=1 // loop_pre_header
      _
    $region3: #{music_genre_forward.8} parent=1 // loop_header
      %s9 = sphi 0, %s13
      %p10 = scmp.ge.s32.totalorder %s9, 4
      %s19 = sphi 0, %s21
      %s22 = sphi 0, %s19
      %s23 = sphi 0, %s22
      %s39 = sphi 0, %s23
      %s43 = sphi 0, %s43
      %s45 = sphi 0, %s43
      %s46 = sphi 0, %s45
      %s60 = sphi 0, %s46
      %s64 = sphi 0, %s64
      %s66 = sphi 0, %s64
      %s67 = sphi 0, %s66
      %s81 = sphi 0, %s67
      %s87 = sphi 0, %s89
      %s90 = sphi 0, %s87
      %s91 = sphi 0, %s90
      %s107 = sphi 0, %s91
    $region4: #{music_genre_forward.8} parent=1 // loop_header_branch
      %12 = sbr.rel (%p10) target = $region8
    $region5: #{music_genre_forward.8} parent=1 // loop_body
      %s14 = ssub.s32 %s9, 1
      %s15 = ssub.s32 %s9, 2
      %s16 = sadd.s32 %s9, 1
      %s17 = ssub.s32 %s9, %s16
      %p18 = scmp.eq.s32.totalorder %s17, 0
      %s20 = sadd.s32 %s19, 1
      %s21 = scalar_select %p18, %s19, %s20
      %p24 = pneg %p18
      %p25 = scmp.eq.s32.totalorder %s9, 1
      %p26 = por %p24, %p25
      %p27 = scmp.ne.s32.totalorder %s19, %s22
      %p28 = scmp.eq.s32.totalorder %s9, 0
      %p29 = por %p27, %p28
      %p30 = scmp.ne.s32.totalorder %s19, %s22
      %p31 = scmp.eq.s32.totalorder %s14, 1
      %p32 = por %p30, %p31
      %p33 = scmp.ne.s32.totalorder %s22, %s23
      %p34 = scmp.eq.s32.totalorder %s14, 0
      %p35 = por %p33, %p34
      %p36 = scmp.ne.s32.totalorder %s22, %s23
      %p37 = scmp.eq.s32.totalorder %s15, 1
      %p38 = por %p36, %p37
      %p40 = scmp.ne.s32.totalorder %s23, %s39
      %p41 = scmp.eq.s32.totalorder %s15, 0
      %p42 = por %p40, %p41
      %s44 = sadd.s32 %s43, 1
      %p47 = scmp.eq.s32.totalorder %s9, 1
      %p48 = scmp.ne.s32.totalorder %s43, %s45
      %p49 = scmp.eq.s32.totalorder %s9, 0
      %p50 = por %p48, %p49
      %p51 = scmp.ne.s32.totalorder %s43, %s45
      %p52 = scmp.eq.s32.totalorder %s14, 1
      %p53 = por %p51, %p52
      %p54 = scmp.ne.s32.totalorder %s45, %s46
      %p55 = scmp.eq.s32.totalorder %s14, 0
      %p56 = por %p54, %p55
      %p57 = scmp.ne.s32.totalorder %s45, %s46
      %p58 = scmp.eq.s32.totalorder %s15, 1
      %p59 = por %p57, %p58
      %p61 = scmp.ne.s32.totalorder %s46, %s60
      %p62 = scmp.eq.s32.totalorder %s15, 0
      %p63 = por %p61, %p62
      %s65 = sadd.s32 %s64, 1
      %p68 = scmp.eq.s32.totalorder %s9, 1
      %p69 = scmp.ne.s32.totalorder %s64, %s66
      %p70 = scmp.eq.s32.totalorder %s9, 0
      %p71 = por %p69, %p70
      %p72 = scmp.ne.s32.totalorder %s64, %s66
      %p73 = scmp.eq.s32.totalorder %s14, 1
      %p74 = por %p72, %p73
      %p75 = scmp.ne.s32.totalorder %s66, %s67
      %p76 = scmp.eq.s32.totalorder %s14, 0
      %p77 = por %p75, %p76
      %p78 = scmp.ne.s32.totalorder %s66, %s67
      %p79 = scmp.eq.s32.totalorder %s15, 1
      %p80 = por %p78, %p79
      %p82 = scmp.ne.s32.totalorder %s67, %s81
      %p83 = scmp.eq.s32.totalorder %s15, 0
      %p84 = por %p82, %p83
      %s85 = ssub.s32 %s9, %s16
      %p86 = scmp.eq.s32.totalorder %s85, 0
      %s88 = sadd.s32 %s87, 1
      %s89 = scalar_select %p86, %s87, %s88
      %p92 = pneg %p86
      %p93 = scmp.eq.s32.totalorder %s9, 1
      %p94 = por %p92, %p93
      %p95 = scmp.ne.s32.totalorder %s87, %s90
      %p96 = scmp.eq.s32.totalorder %s9, 0
      %p97 = por %p95, %p96
      %p98 = scmp.ne.s32.totalorder %s87, %s90
      %p99 = scmp.eq.s32.totalorder %s14, 1
      %p100 = por %p98, %p99
      %p101 = scmp.ne.s32.totalorder %s90, %s91
      %p102 = scmp.eq.s32.totalorder %s14, 0
      %p103 = por %p101, %p102
      %p104 = scmp.ne.s32.totalorder %s90, %s91
      %p105 = scmp.eq.s32.totalorder %s15, 1
      %p106 = por %p104, %p105
      %p108 = scmp.ne.s32.totalorder %s91, %s107
      %p109 = scmp.eq.s32.totalorder %s15, 0
      %p110 = por %p108, %p109
      %p111 = scmp.le.s32.totalorder 1, %s9
      %p112 = scmp.lt.s32.totalorder %s9, 3
      %p113 = pnand %p111, %p112
      %p114 = pneg %p113
      // Predicated region
      $region9: #{music_genre_forward.8} parent=5 // pred_check
        _
      $region10: #{music_genre_forward.8} parent=5 // pred_check_branch
        %116 = sbr.rel (%p113) target = $region12
      $region11: #{music_genre_forward.8} parent=5 // pred_region
        %s117 = ssub.s32 %s9, 1
        // Predicated region
        $region13: #{music_genre_forward.8} parent=11 // pred_check
          %p118 = pneg %p56
        $region14: #{music_genre_forward.8} parent=11 // pred_check_branch
          %120 = sbr.rel (%p118) target = $region16
        $region15: #{music_genre_forward.8} parent=11 // pred_region
          _
        $region16: #{music_genre_forward.8} parent=11 // pred_fallthru
          _
        // Predicated region
        $region17: #{music_genre_forward.8} parent=11 // pred_check
          %p121 = pneg %p77
        $region18: #{music_genre_forward.8} parent=11 // pred_check_branch
          %123 = sbr.rel (%p121) target = $region20
        $region19: #{music_genre_forward.8} parent=11 // pred_region
          _
        $region20: #{music_genre_forward.8} parent=11 // pred_fallthru
          _
      $region12: #{music_genre_forward.8} parent=5 // pred_fallthru
        _
      %p124 = scmp.lt.s32.totalorder %s9, 2
      // Predicated region
      $region21: #{music_genre_forward.8} parent=5 // pred_check
        %p125 = pneg %p124
      $region22: #{music_genre_forward.8} parent=5 // pred_check_branch
        %127 = sbr.rel (%p125) target = $region24
      $region23: #{music_genre_forward.8} parent=5 // pred_region
        // Predicated region
        $region25: #{music_genre_forward.8} parent=23 // pred_check
          %p128 = pneg %p29
        $region26: #{music_genre_forward.8} parent=23 // pred_check_branch
          %130 = sbr.rel (%p128) target = $region28
        $region27: #{music_genre_forward.8} parent=23 // pred_region
          %s131 = sand.u32 %s19, 1
          %s132 = sand.u32 %s19, 1
          %s133 = smul.addr %s132, 32
          %s134 = scalar_lea.vmem [#allocation2], %s133
          %s135 = smul.addr %s9, 2
          %s136 = smul.addr %s135, 4
          %s137 = scalar_lea.vmem %s0, %s136
          // Predicated region
          $region29: #{music_genre_forward.8} parent=27 // pred_check
            _
          $region30: #{music_genre_forward.8} parent=27 // pred_check_branch
            %139 = sbr.rel (0) target = $region32
          $region31: #{music_genre_forward.8} parent=27 // pred_region
            // Predicated region
            $region33: #{music_genre_forward.8} parent=31 // pred_check
              _
            $region34: #{music_genre_forward.8} parent=31 // pred_check_branch
              %141 = sbr.rel target = $region36
            $region35: #{music_genre_forward.8} parent=31 // pred_region
              // Predicated region
              $region48: #{music_genre_forward.8} parent=35 // pred_check
                _
              $region49: #{music_genre_forward.8} parent=35 // pred_check_branch
                %171 = sbr.rel (0) target = $region51
              $region50: #{music_genre_forward.8} parent=35 // pred_region
                loop: start=0, step=1, limit=1
                $region52: #{music_genre_forward.8} parent=50 // loop_pre_header
                  _
                $region53: #{music_genre_forward.8} parent=50 // loop_header
                  %s173 = sphi 0, %s177
                  %p174 = scmp.ge.s32.totalorder %s173, 1
                  %s178 = sphi %s137, %s137
                  %s179 = sphi %s134, %s134
                $region54: #{music_genre_forward.8} parent=50 // loop_header_branch
                  %176 = sbr.rel (%p174) target = $region58
                $region55: #{music_genre_forward.8} parent=50 // loop_body
                  _
                $region56: #{music_genre_forward.8} parent=50 // loop_footer
                  %s177 = sadd.s32 1, %s173
                $region57: #{music_genre_forward.8} parent=50 // loop_footer_branch
                  %172 = sbr.rel target = $region53
                $region58: #{music_genre_forward.8} parent=50 // loop_exit
                  _
                %s181 = ssub.s32 16, 1
                loop: start=0, step=1, limit=1
                $region59: #{music_genre_forward.8} parent=50 // loop_pre_header
                  _
                $region60: #{music_genre_forward.8} parent=50 // loop_header
                  %s183 = sphi 0, %s187
                  %p184 = scmp.ge.s32.totalorder %s183, 1
                  %s188 = sphi %s137, %s137
                  %s189 = sphi %s134, %s134
                $region61: #{music_genre_forward.8} parent=50 // loop_header_branch
                  %186 = sbr.rel (%p184) target = $region65
                $region62: #{music_genre_forward.8} parent=50 // loop_body
                  %v190 = vld [vmem:[%s188] sm:%s181]
                  %191 = vst [vmem:[%s189] sm:%s181] %v190
                  %v192 = vld [vmem:[%s188 + $0x4] sm:%s181]
                  %193 = vst [vmem:[%s189 + $0x4] sm:%s181] %v192
                  %v194 = vld [vmem:[%s188 + $0x10] sm:%s181]
                  %195 = vst [vmem:[%s189 + $0x8] sm:%s181] %v194
                  %v196 = vld [vmem:[%s188 + $0x14] sm:%s181]
                  %197 = vst [vmem:[%s189 + $0xc] sm:%s181] %v196
                  %v198 = vld [vmem:[%s188 + $0x20] sm:%s181]
                  %199 = vst [vmem:[%s189 + $0x10] sm:%s181] %v198
                  %v200 = vld [vmem:[%s188 + $0x24] sm:%s181]
                  %201 = vst [vmem:[%s189 + $0x14] sm:%s181] %v200
                  %v202 = vld [vmem:[%s188 + $0x30] sm:%s181]
                  %203 = vst [vmem:[%s189 + $0x18] sm:%s181] %v202
                  %v204 = vld [vmem:[%s188 + $0x34] sm:%s181]
                  %205 = vst [vmem:[%s189 + $0x1c] sm:%s181] %v204
                $region63: #{music_genre_forward.8} parent=50 // loop_footer
                  %s187 = sadd.s32 1, %s183
                $region64: #{music_genre_forward.8} parent=50 // loop_footer_branch
                  %182 = sbr.rel target = $region60
                $region65: #{music_genre_forward.8} parent=50 // loop_exit
                  _
              $region51: #{music_genre_forward.8} parent=35 // pred_fallthru
                _
            $region36: #{music_genre_forward.8} parent=31 // pred_fallthru
              _
            // Predicated region
            $region37: #{music_genre_forward.8} parent=31 // pred_check
              _
            $region38: #{music_genre_forward.8} parent=31 // pred_check_branch
              %143 = sbr.rel (0) target = $region40
            $region39: #{music_genre_forward.8} parent=31 // pred_region
              %s145 = ssub.s32 16, 1
              loop: start=0, step=1, limit=1
              $region41: #{music_genre_forward.8} parent=39 // loop_pre_header
                _
              $region42: #{music_genre_forward.8} parent=39 // loop_header
                %s147 = sphi 0, %s151
                %p148 = scmp.ge.s32.totalorder %s147, 1
                %s152 = sphi %s137, %s137
                %s153 = sphi %s134, %s134
              $region43: #{music_genre_forward.8} parent=39 // loop_header_branch
                %150 = sbr.rel (%p148) target = $region47
              $region44: #{music_genre_forward.8} parent=39 // loop_body
                %v154 = vld [vmem:[%s152] sm:%s145]
                %155 = vst [vmem:[%s153] sm:%s145] %v154
                %v156 = vld [vmem:[%s152 + $0x4] sm:%s145]
                %157 = vst [vmem:[%s153 + $0x4] sm:%s145] %v156
                %v158 = vld [vmem:[%s152 + $0x10] sm:%s145]
                %159 = vst [vmem:[%s153 + $0x8] sm:%s145] %v158
                %v160 = vld [vmem:[%s152 + $0x14] sm:%s145]
                %161 = vst [vmem:[%s153 + $0xc] sm:%s145] %v160
                %v162 = vld [vmem:[%s152 + $0x20] sm:%s145]
                %163 = vst [vmem:[%s153 + $0x10] sm:%s145] %v162
                %v164 = vld [vmem:[%s152 + $0x24] sm:%s145]
                %165 = vst [vmem:[%s153 + $0x14] sm:%s145] %v164
                %v166 = vld [vmem:[%s152 + $0x30] sm:%s145]
                %167 = vst [vmem:[%s153 + $0x18] sm:%s145] %v166
                %v168 = vld [vmem:[%s152 + $0x34] sm:%s145]
                %169 = vst [vmem:[%s153 + $0x1c] sm:%s145] %v168
              $region45: #{music_genre_forward.8} parent=39 // loop_footer
                %s151 = sadd.s32 1, %s147
              $region46: #{music_genre_forward.8} parent=39 // loop_footer_branch
                %146 = sbr.rel target = $region42
              $region47: #{music_genre_forward.8} parent=39 // loop_exit
                _
            $region40: #{music_genre_forward.8} parent=31 // pred_fallthru
              _
          $region32: #{music_genre_forward.8} parent=27 // pred_fallthru
            _
          %206 = vnop
        $region28: #{music_genre_forward.8} parent=23 // pred_fallthru
          _
      $region24: #{music_genre_forward.8} parent=5 // pred_fallthru
        _
      %p207 = scmp.le.s32.totalorder 1, %s9
      %p208 = scmp.lt.s32.totalorder %s9, 3
      %p209 = pnand %p207, %p208
      %p210 = pneg %p209
      // Predicated region
      $region66: #{music_genre_forward.8} parent=5 // pred_check
        _
      $region67: #{music_genre_forward.8} parent=5 // pred_check_branch
        %212 = sbr.rel (%p209) target = $region69
      $region68: #{music_genre_forward.8} parent=5 // pred_region
        %s213 = ssub.s32 %s9, 1
        %s214 = sand.u32 %s22, 1
        %s215 = sand.u32 %s22, 1
        %s216 = smul.addr %s215, 32
        %s217 = scalar_lea.vmem [#allocation2], %s216
        // Predicated region
        $region70: #{music_genre_forward.8} parent=68 // pred_check
          %p218 = pneg %p35
        $region71: #{music_genre_forward.8} parent=68 // pred_check_branch
          %220 = sbr.rel (%p218) target = $region73
        $region72: #{music_genre_forward.8} parent=68 // pred_region
          _
        $region73: #{music_genre_forward.8} parent=68 // pred_fallthru
          _
        %s221 = sand.u32 %s22, 1
        %s222 = sand.u32 %s22, 1
        %s223 = smul.addr %s222, 32
        %s224 = scalar_lea.vmem [#allocation2], %s223
        %p225 = pneg %p35
        %p226 = pneg %p32
        %p227 = pneg %p56
        %p228 = pneg %p53
        %p229 = pneg %p77
        %p230 = pneg %p74
        %p231 = pneg %p103
        %p232 = pneg %p100
        %p233 = scmp.lt.s32.totalorder %s14, 1
        %s234 = scalar_select %p233, %s14, 1
        %s235 = smul.addr %s234, 4
        %s236 = scalar_lea.vmem %s3, %s235
        %p237 = scmp.lt.s32.totalorder %s14, 1
        %s238 = scalar_select %p237, %s14, 1
        %s239 = smul.addr %s238, 4
        %s240 = scalar_lea.vmem %s3, %s239
        %v241 = vld [vmem:[%s217] sm:$0x7]
        %v242 = vld [vmem:[%s1] sm:$0xf]
        %v243 = vld [vmem:[%s1 + $0x4] sm:$0xf]
        %v244 = vld [vmem:[%s1 + $0x8] sm:$0xf]
        %v245 = vld [vmem:[%s1 + $0xc] sm:$0xf]
        %v246 = vld [vmem:[%s1 + $0x10] sm:$0xf]
        %v247 = vld [vmem:[%s1 + $0x14] sm:$0xf]
        %v248 = vld [vmem:[%s1 + $0x18] sm:$0xf]
        %v249 = vld [vmem:[%s1 + $0x1c] sm:$0xf]
        %v250 = vld [vmem:[%s1 + $0x20] sm:$0xf]
        %v251 = vld [vmem:[%s1 + $0x24] sm:$0xf]
        %v252 = vld [vmem:[%s1 + $0x28] sm:$0xf]
        %v253 = vld [vmem:[%s1 + $0x2c] sm:$0xf]
        %v254 = vld [vmem:[%s1 + $0x30] sm:$0xf]
        %v255 = vld [vmem:[%s1 + $0x34] sm:$0xf]
        %v256 = vld [vmem:[%s1 + $0x38] sm:$0xf]
        %v257 = vld [vmem:[%s1 + $0x3c] sm:$0xf]
        %s258 = scalar_lea.vmem %s217, 8 [#allocation2]
        %v259 = vld [vmem:[%s258] sm:$0x7]
        %s260 = scalar_lea.vmem %s1, 64
        %v261 = vld [vmem:[%s260] sm:$0xf]
        %v262 = vld [vmem:[%s260 + $0x4] sm:$0xf]
        %v263 = vld [vmem:[%s260 + $0x8] sm:$0xf]
        %v264 = vld [vmem:[%s260 + $0xc] sm:$0xf]
        %v265 = vld [vmem:[%s260 + $0x10] sm:$0xf]
        %v266 = vld [vmem:[%s260 + $0x14] sm:$0xf]
        %v267 = vld [vmem:[%s260 + $0x18] sm:$0xf]
        %v268 = vld [vmem:[%s260 + $0x1c] sm:$0xf]
        %v269 = vld [vmem:[%s260 + $0x20] sm:$0xf]
        %v270 = vld [vmem:[%s260 + $0x24] sm:$0xf]
        %v271 = vld [vmem:[%s260 + $0x28] sm:$0xf]
        %v272 = vld [vmem:[%s260 + $0x2c] sm:$0xf]
        %v273 = vld [vmem:[%s260 + $0x30] sm:$0xf]
        %v274 = vld [vmem:[%s260 + $0x34] sm:$0xf]
        %v275 = vld [vmem:[%s260 + $0x38] sm:$0xf]
        %v276 = vld [vmem:[%s260 + $0x3c] sm:$0xf]
        %v293 = vunpack.c.l.b16 %v261
        %v294 = vunpack.c.l.b16 %v262
        %v295 = vunpack.c.l.b16 %v263
        %v296 = vunpack.c.l.b16 %v264
        %v297 = vunpack.c.l.b16 %v265
        %v298 = vunpack.c.l.b16 %v266
        %v299 = vunpack.c.l.b16 %v267
        %v300 = vunpack.c.l.b16 %v268
        %v301 = vunpack.c.l.b16 %v269
        %v302 = vunpack.c.l.b16 %v270
        %v303 = vunpack.c.l.b16 %v271
        %v304 = vunpack.c.l.b16 %v272
        %v305 = vunpack.c.l.b16 %v273
        %v306 = vunpack.c.l.b16 %v274
        %v307 = vunpack.c.l.b16 %v275
        %v308 = vunpack.c.l.b16 %v276
        %v309 = vpack.c.b16 %v294, %v293
        %v310 = vpack.c.b16 %v296, %v295
        %v311 = vpack.c.b16 %v298, %v297
        %v312 = vpack.c.b16 %v300, %v299
        %v313 = vpack.c.b16 %v302, %v301
        %v314 = vpack.c.b16 %v304, %v303
        %v315 = vpack.c.b16 %v306, %v305
        %v316 = vpack.c.b16 %v308, %v307
        %325 = vmatpush.bf16.msra.mxu0 %v316
        %326 = vmatpush.bf16.msra.mxu0 %v315
        %327 = vmatpush.bf16.msra.mxu0 %v314
        %328 = vmatpush.bf16.msra.mxu0 %v313
        %329 = vmatpush.bf16.msra.mxu0 %v312
        %330 = vmatpush.bf16.msra.mxu0 %v311
        %331 = vmatpush.bf16.msra.mxu0 %v310
        %332 = vmatpush.bf16.msra.mxu0 %v309
        %333 = vmatmul.bf16.gmra.mxu0 %v259
        %v334 = vpop.f32.mrf.mxu0
        %v335 = vadd.f32 0.0, %v334
        %v336 = vpop.f32.mrf.mxu0
        %337 = vdwg.mxu0
        %v354 = vunpack.c.l.b16 %v242
        %v355 = vunpack.c.l.b16 %v243
        %v356 = vunpack.c.l.b16 %v244
        %v357 = vunpack.c.l.b16 %v245
        %v358 = vunpack.c.l.b16 %v246
        %v359 = vunpack.c.l.b16 %v247
        %v360 = vunpack.c.l.b16 %v248
        %v361 = vunpack.c.l.b16 %v249
        %v362 = vunpack.c.l.b16 %v250
        %v363 = vunpack.c.l.b16 %v251
        %v364 = vunpack.c.l.b16 %v252
        %v365 = vunpack.c.l.b16 %v253
        %v366 = vunpack.c.l.b16 %v254
        %v367 = vunpack.c.l.b16 %v255
        %v368 = vunpack.c.l.b16 %v256
        %v369 = vunpack.c.l.b16 %v257
        %v370 = vpack.c.b16 %v355, %v354
        %v371 = vpack.c.b16 %v357, %v356
        %v372 = vpack.c.b16 %v359, %v358
        %v373 = vpack.c.b16 %v361, %v360
        %v374 = vpack.c.b16 %v363, %v362
        %v375 = vpack.c.b16 %v365, %v364
        %v376 = vpack.c.b16 %v367, %v366
        %v377 = vpack.c.b16 %v369, %v368
        %386 = vmatpush.bf16.msra.mxu0 %v377
        %387 = vmatpush.bf16.msra.mxu0 %v376
        %388 = vmatpush.bf16.msra.mxu0 %v375
        %389 = vmatpush.bf16.msra.mxu0 %v374
        %390 = vmatpush.bf16.msra.mxu0 %v373
        %391 = vmatpush.bf16.msra.mxu0 %v372
        %392 = vmatpush.bf16.msra.mxu0 %v371
        %393 = vmatpush.bf16.msra.mxu0 %v370
        %394 = vmatmul.bf16.gmra.mxu0 %v241
        %v395 = vpop.f32.mrf.mxu0
        %v396 = vadd.f32 %v335, %v395
        %v397 = vpop.f32.mrf.mxu0
        %398 = vdwg.mxu0
        %v399 = vld [vmem:[%s217] sm:$0xf]
        %s400 = scalar_lea.vmem %s1, 128
        %v401 = vld [vmem:[%s400] sm:$0xf]
        %v402 = vld [vmem:[%s400 + $0x4] sm:$0xf]
        %v403 = vld [vmem:[%s400 + $0x8] sm:$0xf]
        %v404 = vld [vmem:[%s400 + $0xc] sm:$0xf]
        %v405 = vld [vmem:[%s400 + $0x10] sm:$0xf]
        %v406 = vld [vmem:[%s400 + $0x14] sm:$0xf]
        %v407 = vld [vmem:[%s400 + $0x18] sm:$0xf]
        %v408 = vld [vmem:[%s400 + $0x1c] sm:$0xf]
        %v409 = vld [vmem:[%s400 + $0x20] sm:$0xf]
        %v410 = vld [vmem:[%s400 + $0x24] sm:$0xf]
        %v411 = vld [vmem:[%s400 + $0x28] sm:$0xf]
        %v412 = vld [vmem:[%s400 + $0x2c] sm:$0xf]
        %v413 = vld [vmem:[%s400 + $0x30] sm:$0xf]
        %v414 = vld [vmem:[%s400 + $0x34] sm:$0xf]
        %v415 = vld [vmem:[%s400 + $0x38] sm:$0xf]
        %v416 = vld [vmem:[%s400 + $0x3c] sm:$0xf]
        %v418 = vunpack.c.l.b16 %v399
        %v419 = vpack.c.b16 %v418, %v418
        %v421 = vshrl.u32 %v419, 16
        %v423 = vshll.u32 %v419, 16
        %v425 = vrot.slane %v423, 1
        %v426 = vor.u32 %v421, %v425
        %v444 = vunpack.c.l.b16 %v401
        %v445 = vunpack.c.l.b16 %v402
        %v446 = vunpack.c.l.b16 %v403
        %v447 = vunpack.c.l.b16 %v404
        %v448 = vunpack.c.l.b16 %v405
        %v449 = vunpack.c.l.b16 %v406
        %v450 = vunpack.c.l.b16 %v407
        %v451 = vunpack.c.l.b16 %v408
        %v452 = vunpack.c.l.b16 %v409
        %v453 = vunpack.c.l.b16 %v410
        %v454 = vunpack.c.l.b16 %v411
        %v455 = vunpack.c.l.b16 %v412
        %v456 = vunpack.c.l.b16 %v413
        %v457 = vunpack.c.l.b16 %v414
        %v458 = vunpack.c.l.b16 %v415
        %v459 = vunpack.c.l.b16 %v416
        %v460 = vpack.c.b16 %v445, %v444
        %v461 = vpack.c.b16 %v447, %v446
        %v462 = vpack.c.b16 %v449, %v448
        %v463 = vpack.c.b16 %v451, %v450
        %v464 = vpack.c.b16 %v453, %v452
        %v465 = vpack.c.b16 %v455, %v454
        %v466 = vpack.c.b16 %v457, %v456
        %v467 = vpack.c.b16 %v459, %v458
        %476 = vmatpush.bf16.msra.mxu0 %v467
        %477 = vmatpush.bf16.msra.mxu0 %v466
        %478 = vmatpush.bf16.msra.mxu0 %v465
        %479 = vmatpush.bf16.msra.mxu0 %v464
        %480 = vmatpush.bf16.msra.mxu0 %v463
        %481 = vmatpush.bf16.msra.mxu0 %v462
        %482 = vmatpush.bf16.msra.mxu0 %v461
        %483 = vmatpush.bf16.msra.mxu0 %v460
        %484 = vmatmul.bf16.gmra.mxu0 %v426
        %v485 = vpop.f32.mrf.mxu0
        %v486 = vadd.f32 0.0, %v485
        %v487 = vpop.f32.mrf.mxu0
        %488 = vdwg.mxu0
        %v489 = vadd.f32 %v396, %v486
        %s490 = scalar_lea.vmem %s217, 16 [#allocation2]
        %v491 = vld [vmem:[%s490] sm:$0x7]
        %s492 = scalar_lea.vmem %s1, 192
        %v493 = vld [vmem:[%s492] sm:$0xf]
        %v494 = vld [vmem:[%s492 + $0x4] sm:$0xf]
        %v495 = vld [vmem:[%s492 + $0x8] sm:$0xf]
        %v496 = vld [vmem:[%s492 + $0xc] sm:$0xf]
        %v497 = vld [vmem:[%s492 + $0x10] sm:$0xf]
        %v498 = vld [vmem:[%s492 + $0x14] sm:$0xf]
        %v499 = vld [vmem:[%s492 + $0x18] sm:$0xf]
        %v500 = vld [vmem:[%s492 + $0x1c] sm:$0xf]
        %v501 = vld [vmem:[%s492 + $0x20] sm:$0xf]
        %v502 = vld [vmem:[%s492 + $0x24] sm:$0xf]
        %v503 = vld [vmem:[%s492 + $0x28] sm:$0xf]
        %v504 = vld [vmem:[%s492 + $0x2c] sm:$0xf]
        %v505 = vld [vmem:[%s492 + $0x30] sm:$0xf]
        %v506 = vld [vmem:[%s492 + $0x34] sm:$0xf]
        %v507 = vld [vmem:[%s492 + $0x38] sm:$0xf]
        %v508 = vld [vmem:[%s492 + $0x3c] sm:$0xf]
        %v525 = vunpack.c.l.b16 %v493
        %v526 = vunpack.c.l.b16 %v494
        %v527 = vunpack.c.l.b16 %v495
        %v528 = vunpack.c.l.b16 %v496
        %v529 = vunpack.c.l.b16 %v497
        %v530 = vunpack.c.l.b16 %v498
        %v531 = vunpack.c.l.b16 %v499
        %v532 = vunpack.c.l.b16 %v500
        %v533 = vunpack.c.l.b16 %v501
        %v534 = vunpack.c.l.b16 %v502
        %v535 = vunpack.c.l.b16 %v503
        %v536 = vunpack.c.l.b16 %v504
        %v537 = vunpack.c.l.b16 %v505
        %v538 = vunpack.c.l.b16 %v506
        %v539 = vunpack.c.l.b16 %v507
        %v540 = vunpack.c.l.b16 %v508
        %v541 = vpack.c.b16 %v526, %v525
        %v542 = vpack.c.b16 %v528, %v527
        %v543 = vpack.c.b16 %v530, %v529
        %v544 = vpack.c.b16 %v532, %v531
        %v545 = vpack.c.b16 %v534, %v533
        %v546 = vpack.c.b16 %v536, %v535
        %v547 = vpack.c.b16 %v538, %v537
        %v548 = vpack.c.b16 %v540, %v539
        %557 = vmatpush.bf16.msra.mxu0 %v548
        %558 = vmatpush.bf16.msra.mxu0 %v547
        %559 = vmatpush.bf16.msra.mxu0 %v546
        %560 = vmatpush.bf16.msra.mxu0 %v545
        %561 = vmatpush.bf16.msra.mxu0 %v544
        %562 = vmatpush.bf16.msra.mxu0 %v543
        %563 = vmatpush.bf16.msra.mxu0 %v542
        %564 = vmatpush.bf16.msra.mxu0 %v541
        %565 = vmatmul.bf16.gmra.mxu0 %v491
        %v566 = vpop.f32.mrf.mxu0
        %v567 = vadd.f32 0.0, %v566
        %v568 = vpop.f32.mrf.mxu0
        %569 = vdwg.mxu0
        %v570 = vadd.f32 %v489, %v567
        %s571 = scalar_lea.vmem %s217, 24 [#allocation2]
        %v572 = vld [vmem:[%s571] sm:$0x7]
        %s573 = scalar_lea.vmem %s1, 256
        %v574 = vld [vmem:[%s573] sm:$0xf]
        %v575 = vld [vmem:[%s573 + $0x4] sm:$0xf]
        %v576 = vld [vmem:[%s573 + $0x8] sm:$0xf]
        %v577 = vld [vmem:[%s573 + $0xc] sm:$0xf]
        %v578 = vld [vmem:[%s573 + $0x10] sm:$0xf]
        %v579 = vld [vmem:[%s573 + $0x14] sm:$0xf]
        %v580 = vld [vmem:[%s573 + $0x18] sm:$0xf]
        %v581 = vld [vmem:[%s573 + $0x1c] sm:$0xf]
        %v582 = vld [vmem:[%s573 + $0x20] sm:$0xf]
        %v583 = vld [vmem:[%s573 + $0x24] sm:$0xf]
        %v584 = vld [vmem:[%s573 + $0x28] sm:$0xf]
        %v585 = vld [vmem:[%s573 + $0x2c] sm:$0xf]
        %v586 = vld [vmem:[%s573 + $0x30] sm:$0xf]
        %v587 = vld [vmem:[%s573 + $0x34] sm:$0xf]
        %v588 = vld [vmem:[%s573 + $0x38] sm:$0xf]
        %v589 = vld [vmem:[%s573 + $0x3c] sm:$0xf]
        %v606 = vunpack.c.l.b16 %v574
        %v607 = vunpack.c.l.b16 %v575
        %v608 = vunpack.c.l.b16 %v576
        %v609 = vunpack.c.l.b16 %v577
        %v610 = vunpack.c.l.b16 %v578
        %v611 = vunpack.c.l.b16 %v579
        %v612 = vunpack.c.l.b16 %v580
        %v613 = vunpack.c.l.b16 %v581
        %v614 = vunpack.c.l.b16 %v582
        %v615 = vunpack.c.l.b16 %v583
        %v616 = vunpack.c.l.b16 %v584
        %v617 = vunpack.c.l.b16 %v585
        %v618 = vunpack.c.l.b16 %v586
        %v619 = vunpack.c.l.b16 %v587
        %v620 = vunpack.c.l.b16 %v588
        %v621 = vunpack.c.l.b16 %v589
        %v622 = vpack.c.b16 %v607, %v606
        %v623 = vpack.c.b16 %v609, %v608
        %v624 = vpack.c.b16 %v611, %v610
        %v625 = vpack.c.b16 %v613, %v612
        %v626 = vpack.c.b16 %v615, %v614
        %v627 = vpack.c.b16 %v617, %v616
        %v628 = vpack.c.b16 %v619, %v618
        %v629 = vpack.c.b16 %v621, %v620
        %638 = vmatpush.bf16.msra.mxu0 %v629
        %639 = vmatpush.bf16.msra.mxu0 %v628
        %640 = vmatpush.bf16.msra.mxu0 %v627
        %641 = vmatpush.bf16.msra.mxu0 %v626
        %642 = vmatpush.bf16.msra.mxu0 %v625
        %643 = vmatpush.bf16.msra.mxu0 %v624
        %644 = vmatpush.bf16.msra.mxu0 %v623
        %645 = vmatpush.bf16.msra.mxu0 %v622
        %646 = vmatmul.bf16.gmra.mxu0 %v572
        %v647 = vpop.f32.mrf.mxu0
        %v648 = vadd.f32 0.0, %v647
        %v649 = vpop.f32.mrf.mxu0
        %650 = vdwg.mxu0
        %v651 = vadd.f32 %v570, %v648
        %v652 = vld [vmem:[%s490] sm:$0xf]
        %s653 = scalar_lea.vmem %s1, 320
        %v654 = vld [vmem:[%s653] sm:$0xf]
        %v655 = vld [vmem:[%s653 + $0x4] sm:$0xf]
        %v656 = vld [vmem:[%s653 + $0x8] sm:$0xf]
        %v657 = vld [vmem:[%s653 + $0xc] sm:$0xf]
        %v658 = vld [vmem:[%s653 + $0x10] sm:$0xf]
        %v659 = vld [vmem:[%s653 + $0x14] sm:$0xf]
        %v660 = vld [vmem:[%s653 + $0x18] sm:$0xf]
        %v661 = vld [vmem:[%s653 + $0x1c] sm:$0xf]
        %v662 = vld [vmem:[%s653 + $0x20] sm:$0xf]
        %v663 = vld [vmem:[%s653 + $0x24] sm:$0xf]
        %v664 = vld [vmem:[%s653 + $0x28] sm:$0xf]
        %v665 = vld [vmem:[%s653 + $0x2c] sm:$0xf]
        %v666 = vld [vmem:[%s653 + $0x30] sm:$0xf]
        %v667 = vld [vmem:[%s653 + $0x34] sm:$0xf]
        %v668 = vld [vmem:[%s653 + $0x38] sm:$0xf]
        %v669 = vld [vmem:[%s653 + $0x3c] sm:$0xf]
        %v671 = vunpack.c.l.b16 %v652
        %v672 = vpack.c.b16 %v671, %v671
        %v674 = vshrl.u32 %v672, 16
        %v676 = vshll.u32 %v672, 16
        %v678 = vrot.slane %v676, 1
        %v679 = vor.u32 %v674, %v678
        %v697 = vunpack.c.l.b16 %v654
        %v698 = vunpack.c.l.b16 %v655
        %v699 = vunpack.c.l.b16 %v656
        %v700 = vunpack.c.l.b16 %v657
        %v701 = vunpack.c.l.b16 %v658
        %v702 = vunpack.c.l.b16 %v659
        %v703 = vunpack.c.l.b16 %v660
        %v704 = vunpack.c.l.b16 %v661
        %v705 = vunpack.c.l.b16 %v662
        %v706 = vunpack.c.l.b16 %v663
        %v707 = vunpack.c.l.b16 %v664
        %v708 = vunpack.c.l.b16 %v665
        %v709 = vunpack.c.l.b16 %v666
        %v710 = vunpack.c.l.b16 %v667
        %v711 = vunpack.c.l.b16 %v668
        %v712 = vunpack.c.l.b16 %v669
        %v713 = vpack.c.b16 %v698, %v697
        %v714 = vpack.c.b16 %v700, %v699
        %v715 = vpack.c.b16 %v702, %v701
        %v716 = vpack.c.b16 %v704, %v703
        %v717 = vpack.c.b16 %v706, %v705
        %v718 = vpack.c.b16 %v708, %v707
        %v719 = vpack.c.b16 %v710, %v709
        %v720 = vpack.c.b16 %v712, %v711
        %729 = vmatpush.bf16.msra.mxu0 %v720
        %730 = vmatpush.bf16.msra.mxu0 %v719
        %731 = vmatpush.bf16.msra.mxu0 %v718
        %732 = vmatpush.bf16.msra.mxu0 %v717
        %733 = vmatpush.bf16.msra.mxu0 %v716
        %734 = vmatpush.bf16.msra.mxu0 %v715
        %735 = vmatpush.bf16.msra.mxu0 %v714
        %736 = vmatpush.bf16.msra.mxu0 %v713
        %737 = vmatmul.bf16.gmra.mxu0 %v679
        %v738 = vpop.f32.mrf.mxu0
        %v739 = vadd.f32 0.0, %v738
        %v740 = vpop.f32.mrf.mxu0
        %741 = vdwg.mxu0
        %v742 = vadd.f32 %v651, %v739
        %v743 = vld [vmem:[%s217] sm:$0xe]
        %v744 = vld [vmem:[%s217 + $0x4] sm:$0x1]
        %s745 = scalar_lea.vmem %s1, 384
        %v746 = vld [vmem:[%s745] sm:$0xf]
        %v747 = vld [vmem:[%s745 + $0x4] sm:$0xf]
        %v748 = vld [vmem:[%s745 + $0x8] sm:$0xf]
        %v749 = vld [vmem:[%s745 + $0xc] sm:$0xf]
        %v750 = vld [vmem:[%s745 + $0x10] sm:$0xf]
        %v751 = vld [vmem:[%s745 + $0x14] sm:$0xf]
        %v752 = vld [vmem:[%s745 + $0x18] sm:$0xf]
        %v753 = vld [vmem:[%s745 + $0x1c] sm:$0xf]
        %v754 = vld [vmem:[%s745 + $0x20] sm:$0xf]
        %v755 = vld [vmem:[%s745 + $0x24] sm:$0xf]
        %v756 = vld [vmem:[%s745 + $0x28] sm:$0xf]
        %v757 = vld [vmem:[%s745 + $0x2c] sm:$0xf]
        %v758 = vld [vmem:[%s745 + $0x30] sm:$0xf]
        %v759 = vld [vmem:[%s745 + $0x34] sm:$0xf]
        %v760 = vld [vmem:[%s745 + $0x38] sm:$0xf]
        %v761 = vld [vmem:[%s745 + $0x3c] sm:$0xf]
        %v764 = vunpack.c.l.b16 %v743
        %v765 = vunpack.c.l.b16 %v744
        %v766 = vpack.c.b16 %v765, %v764
        %v768 = vshrl.u32 %v766, 16
        %v770 = vrot.slane %v768, 1
        %v771 = vshll.u32 %v766, 16
        %v773 = vrot.slane %v771, 2
        %v774 = vor.u32 %v770, %v773
        %v792 = vunpack.c.l.b16 %v746
        %v793 = vunpack.c.l.b16 %v747
        %v794 = vunpack.c.l.b16 %v748
        %v795 = vunpack.c.l.b16 %v749
        %v796 = vunpack.c.l.b16 %v750
        %v797 = vunpack.c.l.b16 %v751
        %v798 = vunpack.c.l.b16 %v752
        %v799 = vunpack.c.l.b16 %v753
        %v800 = vunpack.c.l.b16 %v754
        %v801 = vunpack.c.l.b16 %v755
        %v802 = vunpack.c.l.b16 %v756
        %v803 = vunpack.c.l.b16 %v757
        %v804 = vunpack.c.l.b16 %v758
        %v805 = vunpack.c.l.b16 %v759
        %v806 = vunpack.c.l.b16 %v760
        %v807 = vunpack.c.l.b16 %v761
        %v808 = vpack.c.b16 %v793, %v792
        %v809 = vpack.c.b16 %v795, %v794
        %v810 = vpack.c.b16 %v797, %v796
        %v811 = vpack.c.b16 %v799, %v798
        %v812 = vpack.c.b16 %v801, %v800
        %v813 = vpack.c.b16 %v803, %v802
        %v814 = vpack.c.b16 %v805, %v804
        %v815 = vpack.c.b16 %v807, %v806
        %824 = vmatpush.bf16.msra.mxu0 %v815
        %825 = vmatpush.bf16.msra.mxu0 %v814
        %826 = vmatpush.bf16.msra.mxu0 %v813
        %827 = vmatpush.bf16.msra.mxu0 %v812
        %828 = vmatpush.bf16.msra.mxu0 %v811
        %829 = vmatpush.bf16.msra.mxu0 %v810
        %830 = vmatpush.bf16.msra.mxu0 %v809
        %831 = vmatpush.bf16.msra.mxu0 %v808
        %832 = vmatmul.bf16.gmra.mxu0 %v774
        %v833 = vpop.f32.mrf.mxu0
        %v834 = vadd.f32 0.0, %v833
        %v835 = vpop.f32.mrf.mxu0
        %836 = vdwg.mxu0
        %v837 = vadd.f32 %v742, %v834
        %v838 = vld [vmem:[%s258] sm:$0xe]
        %v839 = vld [vmem:[%s258 + $0x4] sm:$0x1]
        %s840 = scalar_lea.vmem %s1, 448
        %v841 = vld [vmem:[%s840] sm:$0xf]
        %v842 = vld [vmem:[%s840 + $0x4] sm:$0xf]
        %v843 = vld [vmem:[%s840 + $0x8] sm:$0xf]
        %v844 = vld [vmem:[%s840 + $0xc] sm:$0xf]
        %v845 = vld [vmem:[%s840 + $0x10] sm:$0xf]
        %v846 = vld [vmem:[%s840 + $0x14] sm:$0xf]
        %v847 = vld [vmem:[%s840 + $0x18] sm:$0xf]
        %v848 = vld [vmem:[%s840 + $0x1c] sm:$0xf]
        %v849 = vld [vmem:[%s840 + $0x20] sm:$0xf]
        %v850 = vld [vmem:[%s840 + $0x24] sm:$0xf]
        %v851 = vld [vmem:[%s840 + $0x28] sm:$0xf]
        %v852 = vld [vmem:[%s840 + $0x2c] sm:$0xf]
        %v853 = vld [vmem:[%s840 + $0x30] sm:$0xf]
        %v854 = vld [vmem:[%s840 + $0x34] sm:$0xf]
        %v855 = vld [vmem:[%s840 + $0x38] sm:$0xf]
        %v856 = vld [vmem:[%s840 + $0x3c] sm:$0xf]
        %v859 = vunpack.c.l.b16 %v838
        %v860 = vunpack.c.l.b16 %v839
        %v861 = vpack.c.b16 %v860, %v859
        %v863 = vshrl.u32 %v861, 16
        %v865 = vrot.slane %v863, 1
        %v866 = vshll.u32 %v861, 16
        %v868 = vrot.slane %v866, 2
        %v869 = vor.u32 %v865, %v868
        %v887 = vunpack.c.l.b16 %v841
        %v888 = vunpack.c.l.b16 %v842
        %v889 = vunpack.c.l.b16 %v843
        %v890 = vunpack.c.l.b16 %v844
        %v891 = vunpack.c.l.b16 %v845
        %v892 = vunpack.c.l.b16 %v846
        %v893 = vunpack.c.l.b16 %v847
        %v894 = vunpack.c.l.b16 %v848
        %v895 = vunpack.c.l.b16 %v849
        %v896 = vunpack.c.l.b16 %v850
        %v897 = vunpack.c.l.b16 %v851
        %v898 = vunpack.c.l.b16 %v852
        %v899 = vunpack.c.l.b16 %v853
        %v900 = vunpack.c.l.b16 %v854
        %v901 = vunpack.c.l.b16 %v855
        %v902 = vunpack.c.l.b16 %v856
        %v903 = vpack.c.b16 %v888, %v887
        %v904 = vpack.c.b16 %v890, %v889
        %v905 = vpack.c.b16 %v892, %v891
        %v906 = vpack.c.b16 %v894, %v893
        %v907 = vpack.c.b16 %v896, %v895
        %v908 = vpack.c.b16 %v898, %v897
        %v909 = vpack.c.b16 %v900, %v899
        %v910 = vpack.c.b16 %v902, %v901
        %919 = vmatpush.bf16.msra.mxu0 %v910
        %920 = vmatpush.bf16.msra.mxu0 %v909
        %921 = vmatpush.bf16.msra.mxu0 %v908
        %922 = vmatpush.bf16.msra.mxu0 %v907
        %923 = vmatpush.bf16.msra.mxu0 %v906
        %924 = vmatpush.bf16.msra.mxu0 %v905
        %925 = vmatpush.bf16.msra.mxu0 %v904
        %926 = vmatpush.bf16.msra.mxu0 %v903
        %927 = vmatmul.bf16.gmra.mxu0 %v869
        %v928 = vpop.f32.mrf.mxu0
        %v929 = vadd.f32 0.0, %v928
        %v930 = vpop.f32.mrf.mxu0
        %931 = vdwg.mxu0
        %v932 = vadd.f32 %v837, %v929
        %v933 = vld [vmem:[%s217] sm:$0xc]
        %s934 = scalar_lea.vmem %s1, 512
        %v935 = vld [vmem:[%s934] sm:$0xf]
        %v936 = vld [vmem:[%s934 + $0x4] sm:$0xf]
        %v937 = vld [vmem:[%s934 + $0x8] sm:$0xf]
        %v938 = vld [vmem:[%s934 + $0xc] sm:$0xf]
        %v939 = vld [vmem:[%s934 + $0x10] sm:$0xf]
        %v940 = vld [vmem:[%s934 + $0x14] sm:$0xf]
        %v941 = vld [vmem:[%s934 + $0x18] sm:$0xf]
        %v942 = vld [vmem:[%s934 + $0x1c] sm:$0xf]
        %v943 = vld [vmem:[%s934 + $0x20] sm:$0xf]
        %v944 = vld [vmem:[%s934 + $0x24] sm:$0xf]
        %v945 = vld [vmem:[%s934 + $0x28] sm:$0xf]
        %v946 = vld [vmem:[%s934 + $0x2c] sm:$0xf]
        %v947 = vld [vmem:[%s934 + $0x30] sm:$0xf]
        %v948 = vld [vmem:[%s934 + $0x34] sm:$0xf]
        %v949 = vld [vmem:[%s934 + $0x38] sm:$0xf]
        %v950 = vld [vmem:[%s934 + $0x3c] sm:$0xf]
        %v952 = vunpack.c.l.b16 %v933
        %v953 = vpack.c.b16 %v765, %v952
        %v954 = vrot.slane %v953, 2
        %v972 = vunpack.c.l.b16 %v935
        %v973 = vunpack.c.l.b16 %v936
        %v974 = vunpack.c.l.b16 %v937
        %v975 = vunpack.c.l.b16 %v938
        %v976 = vunpack.c.l.b16 %v939
        %v977 = vunpack.c.l.b16 %v940
        %v978 = vunpack.c.l.b16 %v941
        %v979 = vunpack.c.l.b16 %v942
        %v980 = vunpack.c.l.b16 %v943
        %v981 = vunpack.c.l.b16 %v944
        %v982 = vunpack.c.l.b16 %v945
        %v983 = vunpack.c.l.b16 %v946
        %v984 = vunpack.c.l.b16 %v947
        %v985 = vunpack.c.l.b16 %v948
        %v986 = vunpack.c.l.b16 %v949
        %v987 = vunpack.c.l.b16 %v950
        %v988 = vpack.c.b16 %v973, %v972
        %v989 = vpack.c.b16 %v975, %v974
        %v990 = vpack.c.b16 %v977, %v976
        %v991 = vpack.c.b16 %v979, %v978
        %v992 = vpack.c.b16 %v981, %v980
        %v993 = vpack.c.b16 %v983, %v982
        %v994 = vpack.c.b16 %v985, %v984
        %v995 = vpack.c.b16 %v987, %v986
        %1004 = vmatpush.bf16.msra.mxu0 %v995
        %1005 = vmatpush.bf16.msra.mxu0 %v994
        %1006 = vmatpush.bf16.msra.mxu0 %v993
        %1007 = vmatpush.bf16.msra.mxu0 %v992
        %1008 = vmatpush.bf16.msra.mxu0 %v991
        %1009 = vmatpush.bf16.msra.mxu0 %v990
        %1010 = vmatpush.bf16.msra.mxu0 %v989
        %1011 = vmatpush.bf16.msra.mxu0 %v988
        %1012 = vmatmul.bf16.gmra.mxu0 %v954
        %v1013 = vpop.f32.mrf.mxu0
        %v1014 = vadd.f32 0.0, %v1013
        %v1015 = vpop.f32.mrf.mxu0
        %1016 = vdwg.mxu0
        %v1017 = vadd.f32 %v932, %v1014
        %v1018 = vld [vmem:[%s2] sm:$0x1]
        %v1020 = vperm.slane %v1018, 0
        %v1022 = vadd.f32 %v1017, %v1020
        %vm1023 = vcmp.ge.f32.partialorder %v1022, 0.0
        %v1024 = vmul.f32 %v1022, 0.01
        %v1025 = vsel %vm1023, %v1022, %v1024
        %v1026 = vpack.c.bf16 %v1025, %v1025
        %1027 = vst [vmem:[%s240] sm:$0x7] %v1026
        %p1028 = scmp.lt.s32.totalorder %s14, 1
        %s1029 = scalar_select %p1028, %s14, 1
        %s1030 = smul.addr %s1029, 4
        %s1031 = scalar_lea.vmem %s3, %s1030
        // Predicated region
        $region74: #{music_genre_forward.8} parent=68 // pred_check
          %p1032 = pneg %p100
        $region75: #{music_genre_forward.8} parent=68 // pred_check_branch
          %1034 = sbr.rel (%p1032) target = $region77
        $region76: #{music_genre_forward.8} parent=68 // pred_region
          _
        $region77: #{music_genre_forward.8} parent=68 // pred_fallthru
          _
      $region69: #{music_genre_forward.8} parent=5 // pred_fallthru
        _
      %p1035 = scmp.le.s32.totalorder 2, %s9
      // Predicated region
      $region78: #{music_genre_forward.8} parent=5 // pred_check
        %p1036 = pneg %p1035
      $region79: #{music_genre_forward.8} parent=5 // pred_check_branch
        %1038 = sbr.rel (%p1036) target = $region81
      $region80: #{music_genre_forward.8} parent=5 // pred_region
        %s1039 = ssub.s32 %s9, 2
        // Predicated region
        $region82: #{music_genre_forward.8} parent=80 // pred_check
          %p1040 = pneg %p106
        $region83: #{music_genre_forward.8} parent=80 // pred_check_branch
          %1042 = sbr.rel (%p1040) target = $region85
        $region84: #{music_genre_forward.8} parent=80 // pred_region
          %p1043 = scmp.lt.s32.totalorder %s15, 1
          %s1044 = scalar_select %p1043, %s15, 1
          %s1045 = smul.addr %s1044, 4
          %s1046 = scalar_lea.vmem %s3, %s1045
        $region85: #{music_genre_forward.8} parent=80 // pred_fallthru
          _
      $region81: #{music_genre_forward.8} parent=5 // pred_fallthru
        _
    $region6: #{music_genre_forward.8} parent=1 // loop_footer
      %s13 = sadd.s32 1, %s9
    $region7: #{music_genre_forward.8} parent=1 // loop_footer_branch
      %8 = sbr.rel target = $region3
    $region8: #{music_genre_forward.8} parent=1 // loop_exit
      _

// kernel: music_genre_forward.9
$region0: #{music_genre_forward.9}
  #allocation0 [shape = 'u32[]', space=smem, size = 0x4, offset = 0x4, fixed_abs, tag = 'smem constant byte address 0x4 - core index']
  #allocation1 [shape = 'u32[72,128]{1,0:T(1,128)}', space=vmem, size = 0x9000, scoped, tag = 'internal scratch']
  %s0 = inlined_call_operand.vmem [shape: bf16[2,16,128], index: 0, kind: input, shape index: {}]
  %s1 = inlined_call_operand.vmem [shape: bf16[3,3,128,128], index: 1, kind: input, shape index: {}]
  %s2 = inlined_call_operand.vmem [shape: f32[1,128], index: 2, kind: input, shape index: {}]
  %s3 = inlined_call_operand.vmem [shape: bf16[2,2,2,6,128], index: 3, kind: output, shape index: {}]
  %s4 = sld [smem:[#allocation0]]
  $region82: #{music_genre_forward.9} parent=0
    _
  %s6 = ssub.s32 1, %s4
  %s7 = scalar_select 0, %s6, %s4
  $region1: #{music_genre_forward.9} parent=0
    #allocation2 [shape = 'u8[16384]{0}', space=vmem, size = 0x4000, scoped, tag = 'output window, operand 0']
    loop: start=0, step=1, limit=4
    $region2: #{music_genre_forward.9} parent=1 // loop_pre_header
      _
    $region3: #{music_genre_forward.9} parent=1 // loop_header
      %s9 = sphi 0, %s13
      %p10 = scmp.ge.s32.totalorder %s9, 4
      %s19 = sphi 0, %s21
      %s22 = sphi 0, %s19
      %s23 = sphi 0, %s22
      %s39 = sphi 0, %s23
      %s43 = sphi 0, %s43
      %s45 = sphi 0, %s43
      %s46 = sphi 0, %s45
      %s60 = sphi 0, %s46
      %s64 = sphi 0, %s64
      %s66 = sphi 0, %s64
      %s67 = sphi 0, %s66
      %s81 = sphi 0, %s67
      %s87 = sphi 0, %s89
      %s90 = sphi 0, %s87
      %s91 = sphi 0, %s90
      %s107 = sphi 0, %s91
    $region4: #{music_genre_forward.9} parent=1 // loop_header_branch
      %12 = sbr.rel (%p10) target = $region8
    $region5: #{music_genre_forward.9} parent=1 // loop_body
      %s14 = ssub.s32 %s9, 1
      %s15 = ssub.s32 %s9, 2
      %s16 = sadd.s32 %s9, 1
      %s17 = ssub.s32 %s9, %s16
      %p18 = scmp.eq.s32.totalorder %s17, 0
      %s20 = sadd.s32 %s19, 1
      %s21 = scalar_select %p18, %s19, %s20
      %p24 = pneg %p18
      %p25 = scmp.eq.s32.totalorder %s9, 1
      %p26 = por %p24, %p25
      %p27 = scmp.ne.s32.totalorder %s19, %s22
      %p28 = scmp.eq.s32.totalorder %s9, 0
      %p29 = por %p27, %p28
      %p30 = scmp.ne.s32.totalorder %s19, %s22
      %p31 = scmp.eq.s32.totalorder %s14, 1
      %p32 = por %p30, %p31
      %p33 = scmp.ne.s32.totalorder %s22, %s23
      %p34 = scmp.eq.s32.totalorder %s14, 0
      %p35 = por %p33, %p34
      %p36 = scmp.ne.s32.totalorder %s22, %s23
      %p37 = scmp.eq.s32.totalorder %s15, 1
      %p38 = por %p36, %p37
      %p40 = scmp.ne.s32.totalorder %s23, %s39
      %p41 = scmp.eq.s32.totalorder %s15, 0
      %p42 = por %p40, %p41
      %s44 = sadd.s32 %s43, 1
      %p47 = scmp.eq.s32.totalorder %s9, 1
      %p48 = scmp.ne.s32.totalorder %s43, %s45
      %p49 = scmp.eq.s32.totalorder %s9, 0
      %p50 = por %p48, %p49
      %p51 = scmp.ne.s32.totalorder %s43, %s45
      %p52 = scmp.eq.s32.totalorder %s14, 1
      %p53 = por %p51, %p52
      %p54 = scmp.ne.s32.totalorder %s45, %s46
      %p55 = scmp.eq.s32.totalorder %s14, 0
      %p56 = por %p54, %p55
      %p57 = scmp.ne.s32.totalorder %s45, %s46
      %p58 = scmp.eq.s32.totalorder %s15, 1
      %p59 = por %p57, %p58
      %p61 = scmp.ne.s32.totalorder %s46, %s60
      %p62 = scmp.eq.s32.totalorder %s15, 0
      %p63 = por %p61, %p62
      %s65 = sadd.s32 %s64, 1
      %p68 = scmp.eq.s32.totalorder %s9, 1
      %p69 = scmp.ne.s32.totalorder %s64, %s66
      %p70 = scmp.eq.s32.totalorder %s9, 0
      %p71 = por %p69, %p70
      %p72 = scmp.ne.s32.totalorder %s64, %s66
      %p73 = scmp.eq.s32.totalorder %s14, 1
      %p74 = por %p72, %p73
      %p75 = scmp.ne.s32.totalorder %s66, %s67
      %p76 = scmp.eq.s32.totalorder %s14, 0
      %p77 = por %p75, %p76
      %p78 = scmp.ne.s32.totalorder %s66, %s67
      %p79 = scmp.eq.s32.totalorder %s15, 1
      %p80 = por %p78, %p79
      %p82 = scmp.ne.s32.totalorder %s67, %s81
      %p83 = scmp.eq.s32.totalorder %s15, 0
      %p84 = por %p82, %p83
      %s85 = ssub.s32 %s9, %s16
      %p86 = scmp.eq.s32.totalorder %s85, 0
      %s88 = sadd.s32 %s87, 1
      %s89 = scalar_select %p86, %s87, %s88
      %p92 = pneg %p86
      %p93 = scmp.eq.s32.totalorder %s9, 1
      %p94 = por %p92, %p93
      %p95 = scmp.ne.s32.totalorder %s87, %s90
      %p96 = scmp.eq.s32.totalorder %s9, 0
      %p97 = por %p95, %p96
      %p98 = scmp.ne.s32.totalorder %s87, %s90
      %p99 = scmp.eq.s32.totalorder %s14, 1
      %p100 = por %p98, %p99
      %p101 = scmp.ne.s32.totalorder %s90, %s91
      %p102 = scmp.eq.s32.totalorder %s14, 0
      %p103 = por %p101, %p102
      %p104 = scmp.ne.s32.totalorder %s90, %s91
      %p105 = scmp.eq.s32.totalorder %s15, 1
      %p106 = por %p104, %p105
      %p108 = scmp.ne.s32.totalorder %s91, %s107
      %p109 = scmp.eq.s32.totalorder %s15, 0
      %p110 = por %p108, %p109
      %p111 = scmp.le.s32.totalorder 1, %s9
      %p112 = scmp.lt.s32.totalorder %s9, 3
      %p113 = pnand %p111, %p112
      %p114 = pneg %p113
      // Predicated region
      $region9: #{music_genre_forward.9} parent=5 // pred_check
        _
      $region10: #{music_genre_forward.9} parent=5 // pred_check_branch
        %116 = sbr.rel (%p113) target = $region12
      $region11: #{music_genre_forward.9} parent=5 // pred_region
        %s117 = ssub.s32 %s9, 1
        // Predicated region
        $region13: #{music_genre_forward.9} parent=11 // pred_check
          %p118 = pneg %p56
        $region14: #{music_genre_forward.9} parent=11 // pred_check_branch
          %120 = sbr.rel (%p118) target = $region16
        $region15: #{music_genre_forward.9} parent=11 // pred_region
          _
        $region16: #{music_genre_forward.9} parent=11 // pred_fallthru
          _
        // Predicated region
        $region17: #{music_genre_forward.9} parent=11 // pred_check
          %p121 = pneg %p77
        $region18: #{music_genre_forward.9} parent=11 // pred_check_branch
          %123 = sbr.rel (%p121) target = $region20
        $region19: #{music_genre_forward.9} parent=11 // pred_region
          _
        $region20: #{music_genre_forward.9} parent=11 // pred_fallthru
          _
      $region12: #{music_genre_forward.9} parent=5 // pred_fallthru
        _
      %p124 = scmp.lt.s32.totalorder %s9, 2
      // Predicated region
      $region21: #{music_genre_forward.9} parent=5 // pred_check
        %p125 = pneg %p124
      $region22: #{music_genre_forward.9} parent=5 // pred_check_branch
        %127 = sbr.rel (%p125) target = $region24
      $region23: #{music_genre_forward.9} parent=5 // pred_region
        // Predicated region
        $region25: #{music_genre_forward.9} parent=23 // pred_check
          %p128 = pneg %p29
        $region26: #{music_genre_forward.9} parent=23 // pred_check_branch
          %130 = sbr.rel (%p128) target = $region28
        $region27: #{music_genre_forward.9} parent=23 // pred_region
          %p131 = scmp.lt.s32.totalorder %s9, 1
          %s132 = scalar_select %p131, %s9, 1
          %s133 = smul.addr %s132, 2
          %s134 = smul.addr %s133, 4
          %s135 = scalar_lea.vmem %s0, %s134
        $region28: #{music_genre_forward.9} parent=23 // pred_fallthru
          _
      $region24: #{music_genre_forward.9} parent=5 // pred_fallthru
        _
      %p136 = scmp.le.s32.totalorder 1, %s9
      %p137 = scmp.lt.s32.totalorder %s9, 3
      %p138 = pnand %p136, %p137
      %p139 = pneg %p138
      // Predicated region
      $region29: #{music_genre_forward.9} parent=5 // pred_check
        _
      $region30: #{music_genre_forward.9} parent=5 // pred_check_branch
        %141 = sbr.rel (%p138) target = $region32
      $region31: #{music_genre_forward.9} parent=5 // pred_region
        %s142 = ssub.s32 %s9, 1
        %p143 = scmp.lt.s32.totalorder %s14, 1
        %s144 = scalar_select %p143, %s14, 1
        %s145 = smul.addr %s144, 2
        %s146 = smul.addr %s145, 4
        %s147 = scalar_lea.vmem %s0, %s146
        %p148 = pneg %p35
        %p149 = pneg %p32
        %p150 = pneg %p56
        %p151 = pneg %p53
        %p152 = pneg %p77
        %p153 = pneg %p74
        %p154 = pneg %p103
        %p155 = pneg %p100
        %s156 = sand.u32 %s90, 1
        %s157 = sand.u32 %s90, 1
        %s158 = smul.addr %s157, 16
        %s159 = scalar_lea.vmem [#allocation2], %s158
        %p160 = scmp.lt.s32.totalorder %s14, 1
        %s161 = scalar_select %p160, %s14, 1
        %s162 = smul.addr %s161, 2
        %s163 = smul.addr %s162, 4
        %s164 = scalar_lea.vmem %s0, %s163
        %v165 = vld [vmem:[%s164] sm:$0x7]
        %v166 = vld [vmem:[%s164] sm:$0xf]
        %v167 = vld [vmem:[%s164] sm:$0xe]
        %v168 = vld [vmem:[%s164 + $0x4] sm:$0x1]
        %v169 = vld [vmem:[%s164] sm:$0xc]
        %v170 = vld [vmem:[%s2] sm:$0x1]
        %s171 = scalar_lea.vmem %s1, 256
        %v172 = vld [vmem:[%s171] sm:$0xf]
        %v173 = vld [vmem:[%s171 + $0x4] sm:$0xf]
        %v174 = vld [vmem:[%s171 + $0x8] sm:$0xf]
        %v175 = vld [vmem:[%s171 + $0xc] sm:$0xf]
        %v176 = vld [vmem:[%s171 + $0x10] sm:$0xf]
        %v177 = vld [vmem:[%s171 + $0x14] sm:$0xf]
        %v178 = vld [vmem:[%s171 + $0x18] sm:$0xf]
        %v179 = vld [vmem:[%s171 + $0x1c] sm:$0xf]
        %v180 = vld [vmem:[%s171 + $0x20] sm:$0xf]
        %v181 = vld [vmem:[%s171 + $0x24] sm:$0xf]
        %v182 = vld [vmem:[%s171 + $0x28] sm:$0xf]
        %v183 = vld [vmem:[%s171 + $0x2c] sm:$0xf]
        %v184 = vld [vmem:[%s171 + $0x30] sm:$0xf]
        %v185 = vld [vmem:[%s171 + $0x34] sm:$0xf]
        %v186 = vld [vmem:[%s171 + $0x38] sm:$0xf]
        %v187 = vld [vmem:[%s171 + $0x3c] sm:$0xf]
        %v189 = vperm.slane %v170, 0
        %v207 = vunpack.c.l.b16 %v172
        %v208 = vunpack.c.l.b16 %v173
        %v209 = vunpack.c.l.b16 %v174
        %v210 = vunpack.c.l.b16 %v175
        %v211 = vunpack.c.l.b16 %v176
        %v212 = vunpack.c.l.b16 %v177
        %v213 = vunpack.c.l.b16 %v178
        %v214 = vunpack.c.l.b16 %v179
        %v215 = vunpack.c.l.b16 %v180
        %v216 = vunpack.c.l.b16 %v181
        %v217 = vunpack.c.l.b16 %v182
        %v218 = vunpack.c.l.b16 %v183
        %v219 = vunpack.c.l.b16 %v184
        %v220 = vunpack.c.l.b16 %v185
        %v221 = vunpack.c.l.b16 %v186
        %v222 = vunpack.c.l.b16 %v187
        %v223 = vpack.c.b16 %v208, %v207
        %v224 = vpack.c.b16 %v210, %v209
        %v225 = vpack.c.b16 %v212, %v211
        %v226 = vpack.c.b16 %v214, %v213
        %v227 = vpack.c.b16 %v216, %v215
        %v228 = vpack.c.b16 %v218, %v217
        %v229 = vpack.c.b16 %v220, %v219
        %v230 = vpack.c.b16 %v222, %v221
        %239 = vmatpush.bf16.msra.mxu0 %v230
        %240 = vmatpush.bf16.msra.mxu0 %v229
        %241 = vmatpush.bf16.msra.mxu0 %v228
        %242 = vmatpush.bf16.msra.mxu0 %v227
        %243 = vmatpush.bf16.msra.mxu0 %v226
        %244 = vmatpush.bf16.msra.mxu0 %v225
        %245 = vmatpush.bf16.msra.mxu0 %v224
        %246 = vmatpush.bf16.msra.mxu0 %v223
        %247 = vmatmul.bf16.gmra.mxu0 %v165
        %v248 = vpop.f32.mrf.mxu0
        %v249 = vadd.f32 %v189, %v248
        %v250 = vpop.f32.mrf.mxu0
        %251 = vdwg.mxu0
        %vm252 = vcmp.ge.f32.partialorder %v249, 0.0
        %v253 = vmul.f32 %v249, 0.01
        %v254 = vsel %vm252, %v249, %v253
        %v255 = vpack.c.bf16 %v254, %v254
        %256 = vst [vmem:[%s159] sm:$0x7] %v255
        %s257 = scalar_lea.vmem %s1, 320
        %v258 = vld [vmem:[%s257] sm:$0xf]
        %v259 = vld [vmem:[%s257 + $0x4] sm:$0xf]
        %v260 = vld [vmem:[%s257 + $0x8] sm:$0xf]
        %v261 = vld [vmem:[%s257 + $0xc] sm:$0xf]
        %v262 = vld [vmem:[%s257 + $0x10] sm:$0xf]
        %v263 = vld [vmem:[%s257 + $0x14] sm:$0xf]
        %v264 = vld [vmem:[%s257 + $0x18] sm:$0xf]
        %v265 = vld [vmem:[%s257 + $0x1c] sm:$0xf]
        %v266 = vld [vmem:[%s257 + $0x20] sm:$0xf]
        %v267 = vld [vmem:[%s257 + $0x24] sm:$0xf]
        %v268 = vld [vmem:[%s257 + $0x28] sm:$0xf]
        %v269 = vld [vmem:[%s257 + $0x2c] sm:$0xf]
        %v270 = vld [vmem:[%s257 + $0x30] sm:$0xf]
        %v271 = vld [vmem:[%s257 + $0x34] sm:$0xf]
        %v272 = vld [vmem:[%s257 + $0x38] sm:$0xf]
        %v273 = vld [vmem:[%s257 + $0x3c] sm:$0xf]
        %s274 = scalar_lea.vmem %s1, 192
        %v275 = vld [vmem:[%s274] sm:$0xf]
        %v276 = vld [vmem:[%s274 + $0x4] sm:$0xf]
        %v277 = vld [vmem:[%s274 + $0x8] sm:$0xf]
        %v278 = vld [vmem:[%s274 + $0xc] sm:$0xf]
        %v279 = vld [vmem:[%s274 + $0x10] sm:$0xf]
        %v280 = vld [vmem:[%s274 + $0x14] sm:$0xf]
        %v281 = vld [vmem:[%s274 + $0x18] sm:$0xf]
        %v282 = vld [vmem:[%s274 + $0x1c] sm:$0xf]
        %v283 = vld [vmem:[%s274 + $0x20] sm:$0xf]
        %v284 = vld [vmem:[%s274 + $0x24] sm:$0xf]
        %v285 = vld [vmem:[%s274 + $0x28] sm:$0xf]
        %v286 = vld [vmem:[%s274 + $0x2c] sm:$0xf]
        %v287 = vld [vmem:[%s274 + $0x30] sm:$0xf]
        %v288 = vld [vmem:[%s274 + $0x34] sm:$0xf]
        %v289 = vld [vmem:[%s274 + $0x38] sm:$0xf]
        %v290 = vld [vmem:[%s274 + $0x3c] sm:$0xf]
        %v292 = vunpack.c.l.b16 %v166
        %v293 = vpack.c.b16 %v292, %v292
        %v295 = vshrl.u32 %v293, 16
        %v297 = vshll.u32 %v293, 16
        %v299 = vrot.slane %v297, 1
        %v300 = vor.u32 %v295, %v299
        %v318 = vunpack.c.l.b16 %v275
        %v319 = vunpack.c.l.b16 %v276
        %v320 = vunpack.c.l.b16 %v277
        %v321 = vunpack.c.l.b16 %v278
        %v322 = vunpack.c.l.b16 %v279
        %v323 = vunpack.c.l.b16 %v280
        %v324 = vunpack.c.l.b16 %v281
        %v325 = vunpack.c.l.b16 %v282
        %v326 = vunpack.c.l.b16 %v283
        %v327 = vunpack.c.l.b16 %v284
        %v328 = vunpack.c.l.b16 %v285
        %v329 = vunpack.c.l.b16 %v286
        %v330 = vunpack.c.l.b16 %v287
        %v331 = vunpack.c.l.b16 %v288
        %v332 = vunpack.c.l.b16 %v289
        %v333 = vunpack.c.l.b16 %v290
        %v334 = vpack.c.b16 %v319, %v318
        %v335 = vpack.c.b16 %v321, %v320
        %v336 = vpack.c.b16 %v323, %v322
        %v337 = vpack.c.b16 %v325, %v324
        %v338 = vpack.c.b16 %v327, %v326
        %v339 = vpack.c.b16 %v329, %v328
        %v340 = vpack.c.b16 %v331, %v330
        %v341 = vpack.c.b16 %v333, %v332
        %350 = vmatpush.bf16.msra.mxu0 %v341
        %351 = vmatpush.bf16.msra.mxu0 %v340
        %352 = vmatpush.bf16.msra.mxu0 %v339
        %353 = vmatpush.bf16.msra.mxu0 %v338
        %354 = vmatpush.bf16.msra.mxu0 %v337
        %355 = vmatpush.bf16.msra.mxu0 %v336
        %356 = vmatpush.bf16.msra.mxu0 %v335
        %357 = vmatpush.bf16.msra.mxu0 %v334
        %358 = vmatmul.bf16.gmra.mxu0 %v300
        %v359 = vpop.f32.mrf.mxu0
        %v360 = vadd.f32 0.0, %v359
        %v361 = vpop.f32.mrf.mxu0
        %362 = vdwg.mxu0
        %v379 = vunpack.c.l.b16 %v258
        %v380 = vunpack.c.l.b16 %v259
        %v381 = vunpack.c.l.b16 %v260
        %v382 = vunpack.c.l.b16 %v261
        %v383 = vunpack.c.l.b16 %v262
        %v384 = vunpack.c.l.b16 %v263
        %v385 = vunpack.c.l.b16 %v264
        %v386 = vunpack.c.l.b16 %v265
        %v387 = vunpack.c.l.b16 %v266
        %v388 = vunpack.c.l.b16 %v267
        %v389 = vunpack.c.l.b16 %v268
        %v390 = vunpack.c.l.b16 %v269
        %v391 = vunpack.c.l.b16 %v270
        %v392 = vunpack.c.l.b16 %v271
        %v393 = vunpack.c.l.b16 %v272
        %v394 = vunpack.c.l.b16 %v273
        %v395 = vpack.c.b16 %v380, %v379
        %v396 = vpack.c.b16 %v382, %v381
        %v397 = vpack.c.b16 %v384, %v383
        %v398 = vpack.c.b16 %v386, %v385
        %v399 = vpack.c.b16 %v388, %v387
        %v400 = vpack.c.b16 %v390, %v389
        %v401 = vpack.c.b16 %v392, %v391
        %v402 = vpack.c.b16 %v394, %v393
        %411 = vmatpush.bf16.msra.mxu0 %v402
        %412 = vmatpush.bf16.msra.mxu0 %v401
        %413 = vmatpush.bf16.msra.mxu0 %v400
        %414 = vmatpush.bf16.msra.mxu0 %v399
        %415 = vmatpush.bf16.msra.mxu0 %v398
        %416 = vmatpush.bf16.msra.mxu0 %v397
        %417 = vmatpush.bf16.msra.mxu0 %v396
        %418 = vmatpush.bf16.msra.mxu0 %v395
        %419 = vmatmul.bf16.gmra.mxu0 %v165
        %v420 = vpop.f32.mrf.mxu0
        %v421 = vadd.f32 %v360, %v420
        %v422 = vpop.f32.mrf.mxu0
        %423 = vdwg.mxu0
        %v424 = vadd.f32 %v421, %v189
        %vm425 = vcmp.ge.f32.partialorder %v424, 0.0
        %v426 = vmul.f32 %v424, 0.01
        %v427 = vsel %vm425, %v424, %v426
        %v428 = vpack.c.bf16 %v427, %v427
        %s429 = scalar_lea.vmem %s159, 4 [#allocation2]
        %430 = vst [vmem:[%s429] sm:$0x7] %v428
        %s431 = scalar_lea.vmem %s1, 448
        %v432 = vld [vmem:[%s431] sm:$0xf]
        %v433 = vld [vmem:[%s431 + $0x4] sm:$0xf]
        %v434 = vld [vmem:[%s431 + $0x8] sm:$0xf]
        %v435 = vld [vmem:[%s431 + $0xc] sm:$0xf]
        %v436 = vld [vmem:[%s431 + $0x10] sm:$0xf]
        %v437 = vld [vmem:[%s431 + $0x14] sm:$0xf]
        %v438 = vld [vmem:[%s431 + $0x18] sm:$0xf]
        %v439 = vld [vmem:[%s431 + $0x1c] sm:$0xf]
        %v440 = vld [vmem:[%s431 + $0x20] sm:$0xf]
        %v441 = vld [vmem:[%s431 + $0x24] sm:$0xf]
        %v442 = vld [vmem:[%s431 + $0x28] sm:$0xf]
        %v443 = vld [vmem:[%s431 + $0x2c] sm:$0xf]
        %v444 = vld [vmem:[%s431 + $0x30] sm:$0xf]
        %v445 = vld [vmem:[%s431 + $0x34] sm:$0xf]
        %v446 = vld [vmem:[%s431 + $0x38] sm:$0xf]
        %v447 = vld [vmem:[%s431 + $0x3c] sm:$0xf]
        %s448 = scalar_lea.vmem %s1, 64
        %v449 = vld [vmem:[%s448] sm:$0xf]
        %v450 = vld [vmem:[%s448 + $0x4] sm:$0xf]
        %v451 = vld [vmem:[%s448 + $0x8] sm:$0xf]
        %v452 = vld [vmem:[%s448 + $0xc] sm:$0xf]
        %v453 = vld [vmem:[%s448 + $0x10] sm:$0xf]
        %v454 = vld [vmem:[%s448 + $0x14] sm:$0xf]
        %v455 = vld [vmem:[%s448 + $0x18] sm:$0xf]
        %v456 = vld [vmem:[%s448 + $0x1c] sm:$0xf]
        %v457 = vld [vmem:[%s448 + $0x20] sm:$0xf]
        %v458 = vld [vmem:[%s448 + $0x24] sm:$0xf]
        %v459 = vld [vmem:[%s448 + $0x28] sm:$0xf]
        %v460 = vld [vmem:[%s448 + $0x2c] sm:$0xf]
        %v461 = vld [vmem:[%s448 + $0x30] sm:$0xf]
        %v462 = vld [vmem:[%s448 + $0x34] sm:$0xf]
        %v463 = vld [vmem:[%s448 + $0x38] sm:$0xf]
        %v464 = vld [vmem:[%s448 + $0x3c] sm:$0xf]
        %v467 = vunpack.c.l.b16 %v167
        %v468 = vunpack.c.l.b16 %v168
        %v469 = vpack.c.b16 %v468, %v467
        %v471 = vshrl.u32 %v469, 16
        %v473 = vrot.slane %v471, 1
        %v474 = vshll.u32 %v469, 16
        %v476 = vrot.slane %v474, 2
        %v477 = vor.u32 %v473, %v476
        %v495 = vunpack.c.l.b16 %v449
        %v496 = vunpack.c.l.b16 %v450
        %v497 = vunpack.c.l.b16 %v451
        %v498 = vunpack.c.l.b16 %v452
        %v499 = vunpack.c.l.b16 %v453
        %v500 = vunpack.c.l.b16 %v454
        %v501 = vunpack.c.l.b16 %v455
        %v502 = vunpack.c.l.b16 %v456
        %v503 = vunpack.c.l.b16 %v457
        %v504 = vunpack.c.l.b16 %v458
        %v505 = vunpack.c.l.b16 %v459
        %v506 = vunpack.c.l.b16 %v460
        %v507 = vunpack.c.l.b16 %v461
        %v508 = vunpack.c.l.b16 %v462
        %v509 = vunpack.c.l.b16 %v463
        %v510 = vunpack.c.l.b16 %v464
        %v511 = vpack.c.b16 %v496, %v495
        %v512 = vpack.c.b16 %v498, %v497
        %v513 = vpack.c.b16 %v500, %v499
        %v514 = vpack.c.b16 %v502, %v501
        %v515 = vpack.c.b16 %v504, %v503
        %v516 = vpack.c.b16 %v506, %v505
        %v517 = vpack.c.b16 %v508, %v507
        %v518 = vpack.c.b16 %v510, %v509
        %527 = vmatpush.bf16.msra.mxu0 %v518
        %528 = vmatpush.bf16.msra.mxu0 %v517
        %529 = vmatpush.bf16.msra.mxu0 %v516
        %530 = vmatpush.bf16.msra.mxu0 %v515
        %531 = vmatpush.bf16.msra.mxu0 %v514
        %532 = vmatpush.bf16.msra.mxu0 %v513
        %533 = vmatpush.bf16.msra.mxu0 %v512
        %534 = vmatpush.bf16.msra.mxu0 %v511
        %535 = vmatmul.bf16.gmra.mxu0 %v477
        %v536 = vpop.f32.mrf.mxu0
        %v537 = vadd.f32 0.0, %v536
        %v538 = vpop.f32.mrf.mxu0
        %539 = vdwg.mxu0
        %v556 = vunpack.c.l.b16 %v432
        %v557 = vunpack.c.l.b16 %v433
        %v558 = vunpack.c.l.b16 %v434
        %v559 = vunpack.c.l.b16 %v435
        %v560 = vunpack.c.l.b16 %v436
        %v561 = vunpack.c.l.b16 %v437
        %v562 = vunpack.c.l.b16 %v438
        %v563 = vunpack.c.l.b16 %v439
        %v564 = vunpack.c.l.b16 %v440
        %v565 = vunpack.c.l.b16 %v441
        %v566 = vunpack.c.l.b16 %v442
        %v567 = vunpack.c.l.b16 %v443
        %v568 = vunpack.c.l.b16 %v444
        %v569 = vunpack.c.l.b16 %v445
        %v570 = vunpack.c.l.b16 %v446
        %v571 = vunpack.c.l.b16 %v447
        %v572 = vpack.c.b16 %v557, %v556
        %v573 = vpack.c.b16 %v559, %v558
        %v574 = vpack.c.b16 %v561, %v560
        %v575 = vpack.c.b16 %v563, %v562
        %v576 = vpack.c.b16 %v565, %v564
        %v577 = vpack.c.b16 %v567, %v566
        %v578 = vpack.c.b16 %v569, %v568
        %v579 = vpack.c.b16 %v571, %v570
        %588 = vmatpush.bf16.msra.mxu0 %v579
        %589 = vmatpush.bf16.msra.mxu0 %v578
        %590 = vmatpush.bf16.msra.mxu0 %v577
        %591 = vmatpush.bf16.msra.mxu0 %v576
        %592 = vmatpush.bf16.msra.mxu0 %v575
        %593 = vmatpush.bf16.msra.mxu0 %v574
        %594 = vmatpush.bf16.msra.mxu0 %v573
        %595 = vmatpush.bf16.msra.mxu0 %v572
        %596 = vmatmul.bf16.gmra.mxu0 %v165
        %v597 = vpop.f32.mrf.mxu0
        %v598 = vadd.f32 %v537, %v597
        %v599 = vpop.f32.mrf.mxu0
        %600 = vdwg.mxu0
        %v601 = vadd.f32 %v598, %v189
        %vm602 = vcmp.ge.f32.partialorder %v601, 0.0
        %v603 = vmul.f32 %v601, 0.01
        %v604 = vsel %vm602, %v601, %v603
        %v605 = vpack.c.bf16 %v604, %v604
        %s606 = scalar_lea.vmem %s159, 8 [#allocation2]
        %607 = vst [vmem:[%s606] sm:$0x7] %v605
        %s608 = scalar_lea.vmem %s1, 512
        %v609 = vld [vmem:[%s608] sm:$0xf]
        %v610 = vld [vmem:[%s608 + $0x4] sm:$0xf]
        %v611 = vld [vmem:[%s608 + $0x8] sm:$0xf]
        %v612 = vld [vmem:[%s608 + $0xc] sm:$0xf]
        %v613 = vld [vmem:[%s608 + $0x10] sm:$0xf]
        %v614 = vld [vmem:[%s608 + $0x14] sm:$0xf]
        %v615 = vld [vmem:[%s608 + $0x18] sm:$0xf]
        %v616 = vld [vmem:[%s608 + $0x1c] sm:$0xf]
        %v617 = vld [vmem:[%s608 + $0x20] sm:$0xf]
        %v618 = vld [vmem:[%s608 + $0x24] sm:$0xf]
        %v619 = vld [vmem:[%s608 + $0x28] sm:$0xf]
        %v620 = vld [vmem:[%s608 + $0x2c] sm:$0xf]
        %v621 = vld [vmem:[%s608 + $0x30] sm:$0xf]
        %v622 = vld [vmem:[%s608 + $0x34] sm:$0xf]
        %v623 = vld [vmem:[%s608 + $0x38] sm:$0xf]
        %v624 = vld [vmem:[%s608 + $0x3c] sm:$0xf]
        %s625 = scalar_lea.vmem %s1, 384
        %v626 = vld [vmem:[%s625] sm:$0xf]
        %v627 = vld [vmem:[%s625 + $0x4] sm:$0xf]
        %v628 = vld [vmem:[%s625 + $0x8] sm:$0xf]
        %v629 = vld [vmem:[%s625 + $0xc] sm:$0xf]
        %v630 = vld [vmem:[%s625 + $0x10] sm:$0xf]
        %v631 = vld [vmem:[%s625 + $0x14] sm:$0xf]
        %v632 = vld [vmem:[%s625 + $0x18] sm:$0xf]
        %v633 = vld [vmem:[%s625 + $0x1c] sm:$0xf]
        %v634 = vld [vmem:[%s625 + $0x20] sm:$0xf]
        %v635 = vld [vmem:[%s625 + $0x24] sm:$0xf]
        %v636 = vld [vmem:[%s625 + $0x28] sm:$0xf]
        %v637 = vld [vmem:[%s625 + $0x2c] sm:$0xf]
        %v638 = vld [vmem:[%s625 + $0x30] sm:$0xf]
        %v639 = vld [vmem:[%s625 + $0x34] sm:$0xf]
        %v640 = vld [vmem:[%s625 + $0x38] sm:$0xf]
        %v641 = vld [vmem:[%s625 + $0x3c] sm:$0xf]
        %v658 = vunpack.c.l.b16 %v626
        %v659 = vunpack.c.l.b16 %v627
        %v660 = vunpack.c.l.b16 %v628
        %v661 = vunpack.c.l.b16 %v629
        %v662 = vunpack.c.l.b16 %v630
        %v663 = vunpack.c.l.b16 %v631
        %v664 = vunpack.c.l.b16 %v632
        %v665 = vunpack.c.l.b16 %v633
        %v666 = vunpack.c.l.b16 %v634
        %v667 = vunpack.c.l.b16 %v635
        %v668 = vunpack.c.l.b16 %v636
        %v669 = vunpack.c.l.b16 %v637
        %v670 = vunpack.c.l.b16 %v638
        %v671 = vunpack.c.l.b16 %v639
        %v672 = vunpack.c.l.b16 %v640
        %v673 = vunpack.c.l.b16 %v641
        %v674 = vpack.c.b16 %v659, %v658
        %v675 = vpack.c.b16 %v661, %v660
        %v676 = vpack.c.b16 %v663, %v662
        %v677 = vpack.c.b16 %v665, %v664
        %v678 = vpack.c.b16 %v667, %v666
        %v679 = vpack.c.b16 %v669, %v668
        %v680 = vpack.c.b16 %v671, %v670
        %v681 = vpack.c.b16 %v673, %v672
        %690 = vmatpush.bf16.msra.mxu0 %v681
        %691 = vmatpush.bf16.msra.mxu0 %v680
        %692 = vmatpush.bf16.msra.mxu0 %v679
        %693 = vmatpush.bf16.msra.mxu0 %v678
        %694 = vmatpush.bf16.msra.mxu0 %v677
        %695 = vmatpush.bf16.msra.mxu0 %v676
        %696 = vmatpush.bf16.msra.mxu0 %v675
        %697 = vmatpush.bf16.msra.mxu0 %v674
        %698 = vmatmul.bf16.gmra.mxu0 %v300
        %v699 = vpop.f32.mrf.mxu0
        %v700 = vadd.f32 0.0, %v699
        %v701 = vpop.f32.mrf.mxu0
        %702 = vdwg.mxu0
        %v719 = vunpack.c.l.b16 %v609
        %v720 = vunpack.c.l.b16 %v610
        %v721 = vunpack.c.l.b16 %v611
        %v722 = vunpack.c.l.b16 %v612
        %v723 = vunpack.c.l.b16 %v613
        %v724 = vunpack.c.l.b16 %v614
        %v725 = vunpack.c.l.b16 %v615
        %v726 = vunpack.c.l.b16 %v616
        %v727 = vunpack.c.l.b16 %v617
        %v728 = vunpack.c.l.b16 %v618
        %v729 = vunpack.c.l.b16 %v619
        %v730 = vunpack.c.l.b16 %v620
        %v731 = vunpack.c.l.b16 %v621
        %v732 = vunpack.c.l.b16 %v622
        %v733 = vunpack.c.l.b16 %v623
        %v734 = vunpack.c.l.b16 %v624
        %v735 = vpack.c.b16 %v720, %v719
        %v736 = vpack.c.b16 %v722, %v721
        %v737 = vpack.c.b16 %v724, %v723
        %v738 = vpack.c.b16 %v726, %v725
        %v739 = vpack.c.b16 %v728, %v727
        %v740 = vpack.c.b16 %v730, %v729
        %v741 = vpack.c.b16 %v732, %v731
        %v742 = vpack.c.b16 %v734, %v733
        %751 = vmatpush.bf16.msra.mxu0 %v742
        %752 = vmatpush.bf16.msra.mxu0 %v741
        %753 = vmatpush.bf16.msra.mxu0 %v740
        %754 = vmatpush.bf16.msra.mxu0 %v739
        %755 = vmatpush.bf16.msra.mxu0 %v738
        %756 = vmatpush.bf16.msra.mxu0 %v737
        %757 = vmatpush.bf16.msra.mxu0 %v736
        %758 = vmatpush.bf16.msra.mxu0 %v735
        %759 = vmatmul.bf16.gmra.mxu0 %v165
        %v760 = vpop.f32.mrf.mxu0
        %v761 = vadd.f32 %v700, %v760
        %v762 = vpop.f32.mrf.mxu0
        %763 = vdwg.mxu0
        %s764 = scalar_lea.vmem %s1, 128
        %v765 = vld [vmem:[%s764] sm:$0xf]
        %v766 = vld [vmem:[%s764 + $0x4] sm:$0xf]
        %v767 = vld [vmem:[%s764 + $0x8] sm:$0xf]
        %v768 = vld [vmem:[%s764 + $0xc] sm:$0xf]
        %v769 = vld [vmem:[%s764 + $0x10] sm:$0xf]
        %v770 = vld [vmem:[%s764 + $0x14] sm:$0xf]
        %v771 = vld [vmem:[%s764 + $0x18] sm:$0xf]
        %v772 = vld [vmem:[%s764 + $0x1c] sm:$0xf]
        %v773 = vld [vmem:[%s764 + $0x20] sm:$0xf]
        %v774 = vld [vmem:[%s764 + $0x24] sm:$0xf]
        %v775 = vld [vmem:[%s764 + $0x28] sm:$0xf]
        %v776 = vld [vmem:[%s764 + $0x2c] sm:$0xf]
        %v777 = vld [vmem:[%s764 + $0x30] sm:$0xf]
        %v778 = vld [vmem:[%s764 + $0x34] sm:$0xf]
        %v779 = vld [vmem:[%s764 + $0x38] sm:$0xf]
        %v780 = vld [vmem:[%s764 + $0x3c] sm:$0xf]
        %v797 = vunpack.c.l.b16 %v765
        %v798 = vunpack.c.l.b16 %v766
        %v799 = vunpack.c.l.b16 %v767
        %v800 = vunpack.c.l.b16 %v768
        %v801 = vunpack.c.l.b16 %v769
        %v802 = vunpack.c.l.b16 %v770
        %v803 = vunpack.c.l.b16 %v771
        %v804 = vunpack.c.l.b16 %v772
        %v805 = vunpack.c.l.b16 %v773
        %v806 = vunpack.c.l.b16 %v774
        %v807 = vunpack.c.l.b16 %v775
        %v808 = vunpack.c.l.b16 %v776
        %v809 = vunpack.c.l.b16 %v777
        %v810 = vunpack.c.l.b16 %v778
        %v811 = vunpack.c.l.b16 %v779
        %v812 = vunpack.c.l.b16 %v780
        %v813 = vpack.c.b16 %v798, %v797
        %v814 = vpack.c.b16 %v800, %v799
        %v815 = vpack.c.b16 %v802, %v801
        %v816 = vpack.c.b16 %v804, %v803
        %v817 = vpack.c.b16 %v806, %v805
        %v818 = vpack.c.b16 %v808, %v807
        %v819 = vpack.c.b16 %v810, %v809
        %v820 = vpack.c.b16 %v812, %v811
        %829 = vmatpush.bf16.msra.mxu0 %v820
        %830 = vmatpush.bf16.msra.mxu0 %v819
        %831 = vmatpush.bf16.msra.mxu0 %v818
        %832 = vmatpush.bf16.msra.mxu0 %v817
        %833 = vmatpush.bf16.msra.mxu0 %v816
        %834 = vmatpush.bf16.msra.mxu0 %v815
        %835 = vmatpush.bf16.msra.mxu0 %v814
        %836 = vmatpush.bf16.msra.mxu0 %v813
        %837 = vmatmul.bf16.gmra.mxu0 %v477
        %v838 = vpop.f32.mrf.mxu0
        %v839 = vadd.f32 0.0, %v838
        %v840 = vpop.f32.mrf.mxu0
        %841 = vdwg.mxu0
        %v842 = vadd.f32 %v761, %v839
        %v843 = vld [vmem:[%s1] sm:$0xf]
        %v844 = vld [vmem:[%s1 + $0x4] sm:$0xf]
        %v845 = vld [vmem:[%s1 + $0x8] sm:$0xf]
        %v846 = vld [vmem:[%s1 + $0xc] sm:$0xf]
        %v847 = vld [vmem:[%s1 + $0x10] sm:$0xf]
        %v848 = vld [vmem:[%s1 + $0x14] sm:$0xf]
        %v849 = vld [vmem:[%s1 + $0x18] sm:$0xf]
        %v850 = vld [vmem:[%s1 + $0x1c] sm:$0xf]
        %v851 = vld [vmem:[%s1 + $0x20] sm:$0xf]
        %v852 = vld [vmem:[%s1 + $0x24] sm:$0xf]
        %v853 = vld [vmem:[%s1 + $0x28] sm:$0xf]
        %v854 = vld [vmem:[%s1 + $0x2c] sm:$0xf]
        %v855 = vld [vmem:[%s1 + $0x30] sm:$0xf]
        %v856 = vld [vmem:[%s1 + $0x34] sm:$0xf]
        %v857 = vld [vmem:[%s1 + $0x38] sm:$0xf]
        %v858 = vld [vmem:[%s1 + $0x3c] sm:$0xf]
        %v860 = vunpack.c.l.b16 %v169
        %v861 = vpack.c.b16 %v468, %v860
        %v862 = vrot.slane %v861, 2
        %v880 = vunpack.c.l.b16 %v843
        %v881 = vunpack.c.l.b16 %v844
        %v882 = vunpack.c.l.b16 %v845
        %v883 = vunpack.c.l.b16 %v846
        %v884 = vunpack.c.l.b16 %v847
        %v885 = vunpack.c.l.b16 %v848
        %v886 = vunpack.c.l.b16 %v849
        %v887 = vunpack.c.l.b16 %v850
        %v888 = vunpack.c.l.b16 %v851
        %v889 = vunpack.c.l.b16 %v852
        %v890 = vunpack.c.l.b16 %v853
        %v891 = vunpack.c.l.b16 %v854
        %v892 = vunpack.c.l.b16 %v855
        %v893 = vunpack.c.l.b16 %v856
        %v894 = vunpack.c.l.b16 %v857
        %v895 = vunpack.c.l.b16 %v858
        %v896 = vpack.c.b16 %v881, %v880
        %v897 = vpack.c.b16 %v883, %v882
        %v898 = vpack.c.b16 %v885, %v884
        %v899 = vpack.c.b16 %v887, %v886
        %v900 = vpack.c.b16 %v889, %v888
        %v901 = vpack.c.b16 %v891, %v890
        %v902 = vpack.c.b16 %v893, %v892
        %v903 = vpack.c.b16 %v895, %v894
        %912 = vmatpush.bf16.msra.mxu0 %v903
        %913 = vmatpush.bf16.msra.mxu0 %v902
        %914 = vmatpush.bf16.msra.mxu0 %v901
        %915 = vmatpush.bf16.msra.mxu0 %v900
        %916 = vmatpush.bf16.msra.mxu0 %v899
        %917 = vmatpush.bf16.msra.mxu0 %v898
        %918 = vmatpush.bf16.msra.mxu0 %v897
        %919 = vmatpush.bf16.msra.mxu0 %v896
        %920 = vmatmul.bf16.gmra.mxu0 %v862
        %v921 = vpop.f32.mrf.mxu0
        %v922 = vadd.f32 0.0, %v921
        %v923 = vpop.f32.mrf.mxu0
        %924 = vdwg.mxu0
        %v925 = vadd.f32 %v842, %v922
        %v926 = vadd.f32 %v925, %v189
        %vm927 = vcmp.ge.f32.partialorder %v926, 0.0
        %v928 = vmul.f32 %v926, 0.01
        %v929 = vsel %vm927, %v926, %v928
        %v930 = vpack.c.bf16 %v929, %v929
        %s931 = scalar_lea.vmem %s159, 12 [#allocation2]
        %932 = vst [vmem:[%s931] sm:$0x7] %v930
        %s933 = sand.u32 %s90, 1
        %s934 = sand.u32 %s90, 1
        %s935 = smul.addr %s934, 16
        %s936 = scalar_lea.vmem [#allocation2], %s935
        // Predicated region
        $region33: #{music_genre_forward.9} parent=31 // pred_check
          %p937 = pneg %p100
        $region34: #{music_genre_forward.9} parent=31 // pred_check_branch
          %939 = sbr.rel (%p937) target = $region36
        $region35: #{music_genre_forward.9} parent=31 // pred_region
          %s940 = smul.addr %s14, 4
          %s941 = scalar_lea.vmem %s3, %s940
          // Predicated region
          $region37: #{music_genre_forward.9} parent=35 // pred_check
            _
          $region38: #{music_genre_forward.9} parent=35 // pred_check_branch
            %943 = sbr.rel (0) target = $region40
          $region39: #{music_genre_forward.9} parent=35 // pred_region
            // Predicated region
            $region41: #{music_genre_forward.9} parent=39 // pred_check
              _
            $region42: #{music_genre_forward.9} parent=39 // pred_check_branch
              %945 = sbr.rel target = $region44
            $region43: #{music_genre_forward.9} parent=39 // pred_region
              // Predicated region
              $region56: #{music_genre_forward.9} parent=43 // pred_check
                _
              $region57: #{music_genre_forward.9} parent=43 // pred_check_branch
                %967 = sbr.rel (0) target = $region59
              $region58: #{music_genre_forward.9} parent=43 // pred_region
                loop: start=0, step=1, limit=1
                $region60: #{music_genre_forward.9} parent=58 // loop_pre_header
                  _
                $region61: #{music_genre_forward.9} parent=58 // loop_header
                  %s969 = sphi 0, %s973
                  %p970 = scmp.ge.s32.totalorder %s969, 1
                  %s974 = sphi %s936, %s936
                  %s975 = sphi %s941, %s941
                $region62: #{music_genre_forward.9} parent=58 // loop_header_branch
                  %972 = sbr.rel (%p970) target = $region66
                $region63: #{music_genre_forward.9} parent=58 // loop_body
                  _
                $region64: #{music_genre_forward.9} parent=58 // loop_footer
                  %s973 = sadd.s32 1, %s969
                $region65: #{music_genre_forward.9} parent=58 // loop_footer_branch
                  %968 = sbr.rel target = $region61
                $region66: #{music_genre_forward.9} parent=58 // loop_exit
                  _
                %s977 = ssub.s32 16, 1
                loop: start=0, step=1, limit=1
                $region67: #{music_genre_forward.9} parent=58 // loop_pre_header
                  _
                $region68: #{music_genre_forward.9} parent=58 // loop_header
                  %s979 = sphi 0, %s983
                  %p980 = scmp.ge.s32.totalorder %s979, 1
                  %s984 = sphi %s936, %s936
                  %s985 = sphi %s941, %s941
                $region69: #{music_genre_forward.9} parent=58 // loop_header_branch
                  %982 = sbr.rel (%p980) target = $region73
                $region70: #{music_genre_forward.9} parent=58 // loop_body
                  %v986 = vld [vmem:[%s984] sm:%s977]
                  %987 = vst [vmem:[%s985] sm:%s977] %v986
                  %v988 = vld [vmem:[%s984 + $0x4] sm:%s977]
                  %989 = vst [vmem:[%s985 + $0x8] sm:%s977] %v988
                  %v990 = vld [vmem:[%s984 + $0x8] sm:%s977]
                  %991 = vst [vmem:[%s985 + $0x10] sm:%s977] %v990
                  %v992 = vld [vmem:[%s984 + $0xc] sm:%s977]
                  %993 = vst [vmem:[%s985 + $0x18] sm:%s977] %v992
                $region71: #{music_genre_forward.9} parent=58 // loop_footer
                  %s983 = sadd.s32 1, %s979
                $region72: #{music_genre_forward.9} parent=58 // loop_footer_branch
                  %978 = sbr.rel target = $region68
                $region73: #{music_genre_forward.9} parent=58 // loop_exit
                  _
              $region59: #{music_genre_forward.9} parent=43 // pred_fallthru
                _
            $region44: #{music_genre_forward.9} parent=39 // pred_fallthru
              _
            // Predicated region
            $region45: #{music_genre_forward.9} parent=39 // pred_check
              _
            $region46: #{music_genre_forward.9} parent=39 // pred_check_branch
              %947 = sbr.rel (0) target = $region48
            $region47: #{music_genre_forward.9} parent=39 // pred_region
              %s949 = ssub.s32 16, 1
              loop: start=0, step=1, limit=1
              $region49: #{music_genre_forward.9} parent=47 // loop_pre_header
                _
              $region50: #{music_genre_forward.9} parent=47 // loop_header
                %s951 = sphi 0, %s955
                %p952 = scmp.ge.s32.totalorder %s951, 1
                %s956 = sphi %s936, %s936
                %s957 = sphi %s941, %s941
              $region51: #{music_genre_forward.9} parent=47 // loop_header_branch
                %954 = sbr.rel (%p952) target = $region55
              $region52: #{music_genre_forward.9} parent=47 // loop_body
                %v958 = vld [vmem:[%s956] sm:%s949]
                %959 = vst [vmem:[%s957] sm:%s949] %v958
                %v960 = vld [vmem:[%s956 + $0x4] sm:%s949]
                %961 = vst [vmem:[%s957 + $0x8] sm:%s949] %v960
                %v962 = vld [vmem:[%s956 + $0x8] sm:%s949]
                %963 = vst [vmem:[%s957 + $0x10] sm:%s949] %v962
                %v964 = vld [vmem:[%s956 + $0xc] sm:%s949]
                %965 = vst [vmem:[%s957 + $0x18] sm:%s949] %v964
              $region53: #{music_genre_forward.9} parent=47 // loop_footer
                %s955 = sadd.s32 1, %s951
              $region54: #{music_genre_forward.9} parent=47 // loop_footer_branch
                %950 = sbr.rel target = $region50
              $region55: #{music_genre_forward.9} parent=47 // loop_exit
                _
            $region48: #{music_genre_forward.9} parent=39 // pred_fallthru
              _
          $region40: #{music_genre_forward.9} parent=35 // pred_fallthru
            _
          %994 = vnop
        $region36: #{music_genre_forward.9} parent=31 // pred_fallthru
          _
      $region32: #{music_genre_forward.9} parent=5 // pred_fallthru
        _
      %p995 = scmp.le.s32.totalorder 2, %s9
      // Predicated region
      $region74: #{music_genre_forward.9} parent=5 // pred_check
        %p996 = pneg %p995
      $region75: #{music_genre_forward.9} parent=5 // pred_check_branch
        %998 = sbr.rel (%p996) target = $region77
      $region76: #{music_genre_forward.9} parent=5 // pred_region
        %s999 = ssub.s32 %s9, 2
        // Predicated region
        $region78: #{music_genre_forward.9} parent=76 // pred_check
          %p1000 = pneg %p106
        $region79: #{music_genre_forward.9} parent=76 // pred_check_branch
          %1002 = sbr.rel (%p1000) target = $region81
        $region80: #{music_genre_forward.9} parent=76 // pred_region
          %s1003 = sand.u32 %s91, 1
          %s1004 = sand.u32 %s91, 1
          %s1005 = smul.addr %s1004, 16
          %s1006 = scalar_lea.vmem [#allocation2], %s1005
        $region81: #{music_genre_forward.9} parent=76 // pred_fallthru
          _
      $region77: #{music_genre_forward.9} parent=5 // pred_fallthru
        _
    $region6: #{music_genre_forward.9} parent=1 // loop_footer
      %s13 = sadd.s32 1, %s9
    $region7: #{music_genre_forward.9} parent=1 // loop_footer_branch
      %8 = sbr.rel target = $region3
    $region8: #{music_genre_forward.9} parent=1 // loop_exit
      _

// kernel: music_genre_forward.10
$region0: #{music_genre_forward.10}
  #allocation0 [shape = 'u32[]', space=smem, size = 0x4, offset = 0x4, fixed_abs, tag = 'smem constant byte address 0x4 - core index']
  #allocation1 [shape = 'u32[72,128]{1,0:T(1,128)}', space=vmem, size = 0x9000, scoped, tag = 'internal scratch']
  %s0 = inlined_call_operand.vmem [shape: bf16[2,32,128], index: 0, kind: input, shape index: {}]
  %s1 = inlined_call_operand.vmem [shape: bf16[3,3,128,128], index: 1, kind: input, shape index: {}]
  %s2 = inlined_call_operand.vmem [shape: f32[1,128], index: 2, kind: input, shape index: {}]
  %s3 = inlined_call_operand.vmem [shape: bf16[2,2,2,20,128], index: 3, kind: output, shape index: {}]
  %s4 = sld [smem:[#allocation0]]
  $region82: #{music_genre_forward.10} parent=0
    _
  %s6 = ssub.s32 1, %s4
  %s7 = scalar_select 0, %s6, %s4
  $region1: #{music_genre_forward.10} parent=0
    #allocation2 [shape = 'u8[49152]{0}', space=vmem, size = 0xc000, scoped, tag = 'output window, operand 0']
    loop: start=0, step=1, limit=4
    $region2: #{music_genre_forward.10} parent=1 // loop_pre_header
      _
    $region3: #{music_genre_forward.10} parent=1 // loop_header
      %s9 = sphi 0, %s13
      %p10 = scmp.ge.s32.totalorder %s9, 4
      %s19 = sphi 0, %s21
      %s22 = sphi 0, %s19
      %s23 = sphi 0, %s22
      %s39 = sphi 0, %s23
      %s43 = sphi 0, %s43
      %s45 = sphi 0, %s43
      %s46 = sphi 0, %s45
      %s60 = sphi 0, %s46
      %s64 = sphi 0, %s64
      %s66 = sphi 0, %s64
      %s67 = sphi 0, %s66
      %s81 = sphi 0, %s67
      %s87 = sphi 0, %s89
      %s90 = sphi 0, %s87
      %s91 = sphi 0, %s90
      %s107 = sphi 0, %s91
    $region4: #{music_genre_forward.10} parent=1 // loop_header_branch
      %12 = sbr.rel (%p10) target = $region8
    $region5: #{music_genre_forward.10} parent=1 // loop_body
      %s14 = ssub.s32 %s9, 1
      %s15 = ssub.s32 %s9, 2
      %s16 = sadd.s32 %s9, 1
      %s17 = ssub.s32 %s9, %s16
      %p18 = scmp.eq.s32.totalorder %s17, 0
      %s20 = sadd.s32 %s19, 1
      %s21 = scalar_select %p18, %s19, %s20
      %p24 = pneg %p18
      %p25 = scmp.eq.s32.totalorder %s9, 1
      %p26 = por %p24, %p25
      %p27 = scmp.ne.s32.totalorder %s19, %s22
      %p28 = scmp.eq.s32.totalorder %s9, 0
      %p29 = por %p27, %p28
      %p30 = scmp.ne.s32.totalorder %s19, %s22
      %p31 = scmp.eq.s32.totalorder %s14, 1
      %p32 = por %p30, %p31
      %p33 = scmp.ne.s32.totalorder %s22, %s23
      %p34 = scmp.eq.s32.totalorder %s14, 0
      %p35 = por %p33, %p34
      %p36 = scmp.ne.s32.totalorder %s22, %s23
      %p37 = scmp.eq.s32.totalorder %s15, 1
      %p38 = por %p36, %p37
      %p40 = scmp.ne.s32.totalorder %s23, %s39
      %p41 = scmp.eq.s32.totalorder %s15, 0
      %p42 = por %p40, %p41
      %s44 = sadd.s32 %s43, 1
      %p47 = scmp.eq.s32.totalorder %s9, 1
      %p48 = scmp.ne.s32.totalorder %s43, %s45
      %p49 = scmp.eq.s32.totalorder %s9, 0
      %p50 = por %p48, %p49
      %p51 = scmp.ne.s32.totalorder %s43, %s45
      %p52 = scmp.eq.s32.totalorder %s14, 1
      %p53 = por %p51, %p52
      %p54 = scmp.ne.s32.totalorder %s45, %s46
      %p55 = scmp.eq.s32.totalorder %s14, 0
      %p56 = por %p54, %p55
      %p57 = scmp.ne.s32.totalorder %s45, %s46
      %p58 = scmp.eq.s32.totalorder %s15, 1
      %p59 = por %p57, %p58
      %p61 = scmp.ne.s32.totalorder %s46, %s60
      %p62 = scmp.eq.s32.totalorder %s15, 0
      %p63 = por %p61, %p62
      %s65 = sadd.s32 %s64, 1
      %p68 = scmp.eq.s32.totalorder %s9, 1
      %p69 = scmp.ne.s32.totalorder %s64, %s66
      %p70 = scmp.eq.s32.totalorder %s9, 0
      %p71 = por %p69, %p70
      %p72 = scmp.ne.s32.totalorder %s64, %s66
      %p73 = scmp.eq.s32.totalorder %s14, 1
      %p74 = por %p72, %p73
      %p75 = scmp.ne.s32.totalorder %s66, %s67
      %p76 = scmp.eq.s32.totalorder %s14, 0
      %p77 = por %p75, %p76
      %p78 = scmp.ne.s32.totalorder %s66, %s67
      %p79 = scmp.eq.s32.totalorder %s15, 1
      %p80 = por %p78, %p79
      %p82 = scmp.ne.s32.totalorder %s67, %s81
      %p83 = scmp.eq.s32.totalorder %s15, 0
      %p84 = por %p82, %p83
      %s85 = ssub.s32 %s9, %s16
      %p86 = scmp.eq.s32.totalorder %s85, 0
      %s88 = sadd.s32 %s87, 1
      %s89 = scalar_select %p86, %s87, %s88
      %p92 = pneg %p86
      %p93 = scmp.eq.s32.totalorder %s9, 1
      %p94 = por %p92, %p93
      %p95 = scmp.ne.s32.totalorder %s87, %s90
      %p96 = scmp.eq.s32.totalorder %s9, 0
      %p97 = por %p95, %p96
      %p98 = scmp.ne.s32.totalorder %s87, %s90
      %p99 = scmp.eq.s32.totalorder %s14, 1
      %p100 = por %p98, %p99
      %p101 = scmp.ne.s32.totalorder %s90, %s91
      %p102 = scmp.eq.s32.totalorder %s14, 0
      %p103 = por %p101, %p102
      %p104 = scmp.ne.s32.totalorder %s90, %s91
      %p105 = scmp.eq.s32.totalorder %s15, 1
      %p106 = por %p104, %p105
      %p108 = scmp.ne.s32.totalorder %s91, %s107
      %p109 = scmp.eq.s32.totalorder %s15, 0
      %p110 = por %p108, %p109
      %p111 = scmp.le.s32.totalorder 1, %s9
      %p112 = scmp.lt.s32.totalorder %s9, 3
      %p113 = pnand %p111, %p112
      %p114 = pneg %p113
      // Predicated region
      $region9: #{music_genre_forward.10} parent=5 // pred_check
        _
      $region10: #{music_genre_forward.10} parent=5 // pred_check_branch
        %116 = sbr.rel (%p113) target = $region12
      $region11: #{music_genre_forward.10} parent=5 // pred_region
        %s117 = ssub.s32 %s9, 1
        // Predicated region
        $region13: #{music_genre_forward.10} parent=11 // pred_check
          %p118 = pneg %p56
        $region14: #{music_genre_forward.10} parent=11 // pred_check_branch
          %120 = sbr.rel (%p118) target = $region16
        $region15: #{music_genre_forward.10} parent=11 // pred_region
          _
        $region16: #{music_genre_forward.10} parent=11 // pred_fallthru
          _
        // Predicated region
        $region17: #{music_genre_forward.10} parent=11 // pred_check
          %p121 = pneg %p77
        $region18: #{music_genre_forward.10} parent=11 // pred_check_branch
          %123 = sbr.rel (%p121) target = $region20
        $region19: #{music_genre_forward.10} parent=11 // pred_region
          _
        $region20: #{music_genre_forward.10} parent=11 // pred_fallthru
          _
      $region12: #{music_genre_forward.10} parent=5 // pred_fallthru
        _
      %p124 = scmp.lt.s32.totalorder %s9, 2
      // Predicated region
      $region21: #{music_genre_forward.10} parent=5 // pred_check
        %p125 = pneg %p124
      $region22: #{music_genre_forward.10} parent=5 // pred_check_branch
        %127 = sbr.rel (%p125) target = $region24
      $region23: #{music_genre_forward.10} parent=5 // pred_region
        // Predicated region
        $region25: #{music_genre_forward.10} parent=23 // pred_check
          %p128 = pneg %p29
        $region26: #{music_genre_forward.10} parent=23 // pred_check_branch
          %130 = sbr.rel (%p128) target = $region28
        $region27: #{music_genre_forward.10} parent=23 // pred_region
          %p131 = scmp.lt.s32.totalorder %s9, 1
          %s132 = scalar_select %p131, %s9, 1
          %s133 = smul.addr %s132, 4
          %s134 = smul.addr %s133, 4
          %s135 = scalar_lea.vmem %s0, %s134
        $region28: #{music_genre_forward.10} parent=23 // pred_fallthru
          _
      $region24: #{music_genre_forward.10} parent=5 // pred_fallthru
        _
      %p136 = scmp.le.s32.totalorder 1, %s9
      %p137 = scmp.lt.s32.totalorder %s9, 3
      %p138 = pnand %p136, %p137
      %p139 = pneg %p138
      // Predicated region
      $region29: #{music_genre_forward.10} parent=5 // pred_check
        _
      $region30: #{music_genre_forward.10} parent=5 // pred_check_branch
        %141 = sbr.rel (%p138) target = $region32
      $region31: #{music_genre_forward.10} parent=5 // pred_region
        %s142 = ssub.s32 %s9, 1
        %p143 = scmp.lt.s32.totalorder %s14, 1
        %s144 = scalar_select %p143, %s14, 1
        %s145 = smul.addr %s144, 4
        %s146 = smul.addr %s145, 4
        %s147 = scalar_lea.vmem %s0, %s146
        %p148 = pneg %p35
        %p149 = pneg %p32
        %p150 = pneg %p56
        %p151 = pneg %p53
        %p152 = pneg %p77
        %p153 = pneg %p74
        %p154 = pneg %p103
        %p155 = pneg %p100
        %s156 = sand.u32 %s90, 1
        %s157 = sand.u32 %s90, 1
        %s158 = smul.addr %s157, 48
        %s159 = scalar_lea.vmem [#allocation2], %s158
        %p160 = scmp.lt.s32.totalorder %s14, 1
        %s161 = scalar_select %p160, %s14, 1
        %s162 = smul.addr %s161, 4
        %s163 = smul.addr %s162, 4
        %s164 = scalar_lea.vmem %s0, %s163
        %v165 = vld [vmem:[%s164] sm:$0xf]
        %v166 = vld [vmem:[%s164 + $0x4] sm:$0xf]
        %v167 = vld [vmem:[%s164 + $0x8] sm:$0x3]
        %v168 = vld [vmem:[%s164 + $0x8] sm:$0x7]
        %v169 = vld [vmem:[%s164] sm:$0xc]
        %v170 = vld [vmem:[%s164 + $0x4] sm:$0xf]
        %v171 = vld [vmem:[%s164 + $0x8] sm:$0xf]
        %v172 = vld [vmem:[%s164 + $0xc] sm:$0x1]
        %v173 = vld [vmem:[%s164] sm:$0x8]
        %v174 = vld [vmem:[%s2] sm:$0x1]
        %s175 = scalar_lea.vmem %s1, 256
        %v176 = vld [vmem:[%s175] sm:$0xf]
        %v177 = vld [vmem:[%s175 + $0x4] sm:$0xf]
        %v178 = vld [vmem:[%s175 + $0x8] sm:$0xf]
        %v179 = vld [vmem:[%s175 + $0xc] sm:$0xf]
        %v180 = vld [vmem:[%s175 + $0x10] sm:$0xf]
        %v181 = vld [vmem:[%s175 + $0x14] sm:$0xf]
        %v182 = vld [vmem:[%s175 + $0x18] sm:$0xf]
        %v183 = vld [vmem:[%s175 + $0x1c] sm:$0xf]
        %v184 = vld [vmem:[%s175 + $0x20] sm:$0xf]
        %v185 = vld [vmem:[%s175 + $0x24] sm:$0xf]
        %v186 = vld [vmem:[%s175 + $0x28] sm:$0xf]
        %v187 = vld [vmem:[%s175 + $0x2c] sm:$0xf]
        %v188 = vld [vmem:[%s175 + $0x30] sm:$0xf]
        %v189 = vld [vmem:[%s175 + $0x34] sm:$0xf]
        %v190 = vld [vmem:[%s175 + $0x38] sm:$0xf]
        %v191 = vld [vmem:[%s175 + $0x3c] sm:$0xf]
        %v193 = vperm.slane %v174, 0
        %v198 = vunpack.c.l.b16 %v165
        %v199 = vunpack.c.l.b16 %v166
        %v200 = vunpack.c.l.b16 %v167
        %v201 = vpack.c.b16 %v199, %v198
        %v202 = vpack.c.b16 %v200, %v200
        %v221 = vunpack.c.l.b16 %v176
        %v222 = vunpack.c.l.b16 %v177
        %v223 = vunpack.c.l.b16 %v178
        %v224 = vunpack.c.l.b16 %v179
        %v225 = vunpack.c.l.b16 %v180
        %v226 = vunpack.c.l.b16 %v181
        %v227 = vunpack.c.l.b16 %v182
        %v228 = vunpack.c.l.b16 %v183
        %v229 = vunpack.c.l.b16 %v184
        %v230 = vunpack.c.l.b16 %v185
        %v231 = vunpack.c.l.b16 %v186
        %v232 = vunpack.c.l.b16 %v187
        %v233 = vunpack.c.l.b16 %v188
        %v234 = vunpack.c.l.b16 %v189
        %v235 = vunpack.c.l.b16 %v190
        %v236 = vunpack.c.l.b16 %v191
        %v237 = vpack.c.b16 %v222, %v221
        %v238 = vpack.c.b16 %v224, %v223
        %v239 = vpack.c.b16 %v226, %v225
        %v240 = vpack.c.b16 %v228, %v227
        %v241 = vpack.c.b16 %v230, %v229
        %v242 = vpack.c.b16 %v232, %v231
        %v243 = vpack.c.b16 %v234, %v233
        %v244 = vpack.c.b16 %v236, %v235
        %253 = vmatpush.bf16.msra.mxu0 %v244
        %254 = vmatpush.bf16.msra.mxu0 %v243
        %255 = vmatpush.bf16.msra.mxu0 %v242
        %256 = vmatpush.bf16.msra.mxu0 %v241
        %257 = vmatpush.bf16.msra.mxu0 %v240
        %258 = vmatpush.bf16.msra.mxu0 %v239
        %259 = vmatpush.bf16.msra.mxu0 %v238
        %260 = vmatpush.bf16.msra.mxu0 %v237
        %261 = vmatmul.bf16.gmra.mxu0 %v201
        %v262 = vpop.f32.mrf.mxu0
        %v263 = vadd.f32 %v193, %v262
        %v264 = vpop.f32.mrf.mxu0
        %v265 = vadd.f32 %v193, %v264
        %266 = vmatmul.bf16.gmra.mxu0 %v202
        %v267 = vpop.f32.mrf.mxu0
        %v268 = vadd.f32 %v193, %v267
        %v269 = vpop.f32.mrf.mxu0
        %270 = vdwg.mxu0
        %vm271 = vcmp.ge.f32.partialorder %v263, 0.0
        %vm272 = vcmp.ge.f32.partialorder %v265, 0.0
        %vm273 = vcmp.ge.f32.partialorder %v268, 0.0
        %v274 = vmul.f32 %v263, 0.01
        %v275 = vmul.f32 %v265, 0.01
        %v276 = vmul.f32 %v268, 0.01
        %v277 = vsel %vm271, %v263, %v274
        %v278 = vsel %vm272, %v265, %v275
        %v279 = vsel %vm273, %v268, %v276
        %v280 = vpack.c.bf16 %v277, %v277
        %v281 = vpack.c.bf16 %v278, %v278
        %v282 = vpack.c.bf16 %v279, %v279
        %283 = vst [vmem:[%s159] sm:$0xf] %v280
        %284 = vst [vmem:[%s159 + $0x4] sm:$0xf] %v281
        %285 = vst [vmem:[%s159 + $0x8] sm:$0x3] %v282
        %s286 = scalar_lea.vmem %s1, 320
        %v287 = vld [vmem:[%s286] sm:$0xf]
        %v288 = vld [vmem:[%s286 + $0x4] sm:$0xf]
        %v289 = vld [vmem:[%s286 + $0x8] sm:$0xf]
        %v290 = vld [vmem:[%s286 + $0xc] sm:$0xf]
        %v291 = vld [vmem:[%s286 + $0x10] sm:$0xf]
        %v292 = vld [vmem:[%s286 + $0x14] sm:$0xf]
        %v293 = vld [vmem:[%s286 + $0x18] sm:$0xf]
        %v294 = vld [vmem:[%s286 + $0x1c] sm:$0xf]
        %v295 = vld [vmem:[%s286 + $0x20] sm:$0xf]
        %v296 = vld [vmem:[%s286 + $0x24] sm:$0xf]
        %v297 = vld [vmem:[%s286 + $0x28] sm:$0xf]
        %v298 = vld [vmem:[%s286 + $0x2c] sm:$0xf]
        %v299 = vld [vmem:[%s286 + $0x30] sm:$0xf]
        %v300 = vld [vmem:[%s286 + $0x34] sm:$0xf]
        %v301 = vld [vmem:[%s286 + $0x38] sm:$0xf]
        %v302 = vld [vmem:[%s286 + $0x3c] sm:$0xf]
        %s303 = scalar_lea.vmem %s1, 192
        %v304 = vld [vmem:[%s303] sm:$0xf]
        %v305 = vld [vmem:[%s303 + $0x4] sm:$0xf]
        %v306 = vld [vmem:[%s303 + $0x8] sm:$0xf]
        %v307 = vld [vmem:[%s303 + $0xc] sm:$0xf]
        %v308 = vld [vmem:[%s303 + $0x10] sm:$0xf]
        %v309 = vld [vmem:[%s303 + $0x14] sm:$0xf]
        %v310 = vld [vmem:[%s303 + $0x18] sm:$0xf]
        %v311 = vld [vmem:[%s303 + $0x1c] sm:$0xf]
        %v312 = vld [vmem:[%s303 + $0x20] sm:$0xf]
        %v313 = vld [vmem:[%s303 + $0x24] sm:$0xf]
        %v314 = vld [vmem:[%s303 + $0x28] sm:$0xf]
        %v315 = vld [vmem:[%s303 + $0x2c] sm:$0xf]
        %v316 = vld [vmem:[%s303 + $0x30] sm:$0xf]
        %v317 = vld [vmem:[%s303 + $0x34] sm:$0xf]
        %v318 = vld [vmem:[%s303 + $0x38] sm:$0xf]
        %v319 = vld [vmem:[%s303 + $0x3c] sm:$0xf]
        %v321 = vunpack.c.l.b16 %v168
        %v322 = vpack.c.b16 %v321, %v321
        %vm323 = vsmask.f32 7424
        %v325 = vshrl.u32 %v201, 16
        %v327 = vshll.u32 %v201, 16
        %v329 = vrot.slane %v327, 1
        %v330 = vor.u32 %v325, %v329
        %v332 = vshll.u32 %v322, 16
        %v334 = vrot.slane %v332, 1
        %v335 = vsel %vm323, %v330, %v334
        %v336 = vshrl.u32 %v322, 16
        %v338 = vor.u32 %v336, %v334
        %v357 = vunpack.c.l.b16 %v304
        %v358 = vunpack.c.l.b16 %v305
        %v359 = vunpack.c.l.b16 %v306
        %v360 = vunpack.c.l.b16 %v307
        %v361 = vunpack.c.l.b16 %v308
        %v362 = vunpack.c.l.b16 %v309
        %v363 = vunpack.c.l.b16 %v310
        %v364 = vunpack.c.l.b16 %v311
        %v365 = vunpack.c.l.b16 %v312
        %v366 = vunpack.c.l.b16 %v313
        %v367 = vunpack.c.l.b16 %v314
        %v368 = vunpack.c.l.b16 %v315
        %v369 = vunpack.c.l.b16 %v316
        %v370 = vunpack.c.l.b16 %v317
        %v371 = vunpack.c.l.b16 %v318
        %v372 = vunpack.c.l.b16 %v319
        %v373 = vpack.c.b16 %v358, %v357
        %v374 = vpack.c.b16 %v360, %v359
        %v375 = vpack.c.b16 %v362, %v361
        %v376 = vpack.c.b16 %v364, %v363
        %v377 = vpack.c.b16 %v366, %v365
        %v378 = vpack.c.b16 %v368, %v367
        %v379 = vpack.c.b16 %v370, %v369
        %v380 = vpack.c.b16 %v372, %v371
        %389 = vmatpush.bf16.msra.mxu0 %v380
        %390 = vmatpush.bf16.msra.mxu0 %v379
        %391 = vmatpush.bf16.msra.mxu0 %v378
        %392 = vmatpush.bf16.msra.mxu0 %v377
        %393 = vmatpush.bf16.msra.mxu0 %v376
        %394 = vmatpush.bf16.msra.mxu0 %v375
        %395 = vmatpush.bf16.msra.mxu0 %v374
        %396 = vmatpush.bf16.msra.mxu0 %v373
        %397 = vmatmul.bf16.gmra.mxu0 %v335
        %v398 = vpop.f32.mrf.mxu0
        %v399 = vadd.f32 0.0, %v398
        %v400 = vpop.f32.mrf.mxu0
        %v401 = vadd.f32 0.0, %v400
        %402 = vmatmul.bf16.gmra.mxu0 %v338
        %v403 = vpop.f32.mrf.mxu0
        %v404 = vadd.f32 0.0, %v403
        %v405 = vpop.f32.mrf.mxu0
        %406 = vdwg.mxu0
        %v423 = vunpack.c.l.b16 %v287
        %v424 = vunpack.c.l.b16 %v288
        %v425 = vunpack.c.l.b16 %v289
        %v426 = vunpack.c.l.b16 %v290
        %v427 = vunpack.c.l.b16 %v291
        %v428 = vunpack.c.l.b16 %v292
        %v429 = vunpack.c.l.b16 %v293
        %v430 = vunpack.c.l.b16 %v294
        %v431 = vunpack.c.l.b16 %v295
        %v432 = vunpack.c.l.b16 %v296
        %v433 = vunpack.c.l.b16 %v297
        %v434 = vunpack.c.l.b16 %v298
        %v435 = vunpack.c.l.b16 %v299
        %v436 = vunpack.c.l.b16 %v300
        %v437 = vunpack.c.l.b16 %v301
        %v438 = vunpack.c.l.b16 %v302
        %v439 = vpack.c.b16 %v424, %v423
        %v440 = vpack.c.b16 %v426, %v425
        %v441 = vpack.c.b16 %v428, %v427
        %v442 = vpack.c.b16 %v430, %v429
        %v443 = vpack.c.b16 %v432, %v431
        %v444 = vpack.c.b16 %v434, %v433
        %v445 = vpack.c.b16 %v436, %v435
        %v446 = vpack.c.b16 %v438, %v437
        %455 = vmatpush.bf16.msra.mxu0 %v446
        %456 = vmatpush.bf16.msra.mxu0 %v445
        %457 = vmatpush.bf16.msra.mxu0 %v444
        %458 = vmatpush.bf16.msra.mxu0 %v443
        %459 = vmatpush.bf16.msra.mxu0 %v442
        %460 = vmatpush.bf16.msra.mxu0 %v441
        %461 = vmatpush.bf16.msra.mxu0 %v440
        %462 = vmatpush.bf16.msra.mxu0 %v439
        %463 = vmatmul.bf16.gmra.mxu0 %v201
        %v464 = vpop.f32.mrf.mxu0
        %v465 = vadd.f32 %v399, %v464
        %v466 = vpop.f32.mrf.mxu0
        %v467 = vadd.f32 %v401, %v466
        %468 = vmatmul.bf16.gmra.mxu0 %v202
        %v469 = vpop.f32.mrf.mxu0
        %v470 = vadd.f32 %v404, %v469
        %v471 = vpop.f32.mrf.mxu0
        %472 = vdwg.mxu0
        %v473 = vadd.f32 %v465, %v193
        %v474 = vadd.f32 %v467, %v193
        %v475 = vadd.f32 %v470, %v193
        %vm476 = vcmp.ge.f32.partialorder %v473, 0.0
        %vm477 = vcmp.ge.f32.partialorder %v474, 0.0
        %vm478 = vcmp.ge.f32.partialorder %v475, 0.0
        %v479 = vmul.f32 %v473, 0.01
        %v480 = vmul.f32 %v474, 0.01
        %v481 = vmul.f32 %v475, 0.01
        %v482 = vsel %vm476, %v473, %v479
        %v483 = vsel %vm477, %v474, %v480
        %v484 = vsel %vm478, %v475, %v481
        %v485 = vpack.c.bf16 %v482, %v482
        %v486 = vpack.c.bf16 %v483, %v483
        %v487 = vpack.c.bf16 %v484, %v484
        %s488 = scalar_lea.vmem %s159, 12 [#allocation2]
        %489 = vst [vmem:[%s488] sm:$0xf] %v485
        %490 = vst [vmem:[%s488 + $0x4] sm:$0xf] %v486
        %491 = vst [vmem:[%s488 + $0x8] sm:$0x3] %v487
        %s492 = scalar_lea.vmem %s1, 448
        %v493 = vld [vmem:[%s492] sm:$0xf]
        %v494 = vld [vmem:[%s492 + $0x4] sm:$0xf]
        %v495 = vld [vmem:[%s492 + $0x8] sm:$0xf]
        %v496 = vld [vmem:[%s492 + $0xc] sm:$0xf]
        %v497 = vld [vmem:[%s492 + $0x10] sm:$0xf]
        %v498 = vld [vmem:[%s492 + $0x14] sm:$0xf]
        %v499 = vld [vmem:[%s492 + $0x18] sm:$0xf]
        %v500 = vld [vmem:[%s492 + $0x1c] sm:$0xf]
        %v501 = vld [vmem:[%s492 + $0x20] sm:$0xf]
        %v502 = vld [vmem:[%s492 + $0x24] sm:$0xf]
        %v503 = vld [vmem:[%s492 + $0x28] sm:$0xf]
        %v504 = vld [vmem:[%s492 + $0x2c] sm:$0xf]
        %v505 = vld [vmem:[%s492 + $0x30] sm:$0xf]
        %v506 = vld [vmem:[%s492 + $0x34] sm:$0xf]
        %v507 = vld [vmem:[%s492 + $0x38] sm:$0xf]
        %v508 = vld [vmem:[%s492 + $0x3c] sm:$0xf]
        %s509 = scalar_lea.vmem %s1, 64
        %v510 = vld [vmem:[%s509] sm:$0xf]
        %v511 = vld [vmem:[%s509 + $0x4] sm:$0xf]
        %v512 = vld [vmem:[%s509 + $0x8] sm:$0xf]
        %v513 = vld [vmem:[%s509 + $0xc] sm:$0xf]
        %v514 = vld [vmem:[%s509 + $0x10] sm:$0xf]
        %v515 = vld [vmem:[%s509 + $0x14] sm:$0xf]
        %v516 = vld [vmem:[%s509 + $0x18] sm:$0xf]
        %v517 = vld [vmem:[%s509 + $0x1c] sm:$0xf]
        %v518 = vld [vmem:[%s509 + $0x20] sm:$0xf]
        %v519 = vld [vmem:[%s509 + $0x24] sm:$0xf]
        %v520 = vld [vmem:[%s509 + $0x28] sm:$0xf]
        %v521 = vld [vmem:[%s509 + $0x2c] sm:$0xf]
        %v522 = vld [vmem:[%s509 + $0x30] sm:$0xf]
        %v523 = vld [vmem:[%s509 + $0x34] sm:$0xf]
        %v524 = vld [vmem:[%s509 + $0x38] sm:$0xf]
        %v525 = vld [vmem:[%s509 + $0x3c] sm:$0xf]
        %v530 = vunpack.c.l.b16 %v169
        %v531 = vunpack.c.l.b16 %v170
        %v532 = vunpack.c.l.b16 %v171
        %v533 = vunpack.c.l.b16 %v172
        %v534 = vpack.c.b16 %v531, %v530
        %v535 = vpack.c.b16 %v533, %v532
        %vm536 = vsmask.f32 5376
        %v538 = vshrl.u32 %v534, 16
        %v540 = vrot.slane %v538, 2
        %v541 = vshll.u32 %v534, 16
        %v543 = vrot.slane %v541, 3
        %v544 = vor.u32 %v540, %v543
        %v546 = vshrl.u32 %v535, 16
        %v548 = vrot.slane %v546, 2
        %v549 = vshll.u32 %v535, 16
        %v551 = vrot.slane %v549, 3
        %v552 = vor.u32 %v548, %v551
        %v553 = vsel %vm536, %v544, %v552
        %v572 = vunpack.c.l.b16 %v510
        %v573 = vunpack.c.l.b16 %v511
        %v574 = vunpack.c.l.b16 %v512
        %v575 = vunpack.c.l.b16 %v513
        %v576 = vunpack.c.l.b16 %v514
        %v577 = vunpack.c.l.b16 %v515
        %v578 = vunpack.c.l.b16 %v516
        %v579 = vunpack.c.l.b16 %v517
        %v580 = vunpack.c.l.b16 %v518
        %v581 = vunpack.c.l.b16 %v519
        %v582 = vunpack.c.l.b16 %v520
        %v583 = vunpack.c.l.b16 %v521
        %v584 = vunpack.c.l.b16 %v522
        %v585 = vunpack.c.l.b16 %v523
        %v586 = vunpack.c.l.b16 %v524
        %v587 = vunpack.c.l.b16 %v525
        %v588 = vpack.c.b16 %v573, %v572
        %v589 = vpack.c.b16 %v575, %v574
        %v590 = vpack.c.b16 %v577, %v576
        %v591 = vpack.c.b16 %v579, %v578
        %v592 = vpack.c.b16 %v581, %v580
        %v593 = vpack.c.b16 %v583, %v582
        %v594 = vpack.c.b16 %v585, %v584
        %v595 = vpack.c.b16 %v587, %v586
        %604 = vmatpush.bf16.msra.mxu0 %v595
        %605 = vmatpush.bf16.msra.mxu0 %v594
        %606 = vmatpush.bf16.msra.mxu0 %v593
        %607 = vmatpush.bf16.msra.mxu0 %v592
        %608 = vmatpush.bf16.msra.mxu0 %v591
        %609 = vmatpush.bf16.msra.mxu0 %v590
        %610 = vmatpush.bf16.msra.mxu0 %v589
        %611 = vmatpush.bf16.msra.mxu0 %v588
        %612 = vmatmul.bf16.gmra.mxu0 %v553
        %v613 = vpop.f32.mrf.mxu0
        %v614 = vadd.f32 0.0, %v613
        %v615 = vpop.f32.mrf.mxu0
        %v616 = vadd.f32 0.0, %v615
        %617 = vmatmul.bf16.gmra.mxu0 %v552
        %v618 = vpop.f32.mrf.mxu0
        %v619 = vadd.f32 0.0, %v618
        %v620 = vpop.f32.mrf.mxu0
        %621 = vdwg.mxu0
        %v638 = vunpack.c.l.b16 %v493
        %v639 = vunpack.c.l.b16 %v494
        %v640 = vunpack.c.l.b16 %v495
        %v641 = vunpack.c.l.b16 %v496
        %v642 = vunpack.c.l.b16 %v497
        %v643 = vunpack.c.l.b16 %v498
        %v644 = vunpack.c.l.b16 %v499
        %v645 = vunpack.c.l.b16 %v500
        %v646 = vunpack.c.l.b16 %v501
        %v647 = vunpack.c.l.b16 %v502
        %v648 = vunpack.c.l.b16 %v503
        %v649 = vunpack.c.l.b16 %v504
        %v650 = vunpack.c.l.b16 %v505
        %v651 = vunpack.c.l.b16 %v506
        %v652 = vunpack.c.l.b16 %v507
        %v653 = vunpack.c.l.b16 %v508
        %v654 = vpack.c.b16 %v639, %v638
        %v655 = vpack.c.b16 %v641, %v640
        %v656 = vpack.c.b16 %v643, %v642
        %v657 = vpack.c.b16 %v645, %v644
        %v658 = vpack.c.b16 %v647, %v646
        %v659 = vpack.c.b16 %v649, %v648
        %v660 = vpack.c.b16 %v651, %v650
        %v661 = vpack.c.b16 %v653, %v652
        %670 = vmatpush.bf16.msra.mxu0 %v661
        %671 = vmatpush.bf16.msra.mxu0 %v660
        %672 = vmatpush.bf16.msra.mxu0 %v659
        %673 = vmatpush.bf16.msra.mxu0 %v658
        %674 = vmatpush.bf16.msra.mxu0 %v657
        %675 = vmatpush.bf16.msra.mxu0 %v656
        %676 = vmatpush.bf16.msra.mxu0 %v655
        %677 = vmatpush.bf16.msra.mxu0 %v654
        %678 = vmatmul.bf16.gmra.mxu0 %v201
        %v679 = vpop.f32.mrf.mxu0
        %v680 = vadd.f32 %v614, %v679
        %v681 = vpop.f32.mrf.mxu0
        %v682 = vadd.f32 %v616, %v681
        %683 = vmatmul.bf16.gmra.mxu0 %v202
        %v684 = vpop.f32.mrf.mxu0
        %v685 = vadd.f32 %v619, %v684
        %v686 = vpop.f32.mrf.mxu0
        %687 = vdwg.mxu0
        %v688 = vadd.f32 %v680, %v193
        %v689 = vadd.f32 %v682, %v193
        %v690 = vadd.f32 %v685, %v193
        %vm691 = vcmp.ge.f32.partialorder %v688, 0.0
        %vm692 = vcmp.ge.f32.partialorder %v689, 0.0
        %vm693 = vcmp.ge.f32.partialorder %v690, 0.0
        %v694 = vmul.f32 %v688, 0.01
        %v695 = vmul.f32 %v689, 0.01
        %v696 = vmul.f32 %v690, 0.01
        %v697 = vsel %vm691, %v688, %v694
        %v698 = vsel %vm692, %v689, %v695
        %v699 = vsel %vm693, %v690, %v696
        %v700 = vpack.c.bf16 %v697, %v697
        %v701 = vpack.c.bf16 %v698, %v698
        %v702 = vpack.c.bf16 %v699, %v699
        %s703 = scalar_lea.vmem %s159, 24 [#allocation2]
        %704 = vst [vmem:[%s703] sm:$0xf] %v700
        %705 = vst [vmem:[%s703 + $0x4] sm:$0xf] %v701
        %706 = vst [vmem:[%s703 + $0x8] sm:$0x3] %v702
        %s707 = scalar_lea.vmem %s1, 512
        %v708 = vld [vmem:[%s707] sm:$0xf]
        %v709 = vld [vmem:[%s707 + $0x4] sm:$0xf]
        %v710 = vld [vmem:[%s707 + $0x8] sm:$0xf]
        %v711 = vld [vmem:[%s707 + $0xc] sm:$0xf]
        %v712 = vld [vmem:[%s707 + $0x10] sm:$0xf]
        %v713 = vld [vmem:[%s707 + $0x14] sm:$0xf]
        %v714 = vld [vmem:[%s707 + $0x18] sm:$0xf]
        %v715 = vld [vmem:[%s707 + $0x1c] sm:$0xf]
        %v716 = vld [vmem:[%s707 + $0x20] sm:$0xf]
        %v717 = vld [vmem:[%s707 + $0x24] sm:$0xf]
        %v718 = vld [vmem:[%s707 + $0x28] sm:$0xf]
        %v719 = vld [vmem:[%s707 + $0x2c] sm:$0xf]
        %v720 = vld [vmem:[%s707 + $0x30] sm:$0xf]
        %v721 = vld [vmem:[%s707 + $0x34] sm:$0xf]
        %v722 = vld [vmem:[%s707 + $0x38] sm:$0xf]
        %v723 = vld [vmem:[%s707 + $0x3c] sm:$0xf]
        %s724 = scalar_lea.vmem %s1, 384
        %v725 = vld [vmem:[%s724] sm:$0xf]
        %v726 = vld [vmem:[%s724 + $0x4] sm:$0xf]
        %v727 = vld [vmem:[%s724 + $0x8] sm:$0xf]
        %v728 = vld [vmem:[%s724 + $0xc] sm:$0xf]
        %v729 = vld [vmem:[%s724 + $0x10] sm:$0xf]
        %v730 = vld [vmem:[%s724 + $0x14] sm:$0xf]
        %v731 = vld [vmem:[%s724 + $0x18] sm:$0xf]
        %v732 = vld [vmem:[%s724 + $0x1c] sm:$0xf]
        %v733 = vld [vmem:[%s724 + $0x20] sm:$0xf]
        %v734 = vld [vmem:[%s724 + $0x24] sm:$0xf]
        %v735 = vld [vmem:[%s724 + $0x28] sm:$0xf]
        %v736 = vld [vmem:[%s724 + $0x2c] sm:$0xf]
        %v737 = vld [vmem:[%s724 + $0x30] sm:$0xf]
        %v738 = vld [vmem:[%s724 + $0x34] sm:$0xf]
        %v739 = vld [vmem:[%s724 + $0x38] sm:$0xf]
        %v740 = vld [vmem:[%s724 + $0x3c] sm:$0xf]
        %v757 = vunpack.c.l.b16 %v725
        %v758 = vunpack.c.l.b16 %v726
        %v759 = vunpack.c.l.b16 %v727
        %v760 = vunpack.c.l.b16 %v728
        %v761 = vunpack.c.l.b16 %v729
        %v762 = vunpack.c.l.b16 %v730
        %v763 = vunpack.c.l.b16 %v731
        %v764 = vunpack.c.l.b16 %v732
        %v765 = vunpack.c.l.b16 %v733
        %v766 = vunpack.c.l.b16 %v734
        %v767 = vunpack.c.l.b16 %v735
        %v768 = vunpack.c.l.b16 %v736
        %v769 = vunpack.c.l.b16 %v737
        %v770 = vunpack.c.l.b16 %v738
        %v771 = vunpack.c.l.b16 %v739
        %v772 = vunpack.c.l.b16 %v740
        %v773 = vpack.c.b16 %v758, %v757
        %v774 = vpack.c.b16 %v760, %v759
        %v775 = vpack.c.b16 %v762, %v761
        %v776 = vpack.c.b16 %v764, %v763
        %v777 = vpack.c.b16 %v766, %v765
        %v778 = vpack.c.b16 %v768, %v767
        %v779 = vpack.c.b16 %v770, %v769
        %v780 = vpack.c.b16 %v772, %v771
        %789 = vmatpush.bf16.msra.mxu0 %v780
        %790 = vmatpush.bf16.msra.mxu0 %v779
        %791 = vmatpush.bf16.msra.mxu0 %v778
        %792 = vmatpush.bf16.msra.mxu0 %v777
        %793 = vmatpush.bf16.msra.mxu0 %v776
        %794 = vmatpush.bf16.msra.mxu0 %v775
        %795 = vmatpush.bf16.msra.mxu0 %v774
        %796 = vmatpush.bf16.msra.mxu0 %v773
        %797 = vmatmul.bf16.gmra.mxu0 %v335
        %v798 = vpop.f32.mrf.mxu0
        %v799 = vadd.f32 0.0, %v798
        %v800 = vpop.f32.mrf.mxu0
        %v801 = vadd.f32 0.0, %v800
        %802 = vmatmul.bf16.gmra.mxu0 %v338
        %v803 = vpop.f32.mrf.mxu0
        %v804 = vadd.f32 0.0, %v803
        %v805 = vpop.f32.mrf.mxu0
        %806 = vdwg.mxu0
        %v823 = vunpack.c.l.b16 %v708
        %v824 = vunpack.c.l.b16 %v709
        %v825 = vunpack.c.l.b16 %v710
        %v826 = vunpack.c.l.b16 %v711
        %v827 = vunpack.c.l.b16 %v712
        %v828 = vunpack.c.l.b16 %v713
        %v829 = vunpack.c.l.b16 %v714
        %v830 = vunpack.c.l.b16 %v715
        %v831 = vunpack.c.l.b16 %v716
        %v832 = vunpack.c.l.b16 %v717
        %v833 = vunpack.c.l.b16 %v718
        %v834 = vunpack.c.l.b16 %v719
        %v835 = vunpack.c.l.b16 %v720
        %v836 = vunpack.c.l.b16 %v721
        %v837 = vunpack.c.l.b16 %v722
        %v838 = vunpack.c.l.b16 %v723
        %v839 = vpack.c.b16 %v824, %v823
        %v840 = vpack.c.b16 %v826, %v825
        %v841 = vpack.c.b16 %v828, %v827
        %v842 = vpack.c.b16 %v830, %v829
        %v843 = vpack.c.b16 %v832, %v831
        %v844 = vpack.c.b16 %v834, %v833
        %v845 = vpack.c.b16 %v836, %v835
        %v846 = vpack.c.b16 %v838, %v837
        %855 = vmatpush.bf16.msra.mxu0 %v846
        %856 = vmatpush.bf16.msra.mxu0 %v845
        %857 = vmatpush.bf16.msra.mxu0 %v844
        %858 = vmatpush.bf16.msra.mxu0 %v843
        %859 = vmatpush.bf16.msra.mxu0 %v842
        %860 = vmatpush.bf16.msra.mxu0 %v841
        %861 = vmatpush.bf16.msra.mxu0 %v840
        %862 = vmatpush.bf16.msra.mxu0 %v839
        %863 = vmatmul.bf16.gmra.mxu0 %v201
        %v864 = vpop.f32.mrf.mxu0
        %v865 = vadd.f32 %v799, %v864
        %v866 = vpop.f32.mrf.mxu0
        %v867 = vadd.f32 %v801, %v866
        %868 = vmatmul.bf16.gmra.mxu0 %v202
        %v869 = vpop.f32.mrf.mxu0
        %v870 = vadd.f32 %v804, %v869
        %v871 = vpop.f32.mrf.mxu0
        %872 = vdwg.mxu0
        %s873 = scalar_lea.vmem %s1, 128
        %v874 = vld [vmem:[%s873] sm:$0xf]
        %v875 = vld [vmem:[%s873 + $0x4] sm:$0xf]
        %v876 = vld [vmem:[%s873 + $0x8] sm:$0xf]
        %v877 = vld [vmem:[%s873 + $0xc] sm:$0xf]
        %v878 = vld [vmem:[%s873 + $0x10] sm:$0xf]
        %v879 = vld [vmem:[%s873 + $0x14] sm:$0xf]
        %v880 = vld [vmem:[%s873 + $0x18] sm:$0xf]
        %v881 = vld [vmem:[%s873 + $0x1c] sm:$0xf]
        %v882 = vld [vmem:[%s873 + $0x20] sm:$0xf]
        %v883 = vld [vmem:[%s873 + $0x24] sm:$0xf]
        %v884 = vld [vmem:[%s873 + $0x28] sm:$0xf]
        %v885 = vld [vmem:[%s873 + $0x2c] sm:$0xf]
        %v886 = vld [vmem:[%s873 + $0x30] sm:$0xf]
        %v887 = vld [vmem:[%s873 + $0x34] sm:$0xf]
        %v888 = vld [vmem:[%s873 + $0x38] sm:$0xf]
        %v889 = vld [vmem:[%s873 + $0x3c] sm:$0xf]
        %v906 = vunpack.c.l.b16 %v874
        %v907 = vunpack.c.l.b16 %v875
        %v908 = vunpack.c.l.b16 %v876
        %v909 = vunpack.c.l.b16 %v877
        %v910 = vunpack.c.l.b16 %v878
        %v911 = vunpack.c.l.b16 %v879
        %v912 = vunpack.c.l.b16 %v880
        %v913 = vunpack.c.l.b16 %v881
        %v914 = vunpack.c.l.b16 %v882
        %v915 = vunpack.c.l.b16 %v883
        %v916 = vunpack.c.l.b16 %v884
        %v917 = vunpack.c.l.b16 %v885
        %v918 = vunpack.c.l.b16 %v886
        %v919 = vunpack.c.l.b16 %v887
        %v920 = vunpack.c.l.b16 %v888
        %v921 = vunpack.c.l.b16 %v889
        %v922 = vpack.c.b16 %v907, %v906
        %v923 = vpack.c.b16 %v909, %v908
        %v924 = vpack.c.b16 %v911, %v910
        %v925 = vpack.c.b16 %v913, %v912
        %v926 = vpack.c.b16 %v915, %v914
        %v927 = vpack.c.b16 %v917, %v916
        %v928 = vpack.c.b16 %v919, %v918
        %v929 = vpack.c.b16 %v921, %v920
        %938 = vmatpush.bf16.msra.mxu0 %v929
        %939 = vmatpush.bf16.msra.mxu0 %v928
        %940 = vmatpush.bf16.msra.mxu0 %v927
        %941 = vmatpush.bf16.msra.mxu0 %v926
        %942 = vmatpush.bf16.msra.mxu0 %v925
        %943 = vmatpush.bf16.msra.mxu0 %v924
        %944 = vmatpush.bf16.msra.mxu0 %v923
        %945 = vmatpush.bf16.msra.mxu0 %v922
        %946 = vmatmul.bf16.gmra.mxu0 %v553
        %v947 = vpop.f32.mrf.mxu0
        %v948 = vadd.f32 0.0, %v947
        %v949 = vpop.f32.mrf.mxu0
        %v950 = vadd.f32 0.0, %v949
        %951 = vmatmul.bf16.gmra.mxu0 %v552
        %v952 = vpop.f32.mrf.mxu0
        %v953 = vadd.f32 0.0, %v952
        %v954 = vpop.f32.mrf.mxu0
        %955 = vdwg.mxu0
        %v956 = vadd.f32 %v865, %v948
        %v957 = vadd.f32 %v867, %v950
        %v958 = vadd.f32 %v870, %v953
        %v959 = vld [vmem:[%s1] sm:$0xf]
        %v960 = vld [vmem:[%s1 + $0x4] sm:$0xf]
        %v961 = vld [vmem:[%s1 + $0x8] sm:$0xf]
        %v962 = vld [vmem:[%s1 + $0xc] sm:$0xf]
        %v963 = vld [vmem:[%s1 + $0x10] sm:$0xf]
        %v964 = vld [vmem:[%s1 + $0x14] sm:$0xf]
        %v965 = vld [vmem:[%s1 + $0x18] sm:$0xf]
        %v966 = vld [vmem:[%s1 + $0x1c] sm:$0xf]
        %v967 = vld [vmem:[%s1 + $0x20] sm:$0xf]
        %v968 = vld [vmem:[%s1 + $0x24] sm:$0xf]
        %v969 = vld [vmem:[%s1 + $0x28] sm:$0xf]
        %v970 = vld [vmem:[%s1 + $0x2c] sm:$0xf]
        %v971 = vld [vmem:[%s1 + $0x30] sm:$0xf]
        %v972 = vld [vmem:[%s1 + $0x34] sm:$0xf]
        %v973 = vld [vmem:[%s1 + $0x38] sm:$0xf]
        %v974 = vld [vmem:[%s1 + $0x3c] sm:$0xf]
        %v976 = vunpack.c.l.b16 %v173
        %v977 = vpack.c.b16 %v531, %v976
        %vm978 = vcmask 1044480
        %v979 = vrot.slane %v977, 3
        %v980 = vrot.slane %v535, 3
        %v981 = vsel %vm978, %v979, %v980
        %v1000 = vunpack.c.l.b16 %v959
        %v1001 = vunpack.c.l.b16 %v960
        %v1002 = vunpack.c.l.b16 %v961
        %v1003 = vunpack.c.l.b16 %v962
        %v1004 = vunpack.c.l.b16 %v963
        %v1005 = vunpack.c.l.b16 %v964
        %v1006 = vunpack.c.l.b16 %v965
        %v1007 = vunpack.c.l.b16 %v966
        %v1008 = vunpack.c.l.b16 %v967
        %v1009 = vunpack.c.l.b16 %v968
        %v1010 = vunpack.c.l.b16 %v969
        %v1011 = vunpack.c.l.b16 %v970
        %v1012 = vunpack.c.l.b16 %v971
        %v1013 = vunpack.c.l.b16 %v972
        %v1014 = vunpack.c.l.b16 %v973
        %v1015 = vunpack.c.l.b16 %v974
        %v1016 = vpack.c.b16 %v1001, %v1000
        %v1017 = vpack.c.b16 %v1003, %v1002
        %v1018 = vpack.c.b16 %v1005, %v1004
        %v1019 = vpack.c.b16 %v1007, %v1006
        %v1020 = vpack.c.b16 %v1009, %v1008
        %v1021 = vpack.c.b16 %v1011, %v1010
        %v1022 = vpack.c.b16 %v1013, %v1012
        %v1023 = vpack.c.b16 %v1015, %v1014
        %1032 = vmatpush.bf16.msra.mxu0 %v1023
        %1033 = vmatpush.bf16.msra.mxu0 %v1022
        %1034 = vmatpush.bf16.msra.mxu0 %v1021
        %1035 = vmatpush.bf16.msra.mxu0 %v1020
        %1036 = vmatpush.bf16.msra.mxu0 %v1019
        %1037 = vmatpush.bf16.msra.mxu0 %v1018
        %1038 = vmatpush.bf16.msra.mxu0 %v1017
        %1039 = vmatpush.bf16.msra.mxu0 %v1016
        %1040 = vmatmul.bf16.gmra.mxu0 %v981
        %v1041 = vpop.f32.mrf.mxu0
        %v1042 = vadd.f32 0.0, %v1041
        %v1043 = vpop.f32.mrf.mxu0
        %v1044 = vadd.f32 0.0, %v1043
        %1045 = vmatmul.bf16.gmra.mxu0 %v980
        %v1046 = vpop.f32.mrf.mxu0
        %v1047 = vadd.f32 0.0, %v1046
        %v1048 = vpop.f32.mrf.mxu0
        %1049 = vdwg.mxu0
        %v1050 = vadd.f32 %v956, %v1042
        %v1051 = vadd.f32 %v957, %v1044
        %v1052 = vadd.f32 %v958, %v1047
        %v1053 = vadd.f32 %v1050, %v193
        %v1054 = vadd.f32 %v1051, %v193
        %v1055 = vadd.f32 %v1052, %v193
        %vm1056 = vcmp.ge.f32.partialorder %v1053, 0.0
        %vm1057 = vcmp.ge.f32.partialorder %v1054, 0.0
        %vm1058 = vcmp.ge.f32.partialorder %v1055, 0.0
        %v1059 = vmul.f32 %v1053, 0.01
        %v1060 = vmul.f32 %v1054, 0.01
        %v1061 = vmul.f32 %v1055, 0.01
        %v1062 = vsel %vm1056, %v1053, %v1059
        %v1063 = vsel %vm1057, %v1054, %v1060
        %v1064 = vsel %vm1058, %v1055, %v1061
        %v1065 = vpack.c.bf16 %v1062, %v1062
        %v1066 = vpack.c.bf16 %v1063, %v1063
        %v1067 = vpack.c.bf16 %v1064, %v1064
        %s1068 = scalar_lea.vmem %s159, 36 [#allocation2]
        %1069 = vst [vmem:[%s1068] sm:$0xf] %v1065
        %1070 = vst [vmem:[%s1068 + $0x4] sm:$0xf] %v1066
        %1071 = vst [vmem:[%s1068 + $0x8] sm:$0x3] %v1067
        %s1072 = sand.u32 %s90, 1
        %s1073 = sand.u32 %s90, 1
        %s1074 = smul.addr %s1073, 48
        %s1075 = scalar_lea.vmem [#allocation2], %s1074
        // Predicated region
        $region33: #{music_genre_forward.10} parent=31 // pred_check
          %p1076 = pneg %p100
        $region34: #{music_genre_forward.10} parent=31 // pred_check_branch
          %1078 = sbr.rel (%p1076) target = $region36
        $region35: #{music_genre_forward.10} parent=31 // pred_region
          %s1079 = smul.addr %s14, 3
          %s1080 = smul.addr %s1079, 4
          %s1081 = scalar_lea.vmem %s3, %s1080
          // Predicated region
          $region37: #{music_genre_forward.10} parent=35 // pred_check
            _
          $region38: #{music_genre_forward.10} parent=35 // pred_check_branch
            %1083 = sbr.rel (0) target = $region40
          $region39: #{music_genre_forward.10} parent=35 // pred_region
            // Predicated region
            $region41: #{music_genre_forward.10} parent=39 // pred_check
              _
            $region42: #{music_genre_forward.10} parent=39 // pred_check_branch
              %1085 = sbr.rel target = $region44
            $region43: #{music_genre_forward.10} parent=39 // pred_region
              // Predicated region
              $region56: #{music_genre_forward.10} parent=43 // pred_check
                _
              $region57: #{music_genre_forward.10} parent=43 // pred_check_branch
                %1123 = sbr.rel (0) target = $region59
              $region58: #{music_genre_forward.10} parent=43 // pred_region
                loop: start=0, step=1, limit=1
                $region60: #{music_genre_forward.10} parent=58 // loop_pre_header
                  _
                $region61: #{music_genre_forward.10} parent=58 // loop_header
                  %s1125 = sphi 0, %s1129
                  %p1126 = scmp.ge.s32.totalorder %s1125, 1
                  %s1130 = sphi %s1075, %s1075
                  %s1131 = sphi %s1081, %s1081
                $region62: #{music_genre_forward.10} parent=58 // loop_header_branch
                  %1128 = sbr.rel (%p1126) target = $region66
                $region63: #{music_genre_forward.10} parent=58 // loop_body
                  _
                $region64: #{music_genre_forward.10} parent=58 // loop_footer
                  %s1129 = sadd.s32 1, %s1125
                $region65: #{music_genre_forward.10} parent=58 // loop_footer_branch
                  %1124 = sbr.rel target = $region61
                $region66: #{music_genre_forward.10} parent=58 // loop_exit
                  _
                %s1133 = ssub.s32 16, 1
                loop: start=0, step=1, limit=1
                $region67: #{music_genre_forward.10} parent=58 // loop_pre_header
                  _
                $region68: #{music_genre_forward.10} parent=58 // loop_header
                  %s1135 = sphi 0, %s1139
                  %p1136 = scmp.ge.s32.totalorder %s1135, 1
                  %s1140 = sphi %s1075, %s1075
                  %s1141 = sphi %s1081, %s1081
                $region69: #{music_genre_forward.10} parent=58 // loop_header_branch
                  %1138 = sbr.rel (%p1136) target = $region73
                $region70: #{music_genre_forward.10} parent=58 // loop_body
                  %v1142 = vld [vmem:[%s1140] sm:%s1133]
                  %1143 = vst [vmem:[%s1141] sm:%s1133] %v1142
                  %v1144 = vld [vmem:[%s1140 + $0x4] sm:%s1133]
                  %1145 = vst [vmem:[%s1141 + $0x4] sm:%s1133] %v1144
                  %v1146 = vld [vmem:[%s1140 + $0x8] sm:%s1133]
                  %1147 = vst [vmem:[%s1141 + $0x8] sm:%s1133] %v1146
                  %v1148 = vld [vmem:[%s1140 + $0xc] sm:%s1133]
                  %1149 = vst [vmem:[%s1141 + $0x18] sm:%s1133] %v1148
                  %v1150 = vld [vmem:[%s1140 + $0x10] sm:%s1133]
                  %1151 = vst [vmem:[%s1141 + $0x1c] sm:%s1133] %v1150
                  %v1152 = vld [vmem:[%s1140 + $0x14] sm:%s1133]
                  %1153 = vst [vmem:[%s1141 + $0x20] sm:%s1133] %v1152
                  %v1154 = vld [vmem:[%s1140 + $0x18] sm:%s1133]
                  %1155 = vst [vmem:[%s1141 + $0x30] sm:%s1133] %v1154
                  %v1156 = vld [vmem:[%s1140 + $0x1c] sm:%s1133]
                  %1157 = vst [vmem:[%s1141 + $0x34] sm:%s1133] %v1156
                  %v1158 = vld [vmem:[%s1140 + $0x20] sm:%s1133]
                  %1159 = vst [vmem:[%s1141 + $0x38] sm:%s1133] %v1158
                  %v1160 = vld [vmem:[%s1140 + $0x24] sm:%s1133]
                  %1161 = vst [vmem:[%s1141 + $0x48] sm:%s1133] %v1160
                  %v1162 = vld [vmem:[%s1140 + $0x28] sm:%s1133]
                  %1163 = vst [vmem:[%s1141 + $0x4c] sm:%s1133] %v1162
                  %v1164 = vld [vmem:[%s1140 + $0x2c] sm:%s1133]
                  %1165 = vst [vmem:[%s1141 + $0x50] sm:%s1133] %v1164
                $region71: #{music_genre_forward.10} parent=58 // loop_footer
                  %s1139 = sadd.s32 1, %s1135
                $region72: #{music_genre_forward.10} parent=58 // loop_footer_branch
                  %1134 = sbr.rel target = $region68
                $region73: #{music_genre_forward.10} parent=58 // loop_exit
                  _
              $region59: #{music_genre_forward.10} parent=43 // pred_fallthru
                _
            $region44: #{music_genre_forward.10} parent=39 // pred_fallthru
              _
            // Predicated region
            $region45: #{music_genre_forward.10} parent=39 // pred_check
              _
            $region46: #{music_genre_forward.10} parent=39 // pred_check_branch
              %1087 = sbr.rel (0) target = $region48
            $region47: #{music_genre_forward.10} parent=39 // pred_region
              %s1089 = ssub.s32 16, 1
              loop: start=0, step=1, limit=1
              $region49: #{music_genre_forward.10} parent=47 // loop_pre_header
                _
              $region50: #{music_genre_forward.10} parent=47 // loop_header
                %s1091 = sphi 0, %s1095
                %p1092 = scmp.ge.s32.totalorder %s1091, 1
                %s1096 = sphi %s1075, %s1075
                %s1097 = sphi %s1081, %s1081
              $region51: #{music_genre_forward.10} parent=47 // loop_header_branch
                %1094 = sbr.rel (%p1092) target = $region55
              $region52: #{music_genre_forward.10} parent=47 // loop_body
                %v1098 = vld [vmem:[%s1096] sm:%s1089]
                %1099 = vst [vmem:[%s1097] sm:%s1089] %v1098
                %v1100 = vld [vmem:[%s1096 + $0x4] sm:%s1089]
                %1101 = vst [vmem:[%s1097 + $0x4] sm:%s1089] %v1100
                %v1102 = vld [vmem:[%s1096 + $0x8] sm:%s1089]
                %1103 = vst [vmem:[%s1097 + $0x8] sm:%s1089] %v1102
                %v1104 = vld [vmem:[%s1096 + $0xc] sm:%s1089]
                %1105 = vst [vmem:[%s1097 + $0x18] sm:%s1089] %v1104
                %v1106 = vld [vmem:[%s1096 + $0x10] sm:%s1089]
                %1107 = vst [vmem:[%s1097 + $0x1c] sm:%s1089] %v1106
                %v1108 = vld [vmem:[%s1096 + $0x14] sm:%s1089]
                %1109 = vst [vmem:[%s1097 + $0x20] sm:%s1089] %v1108
                %v1110 = vld [vmem:[%s1096 + $0x18] sm:%s1089]
                %1111 = vst [vmem:[%s1097 + $0x30] sm:%s1089] %v1110
                %v1112 = vld [vmem:[%s1096 + $0x1c] sm:%s1089]
                %1113 = vst [vmem:[%s1097 + $0x34] sm:%s1089] %v1112
                %v1114 = vld [vmem:[%s1096 + $0x20] sm:%s1089]
                %1115 = vst [vmem:[%s1097 + $0x38] sm:%s1089] %v1114
                %v1116 = vld [vmem:[%s1096 + $0x24] sm:%s1089]
                %1117 = vst [vmem:[%s1097 + $0x48] sm:%s1089] %v1116
                %v1118 = vld [vmem:[%s1096 + $0x28] sm:%s1089]
                %1119 = vst [vmem:[%s1097 + $0x4c] sm:%s1089] %v1118
                %v1120 = vld [vmem:[%s1096 + $0x2c] sm:%s1089]
                %1121 = vst [vmem:[%s1097 + $0x50] sm:%s1089] %v1120
              $region53: #{music_genre_forward.10} parent=47 // loop_footer
                %s1095 = sadd.s32 1, %s1091
              $region54: #{music_genre_forward.10} parent=47 // loop_footer_branch
                %1090 = sbr.rel target = $region50
              $region55: #{music_genre_forward.10} parent=47 // loop_exit
                _
            $region48: #{music_genre_forward.10} parent=39 // pred_fallthru
              _
          $region40: #{music_genre_forward.10} parent=35 // pred_fallthru
            _
          %1166 = vnop
        $region36: #{music_genre_forward.10} parent=31 // pred_fallthru
          _
      $region32: #{music_genre_forward.10} parent=5 // pred_fallthru
        _
      %p1167 = scmp.le.s32.totalorder 2, %s9
      // Predicated region
      $region74: #{music_genre_forward.10} parent=5 // pred_check
        %p1168 = pneg %p1167
      $region75: #{music_genre_forward.10} parent=5 // pred_check_branch
        %1170 = sbr.rel (%p1168) target = $region77
      $region76: #{music_genre_forward.10} parent=5 // pred_region
        %s1171 = ssub.s32 %s9, 2
        // Predicated region
        $region78: #{music_genre_forward.10} parent=76 // pred_check
          %p1172 = pneg %p106
        $region79: #{music_genre_forward.10} parent=76 // pred_check_branch
          %1174 = sbr.rel (%p1172) target = $region81
        $region80: #{music_genre_forward.10} parent=76 // pred_region
          %s1175 = sand.u32 %s91, 1
          %s1176 = sand.u32 %s91, 1
          %s1177 = smul.addr %s1176, 48
          %s1178 = scalar_lea.vmem [#allocation2], %s1177
        $region81: #{music_genre_forward.10} parent=76 // pred_fallthru
          _
      $region77: #{music_genre_forward.10} parent=5 // pred_fallthru
        _
    $region6: #{music_genre_forward.10} parent=1 // loop_footer
      %s13 = sadd.s32 1, %s9
    $region7: #{music_genre_forward.10} parent=1 // loop_footer_branch
      %8 = sbr.rel target = $region3
    $region8: #{music_genre_forward.10} parent=1 // loop_exit
      _

// kernel: music_genre_forward.11
$region0: #{music_genre_forward.11}
  #allocation0 [shape = 'u32[]', space=smem, size = 0x4, offset = 0x4, fixed_abs, tag = 'smem constant byte address 0x4 - core index']
  #allocation1 [shape = 'u32[72,128]{1,0:T(1,128)}', space=vmem, size = 0x9000, scoped, tag = 'internal scratch']
  %s0 = inlined_call_operand.vmem [shape: bf16[2,88,128], index: 0, kind: input, shape index: {}]
  %s1 = inlined_call_operand.vmem [shape: bf16[3,3,128,128], index: 1, kind: input, shape index: {}]
  %s2 = inlined_call_operand.vmem [shape: f32[1,128], index: 2, kind: input, shape index: {}]
  %s3 = inlined_call_operand.vmem [shape: f32[2,2,2,72,128], index: 3, kind: output, shape index: {}]
  %s4 = sld [smem:[#allocation0]]
  $region79: #{music_genre_forward.11} parent=0
    _
  %s6 = ssub.s32 1, %s4
  %s7 = scalar_select 0, %s6, %s4
  $region1: #{music_genre_forward.11} parent=0
    #allocation2 [shape = 'u8[294912]{0}', space=vmem, size = 0x48000, scoped, tag = 'output window, operand 0']
    loop: start=0, step=1, limit=4
    $region2: #{music_genre_forward.11} parent=1 // loop_pre_header
      _
    $region3: #{music_genre_forward.11} parent=1 // loop_header
      %s9 = sphi 0, %s13
      %p10 = scmp.ge.s32.totalorder %s9, 4
      %s19 = sphi 0, %s21
      %s22 = sphi 0, %s19
      %s23 = sphi 0, %s22
      %s39 = sphi 0, %s23
      %s43 = sphi 0, %s43
      %s45 = sphi 0, %s43
      %s46 = sphi 0, %s45
      %s60 = sphi 0, %s46
      %s64 = sphi 0, %s64
      %s66 = sphi 0, %s64
      %s67 = sphi 0, %s66
      %s81 = sphi 0, %s67
      %s87 = sphi 0, %s89
      %s90 = sphi 0, %s87
      %s91 = sphi 0, %s90
      %s107 = sphi 0, %s91
    $region4: #{music_genre_forward.11} parent=1 // loop_header_branch
      %12 = sbr.rel (%p10) target = $region8
    $region5: #{music_genre_forward.11} parent=1 // loop_body
      %s14 = ssub.s32 %s9, 1
      %s15 = ssub.s32 %s9, 2
      %s16 = sadd.s32 %s9, 1
      %s17 = ssub.s32 %s9, %s16
      %p18 = scmp.eq.s32.totalorder %s17, 0
      %s20 = sadd.s32 %s19, 1
      %s21 = scalar_select %p18, %s19, %s20
      %p24 = pneg %p18
      %p25 = scmp.eq.s32.totalorder %s9, 1
      %p26 = por %p24, %p25
      %p27 = scmp.ne.s32.totalorder %s19, %s22
      %p28 = scmp.eq.s32.totalorder %s9, 0
      %p29 = por %p27, %p28
      %p30 = scmp.ne.s32.totalorder %s19, %s22
      %p31 = scmp.eq.s32.totalorder %s14, 1
      %p32 = por %p30, %p31
      %p33 = scmp.ne.s32.totalorder %s22, %s23
      %p34 = scmp.eq.s32.totalorder %s14, 0
      %p35 = por %p33, %p34
      %p36 = scmp.ne.s32.totalorder %s22, %s23
      %p37 = scmp.eq.s32.totalorder %s15, 1
      %p38 = por %p36, %p37
      %p40 = scmp.ne.s32.totalorder %s23, %s39
      %p41 = scmp.eq.s32.totalorder %s15, 0
      %p42 = por %p40, %p41
      %s44 = sadd.s32 %s43, 1
      %p47 = scmp.eq.s32.totalorder %s9, 1
      %p48 = scmp.ne.s32.totalorder %s43, %s45
      %p49 = scmp.eq.s32.totalorder %s9, 0
      %p50 = por %p48, %p49
      %p51 = scmp.ne.s32.totalorder %s43, %s45
      %p52 = scmp.eq.s32.totalorder %s14, 1
      %p53 = por %p51, %p52
      %p54 = scmp.ne.s32.totalorder %s45, %s46
      %p55 = scmp.eq.s32.totalorder %s14, 0
      %p56 = por %p54, %p55
      %p57 = scmp.ne.s32.totalorder %s45, %s46
      %p58 = scmp.eq.s32.totalorder %s15, 1
      %p59 = por %p57, %p58
      %p61 = scmp.ne.s32.totalorder %s46, %s60
      %p62 = scmp.eq.s32.totalorder %s15, 0
      %p63 = por %p61, %p62
      %s65 = sadd.s32 %s64, 1
      %p68 = scmp.eq.s32.totalorder %s9, 1
      %p69 = scmp.ne.s32.totalorder %s64, %s66
      %p70 = scmp.eq.s32.totalorder %s9, 0
      %p71 = por %p69, %p70
      %p72 = scmp.ne.s32.totalorder %s64, %s66
      %p73 = scmp.eq.s32.totalorder %s14, 1
      %p74 = por %p72, %p73
      %p75 = scmp.ne.s32.totalorder %s66, %s67
      %p76 = scmp.eq.s32.totalorder %s14, 0
      %p77 = por %p75, %p76
      %p78 = scmp.ne.s32.totalorder %s66, %s67
      %p79 = scmp.eq.s32.totalorder %s15, 1
      %p80 = por %p78, %p79
      %p82 = scmp.ne.s32.totalorder %s67, %s81
      %p83 = scmp.eq.s32.totalorder %s15, 0
      %p84 = por %p82, %p83
      %s85 = ssub.s32 %s9, %s16
      %p86 = scmp.eq.s32.totalorder %s85, 0
      %s88 = sadd.s32 %s87, 1
      %s89 = scalar_select %p86, %s87, %s88
      %p92 = pneg %p86
      %p93 = scmp.eq.s32.totalorder %s9, 1
      %p94 = por %p92, %p93
      %p95 = scmp.ne.s32.totalorder %s87, %s90
      %p96 = scmp.eq.s32.totalorder %s9, 0
      %p97 = por %p95, %p96
      %p98 = scmp.ne.s32.totalorder %s87, %s90
      %p99 = scmp.eq.s32.totalorder %s14, 1
      %p100 = por %p98, %p99
      %p101 = scmp.ne.s32.totalorder %s90, %s91
      %p102 = scmp.eq.s32.totalorder %s14, 0
      %p103 = por %p101, %p102
      %p104 = scmp.ne.s32.totalorder %s90, %s91
      %p105 = scmp.eq.s32.totalorder %s15, 1
      %p106 = por %p104, %p105
      %p108 = scmp.ne.s32.totalorder %s91, %s107
      %p109 = scmp.eq.s32.totalorder %s15, 0
      %p110 = por %p108, %p109
      %p111 = scmp.le.s32.totalorder 1, %s9
      %p112 = scmp.lt.s32.totalorder %s9, 3
      %p113 = pnand %p111, %p112
      %p114 = pneg %p113
      // Predicated region
      $region9: #{music_genre_forward.11} parent=5 // pred_check
        _
      $region10: #{music_genre_forward.11} parent=5 // pred_check_branch
        %116 = sbr.rel (%p113) target = $region12
      $region11: #{music_genre_forward.11} parent=5 // pred_region
        %s117 = ssub.s32 %s9, 1
        // Predicated region
        $region13: #{music_genre_forward.11} parent=11 // pred_check
          %p118 = pneg %p56
        $region14: #{music_genre_forward.11} parent=11 // pred_check_branch
          %120 = sbr.rel (%p118) target = $region16
        $region15: #{music_genre_forward.11} parent=11 // pred_region
          _
        $region16: #{music_genre_forward.11} parent=11 // pred_fallthru
          _
        // Predicated region
        $region17: #{music_genre_forward.11} parent=11 // pred_check
          %p121 = pneg %p77
        $region18: #{music_genre_forward.11} parent=11 // pred_check_branch
          %123 = sbr.rel (%p121) target = $region20
        $region19: #{music_genre_forward.11} parent=11 // pred_region
          _
        $region20: #{music_genre_forward.11} parent=11 // pred_fallthru
          _
      $region12: #{music_genre_forward.11} parent=5 // pred_fallthru
        _
      %p124 = scmp.lt.s32.totalorder %s9, 2
      // Predicated region
      $region21: #{music_genre_forward.11} parent=5 // pred_check
        %p125 = pneg %p124
      $region22: #{music_genre_forward.11} parent=5 // pred_check_branch
        %127 = sbr.rel (%p125) target = $region24
      $region23: #{music_genre_forward.11} parent=5 // pred_region
        // Predicated region
        $region25: #{music_genre_forward.11} parent=23 // pred_check
          %p128 = pneg %p29
        $region26: #{music_genre_forward.11} parent=23 // pred_check_branch
          %130 = sbr.rel (%p128) target = $region28
        $region27: #{music_genre_forward.11} parent=23 // pred_region
          %p131 = scmp.lt.s32.totalorder %s9, 1
          %s132 = scalar_select %p131, %s9, 1
          %s133 = smul.addr %s132, 11
          %s134 = smul.addr %s133, 4
          %s135 = scalar_lea.vmem %s0, %s134
        $region28: #{music_genre_forward.11} parent=23 // pred_fallthru
          _
      $region24: #{music_genre_forward.11} parent=5 // pred_fallthru
        _
      %p136 = scmp.le.s32.totalorder 1, %s9
      %p137 = scmp.lt.s32.totalorder %s9, 3
      %p138 = pnand %p136, %p137
      %p139 = pneg %p138
      // Predicated region
      $region29: #{music_genre_forward.11} parent=5 // pred_check
        _
      $region30: #{music_genre_forward.11} parent=5 // pred_check_branch
        %141 = sbr.rel (%p138) target = $region32
      $region31: #{music_genre_forward.11} parent=5 // pred_region
        %s142 = ssub.s32 %s9, 1
        %p143 = scmp.lt.s32.totalorder %s14, 1
        %s144 = scalar_select %p143, %s14, 1
        %s145 = smul.addr %s144, 11
        %s146 = smul.addr %s145, 4
        %s147 = scalar_lea.vmem %s0, %s146
        %p148 = pneg %p35
        %p149 = pneg %p32
        %p150 = pneg %p56
        %p151 = pneg %p53
        %p152 = pneg %p77
        %p153 = pneg %p74
        %p154 = pneg %p103
        %p155 = pneg %p100
        %s156 = sand.u32 %s90, 1
        %s157 = sand.u32 %s90, 1
        %s158 = smul.addr %s157, 288
        %s159 = scalar_lea.vmem [#allocation2], %s158
        %p160 = scmp.lt.s32.totalorder %s14, 1
        %s161 = scalar_select %p160, %s14, 1
        %s162 = smul.addr %s161, 11
        %s163 = smul.addr %s162, 4
        %s164 = scalar_lea.vmem %s0, %s163
        %v165 = vld [vmem:[%s164] sm:$0xf]
        %v166 = vld [vmem:[%s164 + $0x4] sm:$0xf]
        %v167 = vld [vmem:[%s164 + $0x8] sm:$0xf]
        %v168 = vld [vmem:[%s164 + $0xc] sm:$0xf]
        %v169 = vld [vmem:[%s164 + $0x10] sm:$0xf]
        %v170 = vld [vmem:[%s164 + $0x14] sm:$0xf]
        %v171 = vld [vmem:[%s164 + $0x18] sm:$0xf]
        %v172 = vld [vmem:[%s164 + $0x1c] sm:$0xf]
        %v173 = vld [vmem:[%s164 + $0x20] sm:$0xf]
        %v174 = vld [vmem:[%s164 + $0x24] sm:$0x1]
        %v175 = vld [vmem:[%s164 + $0x4] sm:$0xf]
        %v176 = vld [vmem:[%s164 + $0x8] sm:$0xf]
        %v177 = vld [vmem:[%s164 + $0xc] sm:$0xf]
        %v178 = vld [vmem:[%s164 + $0x10] sm:$0xf]
        %v179 = vld [vmem:[%s164 + $0x14] sm:$0xf]
        %v180 = vld [vmem:[%s164 + $0x18] sm:$0xf]
        %v181 = vld [vmem:[%s164 + $0x1c] sm:$0xf]
        %v182 = vld [vmem:[%s164 + $0x20] sm:$0xf]
        %v183 = vld [vmem:[%s164 + $0x24] sm:$0xf]
        %v184 = vld [vmem:[%s164 + $0x28] sm:$0x1]
        %v185 = vld [vmem:[%s164 + $0x4] sm:$0xe]
        %v186 = vld [vmem:[%s2] sm:$0x1]
        %s187 = scalar_lea.vmem %s1, 256
        %v188 = vld [vmem:[%s187] sm:$0xf]
        %v189 = vld [vmem:[%s187 + $0x4] sm:$0xf]
        %v190 = vld [vmem:[%s187 + $0x8] sm:$0xf]
        %v191 = vld [vmem:[%s187 + $0xc] sm:$0xf]
        %v192 = vld [vmem:[%s187 + $0x10] sm:$0xf]
        %v193 = vld [vmem:[%s187 + $0x14] sm:$0xf]
        %v194 = vld [vmem:[%s187 + $0x18] sm:$0xf]
        %v195 = vld [vmem:[%s187 + $0x1c] sm:$0xf]
        %v196 = vld [vmem:[%s187 + $0x20] sm:$0xf]
        %v197 = vld [vmem:[%s187 + $0x24] sm:$0xf]
        %v198 = vld [vmem:[%s187 + $0x28] sm:$0xf]
        %v199 = vld [vmem:[%s187 + $0x2c] sm:$0xf]
        %v200 = vld [vmem:[%s187 + $0x30] sm:$0xf]
        %v201 = vld [vmem:[%s187 + $0x34] sm:$0xf]
        %v202 = vld [vmem:[%s187 + $0x38] sm:$0xf]
        %v203 = vld [vmem:[%s187 + $0x3c] sm:$0xf]
        %v205 = vperm.slane %v186, 0
        %v216 = vunpack.c.l.b16 %v165
        %v217 = vunpack.c.l.b16 %v166
        %v218 = vunpack.c.l.b16 %v167
        %v219 = vunpack.c.l.b16 %v168
        %v220 = vunpack.c.l.b16 %v169
        %v221 = vunpack.c.l.b16 %v170
        %v222 = vunpack.c.l.b16 %v171
        %v223 = vunpack.c.l.b16 %v172
        %v224 = vunpack.c.l.b16 %v173
        %v225 = vpack.c.b16 %v217, %v216
        %v226 = vpack.c.b16 %v219, %v218
        %v227 = vpack.c.b16 %v221, %v220
        %v228 = vpack.c.b16 %v223, %v222
        %v229 = vpack.c.b16 %v224, %v224
        %v251 = vunpack.c.l.b16 %v188
        %v252 = vunpack.c.l.b16 %v189
        %v253 = vunpack.c.l.b16 %v190
        %v254 = vunpack.c.l.b16 %v191
        %v255 = vunpack.c.l.b16 %v192
        %v256 = vunpack.c.l.b16 %v193
        %v257 = vunpack.c.l.b16 %v194
        %v258 = vunpack.c.l.b16 %v195
        %v259 = vunpack.c.l.b16 %v196
        %v260 = vunpack.c.l.b16 %v197
        %v261 = vunpack.c.l.b16 %v198
        %v262 = vunpack.c.l.b16 %v199
        %v263 = vunpack.c.l.b16 %v200
        %v264 = vunpack.c.l.b16 %v201
        %v265 = vunpack.c.l.b16 %v202
        %v266 = vunpack.c.l.b16 %v203
        %v267 = vpack.c.b16 %v252, %v251
        %v268 = vpack.c.b16 %v254, %v253
        %v269 = vpack.c.b16 %v256, %v255
        %v270 = vpack.c.b16 %v258, %v257
        %v271 = vpack.c.b16 %v260, %v259
        %v272 = vpack.c.b16 %v262, %v261
        %v273 = vpack.c.b16 %v264, %v263
        %v274 = vpack.c.b16 %v266, %v265
        %283 = vmatpush.bf16.msra.mxu0 %v274
        %284 = vmatpush.bf16.msra.mxu0 %v273
        %285 = vmatpush.bf16.msra.mxu0 %v272
        %286 = vmatpush.bf16.msra.mxu0 %v271
        %287 = vmatpush.bf16.msra.mxu0 %v270
        %288 = vmatpush.bf16.msra.mxu0 %v269
        %289 = vmatpush.bf16.msra.mxu0 %v268
        %290 = vmatpush.bf16.msra.mxu0 %v267
        %291 = vmatmul.bf16.gmra.mxu0 %v225
        %v292 = vpop.f32.mrf.mxu0
        %v293 = vadd.f32 %v205, %v292
        %v294 = vpop.f32.mrf.mxu0
        %v295 = vadd.f32 %v205, %v294
        %296 = vmatmul.bf16.gmra.mxu0 %v226
        %v297 = vpop.f32.mrf.mxu0
        %v298 = vadd.f32 %v205, %v297
        %v299 = vpop.f32.mrf.mxu0
        %v300 = vadd.f32 %v205, %v299
        %301 = vmatmul.bf16.gmra.mxu0 %v227
        %v302 = vpop.f32.mrf.mxu0
        %v303 = vadd.f32 %v205, %v302
        %v304 = vpop.f32.mrf.mxu0
        %v305 = vadd.f32 %v205, %v304
        %306 = vmatmul.bf16.gmra.mxu0 %v228
        %v307 = vpop.f32.mrf.mxu0
        %v308 = vadd.f32 %v205, %v307
        %v309 = vpop.f32.mrf.mxu0
        %v310 = vadd.f32 %v205, %v309
        %311 = vmatmul.bf16.gmra.mxu0 %v229
        %v312 = vpop.f32.mrf.mxu0
        %v313 = vadd.f32 %v205, %v312
        %v314 = vpop.f32.mrf.mxu0
        %315 = vdwg.mxu0
        %v316 = vtanh.pop %v293
        %v317 = vtanh.pop %v295
        %v318 = vtanh.pop %v298
        %v319 = vtanh.pop %v300
        %v320 = vtanh.pop %v303
        %v321 = vtanh.pop %v305
        %v322 = vtanh.pop %v308
        %v323 = vtanh.pop %v310
        %v324 = vtanh.pop %v313
        %325 = vst [vmem:[%s159] sm:$0xff] %v316
        %326 = vst [vmem:[%s159 + $0x8] sm:$0xff] %v317
        %327 = vst [vmem:[%s159 + $0x10] sm:$0xff] %v318
        %328 = vst [vmem:[%s159 + $0x18] sm:$0xff] %v319
        %329 = vst [vmem:[%s159 + $0x20] sm:$0xff] %v320
        %330 = vst [vmem:[%s159 + $0x28] sm:$0xff] %v321
        %331 = vst [vmem:[%s159 + $0x30] sm:$0xff] %v322
        %332 = vst [vmem:[%s159 + $0x38] sm:$0xff] %v323
        %333 = vst [vmem:[%s159 + $0x40] sm:$0xff] %v324
        %s334 = scalar_lea.vmem %s1, 320
        %v335 = vld [vmem:[%s334] sm:$0xf]
        %v336 = vld [vmem:[%s334 + $0x4] sm:$0xf]
        %v337 = vld [vmem:[%s334 + $0x8] sm:$0xf]
        %v338 = vld [vmem:[%s334 + $0xc] sm:$0xf]
        %v339 = vld [vmem:[%s334 + $0x10] sm:$0xf]
        %v340 = vld [vmem:[%s334 + $0x14] sm:$0xf]
        %v341 = vld [vmem:[%s334 + $0x18] sm:$0xf]
        %v342 = vld [vmem:[%s334 + $0x1c] sm:$0xf]
        %v343 = vld [vmem:[%s334 + $0x20] sm:$0xf]
        %v344 = vld [vmem:[%s334 + $0x24] sm:$0xf]
        %v345 = vld [vmem:[%s334 + $0x28] sm:$0xf]
        %v346 = vld [vmem:[%s334 + $0x2c] sm:$0xf]
        %v347 = vld [vmem:[%s334 + $0x30] sm:$0xf]
        %v348 = vld [vmem:[%s334 + $0x34] sm:$0xf]
        %v349 = vld [vmem:[%s334 + $0x38] sm:$0xf]
        %v350 = vld [vmem:[%s334 + $0x3c] sm:$0xf]
        %s351 = scalar_lea.vmem %s1, 192
        %v352 = vld [vmem:[%s351] sm:$0xf]
        %v353 = vld [vmem:[%s351 + $0x4] sm:$0xf]
        %v354 = vld [vmem:[%s351 + $0x8] sm:$0xf]
        %v355 = vld [vmem:[%s351 + $0xc] sm:$0xf]
        %v356 = vld [vmem:[%s351 + $0x10] sm:$0xf]
        %v357 = vld [vmem:[%s351 + $0x14] sm:$0xf]
        %v358 = vld [vmem:[%s351 + $0x18] sm:$0xf]
        %v359 = vld [vmem:[%s351 + $0x1c] sm:$0xf]
        %v360 = vld [vmem:[%s351 + $0x20] sm:$0xf]
        %v361 = vld [vmem:[%s351 + $0x24] sm:$0xf]
        %v362 = vld [vmem:[%s351 + $0x28] sm:$0xf]
        %v363 = vld [vmem:[%s351 + $0x2c] sm:$0xf]
        %v364 = vld [vmem:[%s351 + $0x30] sm:$0xf]
        %v365 = vld [vmem:[%s351 + $0x34] sm:$0xf]
        %v366 = vld [vmem:[%s351 + $0x38] sm:$0xf]
        %v367 = vld [vmem:[%s351 + $0x3c] sm:$0xf]
        %v369 = vunpack.c.l.b16 %v174
        %v370 = vpack.c.b16 %v369, %v224
        %vm371 = vsmask.f32 7424
        %v373 = vshrl.u32 %v225, 16
        %v375 = vshll.u32 %v225, 16
        %v377 = vrot.slane %v375, 1
        %v378 = vor.u32 %v373, %v377
        %v380 = vshll.u32 %v226, 16
        %v382 = vrot.slane %v380, 1
        %v383 = vsel %vm371, %v378, %v382
        %v384 = vshrl.u32 %v226, 16
        %v386 = vor.u32 %v384, %v382
        %v388 = vshll.u32 %v227, 16
        %v390 = vrot.slane %v388, 1
        %v391 = vsel %vm371, %v386, %v390
        %v392 = vshrl.u32 %v227, 16
        %v394 = vor.u32 %v392, %v390
        %v396 = vshll.u32 %v228, 16
        %v398 = vrot.slane %v396, 1
        %v399 = vsel %vm371, %v394, %v398
        %v400 = vshrl.u32 %v228, 16
        %v402 = vor.u32 %v400, %v398
        %v404 = vshll.u32 %v370, 16
        %v406 = vrot.slane %v404, 1
        %v407 = vsel %vm371, %v402, %v406
        %v408 = vshrl.u32 %v370, 16
        %v410 = vor.u32 %v408, %v406
        %v432 = vunpack.c.l.b16 %v352
        %v433 = vunpack.c.l.b16 %v353
        %v434 = vunpack.c.l.b16 %v354
        %v435 = vunpack.c.l.b16 %v355
        %v436 = vunpack.c.l.b16 %v356
        %v437 = vunpack.c.l.b16 %v357
        %v438 = vunpack.c.l.b16 %v358
        %v439 = vunpack.c.l.b16 %v359
        %v440 = vunpack.c.l.b16 %v360
        %v441 = vunpack.c.l.b16 %v361
        %v442 = vunpack.c.l.b16 %v362
        %v443 = vunpack.c.l.b16 %v363
        %v444 = vunpack.c.l.b16 %v364
        %v445 = vunpack.c.l.b16 %v365
        %v446 = vunpack.c.l.b16 %v366
        %v447 = vunpack.c.l.b16 %v367
        %v448 = vpack.c.b16 %v433, %v432
        %v449 = vpack.c.b16 %v435, %v434
        %v450 = vpack.c.b16 %v437, %v436
        %v451 = vpack.c.b16 %v439, %v438
        %v452 = vpack.c.b16 %v441, %v440
        %v453 = vpack.c.b16 %v443, %v442
        %v454 = vpack.c.b16 %v445, %v444
        %v455 = vpack.c.b16 %v447, %v446
        %464 = vmatpush.bf16.msra.mxu0 %v455
        %465 = vmatpush.bf16.msra.mxu0 %v454
        %466 = vmatpush.bf16.msra.mxu0 %v453
        %467 = vmatpush.bf16.msra.mxu0 %v452
        %468 = vmatpush.bf16.msra.mxu0 %v451
        %469 = vmatpush.bf16.msra.mxu0 %v450
        %470 = vmatpush.bf16.msra.mxu0 %v449
        %471 = vmatpush.bf16.msra.mxu0 %v448
        %472 = vmatmul.bf16.gmra.mxu0 %v383
        %v473 = vpop.f32.mrf.mxu0
        %v474 = vadd.f32 0.0, %v473
        %v475 = vpop.f32.mrf.mxu0
        %v476 = vadd.f32 0.0, %v475
        %477 = vmatmul.bf16.gmra.mxu0 %v391
        %v478 = vpop.f32.mrf.mxu0
        %v479 = vadd.f32 0.0, %v478
        %v480 = vpop.f32.mrf.mxu0
        %v481 = vadd.f32 0.0, %v480
        %482 = vmatmul.bf16.gmra.mxu0 %v399
        %v483 = vpop.f32.mrf.mxu0
        %v484 = vadd.f32 0.0, %v483
        %v485 = vpop.f32.mrf.mxu0
        %v486 = vadd.f32 0.0, %v485
        %487 = vmatmul.bf16.gmra.mxu0 %v407
        %v488 = vpop.f32.mrf.mxu0
        %v489 = vadd.f32 0.0, %v488
        %v490 = vpop.f32.mrf.mxu0
        %v491 = vadd.f32 0.0, %v490
        %492 = vmatmul.bf16.gmra.mxu0 %v410
        %v493 = vpop.f32.mrf.mxu0
        %v494 = vadd.f32 0.0, %v493
        %v495 = vpop.f32.mrf.mxu0
        %496 = vdwg.mxu0
        %v513 = vunpack.c.l.b16 %v335
        %v514 = vunpack.c.l.b16 %v336
        %v515 = vunpack.c.l.b16 %v337
        %v516 = vunpack.c.l.b16 %v338
        %v517 = vunpack.c.l.b16 %v339
        %v518 = vunpack.c.l.b16 %v340
        %v519 = vunpack.c.l.b16 %v341
        %v520 = vunpack.c.l.b16 %v342
        %v521 = vunpack.c.l.b16 %v343
        %v522 = vunpack.c.l.b16 %v344
        %v523 = vunpack.c.l.b16 %v345
        %v524 = vunpack.c.l.b16 %v346
        %v525 = vunpack.c.l.b16 %v347
        %v526 = vunpack.c.l.b16 %v348
        %v527 = vunpack.c.l.b16 %v349
        %v528 = vunpack.c.l.b16 %v350
        %v529 = vpack.c.b16 %v514, %v513
        %v530 = vpack.c.b16 %v516, %v515
        %v531 = vpack.c.b16 %v518, %v517
        %v532 = vpack.c.b16 %v520, %v519
        %v533 = vpack.c.b16 %v522, %v521
        %v534 = vpack.c.b16 %v524, %v523
        %v535 = vpack.c.b16 %v526, %v525
        %v536 = vpack.c.b16 %v528, %v527
        %545 = vmatpush.bf16.msra.mxu0 %v536
        %546 = vmatpush.bf16.msra.mxu0 %v535
        %547 = vmatpush.bf16.msra.mxu0 %v534
        %548 = vmatpush.bf16.msra.mxu0 %v533
        %549 = vmatpush.bf16.msra.mxu0 %v532
        %550 = vmatpush.bf16.msra.mxu0 %v531
        %551 = vmatpush.bf16.msra.mxu0 %v530
        %552 = vmatpush.bf16.msra.mxu0 %v529
        %553 = vmatmul.bf16.gmra.mxu0 %v225
        %v554 = vpop.f32.mrf.mxu0
        %v555 = vadd.f32 %v474, %v554
        %v556 = vpop.f32.mrf.mxu0
        %v557 = vadd.f32 %v476, %v556
        %558 = vmatmul.bf16.gmra.mxu0 %v226
        %v559 = vpop.f32.mrf.mxu0
        %v560 = vadd.f32 %v479, %v559
        %v561 = vpop.f32.mrf.mxu0
        %v562 = vadd.f32 %v481, %v561
        %563 = vmatmul.bf16.gmra.mxu0 %v227
        %v564 = vpop.f32.mrf.mxu0
        %v565 = vadd.f32 %v484, %v564
        %v566 = vpop.f32.mrf.mxu0
        %v567 = vadd.f32 %v486, %v566
        %568 = vmatmul.bf16.gmra.mxu0 %v228
        %v569 = vpop.f32.mrf.mxu0
        %v570 = vadd.f32 %v489, %v569
        %v571 = vpop.f32.mrf.mxu0
        %v572 = vadd.f32 %v491, %v571
        %573 = vmatmul.bf16.gmra.mxu0 %v229
        %v574 = vpop.f32.mrf.mxu0
        %v575 = vadd.f32 %v494, %v574
        %v576 = vpop.f32.mrf.mxu0
        %577 = vdwg.mxu0
        %v578 = vadd.f32 %v555, %v205
        %v579 = vadd.f32 %v557, %v205
        %v580 = vadd.f32 %v560, %v205
        %v581 = vadd.f32 %v562, %v205
        %v582 = vadd.f32 %v565, %v205
        %v583 = vadd.f32 %v567, %v205
        %v584 = vadd.f32 %v570, %v205
        %v585 = vadd.f32 %v572, %v205
        %v586 = vadd.f32 %v575, %v205
        %v587 = vtanh.pop %v578
        %v588 = vtanh.pop %v579
        %v589 = vtanh.pop %v580
        %v590 = vtanh.pop %v581
        %v591 = vtanh.pop %v582
        %v592 = vtanh.pop %v583
        %v593 = vtanh.pop %v584
        %v594 = vtanh.pop %v585
        %v595 = vtanh.pop %v586
        %s596 = scalar_lea.vmem %s159, 72 [#allocation2]
        %597 = vst [vmem:[%s596] sm:$0xff] %v587
        %598 = vst [vmem:[%s596 + $0x8] sm:$0xff] %v588
        %599 = vst [vmem:[%s596 + $0x10] sm:$0xff] %v589
        %600 = vst [vmem:[%s596 + $0x18] sm:$0xff] %v590
        %601 = vst [vmem:[%s596 + $0x20] sm:$0xff] %v591
        %602 = vst [vmem:[%s596 + $0x28] sm:$0xff] %v592
        %603 = vst [vmem:[%s596 + $0x30] sm:$0xff] %v593
        %604 = vst [vmem:[%s596 + $0x38] sm:$0xff] %v594
        %605 = vst [vmem:[%s596 + $0x40] sm:$0xff] %v595
        %s606 = scalar_lea.vmem %s1, 448
        %v607 = vld [vmem:[%s606] sm:$0xf]
        %v608 = vld [vmem:[%s606 + $0x4] sm:$0xf]
        %v609 = vld [vmem:[%s606 + $0x8] sm:$0xf]
        %v610 = vld [vmem:[%s606 + $0xc] sm:$0xf]
        %v611 = vld [vmem:[%s606 + $0x10] sm:$0xf]
        %v612 = vld [vmem:[%s606 + $0x14] sm:$0xf]
        %v613 = vld [vmem:[%s606 + $0x18] sm:$0xf]
        %v614 = vld [vmem:[%s606 + $0x1c] sm:$0xf]
        %v615 = vld [vmem:[%s606 + $0x20] sm:$0xf]
        %v616 = vld [vmem:[%s606 + $0x24] sm:$0xf]
        %v617 = vld [vmem:[%s606 + $0x28] sm:$0xf]
        %v618 = vld [vmem:[%s606 + $0x2c] sm:$0xf]
        %v619 = vld [vmem:[%s606 + $0x30] sm:$0xf]
        %v620 = vld [vmem:[%s606 + $0x34] sm:$0xf]
        %v621 = vld [vmem:[%s606 + $0x38] sm:$0xf]
        %v622 = vld [vmem:[%s606 + $0x3c] sm:$0xf]
        %s623 = scalar_lea.vmem %s1, 64
        %v624 = vld [vmem:[%s623] sm:$0xf]
        %v625 = vld [vmem:[%s623 + $0x4] sm:$0xf]
        %v626 = vld [vmem:[%s623 + $0x8] sm:$0xf]
        %v627 = vld [vmem:[%s623 + $0xc] sm:$0xf]
        %v628 = vld [vmem:[%s623 + $0x10] sm:$0xf]
        %v629 = vld [vmem:[%s623 + $0x14] sm:$0xf]
        %v630 = vld [vmem:[%s623 + $0x18] sm:$0xf]
        %v631 = vld [vmem:[%s623 + $0x1c] sm:$0xf]
        %v632 = vld [vmem:[%s623 + $0x20] sm:$0xf]
        %v633 = vld [vmem:[%s623 + $0x24] sm:$0xf]
        %v634 = vld [vmem:[%s623 + $0x28] sm:$0xf]
        %v635 = vld [vmem:[%s623 + $0x2c] sm:$0xf]
        %v636 = vld [vmem:[%s623 + $0x30] sm:$0xf]
        %v637 = vld [vmem:[%s623 + $0x34] sm:$0xf]
        %v638 = vld [vmem:[%s623 + $0x38] sm:$0xf]
        %v639 = vld [vmem:[%s623 + $0x3c] sm:$0xf]
        %v650 = vunpack.c.l.b16 %v175
        %v651 = vunpack.c.l.b16 %v176
        %v652 = vunpack.c.l.b16 %v177
        %v653 = vunpack.c.l.b16 %v178
        %v654 = vunpack.c.l.b16 %v179
        %v655 = vunpack.c.l.b16 %v180
        %v656 = vunpack.c.l.b16 %v181
        %v657 = vunpack.c.l.b16 %v182
        %v658 = vunpack.c.l.b16 %v183
        %v659 = vunpack.c.l.b16 %v184
        %v660 = vpack.c.b16 %v651, %v650
        %v661 = vpack.c.b16 %v653, %v652
        %v662 = vpack.c.b16 %v655, %v654
        %v663 = vpack.c.b16 %v657, %v656
        %v664 = vpack.c.b16 %v659, %v658
        %v666 = vshrl.u32 %v660, 16
        %v668 = vshll.u32 %v660, 16
        %v670 = vrot.slane %v668, 1
        %v671 = vor.u32 %v666, %v670
        %v673 = vshll.u32 %v661, 16
        %v675 = vrot.slane %v673, 1
        %v676 = vsel %vm371, %v671, %v675
        %v677 = vshrl.u32 %v661, 16
        %v679 = vor.u32 %v677, %v675
        %v681 = vshll.u32 %v662, 16
        %v683 = vrot.slane %v681, 1
        %v684 = vsel %vm371, %v679, %v683
        %v685 = vshrl.u32 %v662, 16
        %v687 = vor.u32 %v685, %v683
        %v689 = vshll.u32 %v663, 16
        %v691 = vrot.slane %v689, 1
        %v692 = vsel %vm371, %v687, %v691
        %v693 = vshrl.u32 %v663, 16
        %v695 = vor.u32 %v693, %v691
        %v697 = vshll.u32 %v664, 16
        %v699 = vrot.slane %v697, 1
        %v700 = vsel %vm371, %v695, %v699
        %v701 = vshrl.u32 %v664, 16
        %v703 = vor.u32 %v701, %v699
        %v725 = vunpack.c.l.b16 %v624
        %v726 = vunpack.c.l.b16 %v625
        %v727 = vunpack.c.l.b16 %v626
        %v728 = vunpack.c.l.b16 %v627
        %v729 = vunpack.c.l.b16 %v628
        %v730 = vunpack.c.l.b16 %v629
        %v731 = vunpack.c.l.b16 %v630
        %v732 = vunpack.c.l.b16 %v631
        %v733 = vunpack.c.l.b16 %v632
        %v734 = vunpack.c.l.b16 %v633
        %v735 = vunpack.c.l.b16 %v634
        %v736 = vunpack.c.l.b16 %v635
        %v737 = vunpack.c.l.b16 %v636
        %v738 = vunpack.c.l.b16 %v637
        %v739 = vunpack.c.l.b16 %v638
        %v740 = vunpack.c.l.b16 %v639
        %v741 = vpack.c.b16 %v726, %v725
        %v742 = vpack.c.b16 %v728, %v727
        %v743 = vpack.c.b16 %v730, %v729
        %v744 = vpack.c.b16 %v732, %v731
        %v745 = vpack.c.b16 %v734, %v733
        %v746 = vpack.c.b16 %v736, %v735
        %v747 = vpack.c.b16 %v738, %v737
        %v748 = vpack.c.b16 %v740, %v739
        %757 = vmatpush.bf16.msra.mxu0 %v748
        %758 = vmatpush.bf16.msra.mxu0 %v747
        %759 = vmatpush.bf16.msra.mxu0 %v746
        %760 = vmatpush.bf16.msra.mxu0 %v745
        %761 = vmatpush.bf16.msra.mxu0 %v744
        %762 = vmatpush.bf16.msra.mxu0 %v743
        %763 = vmatpush.bf16.msra.mxu0 %v742
        %764 = vmatpush.bf16.msra.mxu0 %v741
        %765 = vmatmul.bf16.gmra.mxu0 %v676
        %v766 = vpop.f32.mrf.mxu0
        %v767 = vadd.f32 0.0, %v766
        %v768 = vpop.f32.mrf.mxu0
        %v769 = vadd.f32 0.0, %v768
        %770 = vmatmul.bf16.gmra.mxu0 %v684
        %v771 = vpop.f32.mrf.mxu0
        %v772 = vadd.f32 0.0, %v771
        %v773 = vpop.f32.mrf.mxu0
        %v774 = vadd.f32 0.0, %v773
        %775 = vmatmul.bf16.gmra.mxu0 %v692
        %v776 = vpop.f32.mrf.mxu0
        %v777 = vadd.f32 0.0, %v776
        %v778 = vpop.f32.mrf.mxu0
        %v779 = vadd.f32 0.0, %v778
        %780 = vmatmul.bf16.gmra.mxu0 %v700
        %v781 = vpop.f32.mrf.mxu0
        %v782 = vadd.f32 0.0, %v781
        %v783 = vpop.f32.mrf.mxu0
        %v784 = vadd.f32 0.0, %v783
        %785 = vmatmul.bf16.gmra.mxu0 %v703
        %v786 = vpop.f32.mrf.mxu0
        %v787 = vadd.f32 0.0, %v786
        %v788 = vpop.f32.mrf.mxu0
        %789 = vdwg.mxu0
        %v806 = vunpack.c.l.b16 %v607
        %v807 = vunpack.c.l.b16 %v608
        %v808 = vunpack.c.l.b16 %v609
        %v809 = vunpack.c.l.b16 %v610
        %v810 = vunpack.c.l.b16 %v611
        %v811 = vunpack.c.l.b16 %v612
        %v812 = vunpack.c.l.b16 %v613
        %v813 = vunpack.c.l.b16 %v614
        %v814 = vunpack.c.l.b16 %v615
        %v815 = vunpack.c.l.b16 %v616
        %v816 = vunpack.c.l.b16 %v617
        %v817 = vunpack.c.l.b16 %v618
        %v818 = vunpack.c.l.b16 %v619
        %v819 = vunpack.c.l.b16 %v620
        %v820 = vunpack.c.l.b16 %v621
        %v821 = vunpack.c.l.b16 %v622
        %v822 = vpack.c.b16 %v807, %v806
        %v823 = vpack.c.b16 %v809, %v808
        %v824 = vpack.c.b16 %v811, %v810
        %v825 = vpack.c.b16 %v813, %v812
        %v826 = vpack.c.b16 %v815, %v814
        %v827 = vpack.c.b16 %v817, %v816
        %v828 = vpack.c.b16 %v819, %v818
        %v829 = vpack.c.b16 %v821, %v820
        %838 = vmatpush.bf16.msra.mxu0 %v829
        %839 = vmatpush.bf16.msra.mxu0 %v828
        %840 = vmatpush.bf16.msra.mxu0 %v827
        %841 = vmatpush.bf16.msra.mxu0 %v826
        %842 = vmatpush.bf16.msra.mxu0 %v825
        %843 = vmatpush.bf16.msra.mxu0 %v824
        %844 = vmatpush.bf16.msra.mxu0 %v823
        %845 = vmatpush.bf16.msra.mxu0 %v822
        %846 = vmatmul.bf16.gmra.mxu0 %v225
        %v847 = vpop.f32.mrf.mxu0
        %v848 = vadd.f32 %v767, %v847
        %v849 = vpop.f32.mrf.mxu0
        %v850 = vadd.f32 %v769, %v849
        %851 = vmatmul.bf16.gmra.mxu0 %v226
        %v852 = vpop.f32.mrf.mxu0
        %v853 = vadd.f32 %v772, %v852
        %v854 = vpop.f32.mrf.mxu0
        %v855 = vadd.f32 %v774, %v854
        %856 = vmatmul.bf16.gmra.mxu0 %v227
        %v857 = vpop.f32.mrf.mxu0
        %v858 = vadd.f32 %v777, %v857
        %v859 = vpop.f32.mrf.mxu0
        %v860 = vadd.f32 %v779, %v859
        %861 = vmatmul.bf16.gmra.mxu0 %v228
        %v862 = vpop.f32.mrf.mxu0
        %v863 = vadd.f32 %v782, %v862
        %v864 = vpop.f32.mrf.mxu0
        %v865 = vadd.f32 %v784, %v864
        %866 = vmatmul.bf16.gmra.mxu0 %v229
        %v867 = vpop.f32.mrf.mxu0
        %v868 = vadd.f32 %v787, %v867
        %v869 = vpop.f32.mrf.mxu0
        %870 = vdwg.mxu0
        %v871 = vadd.f32 %v848, %v205
        %v872 = vadd.f32 %v850, %v205
        %v873 = vadd.f32 %v853, %v205
        %v874 = vadd.f32 %v855, %v205
        %v875 = vadd.f32 %v858, %v205
        %v876 = vadd.f32 %v860, %v205
        %v877 = vadd.f32 %v863, %v205
        %v878 = vadd.f32 %v865, %v205
        %v879 = vadd.f32 %v868, %v205
        %v880 = vtanh.pop %v871
        %v881 = vtanh.pop %v872
        %v882 = vtanh.pop %v873
        %v883 = vtanh.pop %v874
        %v884 = vtanh.pop %v875
        %v885 = vtanh.pop %v876
        %v886 = vtanh.pop %v877
        %v887 = vtanh.pop %v878
        %v888 = vtanh.pop %v879
        %s889 = scalar_lea.vmem %s159, 144 [#allocation2]
        %890 = vst [vmem:[%s889] sm:$0xff] %v880
        %891 = vst [vmem:[%s889 + $0x8] sm:$0xff] %v881
        %892 = vst [vmem:[%s889 + $0x10] sm:$0xff] %v882
        %893 = vst [vmem:[%s889 + $0x18] sm:$0xff] %v883
        %894 = vst [vmem:[%s889 + $0x20] sm:$0xff] %v884
        %895 = vst [vmem:[%s889 + $0x28] sm:$0xff] %v885
        %896 = vst [vmem:[%s889 + $0x30] sm:$0xff] %v886
        %897 = vst [vmem:[%s889 + $0x38] sm:$0xff] %v887
        %898 = vst [vmem:[%s889 + $0x40] sm:$0xff] %v888
        %s899 = scalar_lea.vmem %s1, 512
        %v900 = vld [vmem:[%s899] sm:$0xf]
        %v901 = vld [vmem:[%s899 + $0x4] sm:$0xf]
        %v902 = vld [vmem:[%s899 + $0x8] sm:$0xf]
        %v903 = vld [vmem:[%s899 + $0xc] sm:$0xf]
        %v904 = vld [vmem:[%s899 + $0x10] sm:$0xf]
        %v905 = vld [vmem:[%s899 + $0x14] sm:$0xf]
        %v906 = vld [vmem:[%s899 + $0x18] sm:$0xf]
        %v907 = vld [vmem:[%s899 + $0x1c] sm:$0xf]
        %v908 = vld [vmem:[%s899 + $0x20] sm:$0xf]
        %v909 = vld [vmem:[%s899 + $0x24] sm:$0xf]
        %v910 = vld [vmem:[%s899 + $0x28] sm:$0xf]
        %v911 = vld [vmem:[%s899 + $0x2c] sm:$0xf]
        %v912 = vld [vmem:[%s899 + $0x30] sm:$0xf]
        %v913 = vld [vmem:[%s899 + $0x34] sm:$0xf]
        %v914 = vld [vmem:[%s899 + $0x38] sm:$0xf]
        %v915 = vld [vmem:[%s899 + $0x3c] sm:$0xf]
        %s916 = scalar_lea.vmem %s1, 384
        %v917 = vld [vmem:[%s916] sm:$0xf]
        %v918 = vld [vmem:[%s916 + $0x4] sm:$0xf]
        %v919 = vld [vmem:[%s916 + $0x8] sm:$0xf]
        %v920 = vld [vmem:[%s916 + $0xc] sm:$0xf]
        %v921 = vld [vmem:[%s916 + $0x10] sm:$0xf]
        %v922 = vld [vmem:[%s916 + $0x14] sm:$0xf]
        %v923 = vld [vmem:[%s916 + $0x18] sm:$0xf]
        %v924 = vld [vmem:[%s916 + $0x1c] sm:$0xf]
        %v925 = vld [vmem:[%s916 + $0x20] sm:$0xf]
        %v926 = vld [vmem:[%s916 + $0x24] sm:$0xf]
        %v927 = vld [vmem:[%s916 + $0x28] sm:$0xf]
        %v928 = vld [vmem:[%s916 + $0x2c] sm:$0xf]
        %v929 = vld [vmem:[%s916 + $0x30] sm:$0xf]
        %v930 = vld [vmem:[%s916 + $0x34] sm:$0xf]
        %v931 = vld [vmem:[%s916 + $0x38] sm:$0xf]
        %v932 = vld [vmem:[%s916 + $0x3c] sm:$0xf]
        %v949 = vunpack.c.l.b16 %v917
        %v950 = vunpack.c.l.b16 %v918
        %v951 = vunpack.c.l.b16 %v919
        %v952 = vunpack.c.l.b16 %v920
        %v953 = vunpack.c.l.b16 %v921
        %v954 = vunpack.c.l.b16 %v922
        %v955 = vunpack.c.l.b16 %v923
        %v956 = vunpack.c.l.b16 %v924
        %v957 = vunpack.c.l.b16 %v925
        %v958 = vunpack.c.l.b16 %v926
        %v959 = vunpack.c.l.b16 %v927
        %v960 = vunpack.c.l.b16 %v928
        %v961 = vunpack.c.l.b16 %v929
        %v962 = vunpack.c.l.b16 %v930
        %v963 = vunpack.c.l.b16 %v931
        %v964 = vunpack.c.l.b16 %v932
        %v965 = vpack.c.b16 %v950, %v949
        %v966 = vpack.c.b16 %v952, %v951
        %v967 = vpack.c.b16 %v954, %v953
        %v968 = vpack.c.b16 %v956, %v955
        %v969 = vpack.c.b16 %v958, %v957
        %v970 = vpack.c.b16 %v960, %v959
        %v971 = vpack.c.b16 %v962, %v961
        %v972 = vpack.c.b16 %v964, %v963
        %981 = vmatpush.bf16.msra.mxu0 %v972
        %982 = vmatpush.bf16.msra.mxu0 %v971
        %983 = vmatpush.bf16.msra.mxu0 %v970
        %984 = vmatpush.bf16.msra.mxu0 %v969
        %985 = vmatpush.bf16.msra.mxu0 %v968
        %986 = vmatpush.bf16.msra.mxu0 %v967
        %987 = vmatpush.bf16.msra.mxu0 %v966
        %988 = vmatpush.bf16.msra.mxu0 %v965
        %989 = vmatmul.bf16.gmra.mxu0 %v383
        %v990 = vpop.f32.mrf.mxu0
        %v991 = vadd.f32 0.0, %v990
        %v992 = vpop.f32.mrf.mxu0
        %v993 = vadd.f32 0.0, %v992
        %994 = vmatmul.bf16.gmra.mxu0 %v391
        %v995 = vpop.f32.mrf.mxu0
        %v996 = vadd.f32 0.0, %v995
        %v997 = vpop.f32.mrf.mxu0
        %v998 = vadd.f32 0.0, %v997
        %999 = vmatmul.bf16.gmra.mxu0 %v399
        %v1000 = vpop.f32.mrf.mxu0
        %v1001 = vadd.f32 0.0, %v1000
        %v1002 = vpop.f32.mrf.mxu0
        %v1003 = vadd.f32 0.0, %v1002
        %1004 = vmatmul.bf16.gmra.mxu0 %v407
        %v1005 = vpop.f32.mrf.mxu0
        %v1006 = vadd.f32 0.0, %v1005
        %v1007 = vpop.f32.mrf.mxu0
        %v1008 = vadd.f32 0.0, %v1007
        %1009 = vmatmul.bf16.gmra.mxu0 %v410
        %v1010 = vpop.f32.mrf.mxu0
        %v1011 = vadd.f32 0.0, %v1010
        %v1012 = vpop.f32.mrf.mxu0
        %1013 = vdwg.mxu0
        %v1030 = vunpack.c.l.b16 %v900
        %v1031 = vunpack.c.l.b16 %v901
        %v1032 = vunpack.c.l.b16 %v902
        %v1033 = vunpack.c.l.b16 %v903
        %v1034 = vunpack.c.l.b16 %v904
        %v1035 = vunpack.c.l.b16 %v905
        %v1036 = vunpack.c.l.b16 %v906
        %v1037 = vunpack.c.l.b16 %v907
        %v1038 = vunpack.c.l.b16 %v908
        %v1039 = vunpack.c.l.b16 %v909
        %v1040 = vunpack.c.l.b16 %v910
        %v1041 = vunpack.c.l.b16 %v911
        %v1042 = vunpack.c.l.b16 %v912
        %v1043 = vunpack.c.l.b16 %v913
        %v1044 = vunpack.c.l.b16 %v914
        %v1045 = vunpack.c.l.b16 %v915
        %v1046 = vpack.c.b16 %v1031, %v1030
        %v1047 = vpack.c.b16 %v1033, %v1032
        %v1048 = vpack.c.b16 %v1035, %v1034
        %v1049 = vpack.c.b16 %v1037, %v1036
        %v1050 = vpack.c.b16 %v1039, %v1038
        %v1051 = vpack.c.b16 %v1041, %v1040
        %v1052 = vpack.c.b16 %v1043, %v1042
        %v1053 = vpack.c.b16 %v1045, %v1044
        %1062 = vmatpush.bf16.msra.mxu0 %v1053
        %1063 = vmatpush.bf16.msra.mxu0 %v1052
        %1064 = vmatpush.bf16.msra.mxu0 %v1051
        %1065 = vmatpush.bf16.msra.mxu0 %v1050
        %1066 = vmatpush.bf16.msra.mxu0 %v1049
        %1067 = vmatpush.bf16.msra.mxu0 %v1048
        %1068 = vmatpush.bf16.msra.mxu0 %v1047
        %1069 = vmatpush.bf16.msra.mxu0 %v1046
        %1070 = vmatmul.bf16.gmra.mxu0 %v225
        %v1071 = vpop.f32.mrf.mxu0
        %v1072 = vadd.f32 %v991, %v1071
        %v1073 = vpop.f32.mrf.mxu0
        %v1074 = vadd.f32 %v993, %v1073
        %1075 = vmatmul.bf16.gmra.mxu0 %v226
        %v1076 = vpop.f32.mrf.mxu0
        %v1077 = vadd.f32 %v996, %v1076
        %v1078 = vpop.f32.mrf.mxu0
        %v1079 = vadd.f32 %v998, %v1078
        %1080 = vmatmul.bf16.gmra.mxu0 %v227
        %v1081 = vpop.f32.mrf.mxu0
        %v1082 = vadd.f32 %v1001, %v1081
        %v1083 = vpop.f32.mrf.mxu0
        %v1084 = vadd.f32 %v1003, %v1083
        %1085 = vmatmul.bf16.gmra.mxu0 %v228
        %v1086 = vpop.f32.mrf.mxu0
        %v1087 = vadd.f32 %v1006, %v1086
        %v1088 = vpop.f32.mrf.mxu0
        %v1089 = vadd.f32 %v1008, %v1088
        %1090 = vmatmul.bf16.gmra.mxu0 %v229
        %v1091 = vpop.f32.mrf.mxu0
        %v1092 = vadd.f32 %v1011, %v1091
        %v1093 = vpop.f32.mrf.mxu0
        %1094 = vdwg.mxu0
        %s1095 = scalar_lea.vmem %s1, 128
        %v1096 = vld [vmem:[%s1095] sm:$0xf]
        %v1097 = vld [vmem:[%s1095 + $0x4] sm:$0xf]
        %v1098 = vld [vmem:[%s1095 + $0x8] sm:$0xf]
        %v1099 = vld [vmem:[%s1095 + $0xc] sm:$0xf]
        %v1100 = vld [vmem:[%s1095 + $0x10] sm:$0xf]
        %v1101 = vld [vmem:[%s1095 + $0x14] sm:$0xf]
        %v1102 = vld [vmem:[%s1095 + $0x18] sm:$0xf]
        %v1103 = vld [vmem:[%s1095 + $0x1c] sm:$0xf]
        %v1104 = vld [vmem:[%s1095 + $0x20] sm:$0xf]
        %v1105 = vld [vmem:[%s1095 + $0x24] sm:$0xf]
        %v1106 = vld [vmem:[%s1095 + $0x28] sm:$0xf]
        %v1107 = vld [vmem:[%s1095 + $0x2c] sm:$0xf]
        %v1108 = vld [vmem:[%s1095 + $0x30] sm:$0xf]
        %v1109 = vld [vmem:[%s1095 + $0x34] sm:$0xf]
        %v1110 = vld [vmem:[%s1095 + $0x38] sm:$0xf]
        %v1111 = vld [vmem:[%s1095 + $0x3c] sm:$0xf]
        %v1128 = vunpack.c.l.b16 %v1096
        %v1129 = vunpack.c.l.b16 %v1097
        %v1130 = vunpack.c.l.b16 %v1098
        %v1131 = vunpack.c.l.b16 %v1099
        %v1132 = vunpack.c.l.b16 %v1100
        %v1133 = vunpack.c.l.b16 %v1101
        %v1134 = vunpack.c.l.b16 %v1102
        %v1135 = vunpack.c.l.b16 %v1103
        %v1136 = vunpack.c.l.b16 %v1104
        %v1137 = vunpack.c.l.b16 %v1105
        %v1138 = vunpack.c.l.b16 %v1106
        %v1139 = vunpack.c.l.b16 %v1107
        %v1140 = vunpack.c.l.b16 %v1108
        %v1141 = vunpack.c.l.b16 %v1109
        %v1142 = vunpack.c.l.b16 %v1110
        %v1143 = vunpack.c.l.b16 %v1111
        %v1144 = vpack.c.b16 %v1129, %v1128
        %v1145 = vpack.c.b16 %v1131, %v1130
        %v1146 = vpack.c.b16 %v1133, %v1132
        %v1147 = vpack.c.b16 %v1135, %v1134
        %v1148 = vpack.c.b16 %v1137, %v1136
        %v1149 = vpack.c.b16 %v1139, %v1138
        %v1150 = vpack.c.b16 %v1141, %v1140
        %v1151 = vpack.c.b16 %v1143, %v1142
        %1160 = vmatpush.bf16.msra.mxu0 %v1151
        %1161 = vmatpush.bf16.msra.mxu0 %v1150
        %1162 = vmatpush.bf16.msra.mxu0 %v1149
        %1163 = vmatpush.bf16.msra.mxu0 %v1148
        %1164 = vmatpush.bf16.msra.mxu0 %v1147
        %1165 = vmatpush.bf16.msra.mxu0 %v1146
        %1166 = vmatpush.bf16.msra.mxu0 %v1145
        %1167 = vmatpush.bf16.msra.mxu0 %v1144
        %1168 = vmatmul.bf16.gmra.mxu0 %v676
        %v1169 = vpop.f32.mrf.mxu0
        %v1170 = vadd.f32 0.0, %v1169
        %v1171 = vpop.f32.mrf.mxu0
        %v1172 = vadd.f32 0.0, %v1171
        %1173 = vmatmul.bf16.gmra.mxu0 %v684
        %v1174 = vpop.f32.mrf.mxu0
        %v1175 = vadd.f32 0.0, %v1174
        %v1176 = vpop.f32.mrf.mxu0
        %v1177 = vadd.f32 0.0, %v1176
        %1178 = vmatmul.bf16.gmra.mxu0 %v692
        %v1179 = vpop.f32.mrf.mxu0
        %v1180 = vadd.f32 0.0, %v1179
        %v1181 = vpop.f32.mrf.mxu0
        %v1182 = vadd.f32 0.0, %v1181
        %1183 = vmatmul.bf16.gmra.mxu0 %v700
        %v1184 = vpop.f32.mrf.mxu0
        %v1185 = vadd.f32 0.0, %v1184
        %v1186 = vpop.f32.mrf.mxu0
        %v1187 = vadd.f32 0.0, %v1186
        %1188 = vmatmul.bf16.gmra.mxu0 %v703
        %v1189 = vpop.f32.mrf.mxu0
        %v1190 = vadd.f32 0.0, %v1189
        %v1191 = vpop.f32.mrf.mxu0
        %1192 = vdwg.mxu0
        %v1193 = vadd.f32 %v1072, %v1170
        %v1194 = vadd.f32 %v1074, %v1172
        %v1195 = vadd.f32 %v1077, %v1175
        %v1196 = vadd.f32 %v1079, %v1177
        %v1197 = vadd.f32 %v1082, %v1180
        %v1198 = vadd.f32 %v1084, %v1182
        %v1199 = vadd.f32 %v1087, %v1185
        %v1200 = vadd.f32 %v1089, %v1187
        %v1201 = vadd.f32 %v1092, %v1190
        %v1202 = vld [vmem:[%s1] sm:$0xf]
        %v1203 = vld [vmem:[%s1 + $0x4] sm:$0xf]
        %v1204 = vld [vmem:[%s1 + $0x8] sm:$0xf]
        %v1205 = vld [vmem:[%s1 + $0xc] sm:$0xf]
        %v1206 = vld [vmem:[%s1 + $0x10] sm:$0xf]
        %v1207 = vld [vmem:[%s1 + $0x14] sm:$0xf]
        %v1208 = vld [vmem:[%s1 + $0x18] sm:$0xf]
        %v1209 = vld [vmem:[%s1 + $0x1c] sm:$0xf]
        %v1210 = vld [vmem:[%s1 + $0x20] sm:$0xf]
        %v1211 = vld [vmem:[%s1 + $0x24] sm:$0xf]
        %v1212 = vld [vmem:[%s1 + $0x28] sm:$0xf]
        %v1213 = vld [vmem:[%s1 + $0x2c] sm:$0xf]
        %v1214 = vld [vmem:[%s1 + $0x30] sm:$0xf]
        %v1215 = vld [vmem:[%s1 + $0x34] sm:$0xf]
        %v1216 = vld [vmem:[%s1 + $0x38] sm:$0xf]
        %v1217 = vld [vmem:[%s1 + $0x3c] sm:$0xf]
        %v1219 = vunpack.c.l.b16 %v185
        %v1220 = vpack.c.b16 %v651, %v1219
        %vm1221 = vcmask 1046528
        %v1222 = vrot.slane %v1220, 1
        %v1223 = vrot.slane %v661, 1
        %v1224 = vsel %vm1221, %v1222, %v1223
        %v1225 = vrot.slane %v662, 1
        %v1226 = vsel %vm1221, %v1223, %v1225
        %v1227 = vrot.slane %v663, 1
        %v1228 = vsel %vm1221, %v1225, %v1227
        %v1229 = vrot.slane %v664, 1
        %v1230 = vsel %vm1221, %v1227, %v1229
        %v1252 = vunpack.c.l.b16 %v1202
        %v1253 = vunpack.c.l.b16 %v1203
        %v1254 = vunpack.c.l.b16 %v1204
        %v1255 = vunpack.c.l.b16 %v1205
        %v1256 = vunpack.c.l.b16 %v1206
        %v1257 = vunpack.c.l.b16 %v1207
        %v1258 = vunpack.c.l.b16 %v1208
        %v1259 = vunpack.c.l.b16 %v1209
        %v1260 = vunpack.c.l.b16 %v1210
        %v1261 = vunpack.c.l.b16 %v1211
        %v1262 = vunpack.c.l.b16 %v1212
        %v1263 = vunpack.c.l.b16 %v1213
        %v1264 = vunpack.c.l.b16 %v1214
        %v1265 = vunpack.c.l.b16 %v1215
        %v1266 = vunpack.c.l.b16 %v1216
        %v1267 = vunpack.c.l.b16 %v1217
        %v1268 = vpack.c.b16 %v1253, %v1252
        %v1269 = vpack.c.b16 %v1255, %v1254
        %v1270 = vpack.c.b16 %v1257, %v1256
        %v1271 = vpack.c.b16 %v1259, %v1258
        %v1272 = vpack.c.b16 %v1261, %v1260
        %v1273 = vpack.c.b16 %v1263, %v1262
        %v1274 = vpack.c.b16 %v1265, %v1264
        %v1275 = vpack.c.b16 %v1267, %v1266
        %1284 = vmatpush.bf16.msra.mxu0 %v1275
        %1285 = vmatpush.bf16.msra.mxu0 %v1274
        %1286 = vmatpush.bf16.msra.mxu0 %v1273
        %1287 = vmatpush.bf16.msra.mxu0 %v1272
        %1288 = vmatpush.bf16.msra.mxu0 %v1271
        %1289 = vmatpush.bf16.msra.mxu0 %v1270
        %1290 = vmatpush.bf16.msra.mxu0 %v1269
        %1291 = vmatpush.bf16.msra.mxu0 %v1268
        %1292 = vmatmul.bf16.gmra.mxu0 %v1224
        %v1293 = vpop.f32.mrf.mxu0
        %v1294 = vadd.f32 0.0, %v1293
        %v1295 = vpop.f32.mrf.mxu0
        %v1296 = vadd.f32 0.0, %v1295
        %1297 = vmatmul.bf16.gmra.mxu0 %v1226
        %v1298 = vpop.f32.mrf.mxu0
        %v1299 = vadd.f32 0.0, %v1298
        %v1300 = vpop.f32.mrf.mxu0
        %v1301 = vadd.f32 0.0, %v1300
        %1302 = vmatmul.bf16.gmra.mxu0 %v1228
        %v1303 = vpop.f32.mrf.mxu0
        %v1304 = vadd.f32 0.0, %v1303
        %v1305 = vpop.f32.mrf.mxu0
        %v1306 = vadd.f32 0.0, %v1305
        %1307 = vmatmul.bf16.gmra.mxu0 %v1230
        %v1308 = vpop.f32.mrf.mxu0
        %v1309 = vadd.f32 0.0, %v1308
        %v1310 = vpop.f32.mrf.mxu0
        %v1311 = vadd.f32 0.0, %v1310
        %1312 = vmatmul.bf16.gmra.mxu0 %v1229
        %v1313 = vpop.f32.mrf.mxu0
        %v1314 = vadd.f32 0.0, %v1313
        %v1315 = vpop.f32.mrf.mxu0
        %1316 = vdwg.mxu0
        %v1317 = vadd.f32 %v1193, %v1294
        %v1318 = vadd.f32 %v1194, %v1296
        %v1319 = vadd.f32 %v1195, %v1299
        %v1320 = vadd.f32 %v1196, %v1301
        %v1321 = vadd.f32 %v1197, %v1304
        %v1322 = vadd.f32 %v1198, %v1306
        %v1323 = vadd.f32 %v1199, %v1309
        %v1324 = vadd.f32 %v1200, %v1311
        %v1325 = vadd.f32 %v1201, %v1314
        %v1326 = vadd.f32 %v1317, %v205
        %v1327 = vadd.f32 %v1318, %v205
        %v1328 = vadd.f32 %v1319, %v205
        %v1329 = vadd.f32 %v1320, %v205
        %v1330 = vadd.f32 %v1321, %v205
        %v1331 = vadd.f32 %v1322, %v205
        %v1332 = vadd.f32 %v1323, %v205
        %v1333 = vadd.f32 %v1324, %v205
        %v1334 = vadd.f32 %v1325, %v205
        %v1335 = vtanh.pop %v1326
        %v1336 = vtanh.pop %v1327
        %v1337 = vtanh.pop %v1328
        %v1338 = vtanh.pop %v1329
        %v1339 = vtanh.pop %v1330
        %v1340 = vtanh.pop %v1331
        %v1341 = vtanh.pop %v1332
        %v1342 = vtanh.pop %v1333
        %v1343 = vtanh.pop %v1334
        %s1344 = scalar_lea.vmem %s159, 216 [#allocation2]
        %1345 = vst [vmem:[%s1344] sm:$0xff] %v1335
        %1346 = vst [vmem:[%s1344 + $0x8] sm:$0xff] %v1336
        %1347 = vst [vmem:[%s1344 + $0x10] sm:$0xff] %v1337
        %1348 = vst [vmem:[%s1344 + $0x18] sm:$0xff] %v1338
        %1349 = vst [vmem:[%s1344 + $0x20] sm:$0xff] %v1339
        %1350 = vst [vmem:[%s1344 + $0x28] sm:$0xff] %v1340
        %1351 = vst [vmem:[%s1344 + $0x30] sm:$0xff] %v1341
        %1352 = vst [vmem:[%s1344 + $0x38] sm:$0xff] %v1342
        %1353 = vst [vmem:[%s1344 + $0x40] sm:$0xff] %v1343
        %s1354 = sand.u32 %s90, 1
        %s1355 = sand.u32 %s90, 1
        %s1356 = smul.addr %s1355, 288
        %s1357 = scalar_lea.vmem [#allocation2], %s1356
        // Predicated region
        $region33: #{music_genre_forward.11} parent=31 // pred_check
          %p1358 = pneg %p100
        $region34: #{music_genre_forward.11} parent=31 // pred_check_branch
          %1360 = sbr.rel (%p1358) target = $region36
        $region35: #{music_genre_forward.11} parent=31 // pred_region
          %s1361 = smul.addr %s14, 9
          %s1362 = smul.addr %s1361, 8
          %s1363 = scalar_lea.vmem %s3, %s1362
          // Predicated region
          $region37: #{music_genre_forward.11} parent=35 // pred_check
            _
          $region38: #{music_genre_forward.11} parent=35 // pred_check_branch
            %1365 = sbr.rel (0) target = $region40
          $region39: #{music_genre_forward.11} parent=35 // pred_region
            // Predicated region
            $region41: #{music_genre_forward.11} parent=39 // pred_check
              _
            $region42: #{music_genre_forward.11} parent=39 // pred_check_branch
              %1367 = sbr.rel (0) target = $region44
            $region43: #{music_genre_forward.11} parent=39 // pred_region
              // Predicated region
              $region56: #{music_genre_forward.11} parent=43 // pred_check
                _
              $region57: #{music_genre_forward.11} parent=43 // pred_check_branch
                %1453 = sbr.rel (0) target = $region59
              $region58: #{music_genre_forward.11} parent=43 // pred_region
                loop: start=0, step=1, limit=1
                $region60: #{music_genre_forward.11} parent=58 // loop_pre_header
                  _
                $region61: #{music_genre_forward.11} parent=58 // loop_header
                  %s1455 = sphi 0, %s1459
                  %p1456 = scmp.ge.s32.totalorder %s1455, 1
                  %s1460 = sphi %s1357, %s1357
                  %s1461 = sphi %s1363, %s1363
                $region62: #{music_genre_forward.11} parent=58 // loop_header_branch
                  %1458 = sbr.rel (%p1456) target = $region66
                $region63: #{music_genre_forward.11} parent=58 // loop_body
                  %v1462 = vld [vmem:[%s1460] sm:$0xff]
                  %1463 = vst [vmem:[%s1461] sm:$0xff] %v1462
                  %v1464 = vld [vmem:[%s1460 + $0x8] sm:$0xff]
                  %1465 = vst [vmem:[%s1461 + $0x8] sm:$0xff] %v1464
                  %v1466 = vld [vmem:[%s1460 + $0x10] sm:$0xff]
                  %1467 = vst [vmem:[%s1461 + $0x10] sm:$0xff] %v1466
                  %v1468 = vld [vmem:[%s1460 + $0x18] sm:$0xff]
                  %1469 = vst [vmem:[%s1461 + $0x18] sm:$0xff] %v1468
                  %v1470 = vld [vmem:[%s1460 + $0x20] sm:$0xff]
                  %1471 = vst [vmem:[%s1461 + $0x20] sm:$0xff] %v1470
                  %v1472 = vld [vmem:[%s1460 + $0x28] sm:$0xff]
                  %1473 = vst [vmem:[%s1461 + $0x28] sm:$0xff] %v1472
                  %v1474 = vld [vmem:[%s1460 + $0x30] sm:$0xff]
                  %1475 = vst [vmem:[%s1461 + $0x30] sm:$0xff] %v1474
                  %v1476 = vld [vmem:[%s1460 + $0x38] sm:$0xff]
                  %1477 = vst [vmem:[%s1461 + $0x38] sm:$0xff] %v1476
                  %v1478 = vld [vmem:[%s1460 + $0x40] sm:$0xff]
                  %1479 = vst [vmem:[%s1461 + $0x40] sm:$0xff] %v1478
                  %v1480 = vld [vmem:[%s1460 + $0x48] sm:$0xff]
                  %1481 = vst [vmem:[%s1461 + $0x90] sm:$0xff] %v1480
                  %v1482 = vld [vmem:[%s1460 + $0x50] sm:$0xff]
                  %1483 = vst [vmem:[%s1461 + $0x98] sm:$0xff] %v1482
                  %v1484 = vld [vmem:[%s1460 + $0x58] sm:$0xff]
                  %1485 = vst [vmem:[%s1461 + $0xa0] sm:$0xff] %v1484
                  %v1486 = vld [vmem:[%s1460 + $0x60] sm:$0xff]
                  %1487 = vst [vmem:[%s1461 + $0xa8] sm:$0xff] %v1486
                  %v1488 = vld [vmem:[%s1460 + $0x68] sm:$0xff]
                  %1489 = vst [vmem:[%s1461 + $0xb0] sm:$0xff] %v1488
                  %v1490 = vld [vmem:[%s1460 + $0x70] sm:$0xff]
                  %1491 = vst [vmem:[%s1461 + $0xb8] sm:$0xff] %v1490
                  %v1492 = vld [vmem:[%s1460 + $0x78] sm:$0xff]
                  %1493 = vst [vmem:[%s1461 + $0xc0] sm:$0xff] %v1492
                  %v1494 = vld [vmem:[%s1460 + $0x80] sm:$0xff]
                  %1495 = vst [vmem:[%s1461 + $0xc8] sm:$0xff] %v1494
                  %v1496 = vld [vmem:[%s1460 + $0x88] sm:$0xff]
                  %1497 = vst [vmem:[%s1461 + $0xd0] sm:$0xff] %v1496
                  %v1498 = vld [vmem:[%s1460 + $0x90] sm:$0xff]
                  %1499 = vst [vmem:[%s1461 + $0x120] sm:$0xff] %v1498
                  %v1500 = vld [vmem:[%s1460 + $0x98] sm:$0xff]
                  %1501 = vst [vmem:[%s1461 + $0x128] sm:$0xff] %v1500
                  %v1502 = vld [vmem:[%s1460 + $0xa0] sm:$0xff]
                  %1503 = vst [vmem:[%s1461 + $0x130] sm:$0xff] %v1502
                  %v1504 = vld [vmem:[%s1460 + $0xa8] sm:$0xff]
                  %1505 = vst [vmem:[%s1461 + $0x138] sm:$0xff] %v1504
                  %v1506 = vld [vmem:[%s1460 + $0xb0] sm:$0xff]
                  %1507 = vst [vmem:[%s1461 + $0x140] sm:$0xff] %v1506
                  %v1508 = vld [vmem:[%s1460 + $0xb8] sm:$0xff]
                  %1509 = vst [vmem:[%s1461 + $0x148] sm:$0xff] %v1508
                  %v1510 = vld [vmem:[%s1460 + $0xc0] sm:$0xff]
                  %1511 = vst [vmem:[%s1461 + $0x150] sm:$0xff] %v1510
                  %v1512 = vld [vmem:[%s1460 + $0xc8] sm:$0xff]
                  %1513 = vst [vmem:[%s1461 + $0x158] sm:$0xff] %v1512
                  %v1514 = vld [vmem:[%s1460 + $0xd0] sm:$0xff]
                  %1515 = vst [vmem:[%s1461 + $0x160] sm:$0xff] %v1514
                  %v1516 = vld [vmem:[%s1460 + $0xd8] sm:$0xff]
                  %1517 = vst [vmem:[%s1461 + $0x1b0] sm:$0xff] %v1516
                  %v1518 = vld [vmem:[%s1460 + $0xe0] sm:$0xff]
                  %1519 = vst [vmem:[%s1461 + $0x1b8] sm:$0xff] %v1518
                  %v1520 = vld [vmem:[%s1460 + $0xe8] sm:$0xff]
                  %1521 = vst [vmem:[%s1461 + $0x1c0] sm:$0xff] %v1520
                  %v1522 = vld [vmem:[%s1460 + $0xf0] sm:$0xff]
                  %1523 = vst [vmem:[%s1461 + $0x1c8] sm:$0xff] %v1522
                  %v1524 = vld [vmem:[%s1460 + $0xf8] sm:$0xff]
                  %1525 = vst [vmem:[%s1461 + $0x1d0] sm:$0xff] %v1524
                  %v1526 = vld [vmem:[%s1460 + $0x100] sm:$0xff]
                  %1527 = vst [vmem:[%s1461 + $0x1d8] sm:$0xff] %v1526
                  %v1528 = vld [vmem:[%s1460 + $0x108] sm:$0xff]
                  %1529 = vst [vmem:[%s1461 + $0x1e0] sm:$0xff] %v1528
                  %v1530 = vld [vmem:[%s1460 + $0x110] sm:$0xff]
                  %1531 = vst [vmem:[%s1461 + $0x1e8] sm:$0xff] %v1530
                  %v1532 = vld [vmem:[%s1460 + $0x118] sm:$0xff]
                  %1533 = vst [vmem:[%s1461 + $0x1f0] sm:$0xff] %v1532
                $region64: #{music_genre_forward.11} parent=58 // loop_footer
                  %s1459 = sadd.s32 1, %s1455
                $region65: #{music_genre_forward.11} parent=58 // loop_footer_branch
                  %1454 = sbr.rel target = $region61
                $region66: #{music_genre_forward.11} parent=58 // loop_exit
                  _
              $region59: #{music_genre_forward.11} parent=43 // pred_fallthru
                _
              // Predicated region
              $region67: #{music_genre_forward.11} parent=43 // pred_check
                _
              $region68: #{music_genre_forward.11} parent=43 // pred_check_branch
                %1535 = sbr.rel target = $region70
              $region69: #{music_genre_forward.11} parent=43 // pred_region
                _
              $region70: #{music_genre_forward.11} parent=43 // pred_fallthru
                _
            $region44: #{music_genre_forward.11} parent=39 // pred_fallthru
              _
            // Predicated region
            $region45: #{music_genre_forward.11} parent=39 // pred_check
              _
            $region46: #{music_genre_forward.11} parent=39 // pred_check_branch
              %1369 = sbr.rel target = $region48
            $region47: #{music_genre_forward.11} parent=39 // pred_region
              %s1371 = ssub.s32 256, 1
              loop: start=0, step=1, limit=1
              $region49: #{music_genre_forward.11} parent=47 // loop_pre_header
                _
              $region50: #{music_genre_forward.11} parent=47 // loop_header
                %s1373 = sphi 0, %s1377
                %p1374 = scmp.ge.s32.totalorder %s1373, 1
                %s1378 = sphi %s1357, %s1357
                %s1379 = sphi %s1363, %s1363
              $region51: #{music_genre_forward.11} parent=47 // loop_header_branch
                %1376 = sbr.rel (%p1374) target = $region55
              $region52: #{music_genre_forward.11} parent=47 // loop_body
                %v1380 = vld [vmem:[%s1378] sm:%s1371]
                %1381 = vst [vmem:[%s1379] sm:%s1371] %v1380
                %v1382 = vld [vmem:[%s1378 + $0x8] sm:%s1371]
                %1383 = vst [vmem:[%s1379 + $0x8] sm:%s1371] %v1382
                %v1384 = vld [vmem:[%s1378 + $0x10] sm:%s1371]
                %1385 = vst [vmem:[%s1379 + $0x10] sm:%s1371] %v1384
                %v1386 = vld [vmem:[%s1378 + $0x18] sm:%s1371]
                %1387 = vst [vmem:[%s1379 + $0x18] sm:%s1371] %v1386
                %v1388 = vld [vmem:[%s1378 + $0x20] sm:%s1371]
                %1389 = vst [vmem:[%s1379 + $0x20] sm:%s1371] %v1388
                %v1390 = vld [vmem:[%s1378 + $0x28] sm:%s1371]
                %1391 = vst [vmem:[%s1379 + $0x28] sm:%s1371] %v1390
                %v1392 = vld [vmem:[%s1378 + $0x30] sm:%s1371]
                %1393 = vst [vmem:[%s1379 + $0x30] sm:%s1371] %v1392
                %v1394 = vld [vmem:[%s1378 + $0x38] sm:%s1371]
                %1395 = vst [vmem:[%s1379 + $0x38] sm:%s1371] %v1394
                %v1396 = vld [vmem:[%s1378 + $0x40] sm:%s1371]
                %1397 = vst [vmem:[%s1379 + $0x40] sm:%s1371] %v1396
                %v1398 = vld [vmem:[%s1378 + $0x48] sm:%s1371]
                %1399 = vst [vmem:[%s1379 + $0x90] sm:%s1371] %v1398
                %v1400 = vld [vmem:[%s1378 + $0x50] sm:%s1371]
                %1401 = vst [vmem:[%s1379 + $0x98] sm:%s1371] %v1400
                %v1402 = vld [vmem:[%s1378 + $0x58] sm:%s1371]
                %1403 = vst [vmem:[%s1379 + $0xa0] sm:%s1371] %v1402
                %v1404 = vld [vmem:[%s1378 + $0x60] sm:%s1371]
                %1405 = vst [vmem:[%s1379 + $0xa8] sm:%s1371] %v1404
                %v1406 = vld [vmem:[%s1378 + $0x68] sm:%s1371]
                %1407 = vst [vmem:[%s1379 + $0xb0] sm:%s1371] %v1406
                %v1408 = vld [vmem:[%s1378 + $0x70] sm:%s1371]
                %1409 = vst [vmem:[%s1379 + $0xb8] sm:%s1371] %v1408
                %v1410 = vld [vmem:[%s1378 + $0x78] sm:%s1371]
                %1411 = vst [vmem:[%s1379 + $0xc0] sm:%s1371] %v1410
                %v1412 = vld [vmem:[%s1378 + $0x80] sm:%s1371]
                %1413 = vst [vmem:[%s1379 + $0xc8] sm:%s1371] %v1412
                %v1414 = vld [vmem:[%s1378 + $0x88] sm:%s1371]
                %1415 = vst [vmem:[%s1379 + $0xd0] sm:%s1371] %v1414
                %v1416 = vld [vmem:[%s1378 + $0x90] sm:%s1371]
                %1417 = vst [vmem:[%s1379 + $0x120] sm:%s1371] %v1416
                %v1418 = vld [vmem:[%s1378 + $0x98] sm:%s1371]
                %1419 = vst [vmem:[%s1379 + $0x128] sm:%s1371] %v1418
                %v1420 = vld [vmem:[%s1378 + $0xa0] sm:%s1371]
                %1421 = vst [vmem:[%s1379 + $0x130] sm:%s1371] %v1420
                %v1422 = vld [vmem:[%s1378 + $0xa8] sm:%s1371]
                %1423 = vst [vmem:[%s1379 + $0x138] sm:%s1371] %v1422
                %v1424 = vld [vmem:[%s1378 + $0xb0] sm:%s1371]
                %1425 = vst [vmem:[%s1379 + $0x140] sm:%s1371] %v1424
                %v1426 = vld [vmem:[%s1378 + $0xb8] sm:%s1371]
                %1427 = vst [vmem:[%s1379 + $0x148] sm:%s1371] %v1426
                %v1428 = vld [vmem:[%s1378 + $0xc0] sm:%s1371]
                %1429 = vst [vmem:[%s1379 + $0x150] sm:%s1371] %v1428
                %v1430 = vld [vmem:[%s1378 + $0xc8] sm:%s1371]
                %1431 = vst [vmem:[%s1379 + $0x158] sm:%s1371] %v1430
                %v1432 = vld [vmem:[%s1378 + $0xd0] sm:%s1371]
                %1433 = vst [vmem:[%s1379 + $0x160] sm:%s1371] %v1432
                %v1434 = vld [vmem:[%s1378 + $0xd8] sm:%s1371]
                %1435 = vst [vmem:[%s1379 + $0x1b0] sm:%s1371] %v1434
                %v1436 = vld [vmem:[%s1378 + $0xe0] sm:%s1371]
                %1437 = vst [vmem:[%s1379 + $0x1b8] sm:%s1371] %v1436
                %v1438 = vld [vmem:[%s1378 + $0xe8] sm:%s1371]
                %1439 = vst [vmem:[%s1379 + $0x1c0] sm:%s1371] %v1438
                %v1440 = vld [vmem:[%s1378 + $0xf0] sm:%s1371]
                %1441 = vst [vmem:[%s1379 + $0x1c8] sm:%s1371] %v1440
                %v1442 = vld [vmem:[%s1378 + $0xf8] sm:%s1371]
                %1443 = vst [vmem:[%s1379 + $0x1d0] sm:%s1371] %v1442
                %v1444 = vld [vmem:[%s1378 + $0x100] sm:%s1371]
                %1445 = vst [vmem:[%s1379 + $0x1d8] sm:%s1371] %v1444
                %v1446 = vld [vmem:[%s1378 + $0x108] sm:%s1371]
                %1447 = vst [vmem:[%s1379 + $0x1e0] sm:%s1371] %v1446
                %v1448 = vld [vmem:[%s1378 + $0x110] sm:%s1371]
                %1449 = vst [vmem:[%s1379 + $0x1e8] sm:%s1371] %v1448
                %v1450 = vld [vmem:[%s1378 + $0x118] sm:%s1371]
                %1451 = vst [vmem:[%s1379 + $0x1f0] sm:%s1371] %v1450
              $region53: #{music_genre_forward.11} parent=47 // loop_footer
                %s1377 = sadd.s32 1, %s1373
              $region54: #{music_genre_forward.11} parent=47 // loop_footer_branch
                %1372 = sbr.rel target = $region50
              $region55: #{music_genre_forward.11} parent=47 // loop_exit
                _
            $region48: #{music_genre_forward.11} parent=39 // pred_fallthru
              _
          $region40: #{music_genre_forward.11} parent=35 // pred_fallthru
            _
          %1536 = vnop
        $region36: #{music_genre_forward.11} parent=31 // pred_fallthru
          _
      $region32: #{music_genre_forward.11} parent=5 // pred_fallthru
        _
      %p1537 = scmp.le.s32.totalorder 2, %s9
      // Predicated region
      $region71: #{music_genre_forward.11} parent=5 // pred_check
        %p1538 = pneg %p1537
      $region72: #{music_genre_forward.11} parent=5 // pred_check_branch
        %1540 = sbr.rel (%p1538) target = $region74
      $region73: #{music_genre_forward.11} parent=5 // pred_region
        %s1541 = ssub.s32 %s9, 2
        // Predicated region
        $region75: #{music_genre_forward.11} parent=73 // pred_check
          %p1542 = pneg %p106
        $region76: #{music_genre_forward.11} parent=73 // pred_check_branch
          %1544 = sbr.rel (%p1542) target = $region78
        $region77: #{music_genre_forward.11} parent=73 // pred_region
          %s1545 = sand.u32 %s91, 1
          %s1546 = sand.u32 %s91, 1
          %s1547 = smul.addr %s1546, 288
          %s1548 = scalar_lea.vmem [#allocation2], %s1547
        $region78: #{music_genre_forward.11} parent=73 // pred_fallthru
          _
      $region74: #{music_genre_forward.11} parent=5 // pred_fallthru
        _
    $region6: #{music_genre_forward.11} parent=1 // loop_footer
      %s13 = sadd.s32 1, %s9
    $region7: #{music_genre_forward.11} parent=1 // loop_footer_branch
      %8 = sbr.rel target = $region3
    $region8: #{music_genre_forward.11} parent=1 // loop_exit
      _

</llo_original>
